<compile_context>
chip_gen: v6e
topology: v6e:2x2x1
jax: 0.10.0
libtpu: 0.0.40
codegen_flags: <defaults>
</compile_context>

<pallas_src>
import jax
import jax.numpy as jnp
from jax import lax
from jax.experimental import pallas as pl
from jax.experimental.pallas import tpu as pltpu


def _round_up(x, m):
    return (x + m - 1) // m * m


# ---------------------------------------------------------------------------
# Kernel 1: fused conv1(5x5,valid)+bias+ReLU+2x2pool + conv2(5x5,valid)+bias+
#           ReLU+2x2pool for one 3x32x32 image per grid step.
#
# Input xp is the (dj, cin)-packed image: row = h*32 + w, lane = dj*3 + c,
# value x[h, w+dj, c] (zero where w+dj >= 32).  Garbage conv columns
# (w >= valid width) stay finite and are never combined into any output that
# survives pooling / reaches the FC stack (correct-by-construction, see the
# inline notes).
# ---------------------------------------------------------------------------
def _conv_block_kernel(x_ref, w1_ref, b1_ref, w2_ref, b2_ref, o_ref, s1, s3):
    w1 = w1_ref[...]                            # (5, 16, 16) bf16, rows dj*3+c
    b1 = b1_ref[...]                            # (1, 16) f32

    # ---- conv1 (28x28x6) + ReLU + height-pool; 4 output rows per chunk -----
    def conv1_chunk(i, carry):
        base = pl.multiple_of(i * 128, 128)     # 4 output heights * 32 cols
        acc = jnp.zeros((128, 16), jnp.float32)
        for di in range(5):                     # kernel rows: aligned shifts
            start = pl.multiple_of(base + di * 32, 32)
            acc += jnp.dot(x_ref[0, pl.ds(start, 128), :], w1[di],
                           preferred_element_type=jnp.float32)
        act = jnp.maximum(acc + b1, 0.0)        # (128, 16) f32
        a4 = act.reshape(2, 2, 32, 16)          # (pooled_h, pair, w, cout)
        hpool = jnp.maximum(a4[:, 0], a4[:, 1])  # (2, 32, 16) height-pooled
        # Columns 28..31 hold finite junk (zero-padded input borders) and
        # 32..39 are explicit zeros; the conv2 stage only ever combines
        # columns < 28 into outputs that survive its own pooling.
        hp40 = jnp.concatenate(
            [hpool, jnp.zeros((2, 8, 16), jnp.float32)], axis=1)
        s1[pl.ds(i * 2, 2), :, :] = hp40        # s1 rows = pooled height
        return carry

    lax.fori_loop(0, 7, conv1_chunk, 0)

    # ---- conv2 (10x10x16): width-pool of conv1 folded into the (dj, cin)
    #      tap gathering; 25 zero-free K=16 accumulated dots. ---------------
    w2 = w2_ref[...]                            # (5, 5, 16, 16) bf16
    b2 = b2_ref[...]                            # (1, 16) f32
    acc2 = jnp.zeros((160, 16), jnp.float32)    # rows = h_out*16 + w_out
    for dj in range(5):                         # kernel cols
        ev = s1[:, pl.ds(2 * dj, 16, stride=2), :]        # (14, 16, 16)
        od = s1[:, pl.ds(2 * dj + 1, 16, stride=2), :]
        m = jnp.maximum(ev, od).astype(jnp.bfloat16)      # pooled, shifted dj
        for di in range(5):                     # kernel rows
            lhs = m[di:di + 10].reshape(160, 16)
            acc2 += jnp.dot(lhs, w2[di, dj],
                            preferred_element_type=jnp.float32)
    act2 = jnp.maximum(acc2 + b2, 0.0)          # (160, 16) f32

    # ---- conv2 2x2 pool + FC-ready (5x5x16 -> 40x16) packing ---------------
    a3 = act2.reshape(5, 2, 16, 16)
    hpool2 = jnp.maximum(a3[:, 0], a3[:, 1])    # (5, 16, 16), w_out >= 10 junk
    s3[...] = hpool2
    ev2 = s3[:, pl.ds(0, 5, stride=2), :]       # width pairs (0,1)..(8,9)
    od2 = s3[:, pl.ds(1, 5, stride=2), :]
    pooled2 = jnp.maximum(ev2, od2)             # (5, 5, 16) all-real features
    out = jnp.concatenate(
        [pooled2, jnp.zeros((5, 3, 16), jnp.float32)], axis=1)   # (5, 8, 16)
    o_ref[0] = out.reshape(40, 16).astype(jnp.bfloat16)


def conv_block(xp, w1, b1, w2, b2):
    """xp: (B, 1024, 16) bf16 packed image -> (B, 40, 16) bf16 features."""
    B = xp.shape[0]
    assert xp.shape == (B, 1024, 16)
    return pl.pallas_call(
        _conv_block_kernel,
        out_shape=jax.ShapeDtypeStruct((B, 40, 16), jnp.bfloat16),
        grid=(B,),
        in_specs=[
            pl.BlockSpec((1, 1024, 16), lambda i: (i, 0, 0)),
            # Weight/bias blocks have constant index maps so they stay
            # resident across the batch grid (tiny at bf16: ~15 KB total).
            pl.BlockSpec((5, 16, 16), lambda i: (0, 0, 0)),
            pl.BlockSpec((1, 16), lambda i: (0, 0)),
            pl.BlockSpec((5, 5, 16, 16), lambda i: (0, 0, 0, 0)),
            pl.BlockSpec((1, 16), lambda i: (0, 0)),
        ],
        out_specs=pl.BlockSpec((1, 40, 16), lambda i: (i, 0, 0)),
        scratch_shapes=[pltpu.VMEM((14, 40, 16), jnp.float32),  # pooled conv1
                        pltpu.VMEM((5, 16, 16), jnp.float32)],  # pooled conv2
        compiler_params=pltpu.CompilerParams(
            dimension_semantics=("parallel",)),
    )(xp, w1, b1, w2, b2)


# ---------------------------------------------------------------------------
# Kernel 2: fused fc1 + ReLU + fc2 + ReLU + fc3.  bf16 operands, f32 epilogue.
# ---------------------------------------------------------------------------
def _fc_stack_kernel(x_ref, w1_ref, b1_ref, w2_ref, b2_ref, w3_ref, b3_ref,
                     o_ref):
    h = jnp.dot(x_ref[...], w1_ref[...], preferred_element_type=jnp.float32)
    h = jnp.maximum(h + b1_ref[...], 0.0)
    h = jnp.dot(h.astype(jnp.bfloat16), w2_ref[...],
                preferred_element_type=jnp.float32)
    h = jnp.maximum(h + b2_ref[...], 0.0)
    out = jnp.dot(h.astype(jnp.bfloat16), w3_ref[...],
                  preferred_element_type=jnp.float32)
    o_ref[...] = out + b3_ref[...]


def fc_stack(x, w1, b1, w2, b2, w3, b3):
    B, KIN = x.shape
    N = w1.shape[1]
    # Cap the batch tile so the parallel grid has >= 2 steps for v7x's two
    # TensorCores once B > 8.  bf16 + K=640 keeps VMEM tiny on every gen.
    bm = B if B <= 8 else min(128, _round_up(pl.cdiv(B, 2), 8))
    return pl.pallas_call(
        _fc_stack_kernel,
        out_shape=jax.ShapeDtypeStruct((B, N), jnp.float32),
        grid=(pl.cdiv(B, bm),),
        in_specs=[
            pl.BlockSpec((bm, KIN), lambda i: (i, 0)),
            pl.BlockSpec((KIN, N), lambda i: (0, 0)),
            pl.BlockSpec((1, N), lambda i: (0, 0)),
            pl.BlockSpec((N, N), lambda i: (0, 0)),
            pl.BlockSpec((1, N), lambda i: (0, 0)),
            pl.BlockSpec((N, N), lambda i: (0, 0)),
            pl.BlockSpec((1, N), lambda i: (0, 0)),
        ],
        out_specs=pl.BlockSpec((bm, N), lambda i: (i, 0)),
        compiler_params=pltpu.CompilerParams(
            dimension_semantics=("parallel",)),
    )(x, w1, b1, w2, b2, w3, b3)


# ---------------------------------------------------------------------------
# Parameter init (PyTorch-shaped) and one-time packing into TPU layouts.
# ---------------------------------------------------------------------------
def _uniform(key, shape, fan_in):
    bound = 1.0 / (fan_in ** 0.5)
    return jax.random.uniform(key, shape, jnp.float32, -bound, bound)


def init_params(key, input_channels=3):
    ks = jax.random.split(key, 10)
    k = 5
    return {
        "conv1_w": _uniform(ks[0], (6, input_channels, k, k), input_channels * k * k),
        "conv1_b": _uniform(ks[1], (6,), input_channels * k * k),
        "conv2_w": _uniform(ks[2], (16, 6, k, k), 6 * k * k),
        "conv2_b": _uniform(ks[3], (16,), 6 * k * k),
        # fc weights stored as (in, out)
        "fc1_w": _uniform(ks[4], (16 * 5 * 5, 128), 16 * 5 * 5),
        "fc1_b": _uniform(ks[5], (128,), 16 * 5 * 5),
        "fc2_w": _uniform(ks[6], (128, 64), 128),
        "fc2_b": _uniform(ks[7], (64,), 128),
        "fc3_w": _uniform(ks[8], (64, 10), 64),
        "fc3_b": _uniform(ks[9], (10,), 64),
    }


def pack_params(params):
    """Zero-pad / permute weights once; matmul operands stored in bf16."""
    bf16, f32 = jnp.bfloat16, jnp.float32

    # conv1: (6,3,5,5) -> per-di taps (5, 16, 16): rows dj*3 + cin, cols cout.
    w1 = jnp.transpose(params["conv1_w"], (2, 3, 1, 0))        # (di,dj,ci,co)
    w1 = w1.reshape(5, 15, 6)
    w1 = jnp.pad(w1, ((0, 0), (0, 1), (0, 10)))                # (5,16,16)
    # conv2: (16,6,5,5) -> (5, 5, 16, 16): [di, dj, cin(pad 16), cout].
    w2 = jnp.transpose(params["conv2_w"], (2, 3, 1, 0))        # (5,5,6,16)
    w2 = jnp.pad(w2, ((0, 0), (0, 0), (0, 10), (0, 0)))        # (5,5,16,16)
    b1 = jnp.pad(params["conv1_b"], (0, 10)).reshape(1, 16)
    b2 = params["conv2_b"].reshape(1, 16)

    # fc1: torch flatten order (c, h, w); our feature slab is row = h*8 + w
    # (w padded 5->8), lane = c  ->  packed row = (h*8 + w)*16 + c, K = 640.
    fw1 = params["fc1_w"].reshape(16, 5, 5, 128)               # (c,h,w,out)
    fw1 = jnp.transpose(fw1, (1, 2, 0, 3))                     # (h,w,c,out)
    fw1 = jnp.pad(fw1, ((0, 0), (0, 3), (0, 0), (0, 0)))       # (5,8,16,128)
    fw1 = fw1.reshape(640, 128)
    fw2 = jnp.pad(params["fc2_w"], ((0, 0), (0, 64)))          # (128,128)
    fw3 = jnp.pad(params["fc3_w"], ((0, 64), (0, 118)))        # (128,128)
    fb1 = params["fc1_b"].reshape(1, 128)
    fb2 = jnp.pad(params["fc2_b"], (0, 64)).reshape(1, 128)
    fb3 = jnp.pad(params["fc3_b"], (0, 118)).reshape(1, 128)

    return {
        "conv1_w": w1.astype(bf16), "conv1_b": b1.astype(f32),
        "conv2_w": w2.astype(bf16), "conv2_b": b2.astype(f32),
        "fc1_w": fw1.astype(bf16), "fc1_b": fb1.astype(f32),
        "fc2_w": fw2.astype(bf16), "fc2_b": fb2.astype(f32),
        "fc3_w": fw3.astype(bf16), "fc3_b": fb3.astype(f32),
    }


# ---------------------------------------------------------------------------
# ConvNet forward (mirrors the PyTorch module).
# ---------------------------------------------------------------------------
def convnet_forward(packed, x):
    B, C, H, W = x.shape
    assert (C, H, W) == (3, 32, 32), "the 16*5*5 flatten implies 3x32x32 input"
    # One-time layout conversion + (dj, cin) packing of the conv1 input:
    # xp[b, h*32 + w, dj*3 + c] = x[b, c, h, w + dj]  (0 where w + dj >= 32).
    xt = jnp.transpose(x, (0, 2, 3, 1))                        # NHWC
    taps = [jnp.pad(xt[:, :, dj:, :], ((0, 0), (0, 0), (0, dj), (0, 0)))
            for dj in range(5)]
    xp = jnp.concatenate(taps, axis=-1)                        # (B,32,32,15)
    xp = jnp.pad(xp, ((0, 0), (0, 0), (0, 0), (0, 1)))         # lane pad -> 16
    xp = xp.reshape(B, 32 * 32, 16).astype(jnp.bfloat16)

    feat = conv_block(xp, packed["conv1_w"], packed["conv1_b"],
                      packed["conv2_w"], packed["conv2_b"])    # (B, 40, 16)
    xfc = feat.reshape(B, 640)                                 # contiguous
    logits = fc_stack(xfc, packed["fc1_w"], packed["fc1_b"],
                      packed["fc2_w"], packed["fc2_b"],
                      packed["fc3_w"], packed["fc3_b"])        # (B, 128)
    return logits[:, :10]


# ---------------------------------------------------------------------------
# Pure-JAX reference (for a numerical smoke test).
# ---------------------------------------------------------------------------
def _maxpool_ref(y):
    B, C, H, W = y.shape
    return y.reshape(B, C, H // 2, 2, W // 2, 2).max(axis=(3, 5))


def convnet_reference(params, x):
    dn = ("NCHW", "OIHW", "NCHW")
    y = jax.lax.conv_general_dilated(x, params["conv1_w"], (1, 1), "VALID",
                                     dimension_numbers=dn)
    y = jax.nn.relu(y + params["conv1_b"][None, :, None, None])
    y = _maxpool_ref(y)
    y = jax.lax.conv_general_dilated(y, params["conv2_w"], (1, 1), "VALID",
                                     dimension_numbers=dn)
    y = jax.nn.relu(y + params["conv2_b"][None, :, None, None])
    y = _maxpool_ref(y)
    y = y.reshape(y.shape[0], -1)
    y = jax.nn.relu(y @ params["fc1_w"] + params["fc1_b"])
    y = jax.nn.relu(y @ params["fc2_w"] + params["fc2_b"])
    return y @ params["fc3_w"] + params["fc3_b"]


if __name__ == "__main__":
    key = jax.random.PRNGKey(0)
    pkey, xkey = jax.random.split(key)
    params = init_params(pkey, input_channels=3)
    packed = pack_params(params)
    # 32x32 spatial is required so the flatten equals 16*5*5 = 400.
    x = jax.random.normal(xkey, (2, 3, 32, 32), dtype=jnp.float32)

    out = jax.jit(convnet_forward)(packed, x)
    out = jax.block_until_ready(out)
    assert out.shape == (2, 10) and out.dtype == jnp.float32

    ref = jax.block_until_ready(jax.jit(convnet_reference)(params, x))
    # Tolerance accounts for bf16 matmul operands (reference is pure f32).
    assert jnp.allclose(out, ref, atol=1e-1, rtol=5e-2), (out, ref)
    print("KERNEL_OK")
</pallas_src>

<mosaic_0001>
module attributes {stable_mosaic.version = 11 : i64} {
  func.func @_conv_block_kernel(%arg0: i32, %arg1: memref<1x1024x16xbf16, #tpu.memory_space<vmem>>, %arg2: memref<5x16x16xbf16, #tpu.memory_space<vmem>>, %arg3: memref<1x16xf32, #tpu.memory_space<vmem>>, %arg4: memref<5x5x16x16xbf16, #tpu.memory_space<vmem>>, %arg5: memref<1x16xf32, #tpu.memory_space<vmem>>, %arg6: memref<1x40x16xbf16, #tpu.memory_space<vmem>>, %arg7: memref<14x40x16xf32, #tpu.memory_space<vmem>>, %arg8: memref<5x16x16xf32, #tpu.memory_space<vmem>>) attributes {dimension_semantics = [#tpu.dimension_semantics<parallel>], iteration_bounds = array<i64: 2>, scalar_prefetch = 0 : i64, scratch_operands = 2 : i64, tpu.core_type = #tpu.core_type<tc>, window_params = [{transform_indices = @transform_0, window_bounds = array<i64: 1, 1024, 16>}, {pipeline_mode = #tpu.pipeline_mode<synchronous>, transform_indices = @transform_1, window_bounds = array<i64: 5, 16, 16>}, {pipeline_mode = #tpu.pipeline_mode<synchronous>, transform_indices = @transform_2, window_bounds = array<i64: 1, 16>}, {pipeline_mode = #tpu.pipeline_mode<synchronous>, transform_indices = @transform_3, window_bounds = array<i64: 5, 5, 16, 16>}, {pipeline_mode = #tpu.pipeline_mode<synchronous>, transform_indices = @transform_4, window_bounds = array<i64: 1, 16>}, {transform_indices = @transform_5, window_bounds = array<i64: 1, 40, 16>}]} {
    %c0 = arith.constant 0 : index
    %c0_0 = arith.constant 0 : index
    %c0_1 = arith.constant 0 : index
    %0 = vector.load %arg2[%c0, %c0_0, %c0_1] : memref<5x16x16xbf16, #tpu.memory_space<vmem>>, vector<5x16x16xbf16>
    %c0_2 = arith.constant 0 : index
    %c0_3 = arith.constant 0 : index
    %1 = vector.load %arg3[%c0_2, %c0_3] : memref<1x16xf32, #tpu.memory_space<vmem>>, vector<1x16xf32>
    %c0_i32 = arith.constant 0 : i32
    %c7_i32 = arith.constant 7 : i32
    %2 = arith.addi %c0_i32, %c7_i32 : i32
    %c1_i32 = arith.constant 1 : i32
    scf.for %arg9 = %c0_i32 to %2 step %c1_i32  : i32 {
      %c128_i32 = arith.constant 128 : i32
      %197 = arith.muli %arg9, %c128_i32 : i32
      %198 = tpu.assume_multiple %197, 128 : i32
      %cst_71 = arith.constant 0.000000e+00 : f32
      %199 = vector.broadcast %cst_71 : f32 to vector<128x16xf32>
      %c0_i32_72 = arith.constant 0 : i32
      %200 = arith.addi %198, %c0_i32_72 : i32
      %201 = tpu.assume_multiple %200, 32 : i32
      %c0_73 = arith.constant 0 : index
      %202 = arith.index_cast %201 : i32 to index
      %c0_74 = arith.constant 0 : index
      %203 = vector.load %arg1[%c0_73, %202, %c0_74] : memref<1x1024x16xbf16, #tpu.memory_space<vmem>>, vector<1x128x16xbf16>
      %204 = vector.shape_cast %203 : vector<1x128x16xbf16> to vector<128x16xbf16>
      %205 = vector.extract_strided_slice %0 {offsets = [0, 0, 0], sizes = [1, 16, 16], strides = [1, 1, 1]} : vector<5x16x16xbf16> to vector<1x16x16xbf16>
      %206 = vector.shape_cast %205 : vector<1x16x16xbf16> to vector<16x16xbf16>
      %cst_75 = arith.constant dense<0.000000e+00> : vector<128x16xf32>
      %207 = tpu.matmul %204, %206, %cst_75 {dimension_numbers = #tpu.dot_dimension_numbers<[1], [0], [0], [1], [0, 0, 1, 1], [], []>} : vector<128x16xbf16>, vector<16x16xbf16>, vector<128x16xf32> -> vector<128x16xf32>
      %208 = arith.addf %199, %207 : vector<128x16xf32>
      %c32_i32 = arith.constant 32 : i32
      %209 = arith.addi %198, %c32_i32 : i32
      %210 = tpu.assume_multiple %209, 32 : i32
      %c0_76 = arith.constant 0 : index
      %211 = arith.index_cast %210 : i32 to index
      %c0_77 = arith.constant 0 : index
      %212 = vector.load %arg1[%c0_76, %211, %c0_77] : memref<1x1024x16xbf16, #tpu.memory_space<vmem>>, vector<1x128x16xbf16>
      %213 = vector.shape_cast %212 : vector<1x128x16xbf16> to vector<128x16xbf16>
      %214 = vector.extract_strided_slice %0 {offsets = [1, 0, 0], sizes = [1, 16, 16], strides = [1, 1, 1]} : vector<5x16x16xbf16> to vector<1x16x16xbf16>
      %215 = vector.shape_cast %214 : vector<1x16x16xbf16> to vector<16x16xbf16>
      %cst_78 = arith.constant dense<0.000000e+00> : vector<128x16xf32>
      %216 = tpu.matmul %213, %215, %cst_78 {dimension_numbers = #tpu.dot_dimension_numbers<[1], [0], [0], [1], [0, 0, 1, 1], [], []>} : vector<128x16xbf16>, vector<16x16xbf16>, vector<128x16xf32> -> vector<128x16xf32>
      %217 = arith.addf %208, %216 : vector<128x16xf32>
      %c64_i32 = arith.constant 64 : i32
      %218 = arith.addi %198, %c64_i32 : i32
      %219 = tpu.assume_multiple %218, 32 : i32
      %c0_79 = arith.constant 0 : index
      %220 = arith.index_cast %219 : i32 to index
      %c0_80 = arith.constant 0 : index
      %221 = vector.load %arg1[%c0_79, %220, %c0_80] : memref<1x1024x16xbf16, #tpu.memory_space<vmem>>, vector<1x128x16xbf16>
      %222 = vector.shape_cast %221 : vector<1x128x16xbf16> to vector<128x16xbf16>
      %223 = vector.extract_strided_slice %0 {offsets = [2, 0, 0], sizes = [1, 16, 16], strides = [1, 1, 1]} : vector<5x16x16xbf16> to vector<1x16x16xbf16>
      %224 = vector.shape_cast %223 : vector<1x16x16xbf16> to vector<16x16xbf16>
      %cst_81 = arith.constant dense<0.000000e+00> : vector<128x16xf32>
      %225 = tpu.matmul %222, %224, %cst_81 {dimension_numbers = #tpu.dot_dimension_numbers<[1], [0], [0], [1], [0, 0, 1, 1], [], []>} : vector<128x16xbf16>, vector<16x16xbf16>, vector<128x16xf32> -> vector<128x16xf32>
      %226 = arith.addf %217, %225 : vector<128x16xf32>
      %c96_i32 = arith.constant 96 : i32
      %227 = arith.addi %198, %c96_i32 : i32
      %228 = tpu.assume_multiple %227, 32 : i32
      %c0_82 = arith.constant 0 : index
      %229 = arith.index_cast %228 : i32 to index
      %c0_83 = arith.constant 0 : index
      %230 = vector.load %arg1[%c0_82, %229, %c0_83] : memref<1x1024x16xbf16, #tpu.memory_space<vmem>>, vector<1x128x16xbf16>
      %231 = vector.shape_cast %230 : vector<1x128x16xbf16> to vector<128x16xbf16>
      %232 = vector.extract_strided_slice %0 {offsets = [3, 0, 0], sizes = [1, 16, 16], strides = [1, 1, 1]} : vector<5x16x16xbf16> to vector<1x16x16xbf16>
      %233 = vector.shape_cast %232 : vector<1x16x16xbf16> to vector<16x16xbf16>
      %cst_84 = arith.constant dense<0.000000e+00> : vector<128x16xf32>
      %234 = tpu.matmul %231, %233, %cst_84 {dimension_numbers = #tpu.dot_dimension_numbers<[1], [0], [0], [1], [0, 0, 1, 1], [], []>} : vector<128x16xbf16>, vector<16x16xbf16>, vector<128x16xf32> -> vector<128x16xf32>
      %235 = arith.addf %226, %234 : vector<128x16xf32>
      %c128_i32_85 = arith.constant 128 : i32
      %236 = arith.addi %198, %c128_i32_85 : i32
      %237 = tpu.assume_multiple %236, 32 : i32
      %c0_86 = arith.constant 0 : index
      %238 = arith.index_cast %237 : i32 to index
      %c0_87 = arith.constant 0 : index
      %239 = vector.load %arg1[%c0_86, %238, %c0_87] : memref<1x1024x16xbf16, #tpu.memory_space<vmem>>, vector<1x128x16xbf16>
      %240 = vector.shape_cast %239 : vector<1x128x16xbf16> to vector<128x16xbf16>
      %241 = vector.extract_strided_slice %0 {offsets = [4, 0, 0], sizes = [1, 16, 16], strides = [1, 1, 1]} : vector<5x16x16xbf16> to vector<1x16x16xbf16>
      %242 = vector.shape_cast %241 : vector<1x16x16xbf16> to vector<16x16xbf16>
      %cst_88 = arith.constant dense<0.000000e+00> : vector<128x16xf32>
      %243 = tpu.matmul %240, %242, %cst_88 {dimension_numbers = #tpu.dot_dimension_numbers<[1], [0], [0], [1], [0, 0, 1, 1], [], []>} : vector<128x16xbf16>, vector<16x16xbf16>, vector<128x16xf32> -> vector<128x16xf32>
      %244 = arith.addf %235, %243 : vector<128x16xf32>
      %245 = vector.broadcast %1 : vector<1x16xf32> to vector<128x16xf32>
      %246 = arith.addf %244, %245 : vector<128x16xf32>
      %cst_89 = arith.constant 0.000000e+00 : f32
      %247 = vector.broadcast %cst_89 : f32 to vector<128x16xf32>
      %248 = arith.maximumf %246, %247 : vector<128x16xf32>
      %249 = vector.shape_cast %248 : vector<128x16xf32> to vector<2x2x32x16xf32>
      %250 = vector.extract_strided_slice %249 {offsets = [0, 0, 0, 0], sizes = [2, 1, 32, 16], strides = [1, 1, 1, 1]} : vector<2x2x32x16xf32> to vector<2x1x32x16xf32>
      %251 = vector.shape_cast %250 : vector<2x1x32x16xf32> to vector<2x32x16xf32>
      %252 = vector.extract_strided_slice %249 {offsets = [0, 1, 0, 0], sizes = [2, 1, 32, 16], strides = [1, 1, 1, 1]} : vector<2x2x32x16xf32> to vector<2x1x32x16xf32>
      %253 = vector.shape_cast %252 : vector<2x1x32x16xf32> to vector<2x32x16xf32>
      %254 = arith.maximumf %251, %253 : vector<2x32x16xf32>
      %cst_90 = arith.constant 0.000000e+00 : f32
      %255 = vector.broadcast %cst_90 : f32 to vector<2x8x16xf32>
      %256 = tpu.concatenate %254, %255 in 1 : vector<2x32x16xf32>, vector<2x8x16xf32> -> vector<2x40x16xf32>
      %c2_i32 = arith.constant 2 : i32
      %257 = arith.muli %arg9, %c2_i32 : i32
      %258 = arith.index_cast %257 : i32 to index
      %c0_91 = arith.constant 0 : index
      %c0_92 = arith.constant 0 : index
      %259 = vector.load %arg7[%258, %c0_91, %c0_92] : memref<14x40x16xf32, #tpu.memory_space<vmem>>, vector<2x40x16xf32>
      tpu.vector_store %arg7[%258, %c0_91, %c0_92], %256 {strides = array<i32>} : memref<14x40x16xf32, #tpu.memory_space<vmem>>, vector<2x40x16xf32>,
    }
    %c7_i32_4 = arith.constant 7 : i32
    %c0_5 = arith.constant 0 : index
    %c0_6 = arith.constant 0 : index
    %c0_7 = arith.constant 0 : index
    %c0_8 = arith.constant 0 : index
    %3 = vector.load %arg4[%c0_5, %c0_6, %c0_7, %c0_8] : memref<5x5x16x16xbf16, #tpu.memory_space<vmem>>, vector<5x5x16x16xbf16>
    %c0_9 = arith.constant 0 : index
    %c0_10 = arith.constant 0 : index
    %4 = vector.load %arg5[%c0_9, %c0_10] : memref<1x16xf32, #tpu.memory_space<vmem>>, vector<1x16xf32>
    %cst = arith.constant 0.000000e+00 : f32
    %5 = vector.broadcast %cst : f32 to vector<160x16xf32>
    %c0_11 = arith.constant 0 : index
    %c0_12 = arith.constant 0 : index
    %c0_13 = arith.constant 0 : index
    %6 = tpu.strided_load %arg7[%c0_11, %c0_12, %c0_13] {strides = array<i32: 1, 2, 1>} : memref<14x40x16xf32, #tpu.memory_space<vmem>>, vector<14x16x16xf32>
    %c0_14 = arith.constant 0 : index
    %c1 = arith.constant 1 : index
    %c0_15 = arith.constant 0 : index
    %7 = tpu.strided_load %arg7[%c0_14, %c1, %c0_15] {strides = array<i32: 1, 2, 1>} : memref<14x40x16xf32, #tpu.memory_space<vmem>>, vector<14x16x16xf32>
    %8 = arith.maximumf %6, %7 : vector<14x16x16xf32>
    %9 = arith.truncf %8 : vector<14x16x16xf32> to vector<14x16x16xbf16>
    %10 = vector.extract_strided_slice %9 {offsets = [0, 0, 0], sizes = [10, 16, 16], strides = [1, 1, 1]} : vector<14x16x16xbf16> to vector<10x16x16xbf16>
    %11 = vector.shape_cast %10 : vector<10x16x16xbf16> to vector<160x16xbf16>
    %12 = vector.extract_strided_slice %3 {offsets = [0, 0, 0, 0], sizes = [1, 1, 16, 16], strides = [1, 1, 1, 1]} : vector<5x5x16x16xbf16> to vector<1x1x16x16xbf16>
    %13 = vector.shape_cast %12 : vector<1x1x16x16xbf16> to vector<16x16xbf16>
    %cst_16 = arith.constant dense<0.000000e+00> : vector<160x16xf32>
    %14 = tpu.matmul %11, %13, %cst_16 {dimension_numbers = #tpu.dot_dimension_numbers<[1], [0], [0], [1], [0, 0, 1, 1], [], []>} : vector<160x16xbf16>, vector<16x16xbf16>, vector<160x16xf32> -> vector<160x16xf32>
    %15 = arith.addf %5, %14 : vector<160x16xf32>
    %16 = vector.extract_strided_slice %9 {offsets = [1, 0, 0], sizes = [10, 16, 16], strides = [1, 1, 1]} : vector<14x16x16xbf16> to vector<10x16x16xbf16>
    %17 = vector.shape_cast %16 : vector<10x16x16xbf16> to vector<160x16xbf16>
    %18 = vector.extract_strided_slice %3 {offsets = [1, 0, 0, 0], sizes = [1, 1, 16, 16], strides = [1, 1, 1, 1]} : vector<5x5x16x16xbf16> to vector<1x1x16x16xbf16>
    %19 = vector.shape_cast %18 : vector<1x1x16x16xbf16> to vector<16x16xbf16>
    %cst_17 = arith.constant dense<0.000000e+00> : vector<160x16xf32>
    %20 = tpu.matmul %17, %19, %cst_17 {dimension_numbers = #tpu.dot_dimension_numbers<[1], [0], [0], [1], [0, 0, 1, 1], [], []>} : vector<160x16xbf16>, vector<16x16xbf16>, vector<160x16xf32> -> vector<160x16xf32>
    %21 = arith.addf %15, %20 : vector<160x16xf32>
    %22 = vector.extract_strided_slice %9 {offsets = [2, 0, 0], sizes = [10, 16, 16], strides = [1, 1, 1]} : vector<14x16x16xbf16> to vector<10x16x16xbf16>
    %23 = vector.shape_cast %22 : vector<10x16x16xbf16> to vector<160x16xbf16>
    %24 = vector.extract_strided_slice %3 {offsets = [2, 0, 0, 0], sizes = [1, 1, 16, 16], strides = [1, 1, 1, 1]} : vector<5x5x16x16xbf16> to vector<1x1x16x16xbf16>
    %25 = vector.shape_cast %24 : vector<1x1x16x16xbf16> to vector<16x16xbf16>
    %cst_18 = arith.constant dense<0.000000e+00> : vector<160x16xf32>
    %26 = tpu.matmul %23, %25, %cst_18 {dimension_numbers = #tpu.dot_dimension_numbers<[1], [0], [0], [1], [0, 0, 1, 1], [], []>} : vector<160x16xbf16>, vector<16x16xbf16>, vector<160x16xf32> -> vector<160x16xf32>
    %27 = arith.addf %21, %26 : vector<160x16xf32>
    %28 = vector.extract_strided_slice %9 {offsets = [3, 0, 0], sizes = [10, 16, 16], strides = [1, 1, 1]} : vector<14x16x16xbf16> to vector<10x16x16xbf16>
    %29 = vector.shape_cast %28 : vector<10x16x16xbf16> to vector<160x16xbf16>
    %30 = vector.extract_strided_slice %3 {offsets = [3, 0, 0, 0], sizes = [1, 1, 16, 16], strides = [1, 1, 1, 1]} : vector<5x5x16x16xbf16> to vector<1x1x16x16xbf16>
    %31 = vector.shape_cast %30 : vector<1x1x16x16xbf16> to vector<16x16xbf16>
    %cst_19 = arith.constant dense<0.000000e+00> : vector<160x16xf32>
    %32 = tpu.matmul %29, %31, %cst_19 {dimension_numbers = #tpu.dot_dimension_numbers<[1], [0], [0], [1], [0, 0, 1, 1], [], []>} : vector<160x16xbf16>, vector<16x16xbf16>, vector<160x16xf32> -> vector<160x16xf32>
    %33 = arith.addf %27, %32 : vector<160x16xf32>
    %34 = vector.extract_strided_slice %9 {offsets = [4, 0, 0], sizes = [10, 16, 16], strides = [1, 1, 1]} : vector<14x16x16xbf16> to vector<10x16x16xbf16>
    %35 = vector.shape_cast %34 : vector<10x16x16xbf16> to vector<160x16xbf16>
    %36 = vector.extract_strided_slice %3 {offsets = [4, 0, 0, 0], sizes = [1, 1, 16, 16], strides = [1, 1, 1, 1]} : vector<5x5x16x16xbf16> to vector<1x1x16x16xbf16>
    %37 = vector.shape_cast %36 : vector<1x1x16x16xbf16> to vector<16x16xbf16>
    %cst_20 = arith.constant dense<0.000000e+00> : vector<160x16xf32>
    %38 = tpu.matmul %35, %37, %cst_20 {dimension_numbers = #tpu.dot_dimension_numbers<[1], [0], [0], [1], [0, 0, 1, 1], [], []>} : vector<160x16xbf16>, vector<16x16xbf16>, vector<160x16xf32> -> vector<160x16xf32>
    %39 = arith.addf %33, %38 : vector<160x16xf32>
    %c0_21 = arith.constant 0 : index
    %c2 = arith.constant 2 : index
    %c0_22 = arith.constant 0 : index
    %40 = tpu.strided_load %arg7[%c0_21, %c2, %c0_22] {strides = array<i32: 1, 2, 1>} : memref<14x40x16xf32, #tpu.memory_space<vmem>>, vector<14x16x16xf32>
    %c0_23 = arith.constant 0 : index
    %c3 = arith.constant 3 : index
    %c0_24 = arith.constant 0 : index
    %41 = tpu.strided_load %arg7[%c0_23, %c3, %c0_24] {strides = array<i32: 1, 2, 1>} : memref<14x40x16xf32, #tpu.memory_space<vmem>>, vector<14x16x16xf32>
    %42 = arith.maximumf %40, %41 : vector<14x16x16xf32>
    %43 = arith.truncf %42 : vector<14x16x16xf32> to vector<14x16x16xbf16>
    %44 = vector.extract_strided_slice %43 {offsets = [0, 0, 0], sizes = [10, 16, 16], strides = [1, 1, 1]} : vector<14x16x16xbf16> to vector<10x16x16xbf16>
    %45 = vector.shape_cast %44 : vector<10x16x16xbf16> to vector<160x16xbf16>
    %46 = vector.extract_strided_slice %3 {offsets = [0, 1, 0, 0], sizes = [1, 1, 16, 16], strides = [1, 1, 1, 1]} : vector<5x5x16x16xbf16> to vector<1x1x16x16xbf16>
    %47 = vector.shape_cast %46 : vector<1x1x16x16xbf16> to vector<16x16xbf16>
    %cst_25 = arith.constant dense<0.000000e+00> : vector<160x16xf32>
    %48 = tpu.matmul %45, %47, %cst_25 {dimension_numbers = #tpu.dot_dimension_numbers<[1], [0], [0], [1], [0, 0, 1, 1], [], []>} : vector<160x16xbf16>, vector<16x16xbf16>, vector<160x16xf32> -> vector<160x16xf32>
    %49 = arith.addf %39, %48 : vector<160x16xf32>
    %50 = vector.extract_strided_slice %43 {offsets = [1, 0, 0], sizes = [10, 16, 16], strides = [1, 1, 1]} : vector<14x16x16xbf16> to vector<10x16x16xbf16>
    %51 = vector.shape_cast %50 : vector<10x16x16xbf16> to vector<160x16xbf16>
    %52 = vector.extract_strided_slice %3 {offsets = [1, 1, 0, 0], sizes = [1, 1, 16, 16], strides = [1, 1, 1, 1]} : vector<5x5x16x16xbf16> to vector<1x1x16x16xbf16>
    %53 = vector.shape_cast %52 : vector<1x1x16x16xbf16> to vector<16x16xbf16>
    %cst_26 = arith.constant dense<0.000000e+00> : vector<160x16xf32>
    %54 = tpu.matmul %51, %53, %cst_26 {dimension_numbers = #tpu.dot_dimension_numbers<[1], [0], [0], [1], [0, 0, 1, 1], [], []>} : vector<160x16xbf16>, vector<16x16xbf16>, vector<160x16xf32> -> vector<160x16xf32>
    %55 = arith.addf %49, %54 : vector<160x16xf32>
    %56 = vector.extract_strided_slice %43 {offsets = [2, 0, 0], sizes = [10, 16, 16], strides = [1, 1, 1]} : vector<14x16x16xbf16> to vector<10x16x16xbf16>
    %57 = vector.shape_cast %56 : vector<10x16x16xbf16> to vector<160x16xbf16>
    %58 = vector.extract_strided_slice %3 {offsets = [2, 1, 0, 0], sizes = [1, 1, 16, 16], strides = [1, 1, 1, 1]} : vector<5x5x16x16xbf16> to vector<1x1x16x16xbf16>
    %59 = vector.shape_cast %58 : vector<1x1x16x16xbf16> to vector<16x16xbf16>
    %cst_27 = arith.constant dense<0.000000e+00> : vector<160x16xf32>
    %60 = tpu.matmul %57, %59, %cst_27 {dimension_numbers = #tpu.dot_dimension_numbers<[1], [0], [0], [1], [0, 0, 1, 1], [], []>} : vector<160x16xbf16>, vector<16x16xbf16>, vector<160x16xf32> -> vector<160x16xf32>
    %61 = arith.addf %55, %60 : vector<160x16xf32>
    %62 = vector.extract_strided_slice %43 {offsets = [3, 0, 0], sizes = [10, 16, 16], strides = [1, 1, 1]} : vector<14x16x16xbf16> to vector<10x16x16xbf16>
    %63 = vector.shape_cast %62 : vector<10x16x16xbf16> to vector<160x16xbf16>
    %64 = vector.extract_strided_slice %3 {offsets = [3, 1, 0, 0], sizes = [1, 1, 16, 16], strides = [1, 1, 1, 1]} : vector<5x5x16x16xbf16> to vector<1x1x16x16xbf16>
    %65 = vector.shape_cast %64 : vector<1x1x16x16xbf16> to vector<16x16xbf16>
    %cst_28 = arith.constant dense<0.000000e+00> : vector<160x16xf32>
    %66 = tpu.matmul %63, %65, %cst_28 {dimension_numbers = #tpu.dot_dimension_numbers<[1], [0], [0], [1], [0, 0, 1, 1], [], []>} : vector<160x16xbf16>, vector<16x16xbf16>, vector<160x16xf32> -> vector<160x16xf32>
    %67 = arith.addf %61, %66 : vector<160x16xf32>
    %68 = vector.extract_strided_slice %43 {offsets = [4, 0, 0], sizes = [10, 16, 16], strides = [1, 1, 1]} : vector<14x16x16xbf16> to vector<10x16x16xbf16>
    %69 = vector.shape_cast %68 : vector<10x16x16xbf16> to vector<160x16xbf16>
    %70 = vector.extract_strided_slice %3 {offsets = [4, 1, 0, 0], sizes = [1, 1, 16, 16], strides = [1, 1, 1, 1]} : vector<5x5x16x16xbf16> to vector<1x1x16x16xbf16>
    %71 = vector.shape_cast %70 : vector<1x1x16x16xbf16> to vector<16x16xbf16>
    %cst_29 = arith.constant dense<0.000000e+00> : vector<160x16xf32>
    %72 = tpu.matmul %69, %71, %cst_29 {dimension_numbers = #tpu.dot_dimension_numbers<[1], [0], [0], [1], [0, 0, 1, 1], [], []>} : vector<160x16xbf16>, vector<16x16xbf16>, vector<160x16xf32> -> vector<160x16xf32>
    %73 = arith.addf %67, %72 : vector<160x16xf32>
    %c0_30 = arith.constant 0 : index
    %c4 = arith.constant 4 : index
    %c0_31 = arith.constant 0 : index
    %74 = tpu.strided_load %arg7[%c0_30, %c4, %c0_31] {strides = array<i32: 1, 2, 1>} : memref<14x40x16xf32, #tpu.memory_space<vmem>>, vector<14x16x16xf32>
    %c0_32 = arith.constant 0 : index
    %c5 = arith.constant 5 : index
    %c0_33 = arith.constant 0 : index
    %75 = tpu.strided_load %arg7[%c0_32, %c5, %c0_33] {strides = array<i32: 1, 2, 1>} : memref<14x40x16xf32, #tpu.memory_space<vmem>>, vector<14x16x16xf32>
    %76 = arith.maximumf %74, %75 : vector<14x16x16xf32>
    %77 = arith.truncf %76 : vector<14x16x16xf32> to vector<14x16x16xbf16>
    %78 = vector.extract_strided_slice %77 {offsets = [0, 0, 0], sizes = [10, 16, 16], strides = [1, 1, 1]} : vector<14x16x16xbf16> to vector<10x16x16xbf16>
    %79 = vector.shape_cast %78 : vector<10x16x16xbf16> to vector<160x16xbf16>
    %80 = vector.extract_strided_slice %3 {offsets = [0, 2, 0, 0], sizes = [1, 1, 16, 16], strides = [1, 1, 1, 1]} : vector<5x5x16x16xbf16> to vector<1x1x16x16xbf16>
    %81 = vector.shape_cast %80 : vector<1x1x16x16xbf16> to vector<16x16xbf16>
    %cst_34 = arith.constant dense<0.000000e+00> : vector<160x16xf32>
    %82 = tpu.matmul %79, %81, %cst_34 {dimension_numbers = #tpu.dot_dimension_numbers<[1], [0], [0], [1], [0, 0, 1, 1], [], []>} : vector<160x16xbf16>, vector<16x16xbf16>, vector<160x16xf32> -> vector<160x16xf32>
    %83 = arith.addf %73, %82 : vector<160x16xf32>
    %84 = vector.extract_strided_slice %77 {offsets = [1, 0, 0], sizes = [10, 16, 16], strides = [1, 1, 1]} : vector<14x16x16xbf16> to vector<10x16x16xbf16>
    %85 = vector.shape_cast %84 : vector<10x16x16xbf16> to vector<160x16xbf16>
    %86 = vector.extract_strided_slice %3 {offsets = [1, 2, 0, 0], sizes = [1, 1, 16, 16], strides = [1, 1, 1, 1]} : vector<5x5x16x16xbf16> to vector<1x1x16x16xbf16>
    %87 = vector.shape_cast %86 : vector<1x1x16x16xbf16> to vector<16x16xbf16>
    %cst_35 = arith.constant dense<0.000000e+00> : vector<160x16xf32>
    %88 = tpu.matmul %85, %87, %cst_35 {dimension_numbers = #tpu.dot_dimension_numbers<[1], [0], [0], [1], [0, 0, 1, 1], [], []>} : vector<160x16xbf16>, vector<16x16xbf16>, vector<160x16xf32> -> vector<160x16xf32>
    %89 = arith.addf %83, %88 : vector<160x16xf32>
    %90 = vector.extract_strided_slice %77 {offsets = [2, 0, 0], sizes = [10, 16, 16], strides = [1, 1, 1]} : vector<14x16x16xbf16> to vector<10x16x16xbf16>
    %91 = vector.shape_cast %90 : vector<10x16x16xbf16> to vector<160x16xbf16>
    %92 = vector.extract_strided_slice %3 {offsets = [2, 2, 0, 0], sizes = [1, 1, 16, 16], strides = [1, 1, 1, 1]} : vector<5x5x16x16xbf16> to vector<1x1x16x16xbf16>
    %93 = vector.shape_cast %92 : vector<1x1x16x16xbf16> to vector<16x16xbf16>
    %cst_36 = arith.constant dense<0.000000e+00> : vector<160x16xf32>
    %94 = tpu.matmul %91, %93, %cst_36 {dimension_numbers = #tpu.dot_dimension_numbers<[1], [0], [0], [1], [0, 0, 1, 1], [], []>} : vector<160x16xbf16>, vector<16x16xbf16>, vector<160x16xf32> -> vector<160x16xf32>
    %95 = arith.addf %89, %94 : vector<160x16xf32>
    %96 = vector.extract_strided_slice %77 {offsets = [3, 0, 0], sizes = [10, 16, 16], strides = [1, 1, 1]} : vector<14x16x16xbf16> to vector<10x16x16xbf16>
    %97 = vector.shape_cast %96 : vector<10x16x16xbf16> to vector<160x16xbf16>
    %98 = vector.extract_strided_slice %3 {offsets = [3, 2, 0, 0], sizes = [1, 1, 16, 16], strides = [1, 1, 1, 1]} : vector<5x5x16x16xbf16> to vector<1x1x16x16xbf16>
    %99 = vector.shape_cast %98 : vector<1x1x16x16xbf16> to vector<16x16xbf16>
    %cst_37 = arith.constant dense<0.000000e+00> : vector<160x16xf32>
    %100 = tpu.matmul %97, %99, %cst_37 {dimension_numbers = #tpu.dot_dimension_numbers<[1], [0], [0], [1], [0, 0, 1, 1], [], []>} : vector<160x16xbf16>, vector<16x16xbf16>, vector<160x16xf32> -> vector<160x16xf32>
    %101 = arith.addf %95, %100 : vector<160x16xf32>
    %102 = vector.extract_strided_slice %77 {offsets = [4, 0, 0], sizes = [10, 16, 16], strides = [1, 1, 1]} : vector<14x16x16xbf16> to vector<10x16x16xbf16>
    %103 = vector.shape_cast %102 : vector<10x16x16xbf16> to vector<160x16xbf16>
    %104 = vector.extract_strided_slice %3 {offsets = [4, 2, 0, 0], sizes = [1, 1, 16, 16], strides = [1, 1, 1, 1]} : vector<5x5x16x16xbf16> to vector<1x1x16x16xbf16>
    %105 = vector.shape_cast %104 : vector<1x1x16x16xbf16> to vector<16x16xbf16>
    %cst_38 = arith.constant dense<0.000000e+00> : vector<160x16xf32>
    %106 = tpu.matmul %103, %105, %cst_38 {dimension_numbers = #tpu.dot_dimension_numbers<[1], [0], [0], [1], [0, 0, 1, 1], [], []>} : vector<160x16xbf16>, vector<16x16xbf16>, vector<160x16xf32> -> vector<160x16xf32>
    %107 = arith.addf %101, %106 : vector<160x16xf32>
    %c0_39 = arith.constant 0 : index
    %c6 = arith.constant 6 : index
    %c0_40 = arith.constant 0 : index
    %108 = tpu.strided_load %arg7[%c0_39, %c6, %c0_40] {strides = array<i32: 1, 2, 1>} : memref<14x40x16xf32, #tpu.memory_space<vmem>>, vector<14x16x16xf32>
    %c0_41 = arith.constant 0 : index
    %c7 = arith.constant 7 : index
    %c0_42 = arith.constant 0 : index
    %109 = tpu.strided_load %arg7[%c0_41, %c7, %c0_42] {strides = array<i32: 1, 2, 1>} : memref<14x40x16xf32, #tpu.memory_space<vmem>>, vector<14x16x16xf32>
    %110 = arith.maximumf %108, %109 : vector<14x16x16xf32>
    %111 = arith.truncf %110 : vector<14x16x16xf32> to vector<14x16x16xbf16>
    %112 = vector.extract_strided_slice %111 {offsets = [0, 0, 0], sizes = [10, 16, 16], strides = [1, 1, 1]} : vector<14x16x16xbf16> to vector<10x16x16xbf16>
    %113 = vector.shape_cast %112 : vector<10x16x16xbf16> to vector<160x16xbf16>
    %114 = vector.extract_strided_slice %3 {offsets = [0, 3, 0, 0], sizes = [1, 1, 16, 16], strides = [1, 1, 1, 1]} : vector<5x5x16x16xbf16> to vector<1x1x16x16xbf16>
    %115 = vector.shape_cast %114 : vector<1x1x16x16xbf16> to vector<16x16xbf16>
    %cst_43 = arith.constant dense<0.000000e+00> : vector<160x16xf32>
    %116 = tpu.matmul %113, %115, %cst_43 {dimension_numbers = #tpu.dot_dimension_numbers<[1], [0], [0], [1], [0, 0, 1, 1], [], []>} : vector<160x16xbf16>, vector<16x16xbf16>, vector<160x16xf32> -> vector<160x16xf32>
    %117 = arith.addf %107, %116 : vector<160x16xf32>
    %118 = vector.extract_strided_slice %111 {offsets = [1, 0, 0], sizes = [10, 16, 16], strides = [1, 1, 1]} : vector<14x16x16xbf16> to vector<10x16x16xbf16>
    %119 = vector.shape_cast %118 : vector<10x16x16xbf16> to vector<160x16xbf16>
    %120 = vector.extract_strided_slice %3 {offsets = [1, 3, 0, 0], sizes = [1, 1, 16, 16], strides = [1, 1, 1, 1]} : vector<5x5x16x16xbf16> to vector<1x1x16x16xbf16>
    %121 = vector.shape_cast %120 : vector<1x1x16x16xbf16> to vector<16x16xbf16>
    %cst_44 = arith.constant dense<0.000000e+00> : vector<160x16xf32>
    %122 = tpu.matmul %119, %121, %cst_44 {dimension_numbers = #tpu.dot_dimension_numbers<[1], [0], [0], [1], [0, 0, 1, 1], [], []>} : vector<160x16xbf16>, vector<16x16xbf16>, vector<160x16xf32> -> vector<160x16xf32>
    %123 = arith.addf %117, %122 : vector<160x16xf32>
    %124 = vector.extract_strided_slice %111 {offsets = [2, 0, 0], sizes = [10, 16, 16], strides = [1, 1, 1]} : vector<14x16x16xbf16> to vector<10x16x16xbf16>
    %125 = vector.shape_cast %124 : vector<10x16x16xbf16> to vector<160x16xbf16>
    %126 = vector.extract_strided_slice %3 {offsets = [2, 3, 0, 0], sizes = [1, 1, 16, 16], strides = [1, 1, 1, 1]} : vector<5x5x16x16xbf16> to vector<1x1x16x16xbf16>
    %127 = vector.shape_cast %126 : vector<1x1x16x16xbf16> to vector<16x16xbf16>
    %cst_45 = arith.constant dense<0.000000e+00> : vector<160x16xf32>
    %128 = tpu.matmul %125, %127, %cst_45 {dimension_numbers = #tpu.dot_dimension_numbers<[1], [0], [0], [1], [0, 0, 1, 1], [], []>} : vector<160x16xbf16>, vector<16x16xbf16>, vector<160x16xf32> -> vector<160x16xf32>
    %129 = arith.addf %123, %128 : vector<160x16xf32>
    %130 = vector.extract_strided_slice %111 {offsets = [3, 0, 0], sizes = [10, 16, 16], strides = [1, 1, 1]} : vector<14x16x16xbf16> to vector<10x16x16xbf16>
    %131 = vector.shape_cast %130 : vector<10x16x16xbf16> to vector<160x16xbf16>
    %132 = vector.extract_strided_slice %3 {offsets = [3, 3, 0, 0], sizes = [1, 1, 16, 16], strides = [1, 1, 1, 1]} : vector<5x5x16x16xbf16> to vector<1x1x16x16xbf16>
    %133 = vector.shape_cast %132 : vector<1x1x16x16xbf16> to vector<16x16xbf16>
    %cst_46 = arith.constant dense<0.000000e+00> : vector<160x16xf32>
    %134 = tpu.matmul %131, %133, %cst_46 {dimension_numbers = #tpu.dot_dimension_numbers<[1], [0], [0], [1], [0, 0, 1, 1], [], []>} : vector<160x16xbf16>, vector<16x16xbf16>, vector<160x16xf32> -> vector<160x16xf32>
    %135 = arith.addf %129, %134 : vector<160x16xf32>
    %136 = vector.extract_strided_slice %111 {offsets = [4, 0, 0], sizes = [10, 16, 16], strides = [1, 1, 1]} : vector<14x16x16xbf16> to vector<10x16x16xbf16>
    %137 = vector.shape_cast %136 : vector<10x16x16xbf16> to vector<160x16xbf16>
    %138 = vector.extract_strided_slice %3 {offsets = [4, 3, 0, 0], sizes = [1, 1, 16, 16], strides = [1, 1, 1, 1]} : vector<5x5x16x16xbf16> to vector<1x1x16x16xbf16>
    %139 = vector.shape_cast %138 : vector<1x1x16x16xbf16> to vector<16x16xbf16>
    %cst_47 = arith.constant dense<0.000000e+00> : vector<160x16xf32>
    %140 = tpu.matmul %137, %139, %cst_47 {dimension_numbers = #tpu.dot_dimension_numbers<[1], [0], [0], [1], [0, 0, 1, 1], [], []>} : vector<160x16xbf16>, vector<16x16xbf16>, vector<160x16xf32> -> vector<160x16xf32>
    %141 = arith.addf %135, %140 : vector<160x16xf32>
    %c0_48 = arith.constant 0 : index
    %c8 = arith.constant 8 : index
    %c0_49 = arith.constant 0 : index
    %142 = tpu.strided_load %arg7[%c0_48, %c8, %c0_49] {strides = array<i32: 1, 2, 1>} : memref<14x40x16xf32, #tpu.memory_space<vmem>>, vector<14x16x16xf32>
    %c0_50 = arith.constant 0 : index
    %c9 = arith.constant 9 : index
    %c0_51 = arith.constant 0 : index
    %143 = tpu.strided_load %arg7[%c0_50, %c9, %c0_51] {strides = array<i32: 1, 2, 1>} : memref<14x40x16xf32, #tpu.memory_space<vmem>>, vector<14x16x16xf32>
    %144 = arith.maximumf %142, %143 : vector<14x16x16xf32>
    %145 = arith.truncf %144 : vector<14x16x16xf32> to vector<14x16x16xbf16>
    %146 = vector.extract_strided_slice %145 {offsets = [0, 0, 0], sizes = [10, 16, 16], strides = [1, 1, 1]} : vector<14x16x16xbf16> to vector<10x16x16xbf16>
    %147 = vector.shape_cast %146 : vector<10x16x16xbf16> to vector<160x16xbf16>
    %148 = vector.extract_strided_slice %3 {offsets = [0, 4, 0, 0], sizes = [1, 1, 16, 16], strides = [1, 1, 1, 1]} : vector<5x5x16x16xbf16> to vector<1x1x16x16xbf16>
    %149 = vector.shape_cast %148 : vector<1x1x16x16xbf16> to vector<16x16xbf16>
    %cst_52 = arith.constant dense<0.000000e+00> : vector<160x16xf32>
    %150 = tpu.matmul %147, %149, %cst_52 {dimension_numbers = #tpu.dot_dimension_numbers<[1], [0], [0], [1], [0, 0, 1, 1], [], []>} : vector<160x16xbf16>, vector<16x16xbf16>, vector<160x16xf32> -> vector<160x16xf32>
    %151 = arith.addf %141, %150 : vector<160x16xf32>
    %152 = vector.extract_strided_slice %145 {offsets = [1, 0, 0], sizes = [10, 16, 16], strides = [1, 1, 1]} : vector<14x16x16xbf16> to vector<10x16x16xbf16>
    %153 = vector.shape_cast %152 : vector<10x16x16xbf16> to vector<160x16xbf16>
    %154 = vector.extract_strided_slice %3 {offsets = [1, 4, 0, 0], sizes = [1, 1, 16, 16], strides = [1, 1, 1, 1]} : vector<5x5x16x16xbf16> to vector<1x1x16x16xbf16>
    %155 = vector.shape_cast %154 : vector<1x1x16x16xbf16> to vector<16x16xbf16>
    %cst_53 = arith.constant dense<0.000000e+00> : vector<160x16xf32>
    %156 = tpu.matmul %153, %155, %cst_53 {dimension_numbers = #tpu.dot_dimension_numbers<[1], [0], [0], [1], [0, 0, 1, 1], [], []>} : vector<160x16xbf16>, vector<16x16xbf16>, vector<160x16xf32> -> vector<160x16xf32>
    %157 = arith.addf %151, %156 : vector<160x16xf32>
    %158 = vector.extract_strided_slice %145 {offsets = [2, 0, 0], sizes = [10, 16, 16], strides = [1, 1, 1]} : vector<14x16x16xbf16> to vector<10x16x16xbf16>
    %159 = vector.shape_cast %158 : vector<10x16x16xbf16> to vector<160x16xbf16>
    %160 = vector.extract_strided_slice %3 {offsets = [2, 4, 0, 0], sizes = [1, 1, 16, 16], strides = [1, 1, 1, 1]} : vector<5x5x16x16xbf16> to vector<1x1x16x16xbf16>
    %161 = vector.shape_cast %160 : vector<1x1x16x16xbf16> to vector<16x16xbf16>
    %cst_54 = arith.constant dense<0.000000e+00> : vector<160x16xf32>
    %162 = tpu.matmul %159, %161, %cst_54 {dimension_numbers = #tpu.dot_dimension_numbers<[1], [0], [0], [1], [0, 0, 1, 1], [], []>} : vector<160x16xbf16>, vector<16x16xbf16>, vector<160x16xf32> -> vector<160x16xf32>
    %163 = arith.addf %157, %162 : vector<160x16xf32>
    %164 = vector.extract_strided_slice %145 {offsets = [3, 0, 0], sizes = [10, 16, 16], strides = [1, 1, 1]} : vector<14x16x16xbf16> to vector<10x16x16xbf16>
    %165 = vector.shape_cast %164 : vector<10x16x16xbf16> to vector<160x16xbf16>
    %166 = vector.extract_strided_slice %3 {offsets = [3, 4, 0, 0], sizes = [1, 1, 16, 16], strides = [1, 1, 1, 1]} : vector<5x5x16x16xbf16> to vector<1x1x16x16xbf16>
    %167 = vector.shape_cast %166 : vector<1x1x16x16xbf16> to vector<16x16xbf16>
    %cst_55 = arith.constant dense<0.000000e+00> : vector<160x16xf32>
    %168 = tpu.matmul %165, %167, %cst_55 {dimension_numbers = #tpu.dot_dimension_numbers<[1], [0], [0], [1], [0, 0, 1, 1], [], []>} : vector<160x16xbf16>, vector<16x16xbf16>, vector<160x16xf32> -> vector<160x16xf32>
    %169 = arith.addf %163, %168 : vector<160x16xf32>
    %170 = vector.extract_strided_slice %145 {offsets = [4, 0, 0], sizes = [10, 16, 16], strides = [1, 1, 1]} : vector<14x16x16xbf16> to vector<10x16x16xbf16>
    %171 = vector.shape_cast %170 : vector<10x16x16xbf16> to vector<160x16xbf16>
    %172 = vector.extract_strided_slice %3 {offsets = [4, 4, 0, 0], sizes = [1, 1, 16, 16], strides = [1, 1, 1, 1]} : vector<5x5x16x16xbf16> to vector<1x1x16x16xbf16>
    %173 = vector.shape_cast %172 : vector<1x1x16x16xbf16> to vector<16x16xbf16>
    %cst_56 = arith.constant dense<0.000000e+00> : vector<160x16xf32>
    %174 = tpu.matmul %171, %173, %cst_56 {dimension_numbers = #tpu.dot_dimension_numbers<[1], [0], [0], [1], [0, 0, 1, 1], [], []>} : vector<160x16xbf16>, vector<16x16xbf16>, vector<160x16xf32> -> vector<160x16xf32>
    %175 = arith.addf %169, %174 : vector<160x16xf32>
    %176 = vector.broadcast %4 : vector<1x16xf32> to vector<160x16xf32>
    %177 = arith.addf %175, %176 : vector<160x16xf32>
    %cst_57 = arith.constant 0.000000e+00 : f32
    %178 = vector.broadcast %cst_57 : f32 to vector<160x16xf32>
    %179 = arith.maximumf %177, %178 : vector<160x16xf32>
    %180 = vector.shape_cast %179 : vector<160x16xf32> to vector<5x2x16x16xf32>
    %181 = vector.extract_strided_slice %180 {offsets = [0, 0, 0, 0], sizes = [5, 1, 16, 16], strides = [1, 1, 1, 1]} : vector<5x2x16x16xf32> to vector<5x1x16x16xf32>
    %182 = vector.shape_cast %181 : vector<5x1x16x16xf32> to vector<5x16x16xf32>
    %183 = vector.extract_strided_slice %180 {offsets = [0, 1, 0, 0], sizes = [5, 1, 16, 16], strides = [1, 1, 1, 1]} : vector<5x2x16x16xf32> to vector<5x1x16x16xf32>
    %184 = vector.shape_cast %183 : vector<5x1x16x16xf32> to vector<5x16x16xf32>
    %185 = arith.maximumf %182, %184 : vector<5x16x16xf32>
    %c0_58 = arith.constant 0 : index
    %c0_59 = arith.constant 0 : index
    %c0_60 = arith.constant 0 : index
    %186 = vector.load %arg8[%c0_58, %c0_59, %c0_60] : memref<5x16x16xf32, #tpu.memory_space<vmem>>, vector<5x16x16xf32>
    tpu.vector_store %arg8[%c0_58, %c0_59, %c0_60], %185 {strides = array<i32>} : memref<5x16x16xf32, #tpu.memory_space<vmem>>, vector<5x16x16xf32>,
    %c0_61 = arith.constant 0 : index
    %c0_62 = arith.constant 0 : index
    %c0_63 = arith.constant 0 : index
    %187 = tpu.strided_load %arg8[%c0_61, %c0_62, %c0_63] {strides = array<i32: 1, 2, 1>} : memref<5x16x16xf32, #tpu.memory_space<vmem>>, vector<5x5x16xf32>
    %c0_64 = arith.constant 0 : index
    %c1_65 = arith.constant 1 : index
    %c0_66 = arith.constant 0 : index
    %188 = tpu.strided_load %arg8[%c0_64, %c1_65, %c0_66] {strides = array<i32: 1, 2, 1>} : memref<5x16x16xf32, #tpu.memory_space<vmem>>, vector<5x5x16xf32>
    %189 = arith.maximumf %187, %188 : vector<5x5x16xf32>
    %cst_67 = arith.constant 0.000000e+00 : f32
    %190 = vector.broadcast %cst_67 : f32 to vector<5x3x16xf32>
    %191 = tpu.concatenate %189, %190 in 1 : vector<5x5x16xf32>, vector<5x3x16xf32> -> vector<5x8x16xf32>
    %192 = vector.shape_cast %191 : vector<5x8x16xf32> to vector<40x16xf32>
    %193 = arith.truncf %192 : vector<40x16xf32> to vector<40x16xbf16>
    %c0_68 = arith.constant 0 : index
    %c0_69 = arith.constant 0 : index
    %c0_70 = arith.constant 0 : index
    %194 = vector.load %arg6[%c0_68, %c0_69, %c0_70] : memref<1x40x16xbf16, #tpu.memory_space<vmem>>, vector<1x40x16xbf16>
    %195 = vector.shape_cast %194 : vector<1x40x16xbf16> to vector<40x16xbf16>
    %196 = vector.shape_cast %193 : vector<40x16xbf16> to vector<1x40x16xbf16>
    tpu.vector_store %arg6[%c0_68, %c0_69, %c0_70], %196 {strides = array<i32>} : memref<1x40x16xbf16, #tpu.memory_space<vmem>>, vector<1x40x16xbf16>,
    return
  }
  func.func @transform_0(%arg0: i32) -> (i32, i32, i32) {
    %c0_i32 = arith.constant 0 : i32
    %c0_i32_0 = arith.constant 0 : i32
    %c0_i32_1 = arith.constant 0 : i32
    return %arg0, %c0_i32, %c0_i32_0 : i32, i32, i32
  }
  func.func @transform_1(%arg0: i32) -> (i32, i32, i32) {
    %c0_i32 = arith.constant 0 : i32
    %c0_i32_0 = arith.constant 0 : i32
    %c0_i32_1 = arith.constant 0 : i32
    %c0_i32_2 = arith.constant 0 : i32
    return %c0_i32, %c0_i32_0, %c0_i32_1 : i32, i32, i32
  }
  func.func @transform_2(%arg0: i32) -> (i32, i32) {
    %c0_i32 = arith.constant 0 : i32
    %c0_i32_0 = arith.constant 0 : i32
    %c0_i32_1 = arith.constant 0 : i32
    return %c0_i32, %c0_i32_0 : i32, i32
  }
  func.func @transform_3(%arg0: i32) -> (i32, i32, i32, i32) {
    %c0_i32 = arith.constant 0 : i32
    %c0_i32_0 = arith.constant 0 : i32
    %c0_i32_1 = arith.constant 0 : i32
    %c0_i32_2 = arith.constant 0 : i32
    %c0_i32_3 = arith.constant 0 : i32
    return %c0_i32, %c0_i32_0, %c0_i32_1, %c0_i32_2 : i32, i32, i32, i32
  }
  func.func @transform_4(%arg0: i32) -> (i32, i32) {
    %c0_i32 = arith.constant 0 : i32
    %c0_i32_0 = arith.constant 0 : i32
    %c0_i32_1 = arith.constant 0 : i32
    return %c0_i32, %c0_i32_0 : i32, i32
  }
  func.func @transform_5(%arg0: i32) -> (i32, i32, i32) {
    %c0_i32 = arith.constant 0 : i32
    %c0_i32_0 = arith.constant 0 : i32
    %c0_i32_1 = arith.constant 0 : i32
    return %arg0, %c0_i32, %c0_i32_0 : i32, i32, i32
  }
}

module attributes {stable_mosaic.version = 11 : i64} {
  func.func @_fc_stack_kernel(%arg0: i32, %arg1: memref<2x640xbf16, #tpu.memory_space<vmem>>, %arg2: memref<640x128xbf16, #tpu.memory_space<vmem>>, %arg3: memref<1x128xf32, #tpu.memory_space<vmem>>, %arg4: memref<128x128xbf16, #tpu.memory_space<vmem>>, %arg5: memref<1x128xf32, #tpu.memory_space<vmem>>, %arg6: memref<128x128xbf16, #tpu.memory_space<vmem>>, %arg7: memref<1x128xf32, #tpu.memory_space<vmem>>, %arg8: memref<2x128xf32, #tpu.memory_space<vmem>>) attributes {dimension_semantics = [#tpu.dimension_semantics<parallel>], iteration_bounds = array<i64: 1>, scalar_prefetch = 0 : i64, scratch_operands = 0 : i64, tpu.core_type = #tpu.core_type<tc>, window_params = [{transform_indices = @transform_0, window_bounds = array<i64: 2, 640>}, {pipeline_mode = #tpu.pipeline_mode<synchronous>, transform_indices = @transform_1, window_bounds = array<i64: 640, 128>}, {pipeline_mode = #tpu.pipeline_mode<synchronous>, transform_indices = @transform_2, window_bounds = array<i64: 1, 128>}, {pipeline_mode = #tpu.pipeline_mode<synchronous>, transform_indices = @transform_3, window_bounds = array<i64: 128, 128>}, {pipeline_mode = #tpu.pipeline_mode<synchronous>, transform_indices = @transform_4, window_bounds = array<i64: 1, 128>}, {pipeline_mode = #tpu.pipeline_mode<synchronous>, transform_indices = @transform_5, window_bounds = array<i64: 128, 128>}, {pipeline_mode = #tpu.pipeline_mode<synchronous>, transform_indices = @transform_6, window_bounds = array<i64: 1, 128>}, {transform_indices = @transform_7, window_bounds = array<i64: 2, 128>}]} {
    %c0 = arith.constant 0 : index
    %c0_0 = arith.constant 0 : index
    %0 = vector.load %arg1[%c0, %c0_0] : memref<2x640xbf16, #tpu.memory_space<vmem>>, vector<2x640xbf16>
    %c0_1 = arith.constant 0 : index
    %c0_2 = arith.constant 0 : index
    %1 = vector.load %arg2[%c0_1, %c0_2] : memref<640x128xbf16, #tpu.memory_space<vmem>>, vector<640x128xbf16>
    %cst = arith.constant dense<0.000000e+00> : vector<2x128xf32>
    %2 = tpu.matmul %0, %1, %cst {dimension_numbers = #tpu.dot_dimension_numbers<[1], [0], [0], [1], [0, 0, 1, 1], [], []>} : vector<2x640xbf16>, vector<640x128xbf16>, vector<2x128xf32> -> vector<2x128xf32>
    %c0_3 = arith.constant 0 : index
    %c0_4 = arith.constant 0 : index
    %3 = vector.load %arg3[%c0_3, %c0_4] : memref<1x128xf32, #tpu.memory_space<vmem>>, vector<1x128xf32>
    %4 = vector.broadcast %3 : vector<1x128xf32> to vector<2x128xf32>
    %5 = arith.addf %2, %4 : vector<2x128xf32>
    %cst_5 = arith.constant 0.000000e+00 : f32
    %6 = vector.broadcast %cst_5 : f32 to vector<2x128xf32>
    %7 = arith.maximumf %5, %6 : vector<2x128xf32>
    %8 = arith.truncf %7 : vector<2x128xf32> to vector<2x128xbf16>
    %c0_6 = arith.constant 0 : index
    %c0_7 = arith.constant 0 : index
    %9 = vector.load %arg4[%c0_6, %c0_7] : memref<128x128xbf16, #tpu.memory_space<vmem>>, vector<128x128xbf16>
    %cst_8 = arith.constant dense<0.000000e+00> : vector<2x128xf32>
    %10 = tpu.matmul %8, %9, %cst_8 {dimension_numbers = #tpu.dot_dimension_numbers<[1], [0], [0], [1], [0, 0, 1, 1], [], []>} : vector<2x128xbf16>, vector<128x128xbf16>, vector<2x128xf32> -> vector<2x128xf32>
    %c0_9 = arith.constant 0 : index
    %c0_10 = arith.constant 0 : index
    %11 = vector.load %arg5[%c0_9, %c0_10] : memref<1x128xf32, #tpu.memory_space<vmem>>, vector<1x128xf32>
    %12 = vector.broadcast %11 : vector<1x128xf32> to vector<2x128xf32>
    %13 = arith.addf %10, %12 : vector<2x128xf32>
    %cst_11 = arith.constant 0.000000e+00 : f32
    %14 = vector.broadcast %cst_11 : f32 to vector<2x128xf32>
    %15 = arith.maximumf %13, %14 : vector<2x128xf32>
    %16 = arith.truncf %15 : vector<2x128xf32> to vector<2x128xbf16>
    %c0_12 = arith.constant 0 : index
    %c0_13 = arith.constant 0 : index
    %17 = vector.load %arg6[%c0_12, %c0_13] : memref<128x128xbf16, #tpu.memory_space<vmem>>, vector<128x128xbf16>
    %cst_14 = arith.constant dense<0.000000e+00> : vector<2x128xf32>
    %18 = tpu.matmul %16, %17, %cst_14 {dimension_numbers = #tpu.dot_dimension_numbers<[1], [0], [0], [1], [0, 0, 1, 1], [], []>} : vector<2x128xbf16>, vector<128x128xbf16>, vector<2x128xf32> -> vector<2x128xf32>
    %c0_15 = arith.constant 0 : index
    %c0_16 = arith.constant 0 : index
    %19 = vector.load %arg7[%c0_15, %c0_16] : memref<1x128xf32, #tpu.memory_space<vmem>>, vector<1x128xf32>
    %20 = vector.broadcast %19 : vector<1x128xf32> to vector<2x128xf32>
    %21 = arith.addf %18, %20 : vector<2x128xf32>
    %c0_17 = arith.constant 0 : index
    %c0_18 = arith.constant 0 : index
    %22 = vector.load %arg8[%c0_17, %c0_18] : memref<2x128xf32, #tpu.memory_space<vmem>>, vector<2x128xf32>
    tpu.vector_store %arg8[%c0_17, %c0_18], %21 {strides = array<i32>} : memref<2x128xf32, #tpu.memory_space<vmem>>, vector<2x128xf32>,
    return
  }
  func.func @transform_0(%arg0: i32) -> (i32, i32) {
    %c0_i32 = arith.constant 0 : i32
    %c0_i32_0 = arith.constant 0 : i32
    return %arg0, %c0_i32 : i32, i32
  }
  func.func @transform_1(%arg0: i32) -> (i32, i32) {
    %c0_i32 = arith.constant 0 : i32
    %c0_i32_0 = arith.constant 0 : i32
    %c0_i32_1 = arith.constant 0 : i32
    return %c0_i32, %c0_i32_0 : i32, i32
  }
  func.func @transform_2(%arg0: i32) -> (i32, i32) {
    %c0_i32 = arith.constant 0 : i32
    %c0_i32_0 = arith.constant 0 : i32
    %c0_i32_1 = arith.constant 0 : i32
    return %c0_i32, %c0_i32_0 : i32, i32
  }
  func.func @transform_3(%arg0: i32) -> (i32, i32) {
    %c0_i32 = arith.constant 0 : i32
    %c0_i32_0 = arith.constant 0 : i32
    %c0_i32_1 = arith.constant 0 : i32
    return %c0_i32, %c0_i32_0 : i32, i32
  }
  func.func @transform_4(%arg0: i32) -> (i32, i32) {
    %c0_i32 = arith.constant 0 : i32
    %c0_i32_0 = arith.constant 0 : i32
    %c0_i32_1 = arith.constant 0 : i32
    return %c0_i32, %c0_i32_0 : i32, i32
  }
  func.func @transform_5(%arg0: i32) -> (i32, i32) {
    %c0_i32 = arith.constant 0 : i32
    %c0_i32_0 = arith.constant 0 : i32
    %c0_i32_1 = arith.constant 0 : i32
    return %c0_i32, %c0_i32_0 : i32, i32
  }
  func.func @transform_6(%arg0: i32) -> (i32, i32) {
    %c0_i32 = arith.constant 0 : i32
    %c0_i32_0 = arith.constant 0 : i32
    %c0_i32_1 = arith.constant 0 : i32
    return %c0_i32, %c0_i32_0 : i32, i32
  }
  func.func @transform_7(%arg0: i32) -> (i32, i32) {
    %c0_i32 = arith.constant 0 : i32
    %c0_i32_0 = arith.constant 0 : i32
    return %arg0, %c0_i32 : i32, i32
  }
}

</mosaic_0001>

<llo_original>
// kernel: convnet_forward.3
$region0: #{convnet_forward.3}
  #allocation0 [shape = 'u32[]', space=smem, size = 0x4, offset = 0x4, fixed_abs, tag = 'smem constant byte address 0x4 - core index']
  #allocation1 [shape = 'u32[144,128]{1,0:T(1,128)}', space=vmem, size = 0x12000, scoped, tag = 'internal scratch']
  %s0 = inlined_call_operand.vmem [shape: bf16[2,640], index: 0, kind: input, shape index: {}]
  %s1 = inlined_call_operand.vmem [shape: bf16[640,128], index: 1, kind: input, shape index: {}]
  %s2 = inlined_call_operand.vmem [shape: f32[1,128], index: 2, kind: input, shape index: {}]
  %s3 = inlined_call_operand.vmem [shape: bf16[128,128], index: 3, kind: input, shape index: {}]
  %s4 = inlined_call_operand.vmem [shape: f32[1,128], index: 4, kind: input, shape index: {}]
  %s5 = inlined_call_operand.vmem [shape: bf16[128,128], index: 5, kind: input, shape index: {}]
  %s6 = inlined_call_operand.vmem [shape: f32[1,128], index: 6, kind: input, shape index: {}]
  %s7 = inlined_call_operand.hbm [shape: f32[2,128], index: 7, kind: output, shape index: {}]
  %s8 = sld [smem:[#allocation0]]
  $region38: #{convnet_forward.3} parent=0
    _
  %s10 = ssub.s32 1, %s8
  %s11 = scalar_select 0, %s10, %s8
  $region1: #{convnet_forward.3} parent=0
    #allocation2 [shape = 'u8[1024]{0}', space=vmem, size = 0x400, scoped, tag = 'output window, operand 0, single buffered']
    #allocation3 [shape = 's32[1]{0}', space=sflag, size = 0x4, scoped, tag = 'scoped memory for convnet_forward.3']
    %12 = vsyncpa [#allocation3], 0
    // Predicated region
    $region2: #{convnet_forward.3} parent=1 // pred_check
      _
    $region3: #{convnet_forward.3} parent=1 // pred_check_branch
      %14 = sbr.rel (0) target = $region5
    $region4: #{convnet_forward.3} parent=1 // pred_region
      _
    $region5: #{convnet_forward.3} parent=1 // pred_fallthru
      _
    // Predicated region
    $region6: #{convnet_forward.3} parent=1 // pred_check
      _
    $region7: #{convnet_forward.3} parent=1 // pred_check_branch
      %16 = sbr.rel (0) target = $region9
    $region8: #{convnet_forward.3} parent=1 // pred_region
      _
    $region9: #{convnet_forward.3} parent=1 // pred_fallthru
      _
    // Predicated region
    $region10: #{convnet_forward.3} parent=1 // pred_check
      _
    $region11: #{convnet_forward.3} parent=1 // pred_check_branch
      %18 = sbr.rel (0) target = $region13
    $region12: #{convnet_forward.3} parent=1 // pred_region
      _
    $region13: #{convnet_forward.3} parent=1 // pred_fallthru
      _
    // Predicated region
    $region14: #{convnet_forward.3} parent=1 // pred_check
      _
    $region15: #{convnet_forward.3} parent=1 // pred_check_branch
      %20 = sbr.rel (0) target = $region17
    $region16: #{convnet_forward.3} parent=1 // pred_region
      _
    $region17: #{convnet_forward.3} parent=1 // pred_fallthru
      _
    // Predicated region
    $region18: #{convnet_forward.3} parent=1 // pred_check
      _
    $region19: #{convnet_forward.3} parent=1 // pred_check_branch
      %22 = sbr.rel (0) target = $region21
    $region20: #{convnet_forward.3} parent=1 // pred_region
      _
    $region21: #{convnet_forward.3} parent=1 // pred_fallthru
      _
    // Predicated region
    $region22: #{convnet_forward.3} parent=1 // pred_check
      _
    $region23: #{convnet_forward.3} parent=1 // pred_check_branch
      %24 = sbr.rel (0) target = $region25
    $region24: #{convnet_forward.3} parent=1 // pred_region
      _
    $region25: #{convnet_forward.3} parent=1 // pred_fallthru
      _
    // Predicated region
    $region26: #{convnet_forward.3} parent=1 // pred_check
      _
    $region27: #{convnet_forward.3} parent=1 // pred_check_branch
      %26 = sbr.rel (0) target = $region29
    $region28: #{convnet_forward.3} parent=1 // pred_region
      _
    $region29: #{convnet_forward.3} parent=1 // pred_fallthru
      _
    %v28 = vld [vmem:[%s0] sm:$0x1f]
    %v29 = vld [vmem:[%s1] sm:$0xf]
    %v30 = vld [vmem:[%s1 + $0x4] sm:$0xf]
    %v31 = vld [vmem:[%s1 + $0x8] sm:$0xf]
    %v32 = vld [vmem:[%s1 + $0xc] sm:$0xf]
    %v33 = vld [vmem:[%s1 + $0x10] sm:$0xf]
    %v34 = vld [vmem:[%s1 + $0x14] sm:$0xf]
    %v35 = vld [vmem:[%s1 + $0x18] sm:$0xf]
    %v36 = vld [vmem:[%s1 + $0x1c] sm:$0xf]
    %v37 = vld [vmem:[%s1 + $0x20] sm:$0xf]
    %v38 = vld [vmem:[%s1 + $0x24] sm:$0xf]
    %v39 = vld [vmem:[%s1 + $0x28] sm:$0xf]
    %v40 = vld [vmem:[%s1 + $0x2c] sm:$0xf]
    %v41 = vld [vmem:[%s1 + $0x30] sm:$0xf]
    %v42 = vld [vmem:[%s1 + $0x34] sm:$0xf]
    %v43 = vld [vmem:[%s1 + $0x38] sm:$0xf]
    %v44 = vld [vmem:[%s1 + $0x3c] sm:$0xf]
    %v45 = vld [vmem:[%s1 + $0x40] sm:$0xf]
    %v46 = vld [vmem:[%s1 + $0x44] sm:$0xf]
    %v47 = vld [vmem:[%s1 + $0x48] sm:$0xf]
    %v48 = vld [vmem:[%s1 + $0x4c] sm:$0xf]
    %v49 = vld [vmem:[%s1 + $0x50] sm:$0xf]
    %v50 = vld [vmem:[%s1 + $0x54] sm:$0xf]
    %v51 = vld [vmem:[%s1 + $0x58] sm:$0xf]
    %v52 = vld [vmem:[%s1 + $0x5c] sm:$0xf]
    %v53 = vld [vmem:[%s1 + $0x60] sm:$0xf]
    %v54 = vld [vmem:[%s1 + $0x64] sm:$0xf]
    %v55 = vld [vmem:[%s1 + $0x68] sm:$0xf]
    %v56 = vld [vmem:[%s1 + $0x6c] sm:$0xf]
    %v57 = vld [vmem:[%s1 + $0x70] sm:$0xf]
    %v58 = vld [vmem:[%s1 + $0x74] sm:$0xf]
    %v59 = vld [vmem:[%s1 + $0x78] sm:$0xf]
    %v60 = vld [vmem:[%s1 + $0x7c] sm:$0xf]
    %v61 = vld [vmem:[%s1 + $0x80] sm:$0xf]
    %v62 = vld [vmem:[%s1 + $0x84] sm:$0xf]
    %v63 = vld [vmem:[%s1 + $0x88] sm:$0xf]
    %v64 = vld [vmem:[%s1 + $0x8c] sm:$0xf]
    %v65 = vld [vmem:[%s1 + $0x90] sm:$0xf]
    %v66 = vld [vmem:[%s1 + $0x94] sm:$0xf]
    %v67 = vld [vmem:[%s1 + $0x98] sm:$0xf]
    %v68 = vld [vmem:[%s1 + $0x9c] sm:$0xf]
    %v69 = vld [vmem:[%s1 + $0xa0] sm:$0xf]
    %v70 = vld [vmem:[%s1 + $0xa4] sm:$0xf]
    %v71 = vld [vmem:[%s1 + $0xa8] sm:$0xf]
    %v72 = vld [vmem:[%s1 + $0xac] sm:$0xf]
    %v73 = vld [vmem:[%s1 + $0xb0] sm:$0xf]
    %v74 = vld [vmem:[%s1 + $0xb4] sm:$0xf]
    %v75 = vld [vmem:[%s1 + $0xb8] sm:$0xf]
    %v76 = vld [vmem:[%s1 + $0xbc] sm:$0xf]
    %v77 = vld [vmem:[%s1 + $0xc0] sm:$0xf]
    %v78 = vld [vmem:[%s1 + $0xc4] sm:$0xf]
    %v79 = vld [vmem:[%s1 + $0xc8] sm:$0xf]
    %v80 = vld [vmem:[%s1 + $0xcc] sm:$0xf]
    %v81 = vld [vmem:[%s1 + $0xd0] sm:$0xf]
    %v82 = vld [vmem:[%s1 + $0xd4] sm:$0xf]
    %v83 = vld [vmem:[%s1 + $0xd8] sm:$0xf]
    %v84 = vld [vmem:[%s1 + $0xdc] sm:$0xf]
    %v85 = vld [vmem:[%s1 + $0xe0] sm:$0xf]
    %v86 = vld [vmem:[%s1 + $0xe4] sm:$0xf]
    %v87 = vld [vmem:[%s1 + $0xe8] sm:$0xf]
    %v88 = vld [vmem:[%s1 + $0xec] sm:$0xf]
    %v89 = vld [vmem:[%s1 + $0xf0] sm:$0xf]
    %v90 = vld [vmem:[%s1 + $0xf4] sm:$0xf]
    %v91 = vld [vmem:[%s1 + $0xf8] sm:$0xf]
    %v92 = vld [vmem:[%s1 + $0xfc] sm:$0xf]
    %v93 = vld [vmem:[%s1 + $0x100] sm:$0xf]
    %v94 = vld [vmem:[%s1 + $0x104] sm:$0xf]
    %v95 = vld [vmem:[%s1 + $0x108] sm:$0xf]
    %v96 = vld [vmem:[%s1 + $0x10c] sm:$0xf]
    %v97 = vld [vmem:[%s1 + $0x110] sm:$0xf]
    %v98 = vld [vmem:[%s1 + $0x114] sm:$0xf]
    %v99 = vld [vmem:[%s1 + $0x118] sm:$0xf]
    %v100 = vld [vmem:[%s1 + $0x11c] sm:$0xf]
    %v101 = vld [vmem:[%s1 + $0x120] sm:$0xf]
    %v102 = vld [vmem:[%s1 + $0x124] sm:$0xf]
    %v103 = vld [vmem:[%s1 + $0x128] sm:$0xf]
    %v104 = vld [vmem:[%s1 + $0x12c] sm:$0xf]
    %v105 = vld [vmem:[%s1 + $0x130] sm:$0xf]
    %v106 = vld [vmem:[%s1 + $0x134] sm:$0xf]
    %v107 = vld [vmem:[%s1 + $0x138] sm:$0xf]
    %v108 = vld [vmem:[%s1 + $0x13c] sm:$0xf]
    %v109 = vld [vmem:[%s2] sm:$0x1]
    %v111 = vlaneseq
    %v112 = vshrl.u32 %v111, 7
    %v113 = vsub.s32 0, %v112
    %v114 = vrot.slane %v109, %v113
    %v117 = vcombine.high %v28, %v28
    %v119 = vunpack.c.l.s4 1966171168
    %v120 = vunpack.c.0.s8 %v119
    %v121 = vlaneseq
    %v122 = vshrl.u32 %v121, 7
    %v123 = vsub.s32 %v120, %v122
    %v124 = vrot.slane %v28, %v123
    %v126 = vunpack.c.l.s4 1966171168
    %v127 = vunpack.c.0.s8 %v126
    %v128 = vlaneseq
    %v129 = vshrl.u32 %v128, 7
    %v130 = vsub.s32 %v127, %v129
    %v131 = vrot.slane %v117, %v130
    %v132 = vcombine.high %v124, %v124
    %v134 = vunpack.c.l.s4 1966171168
    %v135 = vunpack.c.0.s8 %v134
    %v136 = vlaneseq
    %v137 = vshrl.u32 %v136, 7
    %v138 = vsub.s32 %v135, %v137
    %v139 = vrot.slane %v124, %v138
    %v141 = vunpack.c.l.s4 1966171168
    %v142 = vunpack.c.0.s8 %v141
    %v143 = vlaneseq
    %v144 = vshrl.u32 %v143, 7
    %v145 = vsub.s32 %v142, %v144
    %v146 = vrot.slane %v131, %v145
    %v148 = vunpack.c.l.s4 1966171168
    %v149 = vunpack.c.0.s8 %v148
    %v150 = vlaneseq
    %v151 = vshrl.u32 %v150, 7
    %v152 = vsub.s32 %v149, %v151
    %v153 = vrot.slane %v132, %v152
    %v154 = vcombine.high %v139, %v139
    %v155 = vcombine.high %v153, %v153
    %v241 = vunpack.c.l.b16 %v29
    %v242 = vunpack.c.l.b16 %v30
    %v243 = vunpack.c.l.b16 %v31
    %v244 = vunpack.c.l.b16 %v32
    %v245 = vunpack.c.l.b16 %v33
    %v246 = vunpack.c.l.b16 %v34
    %v247 = vunpack.c.l.b16 %v35
    %v248 = vunpack.c.l.b16 %v36
    %v249 = vunpack.c.l.b16 %v37
    %v250 = vunpack.c.l.b16 %v38
    %v251 = vunpack.c.l.b16 %v39
    %v252 = vunpack.c.l.b16 %v40
    %v253 = vunpack.c.l.b16 %v41
    %v254 = vunpack.c.l.b16 %v42
    %v255 = vunpack.c.l.b16 %v43
    %v256 = vunpack.c.l.b16 %v44
    %v257 = vunpack.c.l.b16 %v45
    %v258 = vunpack.c.l.b16 %v46
    %v259 = vunpack.c.l.b16 %v47
    %v260 = vunpack.c.l.b16 %v48
    %v261 = vunpack.c.l.b16 %v49
    %v262 = vunpack.c.l.b16 %v50
    %v263 = vunpack.c.l.b16 %v51
    %v264 = vunpack.c.l.b16 %v52
    %v265 = vunpack.c.l.b16 %v53
    %v266 = vunpack.c.l.b16 %v54
    %v267 = vunpack.c.l.b16 %v55
    %v268 = vunpack.c.l.b16 %v56
    %v269 = vunpack.c.l.b16 %v57
    %v270 = vunpack.c.l.b16 %v58
    %v271 = vunpack.c.l.b16 %v59
    %v272 = vunpack.c.l.b16 %v60
    %v273 = vunpack.c.l.b16 %v61
    %v274 = vunpack.c.l.b16 %v62
    %v275 = vunpack.c.l.b16 %v63
    %v276 = vunpack.c.l.b16 %v64
    %v277 = vunpack.c.l.b16 %v65
    %v278 = vunpack.c.l.b16 %v66
    %v279 = vunpack.c.l.b16 %v67
    %v280 = vunpack.c.l.b16 %v68
    %v281 = vunpack.c.l.b16 %v69
    %v282 = vunpack.c.l.b16 %v70
    %v283 = vunpack.c.l.b16 %v71
    %v284 = vunpack.c.l.b16 %v72
    %v285 = vunpack.c.l.b16 %v73
    %v286 = vunpack.c.l.b16 %v74
    %v287 = vunpack.c.l.b16 %v75
    %v288 = vunpack.c.l.b16 %v76
    %v289 = vunpack.c.l.b16 %v77
    %v290 = vunpack.c.l.b16 %v78
    %v291 = vunpack.c.l.b16 %v79
    %v292 = vunpack.c.l.b16 %v80
    %v293 = vunpack.c.l.b16 %v81
    %v294 = vunpack.c.l.b16 %v82
    %v295 = vunpack.c.l.b16 %v83
    %v296 = vunpack.c.l.b16 %v84
    %v297 = vunpack.c.l.b16 %v85
    %v298 = vunpack.c.l.b16 %v86
    %v299 = vunpack.c.l.b16 %v87
    %v300 = vunpack.c.l.b16 %v88
    %v301 = vunpack.c.l.b16 %v89
    %v302 = vunpack.c.l.b16 %v90
    %v303 = vunpack.c.l.b16 %v91
    %v304 = vunpack.c.l.b16 %v92
    %v305 = vunpack.c.l.b16 %v93
    %v306 = vunpack.c.l.b16 %v94
    %v307 = vunpack.c.l.b16 %v95
    %v308 = vunpack.c.l.b16 %v96
    %v309 = vunpack.c.l.b16 %v97
    %v310 = vunpack.c.l.b16 %v98
    %v311 = vunpack.c.l.b16 %v99
    %v312 = vunpack.c.l.b16 %v100
    %v313 = vunpack.c.l.b16 %v101
    %v314 = vunpack.c.l.b16 %v102
    %v315 = vunpack.c.l.b16 %v103
    %v316 = vunpack.c.l.b16 %v104
    %v317 = vunpack.c.l.b16 %v105
    %v318 = vunpack.c.l.b16 %v106
    %v319 = vunpack.c.l.b16 %v107
    %v320 = vunpack.c.l.b16 %v108
    %v321 = vpack.c.b16 %v242, %v241
    %v322 = vpack.c.b16 %v244, %v243
    %v323 = vpack.c.b16 %v246, %v245
    %v324 = vpack.c.b16 %v248, %v247
    %v325 = vpack.c.b16 %v250, %v249
    %v326 = vpack.c.b16 %v252, %v251
    %v327 = vpack.c.b16 %v254, %v253
    %v328 = vpack.c.b16 %v256, %v255
    %v329 = vpack.c.b16 %v258, %v257
    %v330 = vpack.c.b16 %v260, %v259
    %v331 = vpack.c.b16 %v262, %v261
    %v332 = vpack.c.b16 %v264, %v263
    %v333 = vpack.c.b16 %v266, %v265
    %v334 = vpack.c.b16 %v268, %v267
    %v335 = vpack.c.b16 %v270, %v269
    %v336 = vpack.c.b16 %v272, %v271
    %v337 = vpack.c.b16 %v274, %v273
    %v338 = vpack.c.b16 %v276, %v275
    %v339 = vpack.c.b16 %v278, %v277
    %v340 = vpack.c.b16 %v280, %v279
    %v341 = vpack.c.b16 %v282, %v281
    %v342 = vpack.c.b16 %v284, %v283
    %v343 = vpack.c.b16 %v286, %v285
    %v344 = vpack.c.b16 %v288, %v287
    %v345 = vpack.c.b16 %v290, %v289
    %v346 = vpack.c.b16 %v292, %v291
    %v347 = vpack.c.b16 %v294, %v293
    %v348 = vpack.c.b16 %v296, %v295
    %v349 = vpack.c.b16 %v298, %v297
    %v350 = vpack.c.b16 %v300, %v299
    %v351 = vpack.c.b16 %v302, %v301
    %v352 = vpack.c.b16 %v304, %v303
    %v353 = vpack.c.b16 %v306, %v305
    %v354 = vpack.c.b16 %v308, %v307
    %v355 = vpack.c.b16 %v310, %v309
    %v356 = vpack.c.b16 %v312, %v311
    %v357 = vpack.c.b16 %v314, %v313
    %v358 = vpack.c.b16 %v316, %v315
    %v359 = vpack.c.b16 %v318, %v317
    %v360 = vpack.c.b16 %v320, %v319
    %401 = vmatprep.subr.bf16.mxu0 0
    %402 = vmatpush1.bf16.msra.mxu0 %v328
    %403 = vmatprep.subr.bf16.mxu0 0
    %404 = vmatpush1.bf16.msra.mxu0 %v327
    %405 = vmatprep.subr.bf16.mxu0 0
    %406 = vmatpush1.bf16.msra.mxu0 %v326
    %407 = vmatprep.subr.bf16.mxu0 0
    %408 = vmatpush1.bf16.msra.mxu0 %v325
    %409 = vmatprep.subr.bf16.mxu0 0
    %410 = vmatpush1.bf16.msra.mxu0 %v324
    %411 = vmatprep.subr.bf16.mxu0 0
    %412 = vmatpush1.bf16.msra.mxu0 %v323
    %413 = vmatprep.subr.bf16.mxu0 0
    %414 = vmatpush1.bf16.msra.mxu0 %v322
    %415 = vmatprep.subr.bf16.mxu0 0
    %416 = vmatpush1.bf16.msra.mxu0 %v321
    %417 = vmatprep.subr.bf16.mxu0 0
    %418 = vmatpush2.bf16.msra.mxu0 %v336
    %419 = vmatprep.subr.bf16.mxu0 0
    %420 = vmatpush2.bf16.msra.mxu0 %v335
    %421 = vmatprep.subr.bf16.mxu0 0
    %422 = vmatpush2.bf16.msra.mxu0 %v334
    %423 = vmatprep.subr.bf16.mxu0 0
    %424 = vmatpush2.bf16.msra.mxu0 %v333
    %425 = vmatprep.subr.bf16.mxu0 0
    %426 = vmatpush2.bf16.msra.mxu0 %v332
    %427 = vmatprep.subr.bf16.mxu0 0
    %428 = vmatpush2.bf16.msra.mxu0 %v331
    %429 = vmatprep.subr.bf16.mxu0 0
    %430 = vmatpush2.bf16.msra.mxu0 %v330
    %431 = vmatprep.subr.bf16.mxu0 0
    %432 = vmatpush2.bf16.msra.mxu0 %v329
    %433 = vmatprep.mubr.bf16.mxu0 %v153
    %434 = vmatmul.mubr.bf16.gmra.mxu0 %v139
    %v435 = vpop.f32.mrf.mxu0
    %v436 = vadd.f32 %v114, %v435
    %v437 = vpop.f32.mrf.mxu0
    %v438 = vpop.f32.mrf.mxu0
    %v439 = vpop.f32.mrf.mxu0
    %440 = vdwg.mxu0
    %441 = vmatprep.subr.bf16.mxu0 0
    %442 = vmatpush1.bf16.msra.mxu0 %v344
    %443 = vmatprep.subr.bf16.mxu0 0
    %444 = vmatpush1.bf16.msra.mxu0 %v343
    %445 = vmatprep.subr.bf16.mxu0 0
    %446 = vmatpush1.bf16.msra.mxu0 %v342
    %447 = vmatprep.subr.bf16.mxu0 0
    %448 = vmatpush1.bf16.msra.mxu0 %v341
    %449 = vmatprep.subr.bf16.mxu0 0
    %450 = vmatpush1.bf16.msra.mxu0 %v340
    %451 = vmatprep.subr.bf16.mxu0 0
    %452 = vmatpush1.bf16.msra.mxu0 %v339
    %453 = vmatprep.subr.bf16.mxu0 0
    %454 = vmatpush1.bf16.msra.mxu0 %v338
    %455 = vmatprep.subr.bf16.mxu0 0
    %456 = vmatpush1.bf16.msra.mxu0 %v337
    %457 = vmatprep.subr.bf16.mxu0 0
    %458 = vmatpush2.bf16.msra.mxu0 %v352
    %459 = vmatprep.subr.bf16.mxu0 0
    %460 = vmatpush2.bf16.msra.mxu0 %v351
    %461 = vmatprep.subr.bf16.mxu0 0
    %462 = vmatpush2.bf16.msra.mxu0 %v350
    %463 = vmatprep.subr.bf16.mxu0 0
    %464 = vmatpush2.bf16.msra.mxu0 %v349
    %465 = vmatprep.subr.bf16.mxu0 0
    %466 = vmatpush2.bf16.msra.mxu0 %v348
    %467 = vmatprep.subr.bf16.mxu0 0
    %468 = vmatpush2.bf16.msra.mxu0 %v347
    %469 = vmatprep.subr.bf16.mxu0 0
    %470 = vmatpush2.bf16.msra.mxu0 %v346
    %471 = vmatprep.subr.bf16.mxu0 0
    %472 = vmatpush2.bf16.msra.mxu0 %v345
    %473 = vmatprep.mubr.bf16.mxu0 %v155
    %474 = vmatmul.mubr.bf16.gmra.mxu0 %v154
    %v475 = vpop.f32.mrf.mxu0
    %v476 = vadd.f32 %v436, %v475
    %v477 = vpop.f32.mrf.mxu0
    %v478 = vpop.f32.mrf.mxu0
    %v479 = vpop.f32.mrf.mxu0
    %480 = vdwg.mxu0
    %481 = vmatprep.subr.bf16.mxu0 0
    %482 = vmatpush1.bf16.msra.mxu0 %v360
    %483 = vmatprep.subr.bf16.mxu0 0
    %484 = vmatpush1.bf16.msra.mxu0 %v359
    %485 = vmatprep.subr.bf16.mxu0 0
    %486 = vmatpush1.bf16.msra.mxu0 %v358
    %487 = vmatprep.subr.bf16.mxu0 0
    %488 = vmatpush1.bf16.msra.mxu0 %v357
    %489 = vmatprep.subr.bf16.mxu0 0
    %490 = vmatpush1.bf16.msra.mxu0 %v356
    %491 = vmatprep.subr.bf16.mxu0 0
    %492 = vmatpush1.bf16.msra.mxu0 %v355
    %493 = vmatprep.subr.bf16.mxu0 0
    %494 = vmatpush1.bf16.msra.mxu0 %v354
    %495 = vmatprep.subr.bf16.mxu0 0
    %496 = vmatpush1.bf16.msra.mxu0 %v353
    %497 = vmatprep.subr.bf16.mxu0 0
    %498 = vmatpush2.bf16.msra.mxu0 0
    %499 = vmatprep.subr.bf16.mxu0 0
    %500 = vmatpush2.bf16.msra.mxu0 0
    %501 = vmatprep.subr.bf16.mxu0 0
    %502 = vmatpush2.bf16.msra.mxu0 0
    %503 = vmatprep.subr.bf16.mxu0 0
    %504 = vmatpush2.bf16.msra.mxu0 0
    %505 = vmatprep.subr.bf16.mxu0 0
    %506 = vmatpush2.bf16.msra.mxu0 0
    %507 = vmatprep.subr.bf16.mxu0 0
    %508 = vmatpush2.bf16.msra.mxu0 0
    %509 = vmatprep.subr.bf16.mxu0 0
    %510 = vmatpush2.bf16.msra.mxu0 0
    %511 = vmatprep.subr.bf16.mxu0 0
    %512 = vmatpush2.bf16.msra.mxu0 0
    %513 = vmatprep.mubr.bf16.mxu0 0
    %514 = vmatmul.mubr.bf16.gmra.mxu0 %v146
    %v515 = vpop.f32.mrf.mxu0
    %v516 = vadd.f32 %v476, %v515
    %v517 = vpop.f32.mrf.mxu0
    %v518 = vpop.f32.mrf.mxu0
    %v519 = vpop.f32.mrf.mxu0
    %520 = vdwg.mxu0
    %v521 = vmax.f32 %v516, 0.0
    %v522 = vpack.c.bf16 %v521, %v521
    %v523 = vld [vmem:[%s3] sm:$0xf]
    %v524 = vld [vmem:[%s3 + $0x4] sm:$0xf]
    %v525 = vld [vmem:[%s3 + $0x8] sm:$0xf]
    %v526 = vld [vmem:[%s3 + $0xc] sm:$0xf]
    %v527 = vld [vmem:[%s3 + $0x10] sm:$0xf]
    %v528 = vld [vmem:[%s3 + $0x14] sm:$0xf]
    %v529 = vld [vmem:[%s3 + $0x18] sm:$0xf]
    %v530 = vld [vmem:[%s3 + $0x1c] sm:$0xf]
    %v531 = vld [vmem:[%s3 + $0x20] sm:$0xf]
    %v532 = vld [vmem:[%s3 + $0x24] sm:$0xf]
    %v533 = vld [vmem:[%s3 + $0x28] sm:$0xf]
    %v534 = vld [vmem:[%s3 + $0x2c] sm:$0xf]
    %v535 = vld [vmem:[%s3 + $0x30] sm:$0xf]
    %v536 = vld [vmem:[%s3 + $0x34] sm:$0xf]
    %v537 = vld [vmem:[%s3 + $0x38] sm:$0xf]
    %v538 = vld [vmem:[%s3 + $0x3c] sm:$0xf]
    %v539 = vld [vmem:[%s4] sm:$0x1]
    %v541 = vlaneseq
    %v542 = vshrl.u32 %v541, 7
    %v543 = vsub.s32 0, %v542
    %v544 = vrot.slane %v539, %v543
    %v562 = vunpack.c.l.b16 %v523
    %v563 = vunpack.c.l.b16 %v524
    %v564 = vunpack.c.l.b16 %v525
    %v565 = vunpack.c.l.b16 %v526
    %v566 = vunpack.c.l.b16 %v527
    %v567 = vunpack.c.l.b16 %v528
    %v568 = vunpack.c.l.b16 %v529
    %v569 = vunpack.c.l.b16 %v530
    %v570 = vunpack.c.l.b16 %v531
    %v571 = vunpack.c.l.b16 %v532
    %v572 = vunpack.c.l.b16 %v533
    %v573 = vunpack.c.l.b16 %v534
    %v574 = vunpack.c.l.b16 %v535
    %v575 = vunpack.c.l.b16 %v536
    %v576 = vunpack.c.l.b16 %v537
    %v577 = vunpack.c.l.b16 %v538
    %v578 = vpack.c.b16 %v563, %v562
    %v579 = vpack.c.b16 %v565, %v564
    %v580 = vpack.c.b16 %v567, %v566
    %v581 = vpack.c.b16 %v569, %v568
    %v582 = vpack.c.b16 %v571, %v570
    %v583 = vpack.c.b16 %v573, %v572
    %v584 = vpack.c.b16 %v575, %v574
    %v585 = vpack.c.b16 %v577, %v576
    %594 = vmatprep.subr.bf16.mxu0 0
    %595 = vmatpush1.bf16.msra.mxu0 %v585
    %596 = vmatprep.subr.bf16.mxu0 0
    %597 = vmatpush1.bf16.msra.mxu0 %v584
    %598 = vmatprep.subr.bf16.mxu0 0
    %599 = vmatpush1.bf16.msra.mxu0 %v583
    %600 = vmatprep.subr.bf16.mxu0 0
    %601 = vmatpush1.bf16.msra.mxu0 %v582
    %602 = vmatprep.subr.bf16.mxu0 0
    %603 = vmatpush1.bf16.msra.mxu0 %v581
    %604 = vmatprep.subr.bf16.mxu0 0
    %605 = vmatpush1.bf16.msra.mxu0 %v580
    %606 = vmatprep.subr.bf16.mxu0 0
    %607 = vmatpush1.bf16.msra.mxu0 %v579
    %608 = vmatprep.subr.bf16.mxu0 0
    %609 = vmatpush1.bf16.msra.mxu0 %v578
    %610 = vmatprep.subr.bf16.mxu0 0
    %611 = vmatpush2.bf16.msra.mxu0 0
    %612 = vmatprep.subr.bf16.mxu0 0
    %613 = vmatpush2.bf16.msra.mxu0 0
    %614 = vmatprep.subr.bf16.mxu0 0
    %615 = vmatpush2.bf16.msra.mxu0 0
    %616 = vmatprep.subr.bf16.mxu0 0
    %617 = vmatpush2.bf16.msra.mxu0 0
    %618 = vmatprep.subr.bf16.mxu0 0
    %619 = vmatpush2.bf16.msra.mxu0 0
    %620 = vmatprep.subr.bf16.mxu0 0
    %621 = vmatpush2.bf16.msra.mxu0 0
    %622 = vmatprep.subr.bf16.mxu0 0
    %623 = vmatpush2.bf16.msra.mxu0 0
    %624 = vmatprep.subr.bf16.mxu0 0
    %625 = vmatpush2.bf16.msra.mxu0 0
    %626 = vmatprep.mubr.bf16.mxu0 0
    %627 = vmatmul.mubr.bf16.gmra.mxu0 %v522
    %v628 = vpop.f32.mrf.mxu0
    %v629 = vadd.f32 %v544, %v628
    %v630 = vpop.f32.mrf.mxu0
    %v631 = vpop.f32.mrf.mxu0
    %v632 = vpop.f32.mrf.mxu0
    %633 = vdwg.mxu0
    %v634 = vmax.f32 %v629, 0.0
    %v635 = vpack.c.bf16 %v634, %v634
    %v636 = vld [vmem:[%s5] sm:$0xf]
    %v637 = vld [vmem:[%s5 + $0x4] sm:$0xf]
    %v638 = vld [vmem:[%s5 + $0x8] sm:$0xf]
    %v639 = vld [vmem:[%s5 + $0xc] sm:$0xf]
    %v640 = vld [vmem:[%s5 + $0x10] sm:$0xf]
    %v641 = vld [vmem:[%s5 + $0x14] sm:$0xf]
    %v642 = vld [vmem:[%s5 + $0x18] sm:$0xf]
    %v643 = vld [vmem:[%s5 + $0x1c] sm:$0xf]
    %v644 = vld [vmem:[%s5 + $0x20] sm:$0xf]
    %v645 = vld [vmem:[%s5 + $0x24] sm:$0xf]
    %v646 = vld [vmem:[%s5 + $0x28] sm:$0xf]
    %v647 = vld [vmem:[%s5 + $0x2c] sm:$0xf]
    %v648 = vld [vmem:[%s5 + $0x30] sm:$0xf]
    %v649 = vld [vmem:[%s5 + $0x34] sm:$0xf]
    %v650 = vld [vmem:[%s5 + $0x38] sm:$0xf]
    %v651 = vld [vmem:[%s5 + $0x3c] sm:$0xf]
    %v652 = vld [vmem:[%s6] sm:$0x1]
    %v654 = vlaneseq
    %v655 = vshrl.u32 %v654, 7
    %v656 = vsub.s32 0, %v655
    %v657 = vrot.slane %v652, %v656
    %v675 = vunpack.c.l.b16 %v636
    %v676 = vunpack.c.l.b16 %v637
    %v677 = vunpack.c.l.b16 %v638
    %v678 = vunpack.c.l.b16 %v639
    %v679 = vunpack.c.l.b16 %v640
    %v680 = vunpack.c.l.b16 %v641
    %v681 = vunpack.c.l.b16 %v642
    %v682 = vunpack.c.l.b16 %v643
    %v683 = vunpack.c.l.b16 %v644
    %v684 = vunpack.c.l.b16 %v645
    %v685 = vunpack.c.l.b16 %v646
    %v686 = vunpack.c.l.b16 %v647
    %v687 = vunpack.c.l.b16 %v648
    %v688 = vunpack.c.l.b16 %v649
    %v689 = vunpack.c.l.b16 %v650
    %v690 = vunpack.c.l.b16 %v651
    %v691 = vpack.c.b16 %v676, %v675
    %v692 = vpack.c.b16 %v678, %v677
    %v693 = vpack.c.b16 %v680, %v679
    %v694 = vpack.c.b16 %v682, %v681
    %v695 = vpack.c.b16 %v684, %v683
    %v696 = vpack.c.b16 %v686, %v685
    %v697 = vpack.c.b16 %v688, %v687
    %v698 = vpack.c.b16 %v690, %v689
    %707 = vmatprep.subr.bf16.mxu0 0
    %708 = vmatpush1.bf16.msra.mxu0 %v698
    %709 = vmatprep.subr.bf16.mxu0 0
    %710 = vmatpush1.bf16.msra.mxu0 %v697
    %711 = vmatprep.subr.bf16.mxu0 0
    %712 = vmatpush1.bf16.msra.mxu0 %v696
    %713 = vmatprep.subr.bf16.mxu0 0
    %714 = vmatpush1.bf16.msra.mxu0 %v695
    %715 = vmatprep.subr.bf16.mxu0 0
    %716 = vmatpush1.bf16.msra.mxu0 %v694
    %717 = vmatprep.subr.bf16.mxu0 0
    %718 = vmatpush1.bf16.msra.mxu0 %v693
    %719 = vmatprep.subr.bf16.mxu0 0
    %720 = vmatpush1.bf16.msra.mxu0 %v692
    %721 = vmatprep.subr.bf16.mxu0 0
    %722 = vmatpush1.bf16.msra.mxu0 %v691
    %723 = vmatprep.subr.bf16.mxu0 0
    %724 = vmatpush2.bf16.msra.mxu0 0
    %725 = vmatprep.subr.bf16.mxu0 0
    %726 = vmatpush2.bf16.msra.mxu0 0
    %727 = vmatprep.subr.bf16.mxu0 0
    %728 = vmatpush2.bf16.msra.mxu0 0
    %729 = vmatprep.subr.bf16.mxu0 0
    %730 = vmatpush2.bf16.msra.mxu0 0
    %731 = vmatprep.subr.bf16.mxu0 0
    %732 = vmatpush2.bf16.msra.mxu0 0
    %733 = vmatprep.subr.bf16.mxu0 0
    %734 = vmatpush2.bf16.msra.mxu0 0
    %735 = vmatprep.subr.bf16.mxu0 0
    %736 = vmatpush2.bf16.msra.mxu0 0
    %737 = vmatprep.subr.bf16.mxu0 0
    %738 = vmatpush2.bf16.msra.mxu0 0
    %739 = vmatprep.mubr.bf16.mxu0 0
    %740 = vmatmul.mubr.bf16.gmra.mxu0 %v635
    %v741 = vpop.f32.mrf.mxu0
    %v742 = vadd.f32 %v657, %v741
    %v743 = vpop.f32.mrf.mxu0
    %v744 = vpop.f32.mrf.mxu0
    %v745 = vpop.f32.mrf.mxu0
    %746 = vdwg.mxu0
    %747 = vst [vmem:[#allocation2] sm:$0x3] %v742
    // Predicated region
    $region30: #{convnet_forward.3} parent=1 // pred_check
      _
    $region31: #{convnet_forward.3} parent=1 // pred_check_branch
      %749 = sbr.rel (0) target = $region33
    $region32: #{convnet_forward.3} parent=1 // pred_region
      %s751 = ssub.s32 32, 32
      %752 = vsyncadd [#allocation3], %s751
      %s754 = sshll.u32 [#allocation2], 4
      %s755 = int_to_ptr.vmem [resolvable:$true] %s754
      %757 = dma.vmem_to_hbm [thread:$0]  %s755, 32, %s7, [#allocation3]
    $region33: #{convnet_forward.3} parent=1 // pred_fallthru
      _
    // Predicated region
    $region34: #{convnet_forward.3} parent=1 // pred_check
      _
    $region35: #{convnet_forward.3} parent=1 // pred_check_branch
      %759 = sbr.rel (0) target = $region37
    $region36: #{convnet_forward.3} parent=1 // pred_region
      %760 = dma.done [#allocation3], 32
    $region37: #{convnet_forward.3} parent=1 // pred_fallthru
      _
    %761 = vsyncpa [#allocation3], 1

// kernel: convnet_forward.2
$region0: #{convnet_forward.2}
  #allocation0 [shape = 'u32[]', space=smem, size = 0x4, offset = 0x4, fixed_abs, tag = 'smem constant byte address 0x4 - core index']
  #allocation1 [shape = 'u32[144,128]{1,0:T(1,128)}', space=vmem, size = 0x12000, scoped, tag = 'internal scratch']
  #allocation2 [shape = 'f32[14,40,16]{2,1,0:T(8,128)}', space=vmem, size = 0x46000, scoped, tag = 'scratch operand']
  #allocation3 [shape = 'f32[5,16,16]{2,1,0:T(8,128)}', space=vmem, size = 0xa000, scoped, tag = 'scratch operand']
  %s0 = inlined_call_operand.vmem [shape: bf16[2,1024,16], index: 0, kind: input, shape index: {}]
  %s1 = inlined_call_operand.vmem [shape: bf16[5,16,16], index: 1, kind: input, shape index: {}]
  %s2 = inlined_call_operand.vmem [shape: f32[1,16], index: 2, kind: input, shape index: {}]
  %s3 = inlined_call_operand.vmem [shape: bf16[5,5,16,16], index: 3, kind: input, shape index: {}]
  %s4 = inlined_call_operand.vmem [shape: f32[1,16], index: 4, kind: input, shape index: {}]
  %s5 = inlined_call_operand.vmem [shape: bf16[2,40,16], index: 5, kind: output, shape index: {}]
  %s6 = sld [smem:[#allocation0]]
  $region60: #{convnet_forward.2} parent=0
    _
  %s8 = ssub.s32 1, %s6
  %s9 = scalar_select 0, %s8, %s6
  loop: start=0, step=1, limit=4
  $region2: #{convnet_forward.2} parent=0 // loop_pre_header
    _
  $region3: #{convnet_forward.2} parent=0 // loop_header
    %s11 = sphi 0, %s15
    %p12 = scmp.ge.s32.totalorder %s11, 4
    %s21 = sphi 0, %s23
    %s24 = sphi 0, %s21
    %s25 = sphi 0, %s24
    %s41 = sphi 0, %s25
    %s45 = sphi 0, %s45
    %s47 = sphi 0, %s45
    %s48 = sphi 0, %s47
    %s62 = sphi 0, %s48
    %s66 = sphi 0, %s66
    %s68 = sphi 0, %s66
    %s69 = sphi 0, %s68
    %s83 = sphi 0, %s69
    %s87 = sphi 0, %s87
    %s89 = sphi 0, %s87
    %s90 = sphi 0, %s89
    %s104 = sphi 0, %s90
    %s108 = sphi 0, %s108
    %s110 = sphi 0, %s108
    %s111 = sphi 0, %s110
    %s125 = sphi 0, %s111
    %s131 = sphi 0, %s133
    %s134 = sphi 0, %s131
    %s135 = sphi 0, %s134
    %s151 = sphi 0, %s135
  $region4: #{convnet_forward.2} parent=0 // loop_header_branch
    %14 = sbr.rel (%p12) target = $region8
  $region5: #{convnet_forward.2} parent=0 // loop_body
    %s16 = ssub.s32 %s11, 1
    %s17 = ssub.s32 %s11, 2
    %s18 = sadd.s32 %s11, 1
    %s19 = ssub.s32 %s11, %s18
    %p20 = scmp.eq.s32.totalorder %s19, 0
    %s22 = sadd.s32 %s21, 1
    %s23 = scalar_select %p20, %s21, %s22
    %p26 = pneg %p20
    %p27 = scmp.eq.s32.totalorder %s11, 1
    %p28 = por %p26, %p27
    %p29 = scmp.ne.s32.totalorder %s21, %s24
    %p30 = scmp.eq.s32.totalorder %s11, 0
    %p31 = por %p29, %p30
    %p32 = scmp.ne.s32.totalorder %s21, %s24
    %p33 = scmp.eq.s32.totalorder %s16, 1
    %p34 = por %p32, %p33
    %p35 = scmp.ne.s32.totalorder %s24, %s25
    %p36 = scmp.eq.s32.totalorder %s16, 0
    %p37 = por %p35, %p36
    %p38 = scmp.ne.s32.totalorder %s24, %s25
    %p39 = scmp.eq.s32.totalorder %s17, 1
    %p40 = por %p38, %p39
    %p42 = scmp.ne.s32.totalorder %s25, %s41
    %p43 = scmp.eq.s32.totalorder %s17, 0
    %p44 = por %p42, %p43
    %s46 = sadd.s32 %s45, 1
    %p49 = scmp.eq.s32.totalorder %s11, 1
    %p50 = scmp.ne.s32.totalorder %s45, %s47
    %p51 = scmp.eq.s32.totalorder %s11, 0
    %p52 = por %p50, %p51
    %p53 = scmp.ne.s32.totalorder %s45, %s47
    %p54 = scmp.eq.s32.totalorder %s16, 1
    %p55 = por %p53, %p54
    %p56 = scmp.ne.s32.totalorder %s47, %s48
    %p57 = scmp.eq.s32.totalorder %s16, 0
    %p58 = por %p56, %p57
    %p59 = scmp.ne.s32.totalorder %s47, %s48
    %p60 = scmp.eq.s32.totalorder %s17, 1
    %p61 = por %p59, %p60
    %p63 = scmp.ne.s32.totalorder %s48, %s62
    %p64 = scmp.eq.s32.totalorder %s17, 0
    %p65 = por %p63, %p64
    %s67 = sadd.s32 %s66, 1
    %p70 = scmp.eq.s32.totalorder %s11, 1
    %p71 = scmp.ne.s32.totalorder %s66, %s68
    %p72 = scmp.eq.s32.totalorder %s11, 0
    %p73 = por %p71, %p72
    %p74 = scmp.ne.s32.totalorder %s66, %s68
    %p75 = scmp.eq.s32.totalorder %s16, 1
    %p76 = por %p74, %p75
    %p77 = scmp.ne.s32.totalorder %s68, %s69
    %p78 = scmp.eq.s32.totalorder %s16, 0
    %p79 = por %p77, %p78
    %p80 = scmp.ne.s32.totalorder %s68, %s69
    %p81 = scmp.eq.s32.totalorder %s17, 1
    %p82 = por %p80, %p81
    %p84 = scmp.ne.s32.totalorder %s69, %s83
    %p85 = scmp.eq.s32.totalorder %s17, 0
    %p86 = por %p84, %p85
    %s88 = sadd.s32 %s87, 1
    %p91 = scmp.eq.s32.totalorder %s11, 1
    %p92 = scmp.ne.s32.totalorder %s87, %s89
    %p93 = scmp.eq.s32.totalorder %s11, 0
    %p94 = por %p92, %p93
    %p95 = scmp.ne.s32.totalorder %s87, %s89
    %p96 = scmp.eq.s32.totalorder %s16, 1
    %p97 = por %p95, %p96
    %p98 = scmp.ne.s32.totalorder %s89, %s90
    %p99 = scmp.eq.s32.totalorder %s16, 0
    %p100 = por %p98, %p99
    %p101 = scmp.ne.s32.totalorder %s89, %s90
    %p102 = scmp.eq.s32.totalorder %s17, 1
    %p103 = por %p101, %p102
    %p105 = scmp.ne.s32.totalorder %s90, %s104
    %p106 = scmp.eq.s32.totalorder %s17, 0
    %p107 = por %p105, %p106
    %s109 = sadd.s32 %s108, 1
    %p112 = scmp.eq.s32.totalorder %s11, 1
    %p113 = scmp.ne.s32.totalorder %s108, %s110
    %p114 = scmp.eq.s32.totalorder %s11, 0
    %p115 = por %p113, %p114
    %p116 = scmp.ne.s32.totalorder %s108, %s110
    %p117 = scmp.eq.s32.totalorder %s16, 1
    %p118 = por %p116, %p117
    %p119 = scmp.ne.s32.totalorder %s110, %s111
    %p120 = scmp.eq.s32.totalorder %s16, 0
    %p121 = por %p119, %p120
    %p122 = scmp.ne.s32.totalorder %s110, %s111
    %p123 = scmp.eq.s32.totalorder %s17, 1
    %p124 = por %p122, %p123
    %p126 = scmp.ne.s32.totalorder %s111, %s125
    %p127 = scmp.eq.s32.totalorder %s17, 0
    %p128 = por %p126, %p127
    %s129 = ssub.s32 %s11, %s18
    %p130 = scmp.eq.s32.totalorder %s129, 0
    %s132 = sadd.s32 %s131, 1
    %s133 = scalar_select %p130, %s131, %s132
    %p136 = pneg %p130
    %p137 = scmp.eq.s32.totalorder %s11, 1
    %p138 = por %p136, %p137
    %p139 = scmp.ne.s32.totalorder %s131, %s134
    %p140 = scmp.eq.s32.totalorder %s11, 0
    %p141 = por %p139, %p140
    %p142 = scmp.ne.s32.totalorder %s131, %s134
    %p143 = scmp.eq.s32.totalorder %s16, 1
    %p144 = por %p142, %p143
    %p145 = scmp.ne.s32.totalorder %s134, %s135
    %p146 = scmp.eq.s32.totalorder %s16, 0
    %p147 = por %p145, %p146
    %p148 = scmp.ne.s32.totalorder %s134, %s135
    %p149 = scmp.eq.s32.totalorder %s17, 1
    %p150 = por %p148, %p149
    %p152 = scmp.ne.s32.totalorder %s135, %s151
    %p153 = scmp.eq.s32.totalorder %s17, 0
    %p154 = por %p152, %p153
    %p155 = scmp.le.s32.totalorder 1, %s11
    %p156 = scmp.lt.s32.totalorder %s11, 3
    %p157 = pnand %p155, %p156
    %p158 = pneg %p157
    // Predicated region
    $region9: #{convnet_forward.2} parent=5 // pred_check
      _
    $region10: #{convnet_forward.2} parent=5 // pred_check_branch
      %160 = sbr.rel (%p157) target = $region12
    $region11: #{convnet_forward.2} parent=5 // pred_region
      %s161 = ssub.s32 %s11, 1
      // Predicated region
      $region13: #{convnet_forward.2} parent=11 // pred_check
        %p162 = pneg %p58
      $region14: #{convnet_forward.2} parent=11 // pred_check_branch
        %164 = sbr.rel (%p162) target = $region16
      $region15: #{convnet_forward.2} parent=11 // pred_region
        _
      $region16: #{convnet_forward.2} parent=11 // pred_fallthru
        _
      // Predicated region
      $region17: #{convnet_forward.2} parent=11 // pred_check
        %p165 = pneg %p79
      $region18: #{convnet_forward.2} parent=11 // pred_check_branch
        %167 = sbr.rel (%p165) target = $region20
      $region19: #{convnet_forward.2} parent=11 // pred_region
        _
      $region20: #{convnet_forward.2} parent=11 // pred_fallthru
        _
      // Predicated region
      $region21: #{convnet_forward.2} parent=11 // pred_check
        %p168 = pneg %p100
      $region22: #{convnet_forward.2} parent=11 // pred_check_branch
        %170 = sbr.rel (%p168) target = $region24
      $region23: #{convnet_forward.2} parent=11 // pred_region
        _
      $region24: #{convnet_forward.2} parent=11 // pred_fallthru
        _
      // Predicated region
      $region25: #{convnet_forward.2} parent=11 // pred_check
        %p171 = pneg %p121
      $region26: #{convnet_forward.2} parent=11 // pred_check_branch
        %173 = sbr.rel (%p171) target = $region28
      $region27: #{convnet_forward.2} parent=11 // pred_region
        _
      $region28: #{convnet_forward.2} parent=11 // pred_fallthru
        _
    $region12: #{convnet_forward.2} parent=5 // pred_fallthru
      _
    %p174 = scmp.lt.s32.totalorder %s11, 2
    // Predicated region
    $region29: #{convnet_forward.2} parent=5 // pred_check
      %p175 = pneg %p174
    $region30: #{convnet_forward.2} parent=5 // pred_check_branch
      %177 = sbr.rel (%p175) target = $region32
    $region31: #{convnet_forward.2} parent=5 // pred_region
      // Predicated region
      $region33: #{convnet_forward.2} parent=31 // pred_check
        %p178 = pneg %p31
      $region34: #{convnet_forward.2} parent=31 // pred_check_branch
        %180 = sbr.rel (%p178) target = $region36
      $region35: #{convnet_forward.2} parent=31 // pred_region
        %p181 = scmp.lt.s32.totalorder %s11, 1
        %s182 = scalar_select %p181, %s11, 1
        %s183 = smul.addr %s182, 128
        %s184 = smul.addr %s183, 4
        %s185 = scalar_lea.vmem %s0, %s184
      $region36: #{convnet_forward.2} parent=31 // pred_fallthru
        _
    $region32: #{convnet_forward.2} parent=5 // pred_fallthru
      _
    %p186 = scmp.le.s32.totalorder 1, %s11
    %p187 = scmp.lt.s32.totalorder %s11, 3
    %p188 = pnand %p186, %p187
    %p189 = pneg %p188
    // Predicated region
    $region37: #{convnet_forward.2} parent=5 // pred_check
      _
    $region38: #{convnet_forward.2} parent=5 // pred_check_branch
      %191 = sbr.rel (%p188) target = $region40
    $region39: #{convnet_forward.2} parent=5 // pred_region
      %s192 = ssub.s32 %s11, 1
      %p193 = scmp.lt.s32.totalorder %s16, 1
      %s194 = scalar_select %p193, %s16, 1
      %s195 = smul.addr %s194, 128
      %s196 = smul.addr %s195, 4
      %s197 = scalar_lea.vmem %s0, %s196
      %p198 = pneg %p37
      %p199 = pneg %p34
      %p200 = pneg %p58
      %p201 = pneg %p55
      %p202 = pneg %p79
      %p203 = pneg %p76
      %p204 = pneg %p100
      %p205 = pneg %p97
      %p206 = pneg %p121
      %p207 = pneg %p118
      %p208 = pneg %p147
      %p209 = pneg %p144
      %p210 = scmp.lt.s32.totalorder %s16, 1
      %s211 = scalar_select %p210, %s16, 1
      %s212 = smul.addr %s211, 5
      %s213 = smul.addr %s212, 4
      %s214 = scalar_lea.vmem %s5, %s213
      %p215 = scmp.lt.s32.totalorder %s16, 1
      %s216 = scalar_select %p215, %s16, 1
      %s217 = smul.addr %s216, 128
      %s218 = smul.addr %s217, 4
      %s219 = scalar_lea.vmem %s0, %s218
      %p220 = scmp.lt.s32.totalorder %s16, 1
      %s221 = scalar_select %p220, %s16, 1
      %s222 = smul.addr %s221, 5
      %s223 = smul.addr %s222, 4
      %s224 = scalar_lea.vmem %s5, %s223
      %v226 = vld [vmem:[%s1] sm:$0xf]
      %v227 = vld [vmem:[%s1 + $0x4] sm:$0xf]
      %v228 = vld [vmem:[%s1 + $0x8] sm:$0xf]
      %v229 = vld [vmem:[%s1 + $0xc] sm:$0xf]
      %v230 = vld [vmem:[%s1 + $0x10] sm:$0xf]
      %v231 = vld [vmem:[%s1 + $0x14] sm:$0xf]
      %v232 = vld [vmem:[%s1 + $0x18] sm:$0xf]
      %v233 = vld [vmem:[%s1 + $0x1c] sm:$0xf]
      %v234 = vld [vmem:[%s1 + $0x20] sm:$0xf]
      %v235 = vld [vmem:[%s1 + $0x24] sm:$0xf]
      %v236 = vld [vmem:[%s2] sm:$0x1]
      loop: start=0, step=1, limit=7
      $region41: #{convnet_forward.2} parent=39 // loop_pre_header
        _
      $region42: #{convnet_forward.2} parent=39 // loop_header
        %s238 = sphi 0, %s242
        %p239 = scmp.ge.s32.totalorder %s238, 7
      $region43: #{convnet_forward.2} parent=39 // loop_header_branch
        %241 = sbr.rel (%p239) target = $region47
      $region44: #{convnet_forward.2} parent=39 // loop_body
        %s243 = smul.u32 %s238, 128
        %s244 = sshra.s32 %s243, 3
        %s245 = sand.u32 %s243, 7
        %s246 = smul.addr %s244, 4
        %s247 = scalar_lea.vmem %s219, %s246
        %v248 = vld [vmem:[%s247] sm:$0xf]
        %v249 = vld [vmem:[%s247 + $0x4] sm:$0xf]
        %v250 = vld [vmem:[%s247 + $0x8] sm:$0xf]
        %v251 = vld [vmem:[%s247 + $0xc] sm:$0xf]
        %v252 = vld [vmem:[%s247 + $0x10] sm:$0xf]
        %v253 = vld [vmem:[%s247 + $0x14] sm:$0xf]
        %v254 = vld [vmem:[%s247 + $0x18] sm:$0xf]
        %v255 = vld [vmem:[%s247 + $0x1c] sm:$0xf]
        %v256 = vld [vmem:[%s247 + $0x20] sm:$0xf]
        %v257 = vld [vmem:[%s247 + $0x24] sm:$0xf]
        %v258 = vld [vmem:[%s247 + $0x28] sm:$0xf]
        %v259 = vld [vmem:[%s247 + $0x2c] sm:$0xf]
        %v260 = vld [vmem:[%s247 + $0x30] sm:$0xf]
        %v261 = vld [vmem:[%s247 + $0x34] sm:$0xf]
        %v262 = vld [vmem:[%s247 + $0x38] sm:$0xf]
        %v263 = vld [vmem:[%s247 + $0x3c] sm:$0xf]
        %s264 = sadd.s32 %s243, 32
        %s265 = sshra.s32 %s264, 3
        %s266 = sand.u32 %s264, 7
        %s267 = smul.addr %s265, 4
        %s268 = scalar_lea.vmem %s219, %s267
        %v269 = vld [vmem:[%s268] sm:$0xf]
        %v270 = vld [vmem:[%s268 + $0x4] sm:$0xf]
        %v271 = vld [vmem:[%s268 + $0x8] sm:$0xf]
        %v272 = vld [vmem:[%s268 + $0xc] sm:$0xf]
        %v273 = vld [vmem:[%s268 + $0x10] sm:$0xf]
        %v274 = vld [vmem:[%s268 + $0x14] sm:$0xf]
        %v275 = vld [vmem:[%s268 + $0x18] sm:$0xf]
        %v276 = vld [vmem:[%s268 + $0x1c] sm:$0xf]
        %v277 = vld [vmem:[%s268 + $0x20] sm:$0xf]
        %v278 = vld [vmem:[%s268 + $0x24] sm:$0xf]
        %v279 = vld [vmem:[%s268 + $0x28] sm:$0xf]
        %v280 = vld [vmem:[%s268 + $0x2c] sm:$0xf]
        %v281 = vld [vmem:[%s268 + $0x30] sm:$0xf]
        %v282 = vld [vmem:[%s268 + $0x34] sm:$0xf]
        %v283 = vld [vmem:[%s268 + $0x38] sm:$0xf]
        %v284 = vld [vmem:[%s268 + $0x3c] sm:$0xf]
        %v301 = vunpack.c.l.b16 %v269
        %v302 = vunpack.c.l.b16 %v270
        %v303 = vunpack.c.l.b16 %v271
        %v304 = vunpack.c.l.b16 %v272
        %v305 = vunpack.c.l.b16 %v273
        %v306 = vunpack.c.l.b16 %v274
        %v307 = vunpack.c.l.b16 %v275
        %v308 = vunpack.c.l.b16 %v276
        %v309 = vunpack.c.l.b16 %v277
        %v310 = vunpack.c.l.b16 %v278
        %v311 = vunpack.c.l.b16 %v279
        %v312 = vunpack.c.l.b16 %v280
        %v313 = vunpack.c.l.b16 %v281
        %v314 = vunpack.c.l.b16 %v282
        %v315 = vunpack.c.l.b16 %v283
        %v316 = vunpack.c.l.b16 %v284
        %v317 = vpack.c.b16 %v302, %v301
        %v318 = vpack.c.b16 %v304, %v303
        %v319 = vpack.c.b16 %v306, %v305
        %v320 = vpack.c.b16 %v308, %v307
        %v321 = vpack.c.b16 %v310, %v309
        %v322 = vpack.c.b16 %v312, %v311
        %v323 = vpack.c.b16 %v314, %v313
        %v324 = vpack.c.b16 %v316, %v315
        %v327 = vunpack.c.l.b16 %v228
        %v328 = vunpack.c.l.b16 %v229
        %v329 = vpack.c.b16 %v328, %v327
        %vm331 = vcmask 130048
        %v333 = vsel %vm331, %v317, 0
        %v336 = vsel %vm331, %v318, 0
        %v339 = vsel %vm331, %v319, 0
        %v342 = vsel %vm331, %v320, 0
        %v345 = vsel %vm331, %v321, 0
        %v348 = vsel %vm331, %v322, 0
        %v351 = vsel %vm331, %v323, 0
        %v354 = vsel %vm331, %v324, 0
        %356 = vmatprep.subr.bf16.mxu0 0
        %357 = vmatpush1.bf16.msra.mxu0 0
        %358 = vmatprep.subr.bf16.mxu0 0
        %359 = vmatpush1.bf16.msra.mxu0 0
        %360 = vmatprep.subr.bf16.mxu0 0
        %361 = vmatpush1.bf16.msra.mxu0 0
        %362 = vmatprep.subr.bf16.mxu0 0
        %363 = vmatpush1.bf16.msra.mxu0 0
        %364 = vmatprep.subr.bf16.mxu0 0
        %365 = vmatpush1.bf16.msra.mxu0 0
        %366 = vmatprep.subr.bf16.mxu0 0
        %367 = vmatpush1.bf16.msra.mxu0 0
        %368 = vmatprep.subr.bf16.mxu0 0
        %369 = vmatpush1.bf16.msra.mxu0 0
        %370 = vmatprep.subr.bf16.mxu0 0
        %371 = vmatpush1.bf16.msra.mxu0 %v329
        %372 = vmatprep.subr.bf16.mxu0 0
        %373 = vmatpush2.bf16.msra.mxu0 0
        %374 = vmatprep.subr.bf16.mxu0 0
        %375 = vmatpush2.bf16.msra.mxu0 0
        %376 = vmatprep.subr.bf16.mxu0 0
        %377 = vmatpush2.bf16.msra.mxu0 0
        %378 = vmatprep.subr.bf16.mxu0 0
        %379 = vmatpush2.bf16.msra.mxu0 0
        %380 = vmatprep.subr.bf16.mxu0 0
        %381 = vmatpush2.bf16.msra.mxu0 0
        %382 = vmatprep.subr.bf16.mxu0 0
        %383 = vmatpush2.bf16.msra.mxu0 0
        %384 = vmatprep.subr.bf16.mxu0 0
        %385 = vmatpush2.bf16.msra.mxu0 0
        %386 = vmatprep.subr.bf16.mxu0 0
        %387 = vmatpush2.bf16.msra.mxu0 0
        %388 = vmatprep.mubr.bf16.mxu0 0
        %389 = vmatmul.mubr.bf16.gmra.mxu0 %v333
        %v390 = vpop.f32.mrf.mxu0
        %v391 = vadd.f32 0.0, %v390
        %v392 = vpop.f32.mrf.mxu0
        %v393 = vpop.f32.mrf.mxu0
        %v394 = vadd.f32 0.0, %v393
        %v395 = vpop.f32.mrf.mxu0
        %396 = vmatprep.mubr.bf16.mxu0 0
        %397 = vmatmul.mubr.bf16.gmra.mxu0 %v336
        %v398 = vpop.f32.mrf.mxu0
        %v399 = vadd.f32 0.0, %v398
        %v400 = vpop.f32.mrf.mxu0
        %v401 = vpop.f32.mrf.mxu0
        %v402 = vadd.f32 0.0, %v401
        %v403 = vpop.f32.mrf.mxu0
        %404 = vmatprep.mubr.bf16.mxu0 0
        %405 = vmatmul.mubr.bf16.gmra.mxu0 %v339
        %v406 = vpop.f32.mrf.mxu0
        %v407 = vadd.f32 0.0, %v406
        %v408 = vpop.f32.mrf.mxu0
        %v409 = vpop.f32.mrf.mxu0
        %v410 = vadd.f32 0.0, %v409
        %v411 = vpop.f32.mrf.mxu0
        %412 = vmatprep.mubr.bf16.mxu0 0
        %413 = vmatmul.mubr.bf16.gmra.mxu0 %v342
        %v414 = vpop.f32.mrf.mxu0
        %v415 = vadd.f32 0.0, %v414
        %v416 = vpop.f32.mrf.mxu0
        %v417 = vpop.f32.mrf.mxu0
        %v418 = vadd.f32 0.0, %v417
        %v419 = vpop.f32.mrf.mxu0
        %420 = vmatprep.mubr.bf16.mxu0 0
        %421 = vmatmul.mubr.bf16.gmra.mxu0 %v345
        %v422 = vpop.f32.mrf.mxu0
        %v423 = vadd.f32 0.0, %v422
        %v424 = vpop.f32.mrf.mxu0
        %v425 = vpop.f32.mrf.mxu0
        %v426 = vadd.f32 0.0, %v425
        %v427 = vpop.f32.mrf.mxu0
        %428 = vmatprep.mubr.bf16.mxu0 0
        %429 = vmatmul.mubr.bf16.gmra.mxu0 %v348
        %v430 = vpop.f32.mrf.mxu0
        %v431 = vadd.f32 0.0, %v430
        %v432 = vpop.f32.mrf.mxu0
        %v433 = vpop.f32.mrf.mxu0
        %v434 = vadd.f32 0.0, %v433
        %v435 = vpop.f32.mrf.mxu0
        %436 = vmatprep.mubr.bf16.mxu0 0
        %437 = vmatmul.mubr.bf16.gmra.mxu0 %v351
        %v438 = vpop.f32.mrf.mxu0
        %v439 = vadd.f32 0.0, %v438
        %v440 = vpop.f32.mrf.mxu0
        %v441 = vpop.f32.mrf.mxu0
        %v442 = vadd.f32 0.0, %v441
        %v443 = vpop.f32.mrf.mxu0
        %444 = vmatprep.mubr.bf16.mxu0 0
        %445 = vmatmul.mubr.bf16.gmra.mxu0 %v354
        %v446 = vpop.f32.mrf.mxu0
        %v447 = vadd.f32 0.0, %v446
        %v448 = vpop.f32.mrf.mxu0
        %v449 = vpop.f32.mrf.mxu0
        %v450 = vadd.f32 0.0, %v449
        %v451 = vpop.f32.mrf.mxu0
        %452 = vdwg.mxu0
        %v469 = vunpack.c.l.b16 %v248
        %v470 = vunpack.c.l.b16 %v249
        %v471 = vunpack.c.l.b16 %v250
        %v472 = vunpack.c.l.b16 %v251
        %v473 = vunpack.c.l.b16 %v252
        %v474 = vunpack.c.l.b16 %v253
        %v475 = vunpack.c.l.b16 %v254
        %v476 = vunpack.c.l.b16 %v255
        %v477 = vunpack.c.l.b16 %v256
        %v478 = vunpack.c.l.b16 %v257
        %v479 = vunpack.c.l.b16 %v258
        %v480 = vunpack.c.l.b16 %v259
        %v481 = vunpack.c.l.b16 %v260
        %v482 = vunpack.c.l.b16 %v261
        %v483 = vunpack.c.l.b16 %v262
        %v484 = vunpack.c.l.b16 %v263
        %v485 = vpack.c.b16 %v470, %v469
        %v486 = vpack.c.b16 %v472, %v471
        %v487 = vpack.c.b16 %v474, %v473
        %v488 = vpack.c.b16 %v476, %v475
        %v489 = vpack.c.b16 %v478, %v477
        %v490 = vpack.c.b16 %v480, %v479
        %v491 = vpack.c.b16 %v482, %v481
        %v492 = vpack.c.b16 %v484, %v483
        %v495 = vunpack.c.l.b16 %v226
        %v496 = vunpack.c.l.b16 %v227
        %v497 = vpack.c.b16 %v496, %v495
        %v500 = vsel %vm331, %v485, 0
        %v503 = vsel %vm331, %v486, 0
        %v506 = vsel %vm331, %v487, 0
        %v509 = vsel %vm331, %v488, 0
        %v512 = vsel %vm331, %v489, 0
        %v515 = vsel %vm331, %v490, 0
        %v518 = vsel %vm331, %v491, 0
        %v521 = vsel %vm331, %v492, 0
        %523 = vmatprep.subr.bf16.mxu0 0
        %524 = vmatpush1.bf16.msra.mxu0 0
        %525 = vmatprep.subr.bf16.mxu0 0
        %526 = vmatpush1.bf16.msra.mxu0 0
        %527 = vmatprep.subr.bf16.mxu0 0
        %528 = vmatpush1.bf16.msra.mxu0 0
        %529 = vmatprep.subr.bf16.mxu0 0
        %530 = vmatpush1.bf16.msra.mxu0 0
        %531 = vmatprep.subr.bf16.mxu0 0
        %532 = vmatpush1.bf16.msra.mxu0 0
        %533 = vmatprep.subr.bf16.mxu0 0
        %534 = vmatpush1.bf16.msra.mxu0 0
        %535 = vmatprep.subr.bf16.mxu0 0
        %536 = vmatpush1.bf16.msra.mxu0 0
        %537 = vmatprep.subr.bf16.mxu0 0
        %538 = vmatpush1.bf16.msra.mxu0 %v497
        %539 = vmatprep.subr.bf16.mxu0 0
        %540 = vmatpush2.bf16.msra.mxu0 0
        %541 = vmatprep.subr.bf16.mxu0 0
        %542 = vmatpush2.bf16.msra.mxu0 0
        %543 = vmatprep.subr.bf16.mxu0 0
        %544 = vmatpush2.bf16.msra.mxu0 0
        %545 = vmatprep.subr.bf16.mxu0 0
        %546 = vmatpush2.bf16.msra.mxu0 0
        %547 = vmatprep.subr.bf16.mxu0 0
        %548 = vmatpush2.bf16.msra.mxu0 0
        %549 = vmatprep.subr.bf16.mxu0 0
        %550 = vmatpush2.bf16.msra.mxu0 0
        %551 = vmatprep.subr.bf16.mxu0 0
        %552 = vmatpush2.bf16.msra.mxu0 0
        %553 = vmatprep.subr.bf16.mxu0 0
        %554 = vmatpush2.bf16.msra.mxu0 0
        %555 = vmatprep.mubr.bf16.mxu0 0
        %556 = vmatmul.mubr.bf16.gmra.mxu0 %v500
        %v557 = vpop.f32.mrf.mxu0
        %v558 = vadd.f32 %v391, %v557
        %v559 = vpop.f32.mrf.mxu0
        %v560 = vpop.f32.mrf.mxu0
        %v561 = vadd.f32 %v394, %v560
        %v562 = vpop.f32.mrf.mxu0
        %563 = vmatprep.mubr.bf16.mxu0 0
        %564 = vmatmul.mubr.bf16.gmra.mxu0 %v503
        %v565 = vpop.f32.mrf.mxu0
        %v566 = vadd.f32 %v399, %v565
        %v567 = vpop.f32.mrf.mxu0
        %v568 = vpop.f32.mrf.mxu0
        %v569 = vadd.f32 %v402, %v568
        %v570 = vpop.f32.mrf.mxu0
        %571 = vmatprep.mubr.bf16.mxu0 0
        %572 = vmatmul.mubr.bf16.gmra.mxu0 %v506
        %v573 = vpop.f32.mrf.mxu0
        %v574 = vadd.f32 %v407, %v573
        %v575 = vpop.f32.mrf.mxu0
        %v576 = vpop.f32.mrf.mxu0
        %v577 = vadd.f32 %v410, %v576
        %v578 = vpop.f32.mrf.mxu0
        %579 = vmatprep.mubr.bf16.mxu0 0
        %580 = vmatmul.mubr.bf16.gmra.mxu0 %v509
        %v581 = vpop.f32.mrf.mxu0
        %v582 = vadd.f32 %v415, %v581
        %v583 = vpop.f32.mrf.mxu0
        %v584 = vpop.f32.mrf.mxu0
        %v585 = vadd.f32 %v418, %v584
        %v586 = vpop.f32.mrf.mxu0
        %587 = vmatprep.mubr.bf16.mxu0 0
        %588 = vmatmul.mubr.bf16.gmra.mxu0 %v512
        %v589 = vpop.f32.mrf.mxu0
        %v590 = vadd.f32 %v423, %v589
        %v591 = vpop.f32.mrf.mxu0
        %v592 = vpop.f32.mrf.mxu0
        %v593 = vadd.f32 %v426, %v592
        %v594 = vpop.f32.mrf.mxu0
        %595 = vmatprep.mubr.bf16.mxu0 0
        %596 = vmatmul.mubr.bf16.gmra.mxu0 %v515
        %v597 = vpop.f32.mrf.mxu0
        %v598 = vadd.f32 %v431, %v597
        %v599 = vpop.f32.mrf.mxu0
        %v600 = vpop.f32.mrf.mxu0
        %v601 = vadd.f32 %v434, %v600
        %v602 = vpop.f32.mrf.mxu0
        %603 = vmatprep.mubr.bf16.mxu0 0
        %604 = vmatmul.mubr.bf16.gmra.mxu0 %v518
        %v605 = vpop.f32.mrf.mxu0
        %v606 = vadd.f32 %v439, %v605
        %v607 = vpop.f32.mrf.mxu0
        %v608 = vpop.f32.mrf.mxu0
        %v609 = vadd.f32 %v442, %v608
        %v610 = vpop.f32.mrf.mxu0
        %611 = vmatprep.mubr.bf16.mxu0 0
        %612 = vmatmul.mubr.bf16.gmra.mxu0 %v521
        %v613 = vpop.f32.mrf.mxu0
        %v614 = vadd.f32 %v447, %v613
        %v615 = vpop.f32.mrf.mxu0
        %v616 = vpop.f32.mrf.mxu0
        %v617 = vadd.f32 %v450, %v616
        %v618 = vpop.f32.mrf.mxu0
        %619 = vdwg.mxu0
        %s620 = sadd.s32 %s243, 64
        %s621 = sshra.s32 %s620, 3
        %s622 = sand.u32 %s620, 7
        %s623 = smul.addr %s621, 4
        %s624 = scalar_lea.vmem %s219, %s623
        %v625 = vld [vmem:[%s624] sm:$0xf]
        %v626 = vld [vmem:[%s624 + $0x4] sm:$0xf]
        %v627 = vld [vmem:[%s624 + $0x8] sm:$0xf]
        %v628 = vld [vmem:[%s624 + $0xc] sm:$0xf]
        %v629 = vld [vmem:[%s624 + $0x10] sm:$0xf]
        %v630 = vld [vmem:[%s624 + $0x14] sm:$0xf]
        %v631 = vld [vmem:[%s624 + $0x18] sm:$0xf]
        %v632 = vld [vmem:[%s624 + $0x1c] sm:$0xf]
        %v633 = vld [vmem:[%s624 + $0x20] sm:$0xf]
        %v634 = vld [vmem:[%s624 + $0x24] sm:$0xf]
        %v635 = vld [vmem:[%s624 + $0x28] sm:$0xf]
        %v636 = vld [vmem:[%s624 + $0x2c] sm:$0xf]
        %v637 = vld [vmem:[%s624 + $0x30] sm:$0xf]
        %v638 = vld [vmem:[%s624 + $0x34] sm:$0xf]
        %v639 = vld [vmem:[%s624 + $0x38] sm:$0xf]
        %v640 = vld [vmem:[%s624 + $0x3c] sm:$0xf]
        %v657 = vunpack.c.l.b16 %v625
        %v658 = vunpack.c.l.b16 %v626
        %v659 = vunpack.c.l.b16 %v627
        %v660 = vunpack.c.l.b16 %v628
        %v661 = vunpack.c.l.b16 %v629
        %v662 = vunpack.c.l.b16 %v630
        %v663 = vunpack.c.l.b16 %v631
        %v664 = vunpack.c.l.b16 %v632
        %v665 = vunpack.c.l.b16 %v633
        %v666 = vunpack.c.l.b16 %v634
        %v667 = vunpack.c.l.b16 %v635
        %v668 = vunpack.c.l.b16 %v636
        %v669 = vunpack.c.l.b16 %v637
        %v670 = vunpack.c.l.b16 %v638
        %v671 = vunpack.c.l.b16 %v639
        %v672 = vunpack.c.l.b16 %v640
        %v673 = vpack.c.b16 %v658, %v657
        %v674 = vpack.c.b16 %v660, %v659
        %v675 = vpack.c.b16 %v662, %v661
        %v676 = vpack.c.b16 %v664, %v663
        %v677 = vpack.c.b16 %v666, %v665
        %v678 = vpack.c.b16 %v668, %v667
        %v679 = vpack.c.b16 %v670, %v669
        %v680 = vpack.c.b16 %v672, %v671
        %v683 = vunpack.c.l.b16 %v230
        %v684 = vunpack.c.l.b16 %v231
        %v685 = vpack.c.b16 %v684, %v683
        %v688 = vsel %vm331, %v673, 0
        %v691 = vsel %vm331, %v674, 0
        %v694 = vsel %vm331, %v675, 0
        %v697 = vsel %vm331, %v676, 0
        %v700 = vsel %vm331, %v677, 0
        %v703 = vsel %vm331, %v678, 0
        %v706 = vsel %vm331, %v679, 0
        %v709 = vsel %vm331, %v680, 0
        %711 = vmatprep.subr.bf16.mxu0 0
        %712 = vmatpush1.bf16.msra.mxu0 0
        %713 = vmatprep.subr.bf16.mxu0 0
        %714 = vmatpush1.bf16.msra.mxu0 0
        %715 = vmatprep.subr.bf16.mxu0 0
        %716 = vmatpush1.bf16.msra.mxu0 0
        %717 = vmatprep.subr.bf16.mxu0 0
        %718 = vmatpush1.bf16.msra.mxu0 0
        %719 = vmatprep.subr.bf16.mxu0 0
        %720 = vmatpush1.bf16.msra.mxu0 0
        %721 = vmatprep.subr.bf16.mxu0 0
        %722 = vmatpush1.bf16.msra.mxu0 0
        %723 = vmatprep.subr.bf16.mxu0 0
        %724 = vmatpush1.bf16.msra.mxu0 0
        %725 = vmatprep.subr.bf16.mxu0 0
        %726 = vmatpush1.bf16.msra.mxu0 %v685
        %727 = vmatprep.subr.bf16.mxu0 0
        %728 = vmatpush2.bf16.msra.mxu0 0
        %729 = vmatprep.subr.bf16.mxu0 0
        %730 = vmatpush2.bf16.msra.mxu0 0
        %731 = vmatprep.subr.bf16.mxu0 0
        %732 = vmatpush2.bf16.msra.mxu0 0
        %733 = vmatprep.subr.bf16.mxu0 0
        %734 = vmatpush2.bf16.msra.mxu0 0
        %735 = vmatprep.subr.bf16.mxu0 0
        %736 = vmatpush2.bf16.msra.mxu0 0
        %737 = vmatprep.subr.bf16.mxu0 0
        %738 = vmatpush2.bf16.msra.mxu0 0
        %739 = vmatprep.subr.bf16.mxu0 0
        %740 = vmatpush2.bf16.msra.mxu0 0
        %741 = vmatprep.subr.bf16.mxu0 0
        %742 = vmatpush2.bf16.msra.mxu0 0
        %743 = vmatprep.mubr.bf16.mxu0 0
        %744 = vmatmul.mubr.bf16.gmra.mxu0 %v688
        %v745 = vpop.f32.mrf.mxu0
        %v746 = vadd.f32 0.0, %v745
        %v747 = vpop.f32.mrf.mxu0
        %v748 = vpop.f32.mrf.mxu0
        %v749 = vadd.f32 0.0, %v748
        %v750 = vpop.f32.mrf.mxu0
        %751 = vmatprep.mubr.bf16.mxu0 0
        %752 = vmatmul.mubr.bf16.gmra.mxu0 %v691
        %v753 = vpop.f32.mrf.mxu0
        %v754 = vadd.f32 0.0, %v753
        %v755 = vpop.f32.mrf.mxu0
        %v756 = vpop.f32.mrf.mxu0
        %v757 = vadd.f32 0.0, %v756
        %v758 = vpop.f32.mrf.mxu0
        %759 = vmatprep.mubr.bf16.mxu0 0
        %760 = vmatmul.mubr.bf16.gmra.mxu0 %v694
        %v761 = vpop.f32.mrf.mxu0
        %v762 = vadd.f32 0.0, %v761
        %v763 = vpop.f32.mrf.mxu0
        %v764 = vpop.f32.mrf.mxu0
        %v765 = vadd.f32 0.0, %v764
        %v766 = vpop.f32.mrf.mxu0
        %767 = vmatprep.mubr.bf16.mxu0 0
        %768 = vmatmul.mubr.bf16.gmra.mxu0 %v697
        %v769 = vpop.f32.mrf.mxu0
        %v770 = vadd.f32 0.0, %v769
        %v771 = vpop.f32.mrf.mxu0
        %v772 = vpop.f32.mrf.mxu0
        %v773 = vadd.f32 0.0, %v772
        %v774 = vpop.f32.mrf.mxu0
        %775 = vmatprep.mubr.bf16.mxu0 0
        %776 = vmatmul.mubr.bf16.gmra.mxu0 %v700
        %v777 = vpop.f32.mrf.mxu0
        %v778 = vadd.f32 0.0, %v777
        %v779 = vpop.f32.mrf.mxu0
        %v780 = vpop.f32.mrf.mxu0
        %v781 = vadd.f32 0.0, %v780
        %v782 = vpop.f32.mrf.mxu0
        %783 = vmatprep.mubr.bf16.mxu0 0
        %784 = vmatmul.mubr.bf16.gmra.mxu0 %v703
        %v785 = vpop.f32.mrf.mxu0
        %v786 = vadd.f32 0.0, %v785
        %v787 = vpop.f32.mrf.mxu0
        %v788 = vpop.f32.mrf.mxu0
        %v789 = vadd.f32 0.0, %v788
        %v790 = vpop.f32.mrf.mxu0
        %791 = vmatprep.mubr.bf16.mxu0 0
        %792 = vmatmul.mubr.bf16.gmra.mxu0 %v706
        %v793 = vpop.f32.mrf.mxu0
        %v794 = vadd.f32 0.0, %v793
        %v795 = vpop.f32.mrf.mxu0
        %v796 = vpop.f32.mrf.mxu0
        %v797 = vadd.f32 0.0, %v796
        %v798 = vpop.f32.mrf.mxu0
        %799 = vmatprep.mubr.bf16.mxu0 0
        %800 = vmatmul.mubr.bf16.gmra.mxu0 %v709
        %v801 = vpop.f32.mrf.mxu0
        %v802 = vadd.f32 0.0, %v801
        %v803 = vpop.f32.mrf.mxu0
        %v804 = vpop.f32.mrf.mxu0
        %v805 = vadd.f32 0.0, %v804
        %v806 = vpop.f32.mrf.mxu0
        %807 = vdwg.mxu0
        %v808 = vadd.f32 %v558, %v746
        %v809 = vadd.f32 %v561, %v749
        %v810 = vadd.f32 %v566, %v754
        %v811 = vadd.f32 %v569, %v757
        %v812 = vadd.f32 %v574, %v762
        %v813 = vadd.f32 %v577, %v765
        %v814 = vadd.f32 %v582, %v770
        %v815 = vadd.f32 %v585, %v773
        %v816 = vadd.f32 %v590, %v778
        %v817 = vadd.f32 %v593, %v781
        %v818 = vadd.f32 %v598, %v786
        %v819 = vadd.f32 %v601, %v789
        %v820 = vadd.f32 %v606, %v794
        %v821 = vadd.f32 %v609, %v797
        %v822 = vadd.f32 %v614, %v802
        %v823 = vadd.f32 %v617, %v805
        %s824 = sadd.s32 %s243, 96
        %s825 = sshra.s32 %s824, 3
        %s826 = sand.u32 %s824, 7
        %s827 = smul.addr %s825, 4
        %s828 = scalar_lea.vmem %s219, %s827
        %v829 = vld [vmem:[%s828] sm:$0xf]
        %v830 = vld [vmem:[%s828 + $0x4] sm:$0xf]
        %v831 = vld [vmem:[%s828 + $0x8] sm:$0xf]
        %v832 = vld [vmem:[%s828 + $0xc] sm:$0xf]
        %v833 = vld [vmem:[%s828 + $0x10] sm:$0xf]
        %v834 = vld [vmem:[%s828 + $0x14] sm:$0xf]
        %v835 = vld [vmem:[%s828 + $0x18] sm:$0xf]
        %v836 = vld [vmem:[%s828 + $0x1c] sm:$0xf]
        %v837 = vld [vmem:[%s828 + $0x20] sm:$0xf]
        %v838 = vld [vmem:[%s828 + $0x24] sm:$0xf]
        %v839 = vld [vmem:[%s828 + $0x28] sm:$0xf]
        %v840 = vld [vmem:[%s828 + $0x2c] sm:$0xf]
        %v841 = vld [vmem:[%s828 + $0x30] sm:$0xf]
        %v842 = vld [vmem:[%s828 + $0x34] sm:$0xf]
        %v843 = vld [vmem:[%s828 + $0x38] sm:$0xf]
        %v844 = vld [vmem:[%s828 + $0x3c] sm:$0xf]
        %v861 = vunpack.c.l.b16 %v829
        %v862 = vunpack.c.l.b16 %v830
        %v863 = vunpack.c.l.b16 %v831
        %v864 = vunpack.c.l.b16 %v832
        %v865 = vunpack.c.l.b16 %v833
        %v866 = vunpack.c.l.b16 %v834
        %v867 = vunpack.c.l.b16 %v835
        %v868 = vunpack.c.l.b16 %v836
        %v869 = vunpack.c.l.b16 %v837
        %v870 = vunpack.c.l.b16 %v838
        %v871 = vunpack.c.l.b16 %v839
        %v872 = vunpack.c.l.b16 %v840
        %v873 = vunpack.c.l.b16 %v841
        %v874 = vunpack.c.l.b16 %v842
        %v875 = vunpack.c.l.b16 %v843
        %v876 = vunpack.c.l.b16 %v844
        %v877 = vpack.c.b16 %v862, %v861
        %v878 = vpack.c.b16 %v864, %v863
        %v879 = vpack.c.b16 %v866, %v865
        %v880 = vpack.c.b16 %v868, %v867
        %v881 = vpack.c.b16 %v870, %v869
        %v882 = vpack.c.b16 %v872, %v871
        %v883 = vpack.c.b16 %v874, %v873
        %v884 = vpack.c.b16 %v876, %v875
        %v887 = vunpack.c.l.b16 %v232
        %v888 = vunpack.c.l.b16 %v233
        %v889 = vpack.c.b16 %v888, %v887
        %v892 = vsel %vm331, %v877, 0
        %v895 = vsel %vm331, %v878, 0
        %v898 = vsel %vm331, %v879, 0
        %v901 = vsel %vm331, %v880, 0
        %v904 = vsel %vm331, %v881, 0
        %v907 = vsel %vm331, %v882, 0
        %v910 = vsel %vm331, %v883, 0
        %v913 = vsel %vm331, %v884, 0
        %915 = vmatprep.subr.bf16.mxu0 0
        %916 = vmatpush1.bf16.msra.mxu0 0
        %917 = vmatprep.subr.bf16.mxu0 0
        %918 = vmatpush1.bf16.msra.mxu0 0
        %919 = vmatprep.subr.bf16.mxu0 0
        %920 = vmatpush1.bf16.msra.mxu0 0
        %921 = vmatprep.subr.bf16.mxu0 0
        %922 = vmatpush1.bf16.msra.mxu0 0
        %923 = vmatprep.subr.bf16.mxu0 0
        %924 = vmatpush1.bf16.msra.mxu0 0
        %925 = vmatprep.subr.bf16.mxu0 0
        %926 = vmatpush1.bf16.msra.mxu0 0
        %927 = vmatprep.subr.bf16.mxu0 0
        %928 = vmatpush1.bf16.msra.mxu0 0
        %929 = vmatprep.subr.bf16.mxu0 0
        %930 = vmatpush1.bf16.msra.mxu0 %v889
        %931 = vmatprep.subr.bf16.mxu0 0
        %932 = vmatpush2.bf16.msra.mxu0 0
        %933 = vmatprep.subr.bf16.mxu0 0
        %934 = vmatpush2.bf16.msra.mxu0 0
        %935 = vmatprep.subr.bf16.mxu0 0
        %936 = vmatpush2.bf16.msra.mxu0 0
        %937 = vmatprep.subr.bf16.mxu0 0
        %938 = vmatpush2.bf16.msra.mxu0 0
        %939 = vmatprep.subr.bf16.mxu0 0
        %940 = vmatpush2.bf16.msra.mxu0 0
        %941 = vmatprep.subr.bf16.mxu0 0
        %942 = vmatpush2.bf16.msra.mxu0 0
        %943 = vmatprep.subr.bf16.mxu0 0
        %944 = vmatpush2.bf16.msra.mxu0 0
        %945 = vmatprep.subr.bf16.mxu0 0
        %946 = vmatpush2.bf16.msra.mxu0 0
        %947 = vmatprep.mubr.bf16.mxu0 0
        %948 = vmatmul.mubr.bf16.gmra.mxu0 %v892
        %v949 = vpop.f32.mrf.mxu0
        %v950 = vadd.f32 0.0, %v949
        %v951 = vpop.f32.mrf.mxu0
        %v952 = vpop.f32.mrf.mxu0
        %v953 = vadd.f32 0.0, %v952
        %v954 = vpop.f32.mrf.mxu0
        %955 = vmatprep.mubr.bf16.mxu0 0
        %956 = vmatmul.mubr.bf16.gmra.mxu0 %v895
        %v957 = vpop.f32.mrf.mxu0
        %v958 = vadd.f32 0.0, %v957
        %v959 = vpop.f32.mrf.mxu0
        %v960 = vpop.f32.mrf.mxu0
        %v961 = vadd.f32 0.0, %v960
        %v962 = vpop.f32.mrf.mxu0
        %963 = vmatprep.mubr.bf16.mxu0 0
        %964 = vmatmul.mubr.bf16.gmra.mxu0 %v898
        %v965 = vpop.f32.mrf.mxu0
        %v966 = vadd.f32 0.0, %v965
        %v967 = vpop.f32.mrf.mxu0
        %v968 = vpop.f32.mrf.mxu0
        %v969 = vadd.f32 0.0, %v968
        %v970 = vpop.f32.mrf.mxu0
        %971 = vmatprep.mubr.bf16.mxu0 0
        %972 = vmatmul.mubr.bf16.gmra.mxu0 %v901
        %v973 = vpop.f32.mrf.mxu0
        %v974 = vadd.f32 0.0, %v973
        %v975 = vpop.f32.mrf.mxu0
        %v976 = vpop.f32.mrf.mxu0
        %v977 = vadd.f32 0.0, %v976
        %v978 = vpop.f32.mrf.mxu0
        %979 = vmatprep.mubr.bf16.mxu0 0
        %980 = vmatmul.mubr.bf16.gmra.mxu0 %v904
        %v981 = vpop.f32.mrf.mxu0
        %v982 = vadd.f32 0.0, %v981
        %v983 = vpop.f32.mrf.mxu0
        %v984 = vpop.f32.mrf.mxu0
        %v985 = vadd.f32 0.0, %v984
        %v986 = vpop.f32.mrf.mxu0
        %987 = vmatprep.mubr.bf16.mxu0 0
        %988 = vmatmul.mubr.bf16.gmra.mxu0 %v907
        %v989 = vpop.f32.mrf.mxu0
        %v990 = vadd.f32 0.0, %v989
        %v991 = vpop.f32.mrf.mxu0
        %v992 = vpop.f32.mrf.mxu0
        %v993 = vadd.f32 0.0, %v992
        %v994 = vpop.f32.mrf.mxu0
        %995 = vmatprep.mubr.bf16.mxu0 0
        %996 = vmatmul.mubr.bf16.gmra.mxu0 %v910
        %v997 = vpop.f32.mrf.mxu0
        %v998 = vadd.f32 0.0, %v997
        %v999 = vpop.f32.mrf.mxu0
        %v1000 = vpop.f32.mrf.mxu0
        %v1001 = vadd.f32 0.0, %v1000
        %v1002 = vpop.f32.mrf.mxu0
        %1003 = vmatprep.mubr.bf16.mxu0 0
        %1004 = vmatmul.mubr.bf16.gmra.mxu0 %v913
        %v1005 = vpop.f32.mrf.mxu0
        %v1006 = vadd.f32 0.0, %v1005
        %v1007 = vpop.f32.mrf.mxu0
        %v1008 = vpop.f32.mrf.mxu0
        %v1009 = vadd.f32 0.0, %v1008
        %v1010 = vpop.f32.mrf.mxu0
        %1011 = vdwg.mxu0
        %v1012 = vadd.f32 %v808, %v950
        %v1013 = vadd.f32 %v809, %v953
        %v1014 = vadd.f32 %v810, %v958
        %v1015 = vadd.f32 %v811, %v961
        %v1016 = vadd.f32 %v812, %v966
        %v1017 = vadd.f32 %v813, %v969
        %v1018 = vadd.f32 %v814, %v974
        %v1019 = vadd.f32 %v815, %v977
        %v1020 = vadd.f32 %v816, %v982
        %v1021 = vadd.f32 %v817, %v985
        %v1022 = vadd.f32 %v818, %v990
        %v1023 = vadd.f32 %v819, %v993
        %v1024 = vadd.f32 %v820, %v998
        %v1025 = vadd.f32 %v821, %v1001
        %v1026 = vadd.f32 %v822, %v1006
        %v1027 = vadd.f32 %v823, %v1009
        %s1028 = sadd.s32 %s243, 128
        %s1029 = sshra.s32 %s1028, 3
        %s1030 = sand.u32 %s1028, 7
        %s1031 = smul.addr %s1029, 4
        %s1032 = scalar_lea.vmem %s219, %s1031
        %v1033 = vld [vmem:[%s1032] sm:$0xf]
        %v1034 = vld [vmem:[%s1032 + $0x4] sm:$0xf]
        %v1035 = vld [vmem:[%s1032 + $0x8] sm:$0xf]
        %v1036 = vld [vmem:[%s1032 + $0xc] sm:$0xf]
        %v1037 = vld [vmem:[%s1032 + $0x10] sm:$0xf]
        %v1038 = vld [vmem:[%s1032 + $0x14] sm:$0xf]
        %v1039 = vld [vmem:[%s1032 + $0x18] sm:$0xf]
        %v1040 = vld [vmem:[%s1032 + $0x1c] sm:$0xf]
        %v1041 = vld [vmem:[%s1032 + $0x20] sm:$0xf]
        %v1042 = vld [vmem:[%s1032 + $0x24] sm:$0xf]
        %v1043 = vld [vmem:[%s1032 + $0x28] sm:$0xf]
        %v1044 = vld [vmem:[%s1032 + $0x2c] sm:$0xf]
        %v1045 = vld [vmem:[%s1032 + $0x30] sm:$0xf]
        %v1046 = vld [vmem:[%s1032 + $0x34] sm:$0xf]
        %v1047 = vld [vmem:[%s1032 + $0x38] sm:$0xf]
        %v1048 = vld [vmem:[%s1032 + $0x3c] sm:$0xf]
        %v1065 = vunpack.c.l.b16 %v1033
        %v1066 = vunpack.c.l.b16 %v1034
        %v1067 = vunpack.c.l.b16 %v1035
        %v1068 = vunpack.c.l.b16 %v1036
        %v1069 = vunpack.c.l.b16 %v1037
        %v1070 = vunpack.c.l.b16 %v1038
        %v1071 = vunpack.c.l.b16 %v1039
        %v1072 = vunpack.c.l.b16 %v1040
        %v1073 = vunpack.c.l.b16 %v1041
        %v1074 = vunpack.c.l.b16 %v1042
        %v1075 = vunpack.c.l.b16 %v1043
        %v1076 = vunpack.c.l.b16 %v1044
        %v1077 = vunpack.c.l.b16 %v1045
        %v1078 = vunpack.c.l.b16 %v1046
        %v1079 = vunpack.c.l.b16 %v1047
        %v1080 = vunpack.c.l.b16 %v1048
        %v1081 = vpack.c.b16 %v1066, %v1065
        %v1082 = vpack.c.b16 %v1068, %v1067
        %v1083 = vpack.c.b16 %v1070, %v1069
        %v1084 = vpack.c.b16 %v1072, %v1071
        %v1085 = vpack.c.b16 %v1074, %v1073
        %v1086 = vpack.c.b16 %v1076, %v1075
        %v1087 = vpack.c.b16 %v1078, %v1077
        %v1088 = vpack.c.b16 %v1080, %v1079
        %v1091 = vunpack.c.l.b16 %v234
        %v1092 = vunpack.c.l.b16 %v235
        %v1093 = vpack.c.b16 %v1092, %v1091
        %v1096 = vsel %vm331, %v1081, 0
        %v1099 = vsel %vm331, %v1082, 0
        %v1102 = vsel %vm331, %v1083, 0
        %v1105 = vsel %vm331, %v1084, 0
        %v1108 = vsel %vm331, %v1085, 0
        %v1111 = vsel %vm331, %v1086, 0
        %v1114 = vsel %vm331, %v1087, 0
        %v1117 = vsel %vm331, %v1088, 0
        %1119 = vmatprep.subr.bf16.mxu0 0
        %1120 = vmatpush1.bf16.msra.mxu0 0
        %1121 = vmatprep.subr.bf16.mxu0 0
        %1122 = vmatpush1.bf16.msra.mxu0 0
        %1123 = vmatprep.subr.bf16.mxu0 0
        %1124 = vmatpush1.bf16.msra.mxu0 0
        %1125 = vmatprep.subr.bf16.mxu0 0
        %1126 = vmatpush1.bf16.msra.mxu0 0
        %1127 = vmatprep.subr.bf16.mxu0 0
        %1128 = vmatpush1.bf16.msra.mxu0 0
        %1129 = vmatprep.subr.bf16.mxu0 0
        %1130 = vmatpush1.bf16.msra.mxu0 0
        %1131 = vmatprep.subr.bf16.mxu0 0
        %1132 = vmatpush1.bf16.msra.mxu0 0
        %1133 = vmatprep.subr.bf16.mxu0 0
        %1134 = vmatpush1.bf16.msra.mxu0 %v1093
        %1135 = vmatprep.subr.bf16.mxu0 0
        %1136 = vmatpush2.bf16.msra.mxu0 0
        %1137 = vmatprep.subr.bf16.mxu0 0
        %1138 = vmatpush2.bf16.msra.mxu0 0
        %1139 = vmatprep.subr.bf16.mxu0 0
        %1140 = vmatpush2.bf16.msra.mxu0 0
        %1141 = vmatprep.subr.bf16.mxu0 0
        %1142 = vmatpush2.bf16.msra.mxu0 0
        %1143 = vmatprep.subr.bf16.mxu0 0
        %1144 = vmatpush2.bf16.msra.mxu0 0
        %1145 = vmatprep.subr.bf16.mxu0 0
        %1146 = vmatpush2.bf16.msra.mxu0 0
        %1147 = vmatprep.subr.bf16.mxu0 0
        %1148 = vmatpush2.bf16.msra.mxu0 0
        %1149 = vmatprep.subr.bf16.mxu0 0
        %1150 = vmatpush2.bf16.msra.mxu0 0
        %1151 = vmatprep.mubr.bf16.mxu0 0
        %1152 = vmatmul.mubr.bf16.gmra.mxu0 %v1096
        %v1153 = vpop.f32.mrf.mxu0
        %v1154 = vadd.f32 0.0, %v1153
        %v1155 = vpop.f32.mrf.mxu0
        %v1156 = vpop.f32.mrf.mxu0
        %v1157 = vadd.f32 0.0, %v1156
        %v1158 = vpop.f32.mrf.mxu0
        %1159 = vmatprep.mubr.bf16.mxu0 0
        %1160 = vmatmul.mubr.bf16.gmra.mxu0 %v1099
        %v1161 = vpop.f32.mrf.mxu0
        %v1162 = vadd.f32 0.0, %v1161
        %v1163 = vpop.f32.mrf.mxu0
        %v1164 = vpop.f32.mrf.mxu0
        %v1165 = vadd.f32 0.0, %v1164
        %v1166 = vpop.f32.mrf.mxu0
        %1167 = vmatprep.mubr.bf16.mxu0 0
        %1168 = vmatmul.mubr.bf16.gmra.mxu0 %v1102
        %v1169 = vpop.f32.mrf.mxu0
        %v1170 = vadd.f32 0.0, %v1169
        %v1171 = vpop.f32.mrf.mxu0
        %v1172 = vpop.f32.mrf.mxu0
        %v1173 = vadd.f32 0.0, %v1172
        %v1174 = vpop.f32.mrf.mxu0
        %1175 = vmatprep.mubr.bf16.mxu0 0
        %1176 = vmatmul.mubr.bf16.gmra.mxu0 %v1105
        %v1177 = vpop.f32.mrf.mxu0
        %v1178 = vadd.f32 0.0, %v1177
        %v1179 = vpop.f32.mrf.mxu0
        %v1180 = vpop.f32.mrf.mxu0
        %v1181 = vadd.f32 0.0, %v1180
        %v1182 = vpop.f32.mrf.mxu0
        %1183 = vmatprep.mubr.bf16.mxu0 0
        %1184 = vmatmul.mubr.bf16.gmra.mxu0 %v1108
        %v1185 = vpop.f32.mrf.mxu0
        %v1186 = vadd.f32 0.0, %v1185
        %v1187 = vpop.f32.mrf.mxu0
        %v1188 = vpop.f32.mrf.mxu0
        %v1189 = vadd.f32 0.0, %v1188
        %v1190 = vpop.f32.mrf.mxu0
        %1191 = vmatprep.mubr.bf16.mxu0 0
        %1192 = vmatmul.mubr.bf16.gmra.mxu0 %v1111
        %v1193 = vpop.f32.mrf.mxu0
        %v1194 = vadd.f32 0.0, %v1193
        %v1195 = vpop.f32.mrf.mxu0
        %v1196 = vpop.f32.mrf.mxu0
        %v1197 = vadd.f32 0.0, %v1196
        %v1198 = vpop.f32.mrf.mxu0
        %1199 = vmatprep.mubr.bf16.mxu0 0
        %1200 = vmatmul.mubr.bf16.gmra.mxu0 %v1114
        %v1201 = vpop.f32.mrf.mxu0
        %v1202 = vadd.f32 0.0, %v1201
        %v1203 = vpop.f32.mrf.mxu0
        %v1204 = vpop.f32.mrf.mxu0
        %v1205 = vadd.f32 0.0, %v1204
        %v1206 = vpop.f32.mrf.mxu0
        %1207 = vmatprep.mubr.bf16.mxu0 0
        %1208 = vmatmul.mubr.bf16.gmra.mxu0 %v1117
        %v1209 = vpop.f32.mrf.mxu0
        %v1210 = vadd.f32 0.0, %v1209
        %v1211 = vpop.f32.mrf.mxu0
        %v1212 = vpop.f32.mrf.mxu0
        %v1213 = vadd.f32 0.0, %v1212
        %v1214 = vpop.f32.mrf.mxu0
        %1215 = vdwg.mxu0
        %v1216 = vadd.f32 %v1012, %v1154
        %v1217 = vadd.f32 %v1013, %v1157
        %v1218 = vadd.f32 %v1014, %v1162
        %v1219 = vadd.f32 %v1015, %v1165
        %v1220 = vadd.f32 %v1016, %v1170
        %v1221 = vadd.f32 %v1017, %v1173
        %v1222 = vadd.f32 %v1018, %v1178
        %v1223 = vadd.f32 %v1019, %v1181
        %v1224 = vadd.f32 %v1020, %v1186
        %v1225 = vadd.f32 %v1021, %v1189
        %v1226 = vadd.f32 %v1022, %v1194
        %v1227 = vadd.f32 %v1023, %v1197
        %v1228 = vadd.f32 %v1024, %v1202
        %v1229 = vadd.f32 %v1025, %v1205
        %v1230 = vadd.f32 %v1026, %v1210
        %v1231 = vadd.f32 %v1027, %v1213
        %v1233 = vlaneseq
        %v1234 = vshrl.u32 %v1233, 7
        %v1235 = vsub.s32 0, %v1234
        %v1236 = vrot.slane %v236, %v1235
        %v1238 = vadd.f32 %v1216, %v1236
        %v1239 = vadd.f32 %v1217, %v1236
        %v1240 = vadd.f32 %v1218, %v1236
        %v1241 = vadd.f32 %v1219, %v1236
        %v1242 = vadd.f32 %v1220, %v1236
        %v1243 = vadd.f32 %v1221, %v1236
        %v1244 = vadd.f32 %v1222, %v1236
        %v1245 = vadd.f32 %v1223, %v1236
        %v1246 = vadd.f32 %v1224, %v1236
        %v1247 = vadd.f32 %v1225, %v1236
        %v1248 = vadd.f32 %v1226, %v1236
        %v1249 = vadd.f32 %v1227, %v1236
        %v1250 = vadd.f32 %v1228, %v1236
        %v1251 = vadd.f32 %v1229, %v1236
        %v1252 = vadd.f32 %v1230, %v1236
        %v1253 = vadd.f32 %v1231, %v1236
        %v1254 = vmax.f32 %v1238, 0.0
        %v1255 = vmax.f32 %v1239, 0.0
        %v1256 = vmax.f32 %v1240, 0.0
        %v1257 = vmax.f32 %v1241, 0.0
        %v1258 = vmax.f32 %v1242, 0.0
        %v1259 = vmax.f32 %v1243, 0.0
        %v1260 = vmax.f32 %v1244, 0.0
        %v1261 = vmax.f32 %v1245, 0.0
        %v1262 = vmax.f32 %v1246, 0.0
        %v1263 = vmax.f32 %v1247, 0.0
        %v1264 = vmax.f32 %v1248, 0.0
        %v1265 = vmax.f32 %v1249, 0.0
        %v1266 = vmax.f32 %v1250, 0.0
        %v1267 = vmax.f32 %v1251, 0.0
        %v1268 = vmax.f32 %v1252, 0.0
        %v1269 = vmax.f32 %v1253, 0.0
        %v1270 = vmax.f32 %v1254, %v1258
        %v1271 = vmax.f32 %v1255, %v1259
        %v1272 = vmax.f32 %v1256, %v1260
        %v1273 = vmax.f32 %v1257, %v1261
        %v1274 = vmax.f32 %v1262, %v1266
        %v1275 = vmax.f32 %v1263, %v1267
        %v1276 = vmax.f32 %v1264, %v1268
        %v1277 = vmax.f32 %v1265, %v1269
        %s1278 = smul.u32 %s238, 2
        %s1279 = smul.u32 %s1278, 40
        %s1280 = scalar_lea.vmem [#allocation2], %s1279
        %1281 = vst.msk [vmem:[%s1280] sm:$0xff] %vm331, %v1270
        %1282 = vst.msk [vmem:[%s1280 + $0x8] sm:$0xff] %vm331, %v1271
        %1283 = vst.msk [vmem:[%s1280 + $0x10] sm:$0xff] %vm331, %v1272
        %1284 = vst.msk [vmem:[%s1280 + $0x18] sm:$0xff] %vm331, %v1273
        %1285 = vst.msk [vmem:[%s1280 + $0x20] sm:$0xff] %vm331, 0.0
        %1286 = vst.msk [vmem:[%s1280 + $0x28] sm:$0xff] %vm331, %v1274
        %1287 = vst.msk [vmem:[%s1280 + $0x30] sm:$0xff] %vm331, %v1275
        %1288 = vst.msk [vmem:[%s1280 + $0x38] sm:$0xff] %vm331, %v1276
        %1289 = vst.msk [vmem:[%s1280 + $0x40] sm:$0xff] %vm331, %v1277
        %1290 = vst.msk [vmem:[%s1280 + $0x48] sm:$0xff] %vm331, 0.0
      $region45: #{convnet_forward.2} parent=39 // loop_footer
        %s242 = sadd.s32 1, %s238
      $region46: #{convnet_forward.2} parent=39 // loop_footer_branch
        %237 = sbr.rel target = $region42
      $region47: #{convnet_forward.2} parent=39 // loop_exit
        _
      %v1291 = vld [vmem:[%s3] sm:$0xf]
      %v1292 = vld [vmem:[%s3 + $0x4] sm:$0xf]
      %v1293 = vld [vmem:[%s3 + $0x8] sm:$0xf]
      %v1294 = vld [vmem:[%s3 + $0xc] sm:$0xf]
      %v1295 = vld [vmem:[%s3 + $0x10] sm:$0xf]
      %v1296 = vld [vmem:[%s3 + $0x14] sm:$0xf]
      %v1297 = vld [vmem:[%s3 + $0x18] sm:$0xf]
      %v1298 = vld [vmem:[%s3 + $0x1c] sm:$0xf]
      %v1299 = vld [vmem:[%s3 + $0x20] sm:$0xf]
      %v1300 = vld [vmem:[%s3 + $0x24] sm:$0xf]
      %v1301 = vld [vmem:[%s3 + $0x28] sm:$0xf]
      %v1302 = vld [vmem:[%s3 + $0x2c] sm:$0xf]
      %v1303 = vld [vmem:[%s3 + $0x30] sm:$0xf]
      %v1304 = vld [vmem:[%s3 + $0x34] sm:$0xf]
      %v1305 = vld [vmem:[%s3 + $0x38] sm:$0xf]
      %v1306 = vld [vmem:[%s3 + $0x3c] sm:$0xf]
      %v1307 = vld [vmem:[%s3 + $0x40] sm:$0xf]
      %v1308 = vld [vmem:[%s3 + $0x44] sm:$0xf]
      %v1309 = vld [vmem:[%s3 + $0x48] sm:$0xf]
      %v1310 = vld [vmem:[%s3 + $0x4c] sm:$0xf]
      %v1311 = vld [vmem:[%s3 + $0x50] sm:$0xf]
      %v1312 = vld [vmem:[%s3 + $0x54] sm:$0xf]
      %v1313 = vld [vmem:[%s3 + $0x58] sm:$0xf]
      %v1314 = vld [vmem:[%s3 + $0x5c] sm:$0xf]
      %v1315 = vld [vmem:[%s3 + $0x60] sm:$0xf]
      %v1316 = vld [vmem:[%s3 + $0x64] sm:$0xf]
      %v1317 = vld [vmem:[%s3 + $0x68] sm:$0xf]
      %v1318 = vld [vmem:[%s3 + $0x6c] sm:$0xf]
      %v1319 = vld [vmem:[%s3 + $0x70] sm:$0xf]
      %v1320 = vld [vmem:[%s3 + $0x74] sm:$0xf]
      %v1321 = vld [vmem:[%s3 + $0x78] sm:$0xf]
      %v1322 = vld [vmem:[%s3 + $0x7c] sm:$0xf]
      %v1323 = vld [vmem:[%s3 + $0x80] sm:$0xf]
      %v1324 = vld [vmem:[%s3 + $0x84] sm:$0xf]
      %v1325 = vld [vmem:[%s3 + $0x88] sm:$0xf]
      %v1326 = vld [vmem:[%s3 + $0x8c] sm:$0xf]
      %v1327 = vld [vmem:[%s3 + $0x90] sm:$0xf]
      %v1328 = vld [vmem:[%s3 + $0x94] sm:$0xf]
      %v1329 = vld [vmem:[%s3 + $0x98] sm:$0xf]
      %v1330 = vld [vmem:[%s3 + $0x9c] sm:$0xf]
      %v1331 = vld [vmem:[%s3 + $0xa0] sm:$0xf]
      %v1332 = vld [vmem:[%s3 + $0xa4] sm:$0xf]
      %v1333 = vld [vmem:[%s3 + $0xa8] sm:$0xf]
      %v1334 = vld [vmem:[%s3 + $0xac] sm:$0xf]
      %v1335 = vld [vmem:[%s3 + $0xb0] sm:$0xf]
      %v1336 = vld [vmem:[%s3 + $0xb4] sm:$0xf]
      %v1337 = vld [vmem:[%s3 + $0xb8] sm:$0xf]
      %v1338 = vld [vmem:[%s3 + $0xbc] sm:$0xf]
      %v1339 = vld [vmem:[%s3 + $0xc0] sm:$0xf]
      %v1340 = vld [vmem:[%s3 + $0xc4] sm:$0xf]
      %v1341 = vld [vmem:[%s4] sm:$0x1]
      %v1342 = vld [vmem:[#allocation2] ss:$2 sm:$0xff]
      %s1343 = scalar_lea.vmem [#allocation2], 16
      %v1344 = vld [vmem:[%s1343] ss:$2 sm:$0xff]
      %s1345 = scalar_lea.vmem [#allocation2], 40
      %v1346 = vld [vmem:[%s1345] ss:$2 sm:$0xff]
      %s1347 = scalar_lea.vmem [#allocation2], 56
      %v1348 = vld [vmem:[%s1347] ss:$2 sm:$0xff]
      %s1349 = scalar_lea.vmem [#allocation2], 80
      %v1350 = vld [vmem:[%s1349] ss:$2 sm:$0xff]
      %s1351 = scalar_lea.vmem [#allocation2], 96
      %v1352 = vld [vmem:[%s1351] ss:$2 sm:$0xff]
      %s1353 = scalar_lea.vmem [#allocation2], 120
      %v1354 = vld [vmem:[%s1353] ss:$2 sm:$0xff]
      %s1355 = scalar_lea.vmem [#allocation2], 136
      %v1356 = vld [vmem:[%s1355] ss:$2 sm:$0xff]
      %s1357 = scalar_lea.vmem [#allocation2], 160
      %v1358 = vld [vmem:[%s1357] ss:$2 sm:$0xff]
      %s1359 = scalar_lea.vmem [#allocation2], 176
      %v1360 = vld [vmem:[%s1359] ss:$2 sm:$0xff]
      %s1361 = scalar_lea.vmem [#allocation2], 200
      %v1362 = vld [vmem:[%s1361] ss:$2 sm:$0xff]
      %s1363 = scalar_lea.vmem [#allocation2], 216
      %v1364 = vld [vmem:[%s1363] ss:$2 sm:$0xff]
      %s1365 = scalar_lea.vmem [#allocation2], 240
      %v1366 = vld [vmem:[%s1365] ss:$2 sm:$0xff]
      %s1367 = scalar_lea.vmem [#allocation2], 256
      %v1368 = vld [vmem:[%s1367] ss:$2 sm:$0xff]
      %s1369 = scalar_lea.vmem [#allocation2], 280
      %v1370 = vld [vmem:[%s1369] ss:$2 sm:$0xff]
      %s1371 = scalar_lea.vmem [#allocation2], 296
      %v1372 = vld [vmem:[%s1371] ss:$2 sm:$0xff]
      %s1373 = scalar_lea.vmem [#allocation2], 320
      %v1374 = vld [vmem:[%s1373] ss:$2 sm:$0xff]
      %s1375 = scalar_lea.vmem [#allocation2], 336
      %v1376 = vld [vmem:[%s1375] ss:$2 sm:$0xff]
      %s1377 = scalar_lea.vmem [#allocation2], 360
      %v1378 = vld [vmem:[%s1377] ss:$2 sm:$0xff]
      %s1379 = scalar_lea.vmem [#allocation2], 376
      %v1380 = vld [vmem:[%s1379] ss:$2 sm:$0xff]
      %s1381 = scalar_lea.vmem [#allocation2], 400
      %v1382 = vld [vmem:[%s1381] ss:$2 sm:$0xff]
      %s1383 = scalar_lea.vmem [#allocation2], 416
      %v1384 = vld [vmem:[%s1383] ss:$2 sm:$0xff]
      %s1385 = scalar_lea.vmem [#allocation2], 440
      %v1386 = vld [vmem:[%s1385] ss:$2 sm:$0xff]
      %s1387 = scalar_lea.vmem [#allocation2], 456
      %v1388 = vld [vmem:[%s1387] ss:$2 sm:$0xff]
      %s1389 = scalar_lea.vmem [#allocation2], 480
      %v1390 = vld [vmem:[%s1389] ss:$2 sm:$0xff]
      %s1391 = scalar_lea.vmem [#allocation2], 496
      %v1392 = vld [vmem:[%s1391] ss:$2 sm:$0xff]
      %s1393 = scalar_lea.vmem [#allocation2], 520
      %v1394 = vld [vmem:[%s1393] ss:$2 sm:$0xff]
      %s1395 = scalar_lea.vmem [#allocation2], 536
      %v1396 = vld [vmem:[%s1395] ss:$2 sm:$0xff]
      %s1397 = scalar_lea.vmem [#allocation2], 1
      %v1398 = vld [vmem:[%s1397] ss:$2 sm:$0xff]
      %s1399 = scalar_lea.vmem [#allocation2], 17
      %v1400 = vld [vmem:[%s1399] ss:$2 sm:$0xff]
      %s1401 = scalar_lea.vmem [#allocation2], 41
      %v1402 = vld [vmem:[%s1401] ss:$2 sm:$0xff]
      %s1403 = scalar_lea.vmem [#allocation2], 57
      %v1404 = vld [vmem:[%s1403] ss:$2 sm:$0xff]
      %s1405 = scalar_lea.vmem [#allocation2], 81
      %v1406 = vld [vmem:[%s1405] ss:$2 sm:$0xff]
      %s1407 = scalar_lea.vmem [#allocation2], 97
      %v1408 = vld [vmem:[%s1407] ss:$2 sm:$0xff]
      %s1409 = scalar_lea.vmem [#allocation2], 121
      %v1410 = vld [vmem:[%s1409] ss:$2 sm:$0xff]
      %s1411 = scalar_lea.vmem [#allocation2], 137
      %v1412 = vld [vmem:[%s1411] ss:$2 sm:$0xff]
      %s1413 = scalar_lea.vmem [#allocation2], 161
      %v1414 = vld [vmem:[%s1413] ss:$2 sm:$0xff]
      %s1415 = scalar_lea.vmem [#allocation2], 177
      %v1416 = vld [vmem:[%s1415] ss:$2 sm:$0xff]
      %s1417 = scalar_lea.vmem [#allocation2], 201
      %v1418 = vld [vmem:[%s1417] ss:$2 sm:$0xff]
      %s1419 = scalar_lea.vmem [#allocation2], 217
      %v1420 = vld [vmem:[%s1419] ss:$2 sm:$0xff]
      %s1421 = scalar_lea.vmem [#allocation2], 241
      %v1422 = vld [vmem:[%s1421] ss:$2 sm:$0xff]
      %s1423 = scalar_lea.vmem [#allocation2], 257
      %v1424 = vld [vmem:[%s1423] ss:$2 sm:$0xff]
      %s1425 = scalar_lea.vmem [#allocation2], 281
      %v1426 = vld [vmem:[%s1425] ss:$2 sm:$0xff]
      %s1427 = scalar_lea.vmem [#allocation2], 297
      %v1428 = vld [vmem:[%s1427] ss:$2 sm:$0xff]
      %s1429 = scalar_lea.vmem [#allocation2], 321
      %v1430 = vld [vmem:[%s1429] ss:$2 sm:$0xff]
      %s1431 = scalar_lea.vmem [#allocation2], 337
      %v1432 = vld [vmem:[%s1431] ss:$2 sm:$0xff]
      %s1433 = scalar_lea.vmem [#allocation2], 361
      %v1434 = vld [vmem:[%s1433] ss:$2 sm:$0xff]
      %s1435 = scalar_lea.vmem [#allocation2], 377
      %v1436 = vld [vmem:[%s1435] ss:$2 sm:$0xff]
      %s1437 = scalar_lea.vmem [#allocation2], 401
      %v1438 = vld [vmem:[%s1437] ss:$2 sm:$0xff]
      %s1439 = scalar_lea.vmem [#allocation2], 417
      %v1440 = vld [vmem:[%s1439] ss:$2 sm:$0xff]
      %s1441 = scalar_lea.vmem [#allocation2], 441
      %v1442 = vld [vmem:[%s1441] ss:$2 sm:$0xff]
      %s1443 = scalar_lea.vmem [#allocation2], 457
      %v1444 = vld [vmem:[%s1443] ss:$2 sm:$0xff]
      %s1445 = scalar_lea.vmem [#allocation2], 481
      %v1446 = vld [vmem:[%s1445] ss:$2 sm:$0xff]
      %s1447 = scalar_lea.vmem [#allocation2], 497
      %v1448 = vld [vmem:[%s1447] ss:$2 sm:$0xff]
      %s1449 = scalar_lea.vmem [#allocation2], 521
      %v1450 = vld [vmem:[%s1449] ss:$2 sm:$0xff]
      %s1451 = scalar_lea.vmem [#allocation2], 537
      %v1452 = vld [vmem:[%s1451] ss:$2 sm:$0xff]
      %v1453 = vmax.f32 %v1342, %v1398
      %v1454 = vmax.f32 %v1344, %v1400
      %v1455 = vmax.f32 %v1346, %v1402
      %v1456 = vmax.f32 %v1348, %v1404
      %v1457 = vmax.f32 %v1350, %v1406
      %v1458 = vmax.f32 %v1352, %v1408
      %v1459 = vmax.f32 %v1354, %v1410
      %v1460 = vmax.f32 %v1356, %v1412
      %v1461 = vmax.f32 %v1358, %v1414
      %v1462 = vmax.f32 %v1360, %v1416
      %v1463 = vmax.f32 %v1362, %v1418
      %v1464 = vmax.f32 %v1364, %v1420
      %v1465 = vmax.f32 %v1366, %v1422
      %v1466 = vmax.f32 %v1368, %v1424
      %v1467 = vmax.f32 %v1370, %v1426
      %v1468 = vmax.f32 %v1372, %v1428
      %v1469 = vmax.f32 %v1374, %v1430
      %v1470 = vmax.f32 %v1376, %v1432
      %v1471 = vmax.f32 %v1378, %v1434
      %v1472 = vmax.f32 %v1380, %v1436
      %v1473 = vmax.f32 %v1382, %v1438
      %v1474 = vmax.f32 %v1384, %v1440
      %v1475 = vmax.f32 %v1386, %v1442
      %v1476 = vmax.f32 %v1388, %v1444
      %v1477 = vmax.f32 %v1390, %v1446
      %v1478 = vmax.f32 %v1392, %v1448
      %v1479 = vmax.f32 %v1394, %v1450
      %v1480 = vmax.f32 %v1396, %v1452
      %v1481 = vpack.c.bf16 %v1454, %v1453
      %v1482 = vpack.c.bf16 %v1456, %v1455
      %v1483 = vpack.c.bf16 %v1458, %v1457
      %v1484 = vpack.c.bf16 %v1460, %v1459
      %v1485 = vpack.c.bf16 %v1462, %v1461
      %v1486 = vpack.c.bf16 %v1464, %v1463
      %v1487 = vpack.c.bf16 %v1466, %v1465
      %v1488 = vpack.c.bf16 %v1468, %v1467
      %v1489 = vpack.c.bf16 %v1470, %v1469
      %v1490 = vpack.c.bf16 %v1472, %v1471
      %v1491 = vpack.c.bf16 %v1474, %v1473
      %v1492 = vpack.c.bf16 %v1476, %v1475
      %v1493 = vpack.c.bf16 %v1478, %v1477
      %v1494 = vpack.c.bf16 %v1480, %v1479
      %v1497 = vunpack.c.l.b16 %v1301
      %v1498 = vunpack.c.l.b16 %v1302
      %v1499 = vpack.c.b16 %v1498, %v1497
      %vm1501 = vcmask 130048
      %v1503 = vsel %vm1501, %v1482, 0
      %v1506 = vsel %vm1501, %v1483, 0
      %v1509 = vsel %vm1501, %v1484, 0
      %v1512 = vsel %vm1501, %v1485, 0
      %v1515 = vsel %vm1501, %v1486, 0
      %v1518 = vsel %vm1501, %v1487, 0
      %v1521 = vsel %vm1501, %v1488, 0
      %v1524 = vsel %vm1501, %v1489, 0
      %v1527 = vsel %vm1501, %v1490, 0
      %v1530 = vsel %vm1501, %v1491, 0
      %1532 = vmatprep.subr.bf16.mxu0 0
      %1533 = vmatpush1.bf16.msra.mxu0 0
      %1534 = vmatprep.subr.bf16.mxu0 0
      %1535 = vmatpush1.bf16.msra.mxu0 0
      %1536 = vmatprep.subr.bf16.mxu0 0
      %1537 = vmatpush1.bf16.msra.mxu0 0
      %1538 = vmatprep.subr.bf16.mxu0 0
      %1539 = vmatpush1.bf16.msra.mxu0 0
      %1540 = vmatprep.subr.bf16.mxu0 0
      %1541 = vmatpush1.bf16.msra.mxu0 0
      %1542 = vmatprep.subr.bf16.mxu0 0
      %1543 = vmatpush1.bf16.msra.mxu0 0
      %1544 = vmatprep.subr.bf16.mxu0 0
      %1545 = vmatpush1.bf16.msra.mxu0 0
      %1546 = vmatprep.subr.bf16.mxu0 0
      %1547 = vmatpush1.bf16.msra.mxu0 %v1499
      %1548 = vmatprep.subr.bf16.mxu0 0
      %1549 = vmatpush2.bf16.msra.mxu0 0
      %1550 = vmatprep.subr.bf16.mxu0 0
      %1551 = vmatpush2.bf16.msra.mxu0 0
      %1552 = vmatprep.subr.bf16.mxu0 0
      %1553 = vmatpush2.bf16.msra.mxu0 0
      %1554 = vmatprep.subr.bf16.mxu0 0
      %1555 = vmatpush2.bf16.msra.mxu0 0
      %1556 = vmatprep.subr.bf16.mxu0 0
      %1557 = vmatpush2.bf16.msra.mxu0 0
      %1558 = vmatprep.subr.bf16.mxu0 0
      %1559 = vmatpush2.bf16.msra.mxu0 0
      %1560 = vmatprep.subr.bf16.mxu0 0
      %1561 = vmatpush2.bf16.msra.mxu0 0
      %1562 = vmatprep.subr.bf16.mxu0 0
      %1563 = vmatpush2.bf16.msra.mxu0 0
      %1564 = vmatprep.mubr.bf16.mxu0 0
      %1565 = vmatmul.mubr.bf16.gmra.mxu0 %v1503
      %v1566 = vpop.f32.mrf.mxu0
      %v1567 = vadd.f32 0.0, %v1566
      %v1568 = vpop.f32.mrf.mxu0
      %v1569 = vpop.f32.mrf.mxu0
      %v1570 = vadd.f32 0.0, %v1569
      %v1571 = vpop.f32.mrf.mxu0
      %1572 = vmatprep.mubr.bf16.mxu0 0
      %1573 = vmatmul.mubr.bf16.gmra.mxu0 %v1506
      %v1574 = vpop.f32.mrf.mxu0
      %v1575 = vadd.f32 0.0, %v1574
      %v1576 = vpop.f32.mrf.mxu0
      %v1577 = vpop.f32.mrf.mxu0
      %v1578 = vadd.f32 0.0, %v1577
      %v1579 = vpop.f32.mrf.mxu0
      %1580 = vmatprep.mubr.bf16.mxu0 0
      %1581 = vmatmul.mubr.bf16.gmra.mxu0 %v1509
      %v1582 = vpop.f32.mrf.mxu0
      %v1583 = vadd.f32 0.0, %v1582
      %v1584 = vpop.f32.mrf.mxu0
      %v1585 = vpop.f32.mrf.mxu0
      %v1586 = vadd.f32 0.0, %v1585
      %v1587 = vpop.f32.mrf.mxu0
      %1588 = vmatprep.mubr.bf16.mxu0 0
      %1589 = vmatmul.mubr.bf16.gmra.mxu0 %v1512
      %v1590 = vpop.f32.mrf.mxu0
      %v1591 = vadd.f32 0.0, %v1590
      %v1592 = vpop.f32.mrf.mxu0
      %v1593 = vpop.f32.mrf.mxu0
      %v1594 = vadd.f32 0.0, %v1593
      %v1595 = vpop.f32.mrf.mxu0
      %1596 = vmatprep.mubr.bf16.mxu0 0
      %1597 = vmatmul.mubr.bf16.gmra.mxu0 %v1515
      %v1598 = vpop.f32.mrf.mxu0
      %v1599 = vadd.f32 0.0, %v1598
      %v1600 = vpop.f32.mrf.mxu0
      %v1601 = vpop.f32.mrf.mxu0
      %v1602 = vadd.f32 0.0, %v1601
      %v1603 = vpop.f32.mrf.mxu0
      %1604 = vmatprep.mubr.bf16.mxu0 0
      %1605 = vmatmul.mubr.bf16.gmra.mxu0 %v1518
      %v1606 = vpop.f32.mrf.mxu0
      %v1607 = vadd.f32 0.0, %v1606
      %v1608 = vpop.f32.mrf.mxu0
      %v1609 = vpop.f32.mrf.mxu0
      %v1610 = vadd.f32 0.0, %v1609
      %v1611 = vpop.f32.mrf.mxu0
      %1612 = vmatprep.mubr.bf16.mxu0 0
      %1613 = vmatmul.mubr.bf16.gmra.mxu0 %v1521
      %v1614 = vpop.f32.mrf.mxu0
      %v1615 = vadd.f32 0.0, %v1614
      %v1616 = vpop.f32.mrf.mxu0
      %v1617 = vpop.f32.mrf.mxu0
      %v1618 = vadd.f32 0.0, %v1617
      %v1619 = vpop.f32.mrf.mxu0
      %1620 = vmatprep.mubr.bf16.mxu0 0
      %1621 = vmatmul.mubr.bf16.gmra.mxu0 %v1524
      %v1622 = vpop.f32.mrf.mxu0
      %v1623 = vadd.f32 0.0, %v1622
      %v1624 = vpop.f32.mrf.mxu0
      %v1625 = vpop.f32.mrf.mxu0
      %v1626 = vadd.f32 0.0, %v1625
      %v1627 = vpop.f32.mrf.mxu0
      %1628 = vmatprep.mubr.bf16.mxu0 0
      %1629 = vmatmul.mubr.bf16.gmra.mxu0 %v1527
      %v1630 = vpop.f32.mrf.mxu0
      %v1631 = vadd.f32 0.0, %v1630
      %v1632 = vpop.f32.mrf.mxu0
      %v1633 = vpop.f32.mrf.mxu0
      %v1634 = vadd.f32 0.0, %v1633
      %v1635 = vpop.f32.mrf.mxu0
      %1636 = vmatprep.mubr.bf16.mxu0 0
      %1637 = vmatmul.mubr.bf16.gmra.mxu0 %v1530
      %v1638 = vpop.f32.mrf.mxu0
      %v1639 = vadd.f32 0.0, %v1638
      %v1640 = vpop.f32.mrf.mxu0
      %v1641 = vpop.f32.mrf.mxu0
      %v1642 = vadd.f32 0.0, %v1641
      %v1643 = vpop.f32.mrf.mxu0
      %1644 = vdwg.mxu0
      %v1647 = vunpack.c.l.b16 %v1291
      %v1648 = vunpack.c.l.b16 %v1292
      %v1649 = vpack.c.b16 %v1648, %v1647
      %v1652 = vsel %vm1501, %v1481, 0
      %1654 = vmatprep.subr.bf16.mxu0 0
      %1655 = vmatpush1.bf16.msra.mxu0 0
      %1656 = vmatprep.subr.bf16.mxu0 0
      %1657 = vmatpush1.bf16.msra.mxu0 0
      %1658 = vmatprep.subr.bf16.mxu0 0
      %1659 = vmatpush1.bf16.msra.mxu0 0
      %1660 = vmatprep.subr.bf16.mxu0 0
      %1661 = vmatpush1.bf16.msra.mxu0 0
      %1662 = vmatprep.subr.bf16.mxu0 0
      %1663 = vmatpush1.bf16.msra.mxu0 0
      %1664 = vmatprep.subr.bf16.mxu0 0
      %1665 = vmatpush1.bf16.msra.mxu0 0
      %1666 = vmatprep.subr.bf16.mxu0 0
      %1667 = vmatpush1.bf16.msra.mxu0 0
      %1668 = vmatprep.subr.bf16.mxu0 0
      %1669 = vmatpush1.bf16.msra.mxu0 %v1649
      %1670 = vmatprep.subr.bf16.mxu0 0
      %1671 = vmatpush2.bf16.msra.mxu0 0
      %1672 = vmatprep.subr.bf16.mxu0 0
      %1673 = vmatpush2.bf16.msra.mxu0 0
      %1674 = vmatprep.subr.bf16.mxu0 0
      %1675 = vmatpush2.bf16.msra.mxu0 0
      %1676 = vmatprep.subr.bf16.mxu0 0
      %1677 = vmatpush2.bf16.msra.mxu0 0
      %1678 = vmatprep.subr.bf16.mxu0 0
      %1679 = vmatpush2.bf16.msra.mxu0 0
      %1680 = vmatprep.subr.bf16.mxu0 0
      %1681 = vmatpush2.bf16.msra.mxu0 0
      %1682 = vmatprep.subr.bf16.mxu0 0
      %1683 = vmatpush2.bf16.msra.mxu0 0
      %1684 = vmatprep.subr.bf16.mxu0 0
      %1685 = vmatpush2.bf16.msra.mxu0 0
      %1686 = vmatprep.mubr.bf16.mxu0 0
      %1687 = vmatmul.mubr.bf16.gmra.mxu0 %v1652
      %v1688 = vpop.f32.mrf.mxu0
      %v1689 = vadd.f32 %v1567, %v1688
      %v1690 = vpop.f32.mrf.mxu0
      %v1691 = vpop.f32.mrf.mxu0
      %v1692 = vadd.f32 %v1570, %v1691
      %v1693 = vpop.f32.mrf.mxu0
      %1694 = vmatprep.mubr.bf16.mxu0 0
      %1695 = vmatmul.mubr.bf16.gmra.mxu0 %v1503
      %v1696 = vpop.f32.mrf.mxu0
      %v1697 = vadd.f32 %v1575, %v1696
      %v1698 = vpop.f32.mrf.mxu0
      %v1699 = vpop.f32.mrf.mxu0
      %v1700 = vadd.f32 %v1578, %v1699
      %v1701 = vpop.f32.mrf.mxu0
      %1702 = vmatprep.mubr.bf16.mxu0 0
      %1703 = vmatmul.mubr.bf16.gmra.mxu0 %v1506
      %v1704 = vpop.f32.mrf.mxu0
      %v1705 = vadd.f32 %v1583, %v1704
      %v1706 = vpop.f32.mrf.mxu0
      %v1707 = vpop.f32.mrf.mxu0
      %v1708 = vadd.f32 %v1586, %v1707
      %v1709 = vpop.f32.mrf.mxu0
      %1710 = vmatprep.mubr.bf16.mxu0 0
      %1711 = vmatmul.mubr.bf16.gmra.mxu0 %v1509
      %v1712 = vpop.f32.mrf.mxu0
      %v1713 = vadd.f32 %v1591, %v1712
      %v1714 = vpop.f32.mrf.mxu0
      %v1715 = vpop.f32.mrf.mxu0
      %v1716 = vadd.f32 %v1594, %v1715
      %v1717 = vpop.f32.mrf.mxu0
      %1718 = vmatprep.mubr.bf16.mxu0 0
      %1719 = vmatmul.mubr.bf16.gmra.mxu0 %v1512
      %v1720 = vpop.f32.mrf.mxu0
      %v1721 = vadd.f32 %v1599, %v1720
      %v1722 = vpop.f32.mrf.mxu0
      %v1723 = vpop.f32.mrf.mxu0
      %v1724 = vadd.f32 %v1602, %v1723
      %v1725 = vpop.f32.mrf.mxu0
      %1726 = vmatprep.mubr.bf16.mxu0 0
      %1727 = vmatmul.mubr.bf16.gmra.mxu0 %v1515
      %v1728 = vpop.f32.mrf.mxu0
      %v1729 = vadd.f32 %v1607, %v1728
      %v1730 = vpop.f32.mrf.mxu0
      %v1731 = vpop.f32.mrf.mxu0
      %v1732 = vadd.f32 %v1610, %v1731
      %v1733 = vpop.f32.mrf.mxu0
      %1734 = vmatprep.mubr.bf16.mxu0 0
      %1735 = vmatmul.mubr.bf16.gmra.mxu0 %v1518
      %v1736 = vpop.f32.mrf.mxu0
      %v1737 = vadd.f32 %v1615, %v1736
      %v1738 = vpop.f32.mrf.mxu0
      %v1739 = vpop.f32.mrf.mxu0
      %v1740 = vadd.f32 %v1618, %v1739
      %v1741 = vpop.f32.mrf.mxu0
      %1742 = vmatprep.mubr.bf16.mxu0 0
      %1743 = vmatmul.mubr.bf16.gmra.mxu0 %v1521
      %v1744 = vpop.f32.mrf.mxu0
      %v1745 = vadd.f32 %v1623, %v1744
      %v1746 = vpop.f32.mrf.mxu0
      %v1747 = vpop.f32.mrf.mxu0
      %v1748 = vadd.f32 %v1626, %v1747
      %v1749 = vpop.f32.mrf.mxu0
      %1750 = vmatprep.mubr.bf16.mxu0 0
      %1751 = vmatmul.mubr.bf16.gmra.mxu0 %v1524
      %v1752 = vpop.f32.mrf.mxu0
      %v1753 = vadd.f32 %v1631, %v1752
      %v1754 = vpop.f32.mrf.mxu0
      %v1755 = vpop.f32.mrf.mxu0
      %v1756 = vadd.f32 %v1634, %v1755
      %v1757 = vpop.f32.mrf.mxu0
      %1758 = vmatprep.mubr.bf16.mxu0 0
      %1759 = vmatmul.mubr.bf16.gmra.mxu0 %v1527
      %v1760 = vpop.f32.mrf.mxu0
      %v1761 = vadd.f32 %v1639, %v1760
      %v1762 = vpop.f32.mrf.mxu0
      %v1763 = vpop.f32.mrf.mxu0
      %v1764 = vadd.f32 %v1642, %v1763
      %v1765 = vpop.f32.mrf.mxu0
      %1766 = vdwg.mxu0
      %v1769 = vunpack.c.l.b16 %v1311
      %v1770 = vunpack.c.l.b16 %v1312
      %v1771 = vpack.c.b16 %v1770, %v1769
      %v1774 = vsel %vm1501, %v1492, 0
      %1776 = vmatprep.subr.bf16.mxu0 0
      %1777 = vmatpush1.bf16.msra.mxu0 0
      %1778 = vmatprep.subr.bf16.mxu0 0
      %1779 = vmatpush1.bf16.msra.mxu0 0
      %1780 = vmatprep.subr.bf16.mxu0 0
      %1781 = vmatpush1.bf16.msra.mxu0 0
      %1782 = vmatprep.subr.bf16.mxu0 0
      %1783 = vmatpush1.bf16.msra.mxu0 0
      %1784 = vmatprep.subr.bf16.mxu0 0
      %1785 = vmatpush1.bf16.msra.mxu0 0
      %1786 = vmatprep.subr.bf16.mxu0 0
      %1787 = vmatpush1.bf16.msra.mxu0 0
      %1788 = vmatprep.subr.bf16.mxu0 0
      %1789 = vmatpush1.bf16.msra.mxu0 0
      %1790 = vmatprep.subr.bf16.mxu0 0
      %1791 = vmatpush1.bf16.msra.mxu0 %v1771
      %1792 = vmatprep.subr.bf16.mxu0 0
      %1793 = vmatpush2.bf16.msra.mxu0 0
      %1794 = vmatprep.subr.bf16.mxu0 0
      %1795 = vmatpush2.bf16.msra.mxu0 0
      %1796 = vmatprep.subr.bf16.mxu0 0
      %1797 = vmatpush2.bf16.msra.mxu0 0
      %1798 = vmatprep.subr.bf16.mxu0 0
      %1799 = vmatpush2.bf16.msra.mxu0 0
      %1800 = vmatprep.subr.bf16.mxu0 0
      %1801 = vmatpush2.bf16.msra.mxu0 0
      %1802 = vmatprep.subr.bf16.mxu0 0
      %1803 = vmatpush2.bf16.msra.mxu0 0
      %1804 = vmatprep.subr.bf16.mxu0 0
      %1805 = vmatpush2.bf16.msra.mxu0 0
      %1806 = vmatprep.subr.bf16.mxu0 0
      %1807 = vmatpush2.bf16.msra.mxu0 0
      %1808 = vmatprep.mubr.bf16.mxu0 0
      %1809 = vmatmul.mubr.bf16.gmra.mxu0 %v1506
      %v1810 = vpop.f32.mrf.mxu0
      %v1811 = vadd.f32 0.0, %v1810
      %v1812 = vpop.f32.mrf.mxu0
      %v1813 = vpop.f32.mrf.mxu0
      %v1814 = vadd.f32 0.0, %v1813
      %v1815 = vpop.f32.mrf.mxu0
      %1816 = vmatprep.mubr.bf16.mxu0 0
      %1817 = vmatmul.mubr.bf16.gmra.mxu0 %v1509
      %v1818 = vpop.f32.mrf.mxu0
      %v1819 = vadd.f32 0.0, %v1818
      %v1820 = vpop.f32.mrf.mxu0
      %v1821 = vpop.f32.mrf.mxu0
      %v1822 = vadd.f32 0.0, %v1821
      %v1823 = vpop.f32.mrf.mxu0
      %1824 = vmatprep.mubr.bf16.mxu0 0
      %1825 = vmatmul.mubr.bf16.gmra.mxu0 %v1512
      %v1826 = vpop.f32.mrf.mxu0
      %v1827 = vadd.f32 0.0, %v1826
      %v1828 = vpop.f32.mrf.mxu0
      %v1829 = vpop.f32.mrf.mxu0
      %v1830 = vadd.f32 0.0, %v1829
      %v1831 = vpop.f32.mrf.mxu0
      %1832 = vmatprep.mubr.bf16.mxu0 0
      %1833 = vmatmul.mubr.bf16.gmra.mxu0 %v1515
      %v1834 = vpop.f32.mrf.mxu0
      %v1835 = vadd.f32 0.0, %v1834
      %v1836 = vpop.f32.mrf.mxu0
      %v1837 = vpop.f32.mrf.mxu0
      %v1838 = vadd.f32 0.0, %v1837
      %v1839 = vpop.f32.mrf.mxu0
      %1840 = vmatprep.mubr.bf16.mxu0 0
      %1841 = vmatmul.mubr.bf16.gmra.mxu0 %v1518
      %v1842 = vpop.f32.mrf.mxu0
      %v1843 = vadd.f32 0.0, %v1842
      %v1844 = vpop.f32.mrf.mxu0
      %v1845 = vpop.f32.mrf.mxu0
      %v1846 = vadd.f32 0.0, %v1845
      %v1847 = vpop.f32.mrf.mxu0
      %1848 = vmatprep.mubr.bf16.mxu0 0
      %1849 = vmatmul.mubr.bf16.gmra.mxu0 %v1521
      %v1850 = vpop.f32.mrf.mxu0
      %v1851 = vadd.f32 0.0, %v1850
      %v1852 = vpop.f32.mrf.mxu0
      %v1853 = vpop.f32.mrf.mxu0
      %v1854 = vadd.f32 0.0, %v1853
      %v1855 = vpop.f32.mrf.mxu0
      %1856 = vmatprep.mubr.bf16.mxu0 0
      %1857 = vmatmul.mubr.bf16.gmra.mxu0 %v1524
      %v1858 = vpop.f32.mrf.mxu0
      %v1859 = vadd.f32 0.0, %v1858
      %v1860 = vpop.f32.mrf.mxu0
      %v1861 = vpop.f32.mrf.mxu0
      %v1862 = vadd.f32 0.0, %v1861
      %v1863 = vpop.f32.mrf.mxu0
      %1864 = vmatprep.mubr.bf16.mxu0 0
      %1865 = vmatmul.mubr.bf16.gmra.mxu0 %v1527
      %v1866 = vpop.f32.mrf.mxu0
      %v1867 = vadd.f32 0.0, %v1866
      %v1868 = vpop.f32.mrf.mxu0
      %v1869 = vpop.f32.mrf.mxu0
      %v1870 = vadd.f32 0.0, %v1869
      %v1871 = vpop.f32.mrf.mxu0
      %1872 = vmatprep.mubr.bf16.mxu0 0
      %1873 = vmatmul.mubr.bf16.gmra.mxu0 %v1530
      %v1874 = vpop.f32.mrf.mxu0
      %v1875 = vadd.f32 0.0, %v1874
      %v1876 = vpop.f32.mrf.mxu0
      %v1877 = vpop.f32.mrf.mxu0
      %v1878 = vadd.f32 0.0, %v1877
      %v1879 = vpop.f32.mrf.mxu0
      %1880 = vmatprep.mubr.bf16.mxu0 0
      %1881 = vmatmul.mubr.bf16.gmra.mxu0 %v1774
      %v1882 = vpop.f32.mrf.mxu0
      %v1883 = vadd.f32 0.0, %v1882
      %v1884 = vpop.f32.mrf.mxu0
      %v1885 = vpop.f32.mrf.mxu0
      %v1886 = vadd.f32 0.0, %v1885
      %v1887 = vpop.f32.mrf.mxu0
      %1888 = vdwg.mxu0
      %v1889 = vadd.f32 %v1689, %v1811
      %v1890 = vadd.f32 %v1692, %v1814
      %v1891 = vadd.f32 %v1697, %v1819
      %v1892 = vadd.f32 %v1700, %v1822
      %v1893 = vadd.f32 %v1705, %v1827
      %v1894 = vadd.f32 %v1708, %v1830
      %v1895 = vadd.f32 %v1713, %v1835
      %v1896 = vadd.f32 %v1716, %v1838
      %v1897 = vadd.f32 %v1721, %v1843
      %v1898 = vadd.f32 %v1724, %v1846
      %v1899 = vadd.f32 %v1729, %v1851
      %v1900 = vadd.f32 %v1732, %v1854
      %v1901 = vadd.f32 %v1737, %v1859
      %v1902 = vadd.f32 %v1740, %v1862
      %v1903 = vadd.f32 %v1745, %v1867
      %v1904 = vadd.f32 %v1748, %v1870
      %v1905 = vadd.f32 %v1753, %v1875
      %v1906 = vadd.f32 %v1756, %v1878
      %v1907 = vadd.f32 %v1761, %v1883
      %v1908 = vadd.f32 %v1764, %v1886
      %v1911 = vunpack.c.l.b16 %v1321
      %v1912 = vunpack.c.l.b16 %v1322
      %v1913 = vpack.c.b16 %v1912, %v1911
      %v1916 = vsel %vm1501, %v1493, 0
      %1918 = vmatprep.subr.bf16.mxu0 0
      %1919 = vmatpush1.bf16.msra.mxu0 0
      %1920 = vmatprep.subr.bf16.mxu0 0
      %1921 = vmatpush1.bf16.msra.mxu0 0
      %1922 = vmatprep.subr.bf16.mxu0 0
      %1923 = vmatpush1.bf16.msra.mxu0 0
      %1924 = vmatprep.subr.bf16.mxu0 0
      %1925 = vmatpush1.bf16.msra.mxu0 0
      %1926 = vmatprep.subr.bf16.mxu0 0
      %1927 = vmatpush1.bf16.msra.mxu0 0
      %1928 = vmatprep.subr.bf16.mxu0 0
      %1929 = vmatpush1.bf16.msra.mxu0 0
      %1930 = vmatprep.subr.bf16.mxu0 0
      %1931 = vmatpush1.bf16.msra.mxu0 0
      %1932 = vmatprep.subr.bf16.mxu0 0
      %1933 = vmatpush1.bf16.msra.mxu0 %v1913
      %1934 = vmatprep.subr.bf16.mxu0 0
      %1935 = vmatpush2.bf16.msra.mxu0 0
      %1936 = vmatprep.subr.bf16.mxu0 0
      %1937 = vmatpush2.bf16.msra.mxu0 0
      %1938 = vmatprep.subr.bf16.mxu0 0
      %1939 = vmatpush2.bf16.msra.mxu0 0
      %1940 = vmatprep.subr.bf16.mxu0 0
      %1941 = vmatpush2.bf16.msra.mxu0 0
      %1942 = vmatprep.subr.bf16.mxu0 0
      %1943 = vmatpush2.bf16.msra.mxu0 0
      %1944 = vmatprep.subr.bf16.mxu0 0
      %1945 = vmatpush2.bf16.msra.mxu0 0
      %1946 = vmatprep.subr.bf16.mxu0 0
      %1947 = vmatpush2.bf16.msra.mxu0 0
      %1948 = vmatprep.subr.bf16.mxu0 0
      %1949 = vmatpush2.bf16.msra.mxu0 0
      %1950 = vmatprep.mubr.bf16.mxu0 0
      %1951 = vmatmul.mubr.bf16.gmra.mxu0 %v1509
      %v1952 = vpop.f32.mrf.mxu0
      %v1953 = vadd.f32 0.0, %v1952
      %v1954 = vpop.f32.mrf.mxu0
      %v1955 = vpop.f32.mrf.mxu0
      %v1956 = vadd.f32 0.0, %v1955
      %v1957 = vpop.f32.mrf.mxu0
      %1958 = vmatprep.mubr.bf16.mxu0 0
      %1959 = vmatmul.mubr.bf16.gmra.mxu0 %v1512
      %v1960 = vpop.f32.mrf.mxu0
      %v1961 = vadd.f32 0.0, %v1960
      %v1962 = vpop.f32.mrf.mxu0
      %v1963 = vpop.f32.mrf.mxu0
      %v1964 = vadd.f32 0.0, %v1963
      %v1965 = vpop.f32.mrf.mxu0
      %1966 = vmatprep.mubr.bf16.mxu0 0
      %1967 = vmatmul.mubr.bf16.gmra.mxu0 %v1515
      %v1968 = vpop.f32.mrf.mxu0
      %v1969 = vadd.f32 0.0, %v1968
      %v1970 = vpop.f32.mrf.mxu0
      %v1971 = vpop.f32.mrf.mxu0
      %v1972 = vadd.f32 0.0, %v1971
      %v1973 = vpop.f32.mrf.mxu0
      %1974 = vmatprep.mubr.bf16.mxu0 0
      %1975 = vmatmul.mubr.bf16.gmra.mxu0 %v1518
      %v1976 = vpop.f32.mrf.mxu0
      %v1977 = vadd.f32 0.0, %v1976
      %v1978 = vpop.f32.mrf.mxu0
      %v1979 = vpop.f32.mrf.mxu0
      %v1980 = vadd.f32 0.0, %v1979
      %v1981 = vpop.f32.mrf.mxu0
      %1982 = vmatprep.mubr.bf16.mxu0 0
      %1983 = vmatmul.mubr.bf16.gmra.mxu0 %v1521
      %v1984 = vpop.f32.mrf.mxu0
      %v1985 = vadd.f32 0.0, %v1984
      %v1986 = vpop.f32.mrf.mxu0
      %v1987 = vpop.f32.mrf.mxu0
      %v1988 = vadd.f32 0.0, %v1987
      %v1989 = vpop.f32.mrf.mxu0
      %1990 = vmatprep.mubr.bf16.mxu0 0
      %1991 = vmatmul.mubr.bf16.gmra.mxu0 %v1524
      %v1992 = vpop.f32.mrf.mxu0
      %v1993 = vadd.f32 0.0, %v1992
      %v1994 = vpop.f32.mrf.mxu0
      %v1995 = vpop.f32.mrf.mxu0
      %v1996 = vadd.f32 0.0, %v1995
      %v1997 = vpop.f32.mrf.mxu0
      %1998 = vmatprep.mubr.bf16.mxu0 0
      %1999 = vmatmul.mubr.bf16.gmra.mxu0 %v1527
      %v2000 = vpop.f32.mrf.mxu0
      %v2001 = vadd.f32 0.0, %v2000
      %v2002 = vpop.f32.mrf.mxu0
      %v2003 = vpop.f32.mrf.mxu0
      %v2004 = vadd.f32 0.0, %v2003
      %v2005 = vpop.f32.mrf.mxu0
      %2006 = vmatprep.mubr.bf16.mxu0 0
      %2007 = vmatmul.mubr.bf16.gmra.mxu0 %v1530
      %v2008 = vpop.f32.mrf.mxu0
      %v2009 = vadd.f32 0.0, %v2008
      %v2010 = vpop.f32.mrf.mxu0
      %v2011 = vpop.f32.mrf.mxu0
      %v2012 = vadd.f32 0.0, %v2011
      %v2013 = vpop.f32.mrf.mxu0
      %2014 = vmatprep.mubr.bf16.mxu0 0
      %2015 = vmatmul.mubr.bf16.gmra.mxu0 %v1774
      %v2016 = vpop.f32.mrf.mxu0
      %v2017 = vadd.f32 0.0, %v2016
      %v2018 = vpop.f32.mrf.mxu0
      %v2019 = vpop.f32.mrf.mxu0
      %v2020 = vadd.f32 0.0, %v2019
      %v2021 = vpop.f32.mrf.mxu0
      %2022 = vmatprep.mubr.bf16.mxu0 0
      %2023 = vmatmul.mubr.bf16.gmra.mxu0 %v1916
      %v2024 = vpop.f32.mrf.mxu0
      %v2025 = vadd.f32 0.0, %v2024
      %v2026 = vpop.f32.mrf.mxu0
      %v2027 = vpop.f32.mrf.mxu0
      %v2028 = vadd.f32 0.0, %v2027
      %v2029 = vpop.f32.mrf.mxu0
      %2030 = vdwg.mxu0
      %v2031 = vadd.f32 %v1889, %v1953
      %v2032 = vadd.f32 %v1890, %v1956
      %v2033 = vadd.f32 %v1891, %v1961
      %v2034 = vadd.f32 %v1892, %v1964
      %v2035 = vadd.f32 %v1893, %v1969
      %v2036 = vadd.f32 %v1894, %v1972
      %v2037 = vadd.f32 %v1895, %v1977
      %v2038 = vadd.f32 %v1896, %v1980
      %v2039 = vadd.f32 %v1897, %v1985
      %v2040 = vadd.f32 %v1898, %v1988
      %v2041 = vadd.f32 %v1899, %v1993
      %v2042 = vadd.f32 %v1900, %v1996
      %v2043 = vadd.f32 %v1901, %v2001
      %v2044 = vadd.f32 %v1902, %v2004
      %v2045 = vadd.f32 %v1903, %v2009
      %v2046 = vadd.f32 %v1904, %v2012
      %v2047 = vadd.f32 %v1905, %v2017
      %v2048 = vadd.f32 %v1906, %v2020
      %v2049 = vadd.f32 %v1907, %v2025
      %v2050 = vadd.f32 %v1908, %v2028
      %v2053 = vunpack.c.l.b16 %v1331
      %v2054 = vunpack.c.l.b16 %v1332
      %v2055 = vpack.c.b16 %v2054, %v2053
      %v2058 = vsel %vm1501, %v1494, 0
      %2060 = vmatprep.subr.bf16.mxu0 0
      %2061 = vmatpush1.bf16.msra.mxu0 0
      %2062 = vmatprep.subr.bf16.mxu0 0
      %2063 = vmatpush1.bf16.msra.mxu0 0
      %2064 = vmatprep.subr.bf16.mxu0 0
      %2065 = vmatpush1.bf16.msra.mxu0 0
      %2066 = vmatprep.subr.bf16.mxu0 0
      %2067 = vmatpush1.bf16.msra.mxu0 0
      %2068 = vmatprep.subr.bf16.mxu0 0
      %2069 = vmatpush1.bf16.msra.mxu0 0
      %2070 = vmatprep.subr.bf16.mxu0 0
      %2071 = vmatpush1.bf16.msra.mxu0 0
      %2072 = vmatprep.subr.bf16.mxu0 0
      %2073 = vmatpush1.bf16.msra.mxu0 0
      %2074 = vmatprep.subr.bf16.mxu0 0
      %2075 = vmatpush1.bf16.msra.mxu0 %v2055
      %2076 = vmatprep.subr.bf16.mxu0 0
      %2077 = vmatpush2.bf16.msra.mxu0 0
      %2078 = vmatprep.subr.bf16.mxu0 0
      %2079 = vmatpush2.bf16.msra.mxu0 0
      %2080 = vmatprep.subr.bf16.mxu0 0
      %2081 = vmatpush2.bf16.msra.mxu0 0
      %2082 = vmatprep.subr.bf16.mxu0 0
      %2083 = vmatpush2.bf16.msra.mxu0 0
      %2084 = vmatprep.subr.bf16.mxu0 0
      %2085 = vmatpush2.bf16.msra.mxu0 0
      %2086 = vmatprep.subr.bf16.mxu0 0
      %2087 = vmatpush2.bf16.msra.mxu0 0
      %2088 = vmatprep.subr.bf16.mxu0 0
      %2089 = vmatpush2.bf16.msra.mxu0 0
      %2090 = vmatprep.subr.bf16.mxu0 0
      %2091 = vmatpush2.bf16.msra.mxu0 0
      %2092 = vmatprep.mubr.bf16.mxu0 0
      %2093 = vmatmul.mubr.bf16.gmra.mxu0 %v1512
      %v2094 = vpop.f32.mrf.mxu0
      %v2095 = vadd.f32 0.0, %v2094
      %v2096 = vpop.f32.mrf.mxu0
      %v2097 = vpop.f32.mrf.mxu0
      %v2098 = vadd.f32 0.0, %v2097
      %v2099 = vpop.f32.mrf.mxu0
      %2100 = vmatprep.mubr.bf16.mxu0 0
      %2101 = vmatmul.mubr.bf16.gmra.mxu0 %v1515
      %v2102 = vpop.f32.mrf.mxu0
      %v2103 = vadd.f32 0.0, %v2102
      %v2104 = vpop.f32.mrf.mxu0
      %v2105 = vpop.f32.mrf.mxu0
      %v2106 = vadd.f32 0.0, %v2105
      %v2107 = vpop.f32.mrf.mxu0
      %2108 = vmatprep.mubr.bf16.mxu0 0
      %2109 = vmatmul.mubr.bf16.gmra.mxu0 %v1518
      %v2110 = vpop.f32.mrf.mxu0
      %v2111 = vadd.f32 0.0, %v2110
      %v2112 = vpop.f32.mrf.mxu0
      %v2113 = vpop.f32.mrf.mxu0
      %v2114 = vadd.f32 0.0, %v2113
      %v2115 = vpop.f32.mrf.mxu0
      %2116 = vmatprep.mubr.bf16.mxu0 0
      %2117 = vmatmul.mubr.bf16.gmra.mxu0 %v1521
      %v2118 = vpop.f32.mrf.mxu0
      %v2119 = vadd.f32 0.0, %v2118
      %v2120 = vpop.f32.mrf.mxu0
      %v2121 = vpop.f32.mrf.mxu0
      %v2122 = vadd.f32 0.0, %v2121
      %v2123 = vpop.f32.mrf.mxu0
      %2124 = vmatprep.mubr.bf16.mxu0 0
      %2125 = vmatmul.mubr.bf16.gmra.mxu0 %v1524
      %v2126 = vpop.f32.mrf.mxu0
      %v2127 = vadd.f32 0.0, %v2126
      %v2128 = vpop.f32.mrf.mxu0
      %v2129 = vpop.f32.mrf.mxu0
      %v2130 = vadd.f32 0.0, %v2129
      %v2131 = vpop.f32.mrf.mxu0
      %2132 = vmatprep.mubr.bf16.mxu0 0
      %2133 = vmatmul.mubr.bf16.gmra.mxu0 %v1527
      %v2134 = vpop.f32.mrf.mxu0
      %v2135 = vadd.f32 0.0, %v2134
      %v2136 = vpop.f32.mrf.mxu0
      %v2137 = vpop.f32.mrf.mxu0
      %v2138 = vadd.f32 0.0, %v2137
      %v2139 = vpop.f32.mrf.mxu0
      %2140 = vmatprep.mubr.bf16.mxu0 0
      %2141 = vmatmul.mubr.bf16.gmra.mxu0 %v1530
      %v2142 = vpop.f32.mrf.mxu0
      %v2143 = vadd.f32 0.0, %v2142
      %v2144 = vpop.f32.mrf.mxu0
      %v2145 = vpop.f32.mrf.mxu0
      %v2146 = vadd.f32 0.0, %v2145
      %v2147 = vpop.f32.mrf.mxu0
      %2148 = vmatprep.mubr.bf16.mxu0 0
      %2149 = vmatmul.mubr.bf16.gmra.mxu0 %v1774
      %v2150 = vpop.f32.mrf.mxu0
      %v2151 = vadd.f32 0.0, %v2150
      %v2152 = vpop.f32.mrf.mxu0
      %v2153 = vpop.f32.mrf.mxu0
      %v2154 = vadd.f32 0.0, %v2153
      %v2155 = vpop.f32.mrf.mxu0
      %2156 = vmatprep.mubr.bf16.mxu0 0
      %2157 = vmatmul.mubr.bf16.gmra.mxu0 %v1916
      %v2158 = vpop.f32.mrf.mxu0
      %v2159 = vadd.f32 0.0, %v2158
      %v2160 = vpop.f32.mrf.mxu0
      %v2161 = vpop.f32.mrf.mxu0
      %v2162 = vadd.f32 0.0, %v2161
      %v2163 = vpop.f32.mrf.mxu0
      %2164 = vmatprep.mubr.bf16.mxu0 0
      %2165 = vmatmul.mubr.bf16.gmra.mxu0 %v2058
      %v2166 = vpop.f32.mrf.mxu0
      %v2167 = vadd.f32 0.0, %v2166
      %v2168 = vpop.f32.mrf.mxu0
      %v2169 = vpop.f32.mrf.mxu0
      %v2170 = vadd.f32 0.0, %v2169
      %v2171 = vpop.f32.mrf.mxu0
      %2172 = vdwg.mxu0
      %v2173 = vadd.f32 %v2031, %v2095
      %v2174 = vadd.f32 %v2032, %v2098
      %v2175 = vadd.f32 %v2033, %v2103
      %v2176 = vadd.f32 %v2034, %v2106
      %v2177 = vadd.f32 %v2035, %v2111
      %v2178 = vadd.f32 %v2036, %v2114
      %v2179 = vadd.f32 %v2037, %v2119
      %v2180 = vadd.f32 %v2038, %v2122
      %v2181 = vadd.f32 %v2039, %v2127
      %v2182 = vadd.f32 %v2040, %v2130
      %v2183 = vadd.f32 %v2041, %v2135
      %v2184 = vadd.f32 %v2042, %v2138
      %v2185 = vadd.f32 %v2043, %v2143
      %v2186 = vadd.f32 %v2044, %v2146
      %v2187 = vadd.f32 %v2045, %v2151
      %v2188 = vadd.f32 %v2046, %v2154
      %v2189 = vadd.f32 %v2047, %v2159
      %v2190 = vadd.f32 %v2048, %v2162
      %v2191 = vadd.f32 %v2049, %v2167
      %v2192 = vadd.f32 %v2050, %v2170
      %s2193 = scalar_lea.vmem [#allocation2], 2
      %v2194 = vld [vmem:[%s2193] ss:$2 sm:$0xff]
      %s2195 = scalar_lea.vmem [#allocation2], 18
      %v2196 = vld [vmem:[%s2195] ss:$2 sm:$0xff]
      %s2197 = scalar_lea.vmem [#allocation2], 42
      %v2198 = vld [vmem:[%s2197] ss:$2 sm:$0xff]
      %s2199 = scalar_lea.vmem [#allocation2], 58
      %v2200 = vld [vmem:[%s2199] ss:$2 sm:$0xff]
      %s2201 = scalar_lea.vmem [#allocation2], 82
      %v2202 = vld [vmem:[%s2201] ss:$2 sm:$0xff]
      %s2203 = scalar_lea.vmem [#allocation2], 98
      %v2204 = vld [vmem:[%s2203] ss:$2 sm:$0xff]
      %s2205 = scalar_lea.vmem [#allocation2], 122
      %v2206 = vld [vmem:[%s2205] ss:$2 sm:$0xff]
      %s2207 = scalar_lea.vmem [#allocation2], 138
      %v2208 = vld [vmem:[%s2207] ss:$2 sm:$0xff]
      %s2209 = scalar_lea.vmem [#allocation2], 162
      %v2210 = vld [vmem:[%s2209] ss:$2 sm:$0xff]
      %s2211 = scalar_lea.vmem [#allocation2], 178
      %v2212 = vld [vmem:[%s2211] ss:$2 sm:$0xff]
      %s2213 = scalar_lea.vmem [#allocation2], 202
      %v2214 = vld [vmem:[%s2213] ss:$2 sm:$0xff]
      %s2215 = scalar_lea.vmem [#allocation2], 218
      %v2216 = vld [vmem:[%s2215] ss:$2 sm:$0xff]
      %s2217 = scalar_lea.vmem [#allocation2], 242
      %v2218 = vld [vmem:[%s2217] ss:$2 sm:$0xff]
      %s2219 = scalar_lea.vmem [#allocation2], 258
      %v2220 = vld [vmem:[%s2219] ss:$2 sm:$0xff]
      %s2221 = scalar_lea.vmem [#allocation2], 282
      %v2222 = vld [vmem:[%s2221] ss:$2 sm:$0xff]
      %s2223 = scalar_lea.vmem [#allocation2], 298
      %v2224 = vld [vmem:[%s2223] ss:$2 sm:$0xff]
      %s2225 = scalar_lea.vmem [#allocation2], 322
      %v2226 = vld [vmem:[%s2225] ss:$2 sm:$0xff]
      %s2227 = scalar_lea.vmem [#allocation2], 338
      %v2228 = vld [vmem:[%s2227] ss:$2 sm:$0xff]
      %s2229 = scalar_lea.vmem [#allocation2], 362
      %v2230 = vld [vmem:[%s2229] ss:$2 sm:$0xff]
      %s2231 = scalar_lea.vmem [#allocation2], 378
      %v2232 = vld [vmem:[%s2231] ss:$2 sm:$0xff]
      %s2233 = scalar_lea.vmem [#allocation2], 402
      %v2234 = vld [vmem:[%s2233] ss:$2 sm:$0xff]
      %s2235 = scalar_lea.vmem [#allocation2], 418
      %v2236 = vld [vmem:[%s2235] ss:$2 sm:$0xff]
      %s2237 = scalar_lea.vmem [#allocation2], 442
      %v2238 = vld [vmem:[%s2237] ss:$2 sm:$0xff]
      %s2239 = scalar_lea.vmem [#allocation2], 458
      %v2240 = vld [vmem:[%s2239] ss:$2 sm:$0xff]
      %s2241 = scalar_lea.vmem [#allocation2], 482
      %v2242 = vld [vmem:[%s2241] ss:$2 sm:$0xff]
      %s2243 = scalar_lea.vmem [#allocation2], 498
      %v2244 = vld [vmem:[%s2243] ss:$2 sm:$0xff]
      %s2245 = scalar_lea.vmem [#allocation2], 522
      %v2246 = vld [vmem:[%s2245] ss:$2 sm:$0xff]
      %s2247 = scalar_lea.vmem [#allocation2], 538
      %v2248 = vld [vmem:[%s2247] ss:$2 sm:$0xff]
      %s2249 = scalar_lea.vmem [#allocation2], 3
      %v2250 = vld [vmem:[%s2249] ss:$2 sm:$0xff]
      %s2251 = scalar_lea.vmem [#allocation2], 19
      %v2252 = vld [vmem:[%s2251] ss:$2 sm:$0xff]
      %s2253 = scalar_lea.vmem [#allocation2], 43
      %v2254 = vld [vmem:[%s2253] ss:$2 sm:$0xff]
      %s2255 = scalar_lea.vmem [#allocation2], 59
      %v2256 = vld [vmem:[%s2255] ss:$2 sm:$0xff]
      %s2257 = scalar_lea.vmem [#allocation2], 83
      %v2258 = vld [vmem:[%s2257] ss:$2 sm:$0xff]
      %s2259 = scalar_lea.vmem [#allocation2], 99
      %v2260 = vld [vmem:[%s2259] ss:$2 sm:$0xff]
      %s2261 = scalar_lea.vmem [#allocation2], 123
      %v2262 = vld [vmem:[%s2261] ss:$2 sm:$0xff]
      %s2263 = scalar_lea.vmem [#allocation2], 139
      %v2264 = vld [vmem:[%s2263] ss:$2 sm:$0xff]
      %s2265 = scalar_lea.vmem [#allocation2], 163
      %v2266 = vld [vmem:[%s2265] ss:$2 sm:$0xff]
      %s2267 = scalar_lea.vmem [#allocation2], 179
      %v2268 = vld [vmem:[%s2267] ss:$2 sm:$0xff]
      %s2269 = scalar_lea.vmem [#allocation2], 203
      %v2270 = vld [vmem:[%s2269] ss:$2 sm:$0xff]
      %s2271 = scalar_lea.vmem [#allocation2], 219
      %v2272 = vld [vmem:[%s2271] ss:$2 sm:$0xff]
      %s2273 = scalar_lea.vmem [#allocation2], 243
      %v2274 = vld [vmem:[%s2273] ss:$2 sm:$0xff]
      %s2275 = scalar_lea.vmem [#allocation2], 259
      %v2276 = vld [vmem:[%s2275] ss:$2 sm:$0xff]
      %s2277 = scalar_lea.vmem [#allocation2], 283
      %v2278 = vld [vmem:[%s2277] ss:$2 sm:$0xff]
      %s2279 = scalar_lea.vmem [#allocation2], 299
      %v2280 = vld [vmem:[%s2279] ss:$2 sm:$0xff]
      %s2281 = scalar_lea.vmem [#allocation2], 323
      %v2282 = vld [vmem:[%s2281] ss:$2 sm:$0xff]
      %s2283 = scalar_lea.vmem [#allocation2], 339
      %v2284 = vld [vmem:[%s2283] ss:$2 sm:$0xff]
      %s2285 = scalar_lea.vmem [#allocation2], 363
      %v2286 = vld [vmem:[%s2285] ss:$2 sm:$0xff]
      %s2287 = scalar_lea.vmem [#allocation2], 379
      %v2288 = vld [vmem:[%s2287] ss:$2 sm:$0xff]
      %s2289 = scalar_lea.vmem [#allocation2], 403
      %v2290 = vld [vmem:[%s2289] ss:$2 sm:$0xff]
      %s2291 = scalar_lea.vmem [#allocation2], 419
      %v2292 = vld [vmem:[%s2291] ss:$2 sm:$0xff]
      %s2293 = scalar_lea.vmem [#allocation2], 443
      %v2294 = vld [vmem:[%s2293] ss:$2 sm:$0xff]
      %s2295 = scalar_lea.vmem [#allocation2], 459
      %v2296 = vld [vmem:[%s2295] ss:$2 sm:$0xff]
      %s2297 = scalar_lea.vmem [#allocation2], 483
      %v2298 = vld [vmem:[%s2297] ss:$2 sm:$0xff]
      %s2299 = scalar_lea.vmem [#allocation2], 499
      %v2300 = vld [vmem:[%s2299] ss:$2 sm:$0xff]
      %s2301 = scalar_lea.vmem [#allocation2], 523
      %v2302 = vld [vmem:[%s2301] ss:$2 sm:$0xff]
      %s2303 = scalar_lea.vmem [#allocation2], 539
      %v2304 = vld [vmem:[%s2303] ss:$2 sm:$0xff]
      %v2305 = vmax.f32 %v2194, %v2250
      %v2306 = vmax.f32 %v2196, %v2252
      %v2307 = vmax.f32 %v2198, %v2254
      %v2308 = vmax.f32 %v2200, %v2256
      %v2309 = vmax.f32 %v2202, %v2258
      %v2310 = vmax.f32 %v2204, %v2260
      %v2311 = vmax.f32 %v2206, %v2262
      %v2312 = vmax.f32 %v2208, %v2264
      %v2313 = vmax.f32 %v2210, %v2266
      %v2314 = vmax.f32 %v2212, %v2268
      %v2315 = vmax.f32 %v2214, %v2270
      %v2316 = vmax.f32 %v2216, %v2272
      %v2317 = vmax.f32 %v2218, %v2274
      %v2318 = vmax.f32 %v2220, %v2276
      %v2319 = vmax.f32 %v2222, %v2278
      %v2320 = vmax.f32 %v2224, %v2280
      %v2321 = vmax.f32 %v2226, %v2282
      %v2322 = vmax.f32 %v2228, %v2284
      %v2323 = vmax.f32 %v2230, %v2286
      %v2324 = vmax.f32 %v2232, %v2288
      %v2325 = vmax.f32 %v2234, %v2290
      %v2326 = vmax.f32 %v2236, %v2292
      %v2327 = vmax.f32 %v2238, %v2294
      %v2328 = vmax.f32 %v2240, %v2296
      %v2329 = vmax.f32 %v2242, %v2298
      %v2330 = vmax.f32 %v2244, %v2300
      %v2331 = vmax.f32 %v2246, %v2302
      %v2332 = vmax.f32 %v2248, %v2304
      %v2333 = vpack.c.bf16 %v2306, %v2305
      %v2334 = vpack.c.bf16 %v2308, %v2307
      %v2335 = vpack.c.bf16 %v2310, %v2309
      %v2336 = vpack.c.bf16 %v2312, %v2311
      %v2337 = vpack.c.bf16 %v2314, %v2313
      %v2338 = vpack.c.bf16 %v2316, %v2315
      %v2339 = vpack.c.bf16 %v2318, %v2317
      %v2340 = vpack.c.bf16 %v2320, %v2319
      %v2341 = vpack.c.bf16 %v2322, %v2321
      %v2342 = vpack.c.bf16 %v2324, %v2323
      %v2343 = vpack.c.bf16 %v2326, %v2325
      %v2344 = vpack.c.bf16 %v2328, %v2327
      %v2345 = vpack.c.bf16 %v2330, %v2329
      %v2346 = vpack.c.bf16 %v2332, %v2331
      %v2349 = vunpack.c.l.b16 %v1293
      %v2350 = vunpack.c.l.b16 %v1294
      %v2351 = vpack.c.b16 %v2350, %v2349
      %v2354 = vsel %vm1501, %v2333, 0
      %v2357 = vsel %vm1501, %v2334, 0
      %v2360 = vsel %vm1501, %v2335, 0
      %v2363 = vsel %vm1501, %v2336, 0
      %v2366 = vsel %vm1501, %v2337, 0
      %v2369 = vsel %vm1501, %v2338, 0
      %v2372 = vsel %vm1501, %v2339, 0
      %v2375 = vsel %vm1501, %v2340, 0
      %v2378 = vsel %vm1501, %v2341, 0
      %v2381 = vsel %vm1501, %v2342, 0
      %2383 = vmatprep.subr.bf16.mxu0 0
      %2384 = vmatpush1.bf16.msra.mxu0 0
      %2385 = vmatprep.subr.bf16.mxu0 0
      %2386 = vmatpush1.bf16.msra.mxu0 0
      %2387 = vmatprep.subr.bf16.mxu0 0
      %2388 = vmatpush1.bf16.msra.mxu0 0
      %2389 = vmatprep.subr.bf16.mxu0 0
      %2390 = vmatpush1.bf16.msra.mxu0 0
      %2391 = vmatprep.subr.bf16.mxu0 0
      %2392 = vmatpush1.bf16.msra.mxu0 0
      %2393 = vmatprep.subr.bf16.mxu0 0
      %2394 = vmatpush1.bf16.msra.mxu0 0
      %2395 = vmatprep.subr.bf16.mxu0 0
      %2396 = vmatpush1.bf16.msra.mxu0 0
      %2397 = vmatprep.subr.bf16.mxu0 0
      %2398 = vmatpush1.bf16.msra.mxu0 %v2351
      %2399 = vmatprep.subr.bf16.mxu0 0
      %2400 = vmatpush2.bf16.msra.mxu0 0
      %2401 = vmatprep.subr.bf16.mxu0 0
      %2402 = vmatpush2.bf16.msra.mxu0 0
      %2403 = vmatprep.subr.bf16.mxu0 0
      %2404 = vmatpush2.bf16.msra.mxu0 0
      %2405 = vmatprep.subr.bf16.mxu0 0
      %2406 = vmatpush2.bf16.msra.mxu0 0
      %2407 = vmatprep.subr.bf16.mxu0 0
      %2408 = vmatpush2.bf16.msra.mxu0 0
      %2409 = vmatprep.subr.bf16.mxu0 0
      %2410 = vmatpush2.bf16.msra.mxu0 0
      %2411 = vmatprep.subr.bf16.mxu0 0
      %2412 = vmatpush2.bf16.msra.mxu0 0
      %2413 = vmatprep.subr.bf16.mxu0 0
      %2414 = vmatpush2.bf16.msra.mxu0 0
      %2415 = vmatprep.mubr.bf16.mxu0 0
      %2416 = vmatmul.mubr.bf16.gmra.mxu0 %v2354
      %v2417 = vpop.f32.mrf.mxu0
      %v2418 = vadd.f32 0.0, %v2417
      %v2419 = vpop.f32.mrf.mxu0
      %v2420 = vpop.f32.mrf.mxu0
      %v2421 = vadd.f32 0.0, %v2420
      %v2422 = vpop.f32.mrf.mxu0
      %2423 = vmatprep.mubr.bf16.mxu0 0
      %2424 = vmatmul.mubr.bf16.gmra.mxu0 %v2357
      %v2425 = vpop.f32.mrf.mxu0
      %v2426 = vadd.f32 0.0, %v2425
      %v2427 = vpop.f32.mrf.mxu0
      %v2428 = vpop.f32.mrf.mxu0
      %v2429 = vadd.f32 0.0, %v2428
      %v2430 = vpop.f32.mrf.mxu0
      %2431 = vmatprep.mubr.bf16.mxu0 0
      %2432 = vmatmul.mubr.bf16.gmra.mxu0 %v2360
      %v2433 = vpop.f32.mrf.mxu0
      %v2434 = vadd.f32 0.0, %v2433
      %v2435 = vpop.f32.mrf.mxu0
      %v2436 = vpop.f32.mrf.mxu0
      %v2437 = vadd.f32 0.0, %v2436
      %v2438 = vpop.f32.mrf.mxu0
      %2439 = vmatprep.mubr.bf16.mxu0 0
      %2440 = vmatmul.mubr.bf16.gmra.mxu0 %v2363
      %v2441 = vpop.f32.mrf.mxu0
      %v2442 = vadd.f32 0.0, %v2441
      %v2443 = vpop.f32.mrf.mxu0
      %v2444 = vpop.f32.mrf.mxu0
      %v2445 = vadd.f32 0.0, %v2444
      %v2446 = vpop.f32.mrf.mxu0
      %2447 = vmatprep.mubr.bf16.mxu0 0
      %2448 = vmatmul.mubr.bf16.gmra.mxu0 %v2366
      %v2449 = vpop.f32.mrf.mxu0
      %v2450 = vadd.f32 0.0, %v2449
      %v2451 = vpop.f32.mrf.mxu0
      %v2452 = vpop.f32.mrf.mxu0
      %v2453 = vadd.f32 0.0, %v2452
      %v2454 = vpop.f32.mrf.mxu0
      %2455 = vmatprep.mubr.bf16.mxu0 0
      %2456 = vmatmul.mubr.bf16.gmra.mxu0 %v2369
      %v2457 = vpop.f32.mrf.mxu0
      %v2458 = vadd.f32 0.0, %v2457
      %v2459 = vpop.f32.mrf.mxu0
      %v2460 = vpop.f32.mrf.mxu0
      %v2461 = vadd.f32 0.0, %v2460
      %v2462 = vpop.f32.mrf.mxu0
      %2463 = vmatprep.mubr.bf16.mxu0 0
      %2464 = vmatmul.mubr.bf16.gmra.mxu0 %v2372
      %v2465 = vpop.f32.mrf.mxu0
      %v2466 = vadd.f32 0.0, %v2465
      %v2467 = vpop.f32.mrf.mxu0
      %v2468 = vpop.f32.mrf.mxu0
      %v2469 = vadd.f32 0.0, %v2468
      %v2470 = vpop.f32.mrf.mxu0
      %2471 = vmatprep.mubr.bf16.mxu0 0
      %2472 = vmatmul.mubr.bf16.gmra.mxu0 %v2375
      %v2473 = vpop.f32.mrf.mxu0
      %v2474 = vadd.f32 0.0, %v2473
      %v2475 = vpop.f32.mrf.mxu0
      %v2476 = vpop.f32.mrf.mxu0
      %v2477 = vadd.f32 0.0, %v2476
      %v2478 = vpop.f32.mrf.mxu0
      %2479 = vmatprep.mubr.bf16.mxu0 0
      %2480 = vmatmul.mubr.bf16.gmra.mxu0 %v2378
      %v2481 = vpop.f32.mrf.mxu0
      %v2482 = vadd.f32 0.0, %v2481
      %v2483 = vpop.f32.mrf.mxu0
      %v2484 = vpop.f32.mrf.mxu0
      %v2485 = vadd.f32 0.0, %v2484
      %v2486 = vpop.f32.mrf.mxu0
      %2487 = vmatprep.mubr.bf16.mxu0 0
      %2488 = vmatmul.mubr.bf16.gmra.mxu0 %v2381
      %v2489 = vpop.f32.mrf.mxu0
      %v2490 = vadd.f32 0.0, %v2489
      %v2491 = vpop.f32.mrf.mxu0
      %v2492 = vpop.f32.mrf.mxu0
      %v2493 = vadd.f32 0.0, %v2492
      %v2494 = vpop.f32.mrf.mxu0
      %2495 = vdwg.mxu0
      %v2496 = vadd.f32 %v2173, %v2418
      %v2497 = vadd.f32 %v2174, %v2421
      %v2498 = vadd.f32 %v2175, %v2426
      %v2499 = vadd.f32 %v2176, %v2429
      %v2500 = vadd.f32 %v2177, %v2434
      %v2501 = vadd.f32 %v2178, %v2437
      %v2502 = vadd.f32 %v2179, %v2442
      %v2503 = vadd.f32 %v2180, %v2445
      %v2504 = vadd.f32 %v2181, %v2450
      %v2505 = vadd.f32 %v2182, %v2453
      %v2506 = vadd.f32 %v2183, %v2458
      %v2507 = vadd.f32 %v2184, %v2461
      %v2508 = vadd.f32 %v2185, %v2466
      %v2509 = vadd.f32 %v2186, %v2469
      %v2510 = vadd.f32 %v2187, %v2474
      %v2511 = vadd.f32 %v2188, %v2477
      %v2512 = vadd.f32 %v2189, %v2482
      %v2513 = vadd.f32 %v2190, %v2485
      %v2514 = vadd.f32 %v2191, %v2490
      %v2515 = vadd.f32 %v2192, %v2493
      %v2518 = vunpack.c.l.b16 %v1303
      %v2519 = vunpack.c.l.b16 %v1304
      %v2520 = vpack.c.b16 %v2519, %v2518
      %v2523 = vsel %vm1501, %v2343, 0
      %2525 = vmatprep.subr.bf16.mxu0 0
      %2526 = vmatpush1.bf16.msra.mxu0 0
      %2527 = vmatprep.subr.bf16.mxu0 0
      %2528 = vmatpush1.bf16.msra.mxu0 0
      %2529 = vmatprep.subr.bf16.mxu0 0
      %2530 = vmatpush1.bf16.msra.mxu0 0
      %2531 = vmatprep.subr.bf16.mxu0 0
      %2532 = vmatpush1.bf16.msra.mxu0 0
      %2533 = vmatprep.subr.bf16.mxu0 0
      %2534 = vmatpush1.bf16.msra.mxu0 0
      %2535 = vmatprep.subr.bf16.mxu0 0
      %2536 = vmatpush1.bf16.msra.mxu0 0
      %2537 = vmatprep.subr.bf16.mxu0 0
      %2538 = vmatpush1.bf16.msra.mxu0 0
      %2539 = vmatprep.subr.bf16.mxu0 0
      %2540 = vmatpush1.bf16.msra.mxu0 %v2520
      %2541 = vmatprep.subr.bf16.mxu0 0
      %2542 = vmatpush2.bf16.msra.mxu0 0
      %2543 = vmatprep.subr.bf16.mxu0 0
      %2544 = vmatpush2.bf16.msra.mxu0 0
      %2545 = vmatprep.subr.bf16.mxu0 0
      %2546 = vmatpush2.bf16.msra.mxu0 0
      %2547 = vmatprep.subr.bf16.mxu0 0
      %2548 = vmatpush2.bf16.msra.mxu0 0
      %2549 = vmatprep.subr.bf16.mxu0 0
      %2550 = vmatpush2.bf16.msra.mxu0 0
      %2551 = vmatprep.subr.bf16.mxu0 0
      %2552 = vmatpush2.bf16.msra.mxu0 0
      %2553 = vmatprep.subr.bf16.mxu0 0
      %2554 = vmatpush2.bf16.msra.mxu0 0
      %2555 = vmatprep.subr.bf16.mxu0 0
      %2556 = vmatpush2.bf16.msra.mxu0 0
      %2557 = vmatprep.mubr.bf16.mxu0 0
      %2558 = vmatmul.mubr.bf16.gmra.mxu0 %v2357
      %v2559 = vpop.f32.mrf.mxu0
      %v2560 = vadd.f32 0.0, %v2559
      %v2561 = vpop.f32.mrf.mxu0
      %v2562 = vpop.f32.mrf.mxu0
      %v2563 = vadd.f32 0.0, %v2562
      %v2564 = vpop.f32.mrf.mxu0
      %2565 = vmatprep.mubr.bf16.mxu0 0
      %2566 = vmatmul.mubr.bf16.gmra.mxu0 %v2360
      %v2567 = vpop.f32.mrf.mxu0
      %v2568 = vadd.f32 0.0, %v2567
      %v2569 = vpop.f32.mrf.mxu0
      %v2570 = vpop.f32.mrf.mxu0
      %v2571 = vadd.f32 0.0, %v2570
      %v2572 = vpop.f32.mrf.mxu0
      %2573 = vmatprep.mubr.bf16.mxu0 0
      %2574 = vmatmul.mubr.bf16.gmra.mxu0 %v2363
      %v2575 = vpop.f32.mrf.mxu0
      %v2576 = vadd.f32 0.0, %v2575
      %v2577 = vpop.f32.mrf.mxu0
      %v2578 = vpop.f32.mrf.mxu0
      %v2579 = vadd.f32 0.0, %v2578
      %v2580 = vpop.f32.mrf.mxu0
      %2581 = vmatprep.mubr.bf16.mxu0 0
      %2582 = vmatmul.mubr.bf16.gmra.mxu0 %v2366
      %v2583 = vpop.f32.mrf.mxu0
      %v2584 = vadd.f32 0.0, %v2583
      %v2585 = vpop.f32.mrf.mxu0
      %v2586 = vpop.f32.mrf.mxu0
      %v2587 = vadd.f32 0.0, %v2586
      %v2588 = vpop.f32.mrf.mxu0
      %2589 = vmatprep.mubr.bf16.mxu0 0
      %2590 = vmatmul.mubr.bf16.gmra.mxu0 %v2369
      %v2591 = vpop.f32.mrf.mxu0
      %v2592 = vadd.f32 0.0, %v2591
      %v2593 = vpop.f32.mrf.mxu0
      %v2594 = vpop.f32.mrf.mxu0
      %v2595 = vadd.f32 0.0, %v2594
      %v2596 = vpop.f32.mrf.mxu0
      %2597 = vmatprep.mubr.bf16.mxu0 0
      %2598 = vmatmul.mubr.bf16.gmra.mxu0 %v2372
      %v2599 = vpop.f32.mrf.mxu0
      %v2600 = vadd.f32 0.0, %v2599
      %v2601 = vpop.f32.mrf.mxu0
      %v2602 = vpop.f32.mrf.mxu0
      %v2603 = vadd.f32 0.0, %v2602
      %v2604 = vpop.f32.mrf.mxu0
      %2605 = vmatprep.mubr.bf16.mxu0 0
      %2606 = vmatmul.mubr.bf16.gmra.mxu0 %v2375
      %v2607 = vpop.f32.mrf.mxu0
      %v2608 = vadd.f32 0.0, %v2607
      %v2609 = vpop.f32.mrf.mxu0
      %v2610 = vpop.f32.mrf.mxu0
      %v2611 = vadd.f32 0.0, %v2610
      %v2612 = vpop.f32.mrf.mxu0
      %2613 = vmatprep.mubr.bf16.mxu0 0
      %2614 = vmatmul.mubr.bf16.gmra.mxu0 %v2378
      %v2615 = vpop.f32.mrf.mxu0
      %v2616 = vadd.f32 0.0, %v2615
      %v2617 = vpop.f32.mrf.mxu0
      %v2618 = vpop.f32.mrf.mxu0
      %v2619 = vadd.f32 0.0, %v2618
      %v2620 = vpop.f32.mrf.mxu0
      %2621 = vmatprep.mubr.bf16.mxu0 0
      %2622 = vmatmul.mubr.bf16.gmra.mxu0 %v2381
      %v2623 = vpop.f32.mrf.mxu0
      %v2624 = vadd.f32 0.0, %v2623
      %v2625 = vpop.f32.mrf.mxu0
      %v2626 = vpop.f32.mrf.mxu0
      %v2627 = vadd.f32 0.0, %v2626
      %v2628 = vpop.f32.mrf.mxu0
      %2629 = vmatprep.mubr.bf16.mxu0 0
      %2630 = vmatmul.mubr.bf16.gmra.mxu0 %v2523
      %v2631 = vpop.f32.mrf.mxu0
      %v2632 = vadd.f32 0.0, %v2631
      %v2633 = vpop.f32.mrf.mxu0
      %v2634 = vpop.f32.mrf.mxu0
      %v2635 = vadd.f32 0.0, %v2634
      %v2636 = vpop.f32.mrf.mxu0
      %2637 = vdwg.mxu0
      %v2638 = vadd.f32 %v2496, %v2560
      %v2639 = vadd.f32 %v2497, %v2563
      %v2640 = vadd.f32 %v2498, %v2568
      %v2641 = vadd.f32 %v2499, %v2571
      %v2642 = vadd.f32 %v2500, %v2576
      %v2643 = vadd.f32 %v2501, %v2579
      %v2644 = vadd.f32 %v2502, %v2584
      %v2645 = vadd.f32 %v2503, %v2587
      %v2646 = vadd.f32 %v2504, %v2592
      %v2647 = vadd.f32 %v2505, %v2595
      %v2648 = vadd.f32 %v2506, %v2600
      %v2649 = vadd.f32 %v2507, %v2603
      %v2650 = vadd.f32 %v2508, %v2608
      %v2651 = vadd.f32 %v2509, %v2611
      %v2652 = vadd.f32 %v2510, %v2616
      %v2653 = vadd.f32 %v2511, %v2619
      %v2654 = vadd.f32 %v2512, %v2624
      %v2655 = vadd.f32 %v2513, %v2627
      %v2656 = vadd.f32 %v2514, %v2632
      %v2657 = vadd.f32 %v2515, %v2635
      %v2660 = vunpack.c.l.b16 %v1313
      %v2661 = vunpack.c.l.b16 %v1314
      %v2662 = vpack.c.b16 %v2661, %v2660
      %v2665 = vsel %vm1501, %v2344, 0
      %2667 = vmatprep.subr.bf16.mxu0 0
      %2668 = vmatpush1.bf16.msra.mxu0 0
      %2669 = vmatprep.subr.bf16.mxu0 0
      %2670 = vmatpush1.bf16.msra.mxu0 0
      %2671 = vmatprep.subr.bf16.mxu0 0
      %2672 = vmatpush1.bf16.msra.mxu0 0
      %2673 = vmatprep.subr.bf16.mxu0 0
      %2674 = vmatpush1.bf16.msra.mxu0 0
      %2675 = vmatprep.subr.bf16.mxu0 0
      %2676 = vmatpush1.bf16.msra.mxu0 0
      %2677 = vmatprep.subr.bf16.mxu0 0
      %2678 = vmatpush1.bf16.msra.mxu0 0
      %2679 = vmatprep.subr.bf16.mxu0 0
      %2680 = vmatpush1.bf16.msra.mxu0 0
      %2681 = vmatprep.subr.bf16.mxu0 0
      %2682 = vmatpush1.bf16.msra.mxu0 %v2662
      %2683 = vmatprep.subr.bf16.mxu0 0
      %2684 = vmatpush2.bf16.msra.mxu0 0
      %2685 = vmatprep.subr.bf16.mxu0 0
      %2686 = vmatpush2.bf16.msra.mxu0 0
      %2687 = vmatprep.subr.bf16.mxu0 0
      %2688 = vmatpush2.bf16.msra.mxu0 0
      %2689 = vmatprep.subr.bf16.mxu0 0
      %2690 = vmatpush2.bf16.msra.mxu0 0
      %2691 = vmatprep.subr.bf16.mxu0 0
      %2692 = vmatpush2.bf16.msra.mxu0 0
      %2693 = vmatprep.subr.bf16.mxu0 0
      %2694 = vmatpush2.bf16.msra.mxu0 0
      %2695 = vmatprep.subr.bf16.mxu0 0
      %2696 = vmatpush2.bf16.msra.mxu0 0
      %2697 = vmatprep.subr.bf16.mxu0 0
      %2698 = vmatpush2.bf16.msra.mxu0 0
      %2699 = vmatprep.mubr.bf16.mxu0 0
      %2700 = vmatmul.mubr.bf16.gmra.mxu0 %v2360
      %v2701 = vpop.f32.mrf.mxu0
      %v2702 = vadd.f32 0.0, %v2701
      %v2703 = vpop.f32.mrf.mxu0
      %v2704 = vpop.f32.mrf.mxu0
      %v2705 = vadd.f32 0.0, %v2704
      %v2706 = vpop.f32.mrf.mxu0
      %2707 = vmatprep.mubr.bf16.mxu0 0
      %2708 = vmatmul.mubr.bf16.gmra.mxu0 %v2363
      %v2709 = vpop.f32.mrf.mxu0
      %v2710 = vadd.f32 0.0, %v2709
      %v2711 = vpop.f32.mrf.mxu0
      %v2712 = vpop.f32.mrf.mxu0
      %v2713 = vadd.f32 0.0, %v2712
      %v2714 = vpop.f32.mrf.mxu0
      %2715 = vmatprep.mubr.bf16.mxu0 0
      %2716 = vmatmul.mubr.bf16.gmra.mxu0 %v2366
      %v2717 = vpop.f32.mrf.mxu0
      %v2718 = vadd.f32 0.0, %v2717
      %v2719 = vpop.f32.mrf.mxu0
      %v2720 = vpop.f32.mrf.mxu0
      %v2721 = vadd.f32 0.0, %v2720
      %v2722 = vpop.f32.mrf.mxu0
      %2723 = vmatprep.mubr.bf16.mxu0 0
      %2724 = vmatmul.mubr.bf16.gmra.mxu0 %v2369
      %v2725 = vpop.f32.mrf.mxu0
      %v2726 = vadd.f32 0.0, %v2725
      %v2727 = vpop.f32.mrf.mxu0
      %v2728 = vpop.f32.mrf.mxu0
      %v2729 = vadd.f32 0.0, %v2728
      %v2730 = vpop.f32.mrf.mxu0
      %2731 = vmatprep.mubr.bf16.mxu0 0
      %2732 = vmatmul.mubr.bf16.gmra.mxu0 %v2372
      %v2733 = vpop.f32.mrf.mxu0
      %v2734 = vadd.f32 0.0, %v2733
      %v2735 = vpop.f32.mrf.mxu0
      %v2736 = vpop.f32.mrf.mxu0
      %v2737 = vadd.f32 0.0, %v2736
      %v2738 = vpop.f32.mrf.mxu0
      %2739 = vmatprep.mubr.bf16.mxu0 0
      %2740 = vmatmul.mubr.bf16.gmra.mxu0 %v2375
      %v2741 = vpop.f32.mrf.mxu0
      %v2742 = vadd.f32 0.0, %v2741
      %v2743 = vpop.f32.mrf.mxu0
      %v2744 = vpop.f32.mrf.mxu0
      %v2745 = vadd.f32 0.0, %v2744
      %v2746 = vpop.f32.mrf.mxu0
      %2747 = vmatprep.mubr.bf16.mxu0 0
      %2748 = vmatmul.mubr.bf16.gmra.mxu0 %v2378
      %v2749 = vpop.f32.mrf.mxu0
      %v2750 = vadd.f32 0.0, %v2749
      %v2751 = vpop.f32.mrf.mxu0
      %v2752 = vpop.f32.mrf.mxu0
      %v2753 = vadd.f32 0.0, %v2752
      %v2754 = vpop.f32.mrf.mxu0
      %2755 = vmatprep.mubr.bf16.mxu0 0
      %2756 = vmatmul.mubr.bf16.gmra.mxu0 %v2381
      %v2757 = vpop.f32.mrf.mxu0
      %v2758 = vadd.f32 0.0, %v2757
      %v2759 = vpop.f32.mrf.mxu0
      %v2760 = vpop.f32.mrf.mxu0
      %v2761 = vadd.f32 0.0, %v2760
      %v2762 = vpop.f32.mrf.mxu0
      %2763 = vmatprep.mubr.bf16.mxu0 0
      %2764 = vmatmul.mubr.bf16.gmra.mxu0 %v2523
      %v2765 = vpop.f32.mrf.mxu0
      %v2766 = vadd.f32 0.0, %v2765
      %v2767 = vpop.f32.mrf.mxu0
      %v2768 = vpop.f32.mrf.mxu0
      %v2769 = vadd.f32 0.0, %v2768
      %v2770 = vpop.f32.mrf.mxu0
      %2771 = vmatprep.mubr.bf16.mxu0 0
      %2772 = vmatmul.mubr.bf16.gmra.mxu0 %v2665
      %v2773 = vpop.f32.mrf.mxu0
      %v2774 = vadd.f32 0.0, %v2773
      %v2775 = vpop.f32.mrf.mxu0
      %v2776 = vpop.f32.mrf.mxu0
      %v2777 = vadd.f32 0.0, %v2776
      %v2778 = vpop.f32.mrf.mxu0
      %2779 = vdwg.mxu0
      %v2780 = vadd.f32 %v2638, %v2702
      %v2781 = vadd.f32 %v2639, %v2705
      %v2782 = vadd.f32 %v2640, %v2710
      %v2783 = vadd.f32 %v2641, %v2713
      %v2784 = vadd.f32 %v2642, %v2718
      %v2785 = vadd.f32 %v2643, %v2721
      %v2786 = vadd.f32 %v2644, %v2726
      %v2787 = vadd.f32 %v2645, %v2729
      %v2788 = vadd.f32 %v2646, %v2734
      %v2789 = vadd.f32 %v2647, %v2737
      %v2790 = vadd.f32 %v2648, %v2742
      %v2791 = vadd.f32 %v2649, %v2745
      %v2792 = vadd.f32 %v2650, %v2750
      %v2793 = vadd.f32 %v2651, %v2753
      %v2794 = vadd.f32 %v2652, %v2758
      %v2795 = vadd.f32 %v2653, %v2761
      %v2796 = vadd.f32 %v2654, %v2766
      %v2797 = vadd.f32 %v2655, %v2769
      %v2798 = vadd.f32 %v2656, %v2774
      %v2799 = vadd.f32 %v2657, %v2777
      %v2802 = vunpack.c.l.b16 %v1323
      %v2803 = vunpack.c.l.b16 %v1324
      %v2804 = vpack.c.b16 %v2803, %v2802
      %v2807 = vsel %vm1501, %v2345, 0
      %2809 = vmatprep.subr.bf16.mxu0 0
      %2810 = vmatpush1.bf16.msra.mxu0 0
      %2811 = vmatprep.subr.bf16.mxu0 0
      %2812 = vmatpush1.bf16.msra.mxu0 0
      %2813 = vmatprep.subr.bf16.mxu0 0
      %2814 = vmatpush1.bf16.msra.mxu0 0
      %2815 = vmatprep.subr.bf16.mxu0 0
      %2816 = vmatpush1.bf16.msra.mxu0 0
      %2817 = vmatprep.subr.bf16.mxu0 0
      %2818 = vmatpush1.bf16.msra.mxu0 0
      %2819 = vmatprep.subr.bf16.mxu0 0
      %2820 = vmatpush1.bf16.msra.mxu0 0
      %2821 = vmatprep.subr.bf16.mxu0 0
      %2822 = vmatpush1.bf16.msra.mxu0 0
      %2823 = vmatprep.subr.bf16.mxu0 0
      %2824 = vmatpush1.bf16.msra.mxu0 %v2804
      %2825 = vmatprep.subr.bf16.mxu0 0
      %2826 = vmatpush2.bf16.msra.mxu0 0
      %2827 = vmatprep.subr.bf16.mxu0 0
      %2828 = vmatpush2.bf16.msra.mxu0 0
      %2829 = vmatprep.subr.bf16.mxu0 0
      %2830 = vmatpush2.bf16.msra.mxu0 0
      %2831 = vmatprep.subr.bf16.mxu0 0
      %2832 = vmatpush2.bf16.msra.mxu0 0
      %2833 = vmatprep.subr.bf16.mxu0 0
      %2834 = vmatpush2.bf16.msra.mxu0 0
      %2835 = vmatprep.subr.bf16.mxu0 0
      %2836 = vmatpush2.bf16.msra.mxu0 0
      %2837 = vmatprep.subr.bf16.mxu0 0
      %2838 = vmatpush2.bf16.msra.mxu0 0
      %2839 = vmatprep.subr.bf16.mxu0 0
      %2840 = vmatpush2.bf16.msra.mxu0 0
      %2841 = vmatprep.mubr.bf16.mxu0 0
      %2842 = vmatmul.mubr.bf16.gmra.mxu0 %v2363
      %v2843 = vpop.f32.mrf.mxu0
      %v2844 = vadd.f32 0.0, %v2843
      %v2845 = vpop.f32.mrf.mxu0
      %v2846 = vpop.f32.mrf.mxu0
      %v2847 = vadd.f32 0.0, %v2846
      %v2848 = vpop.f32.mrf.mxu0
      %2849 = vmatprep.mubr.bf16.mxu0 0
      %2850 = vmatmul.mubr.bf16.gmra.mxu0 %v2366
      %v2851 = vpop.f32.mrf.mxu0
      %v2852 = vadd.f32 0.0, %v2851
      %v2853 = vpop.f32.mrf.mxu0
      %v2854 = vpop.f32.mrf.mxu0
      %v2855 = vadd.f32 0.0, %v2854
      %v2856 = vpop.f32.mrf.mxu0
      %2857 = vmatprep.mubr.bf16.mxu0 0
      %2858 = vmatmul.mubr.bf16.gmra.mxu0 %v2369
      %v2859 = vpop.f32.mrf.mxu0
      %v2860 = vadd.f32 0.0, %v2859
      %v2861 = vpop.f32.mrf.mxu0
      %v2862 = vpop.f32.mrf.mxu0
      %v2863 = vadd.f32 0.0, %v2862
      %v2864 = vpop.f32.mrf.mxu0
      %2865 = vmatprep.mubr.bf16.mxu0 0
      %2866 = vmatmul.mubr.bf16.gmra.mxu0 %v2372
      %v2867 = vpop.f32.mrf.mxu0
      %v2868 = vadd.f32 0.0, %v2867
      %v2869 = vpop.f32.mrf.mxu0
      %v2870 = vpop.f32.mrf.mxu0
      %v2871 = vadd.f32 0.0, %v2870
      %v2872 = vpop.f32.mrf.mxu0
      %2873 = vmatprep.mubr.bf16.mxu0 0
      %2874 = vmatmul.mubr.bf16.gmra.mxu0 %v2375
      %v2875 = vpop.f32.mrf.mxu0
      %v2876 = vadd.f32 0.0, %v2875
      %v2877 = vpop.f32.mrf.mxu0
      %v2878 = vpop.f32.mrf.mxu0
      %v2879 = vadd.f32 0.0, %v2878
      %v2880 = vpop.f32.mrf.mxu0
      %2881 = vmatprep.mubr.bf16.mxu0 0
      %2882 = vmatmul.mubr.bf16.gmra.mxu0 %v2378
      %v2883 = vpop.f32.mrf.mxu0
      %v2884 = vadd.f32 0.0, %v2883
      %v2885 = vpop.f32.mrf.mxu0
      %v2886 = vpop.f32.mrf.mxu0
      %v2887 = vadd.f32 0.0, %v2886
      %v2888 = vpop.f32.mrf.mxu0
      %2889 = vmatprep.mubr.bf16.mxu0 0
      %2890 = vmatmul.mubr.bf16.gmra.mxu0 %v2381
      %v2891 = vpop.f32.mrf.mxu0
      %v2892 = vadd.f32 0.0, %v2891
      %v2893 = vpop.f32.mrf.mxu0
      %v2894 = vpop.f32.mrf.mxu0
      %v2895 = vadd.f32 0.0, %v2894
      %v2896 = vpop.f32.mrf.mxu0
      %2897 = vmatprep.mubr.bf16.mxu0 0
      %2898 = vmatmul.mubr.bf16.gmra.mxu0 %v2523
      %v2899 = vpop.f32.mrf.mxu0
      %v2900 = vadd.f32 0.0, %v2899
      %v2901 = vpop.f32.mrf.mxu0
      %v2902 = vpop.f32.mrf.mxu0
      %v2903 = vadd.f32 0.0, %v2902
      %v2904 = vpop.f32.mrf.mxu0
      %2905 = vmatprep.mubr.bf16.mxu0 0
      %2906 = vmatmul.mubr.bf16.gmra.mxu0 %v2665
      %v2907 = vpop.f32.mrf.mxu0
      %v2908 = vadd.f32 0.0, %v2907
      %v2909 = vpop.f32.mrf.mxu0
      %v2910 = vpop.f32.mrf.mxu0
      %v2911 = vadd.f32 0.0, %v2910
      %v2912 = vpop.f32.mrf.mxu0
      %2913 = vmatprep.mubr.bf16.mxu0 0
      %2914 = vmatmul.mubr.bf16.gmra.mxu0 %v2807
      %v2915 = vpop.f32.mrf.mxu0
      %v2916 = vadd.f32 0.0, %v2915
      %v2917 = vpop.f32.mrf.mxu0
      %v2918 = vpop.f32.mrf.mxu0
      %v2919 = vadd.f32 0.0, %v2918
      %v2920 = vpop.f32.mrf.mxu0
      %2921 = vdwg.mxu0
      %v2922 = vadd.f32 %v2780, %v2844
      %v2923 = vadd.f32 %v2781, %v2847
      %v2924 = vadd.f32 %v2782, %v2852
      %v2925 = vadd.f32 %v2783, %v2855
      %v2926 = vadd.f32 %v2784, %v2860
      %v2927 = vadd.f32 %v2785, %v2863
      %v2928 = vadd.f32 %v2786, %v2868
      %v2929 = vadd.f32 %v2787, %v2871
      %v2930 = vadd.f32 %v2788, %v2876
      %v2931 = vadd.f32 %v2789, %v2879
      %v2932 = vadd.f32 %v2790, %v2884
      %v2933 = vadd.f32 %v2791, %v2887
      %v2934 = vadd.f32 %v2792, %v2892
      %v2935 = vadd.f32 %v2793, %v2895
      %v2936 = vadd.f32 %v2794, %v2900
      %v2937 = vadd.f32 %v2795, %v2903
      %v2938 = vadd.f32 %v2796, %v2908
      %v2939 = vadd.f32 %v2797, %v2911
      %v2940 = vadd.f32 %v2798, %v2916
      %v2941 = vadd.f32 %v2799, %v2919
      %v2944 = vunpack.c.l.b16 %v1333
      %v2945 = vunpack.c.l.b16 %v1334
      %v2946 = vpack.c.b16 %v2945, %v2944
      %v2949 = vsel %vm1501, %v2346, 0
      %2951 = vmatprep.subr.bf16.mxu0 0
      %2952 = vmatpush1.bf16.msra.mxu0 0
      %2953 = vmatprep.subr.bf16.mxu0 0
      %2954 = vmatpush1.bf16.msra.mxu0 0
      %2955 = vmatprep.subr.bf16.mxu0 0
      %2956 = vmatpush1.bf16.msra.mxu0 0
      %2957 = vmatprep.subr.bf16.mxu0 0
      %2958 = vmatpush1.bf16.msra.mxu0 0
      %2959 = vmatprep.subr.bf16.mxu0 0
      %2960 = vmatpush1.bf16.msra.mxu0 0
      %2961 = vmatprep.subr.bf16.mxu0 0
      %2962 = vmatpush1.bf16.msra.mxu0 0
      %2963 = vmatprep.subr.bf16.mxu0 0
      %2964 = vmatpush1.bf16.msra.mxu0 0
      %2965 = vmatprep.subr.bf16.mxu0 0
      %2966 = vmatpush1.bf16.msra.mxu0 %v2946
      %2967 = vmatprep.subr.bf16.mxu0 0
      %2968 = vmatpush2.bf16.msra.mxu0 0
      %2969 = vmatprep.subr.bf16.mxu0 0
      %2970 = vmatpush2.bf16.msra.mxu0 0
      %2971 = vmatprep.subr.bf16.mxu0 0
      %2972 = vmatpush2.bf16.msra.mxu0 0
      %2973 = vmatprep.subr.bf16.mxu0 0
      %2974 = vmatpush2.bf16.msra.mxu0 0
      %2975 = vmatprep.subr.bf16.mxu0 0
      %2976 = vmatpush2.bf16.msra.mxu0 0
      %2977 = vmatprep.subr.bf16.mxu0 0
      %2978 = vmatpush2.bf16.msra.mxu0 0
      %2979 = vmatprep.subr.bf16.mxu0 0
      %2980 = vmatpush2.bf16.msra.mxu0 0
      %2981 = vmatprep.subr.bf16.mxu0 0
      %2982 = vmatpush2.bf16.msra.mxu0 0
      %2983 = vmatprep.mubr.bf16.mxu0 0
      %2984 = vmatmul.mubr.bf16.gmra.mxu0 %v2366
      %v2985 = vpop.f32.mrf.mxu0
      %v2986 = vadd.f32 0.0, %v2985
      %v2987 = vpop.f32.mrf.mxu0
      %v2988 = vpop.f32.mrf.mxu0
      %v2989 = vadd.f32 0.0, %v2988
      %v2990 = vpop.f32.mrf.mxu0
      %2991 = vmatprep.mubr.bf16.mxu0 0
      %2992 = vmatmul.mubr.bf16.gmra.mxu0 %v2369
      %v2993 = vpop.f32.mrf.mxu0
      %v2994 = vadd.f32 0.0, %v2993
      %v2995 = vpop.f32.mrf.mxu0
      %v2996 = vpop.f32.mrf.mxu0
      %v2997 = vadd.f32 0.0, %v2996
      %v2998 = vpop.f32.mrf.mxu0
      %2999 = vmatprep.mubr.bf16.mxu0 0
      %3000 = vmatmul.mubr.bf16.gmra.mxu0 %v2372
      %v3001 = vpop.f32.mrf.mxu0
      %v3002 = vadd.f32 0.0, %v3001
      %v3003 = vpop.f32.mrf.mxu0
      %v3004 = vpop.f32.mrf.mxu0
      %v3005 = vadd.f32 0.0, %v3004
      %v3006 = vpop.f32.mrf.mxu0
      %3007 = vmatprep.mubr.bf16.mxu0 0
      %3008 = vmatmul.mubr.bf16.gmra.mxu0 %v2375
      %v3009 = vpop.f32.mrf.mxu0
      %v3010 = vadd.f32 0.0, %v3009
      %v3011 = vpop.f32.mrf.mxu0
      %v3012 = vpop.f32.mrf.mxu0
      %v3013 = vadd.f32 0.0, %v3012
      %v3014 = vpop.f32.mrf.mxu0
      %3015 = vmatprep.mubr.bf16.mxu0 0
      %3016 = vmatmul.mubr.bf16.gmra.mxu0 %v2378
      %v3017 = vpop.f32.mrf.mxu0
      %v3018 = vadd.f32 0.0, %v3017
      %v3019 = vpop.f32.mrf.mxu0
      %v3020 = vpop.f32.mrf.mxu0
      %v3021 = vadd.f32 0.0, %v3020
      %v3022 = vpop.f32.mrf.mxu0
      %3023 = vmatprep.mubr.bf16.mxu0 0
      %3024 = vmatmul.mubr.bf16.gmra.mxu0 %v2381
      %v3025 = vpop.f32.mrf.mxu0
      %v3026 = vadd.f32 0.0, %v3025
      %v3027 = vpop.f32.mrf.mxu0
      %v3028 = vpop.f32.mrf.mxu0
      %v3029 = vadd.f32 0.0, %v3028
      %v3030 = vpop.f32.mrf.mxu0
      %3031 = vmatprep.mubr.bf16.mxu0 0
      %3032 = vmatmul.mubr.bf16.gmra.mxu0 %v2523
      %v3033 = vpop.f32.mrf.mxu0
      %v3034 = vadd.f32 0.0, %v3033
      %v3035 = vpop.f32.mrf.mxu0
      %v3036 = vpop.f32.mrf.mxu0
      %v3037 = vadd.f32 0.0, %v3036
      %v3038 = vpop.f32.mrf.mxu0
      %3039 = vmatprep.mubr.bf16.mxu0 0
      %3040 = vmatmul.mubr.bf16.gmra.mxu0 %v2665
      %v3041 = vpop.f32.mrf.mxu0
      %v3042 = vadd.f32 0.0, %v3041
      %v3043 = vpop.f32.mrf.mxu0
      %v3044 = vpop.f32.mrf.mxu0
      %v3045 = vadd.f32 0.0, %v3044
      %v3046 = vpop.f32.mrf.mxu0
      %3047 = vmatprep.mubr.bf16.mxu0 0
      %3048 = vmatmul.mubr.bf16.gmra.mxu0 %v2807
      %v3049 = vpop.f32.mrf.mxu0
      %v3050 = vadd.f32 0.0, %v3049
      %v3051 = vpop.f32.mrf.mxu0
      %v3052 = vpop.f32.mrf.mxu0
      %v3053 = vadd.f32 0.0, %v3052
      %v3054 = vpop.f32.mrf.mxu0
      %3055 = vmatprep.mubr.bf16.mxu0 0
      %3056 = vmatmul.mubr.bf16.gmra.mxu0 %v2949
      %v3057 = vpop.f32.mrf.mxu0
      %v3058 = vadd.f32 0.0, %v3057
      %v3059 = vpop.f32.mrf.mxu0
      %v3060 = vpop.f32.mrf.mxu0
      %v3061 = vadd.f32 0.0, %v3060
      %v3062 = vpop.f32.mrf.mxu0
      %3063 = vdwg.mxu0
      %v3064 = vadd.f32 %v2922, %v2986
      %v3065 = vadd.f32 %v2923, %v2989
      %v3066 = vadd.f32 %v2924, %v2994
      %v3067 = vadd.f32 %v2925, %v2997
      %v3068 = vadd.f32 %v2926, %v3002
      %v3069 = vadd.f32 %v2927, %v3005
      %v3070 = vadd.f32 %v2928, %v3010
      %v3071 = vadd.f32 %v2929, %v3013
      %v3072 = vadd.f32 %v2930, %v3018
      %v3073 = vadd.f32 %v2931, %v3021
      %v3074 = vadd.f32 %v2932, %v3026
      %v3075 = vadd.f32 %v2933, %v3029
      %v3076 = vadd.f32 %v2934, %v3034
      %v3077 = vadd.f32 %v2935, %v3037
      %v3078 = vadd.f32 %v2936, %v3042
      %v3079 = vadd.f32 %v2937, %v3045
      %v3080 = vadd.f32 %v2938, %v3050
      %v3081 = vadd.f32 %v2939, %v3053
      %v3082 = vadd.f32 %v2940, %v3058
      %v3083 = vadd.f32 %v2941, %v3061
      %s3084 = scalar_lea.vmem [#allocation2], 4
      %v3085 = vld [vmem:[%s3084] ss:$2 sm:$0xff]
      %s3086 = scalar_lea.vmem [#allocation2], 20
      %v3087 = vld [vmem:[%s3086] ss:$2 sm:$0xff]
      %s3088 = scalar_lea.vmem [#allocation2], 44
      %v3089 = vld [vmem:[%s3088] ss:$2 sm:$0xff]
      %s3090 = scalar_lea.vmem [#allocation2], 60
      %v3091 = vld [vmem:[%s3090] ss:$2 sm:$0xff]
      %s3092 = scalar_lea.vmem [#allocation2], 84
      %v3093 = vld [vmem:[%s3092] ss:$2 sm:$0xff]
      %s3094 = scalar_lea.vmem [#allocation2], 100
      %v3095 = vld [vmem:[%s3094] ss:$2 sm:$0xff]
      %s3096 = scalar_lea.vmem [#allocation2], 124
      %v3097 = vld [vmem:[%s3096] ss:$2 sm:$0xff]
      %s3098 = scalar_lea.vmem [#allocation2], 140
      %v3099 = vld [vmem:[%s3098] ss:$2 sm:$0xff]
      %s3100 = scalar_lea.vmem [#allocation2], 164
      %v3101 = vld [vmem:[%s3100] ss:$2 sm:$0xff]
      %s3102 = scalar_lea.vmem [#allocation2], 180
      %v3103 = vld [vmem:[%s3102] ss:$2 sm:$0xff]
      %s3104 = scalar_lea.vmem [#allocation2], 204
      %v3105 = vld [vmem:[%s3104] ss:$2 sm:$0xff]
      %s3106 = scalar_lea.vmem [#allocation2], 220
      %v3107 = vld [vmem:[%s3106] ss:$2 sm:$0xff]
      %s3108 = scalar_lea.vmem [#allocation2], 244
      %v3109 = vld [vmem:[%s3108] ss:$2 sm:$0xff]
      %s3110 = scalar_lea.vmem [#allocation2], 260
      %v3111 = vld [vmem:[%s3110] ss:$2 sm:$0xff]
      %s3112 = scalar_lea.vmem [#allocation2], 284
      %v3113 = vld [vmem:[%s3112] ss:$2 sm:$0xff]
      %s3114 = scalar_lea.vmem [#allocation2], 300
      %v3115 = vld [vmem:[%s3114] ss:$2 sm:$0xff]
      %s3116 = scalar_lea.vmem [#allocation2], 324
      %v3117 = vld [vmem:[%s3116] ss:$2 sm:$0xff]
      %s3118 = scalar_lea.vmem [#allocation2], 340
      %v3119 = vld [vmem:[%s3118] ss:$2 sm:$0xff]
      %s3120 = scalar_lea.vmem [#allocation2], 364
      %v3121 = vld [vmem:[%s3120] ss:$2 sm:$0xff]
      %s3122 = scalar_lea.vmem [#allocation2], 380
      %v3123 = vld [vmem:[%s3122] ss:$2 sm:$0xff]
      %s3124 = scalar_lea.vmem [#allocation2], 404
      %v3125 = vld [vmem:[%s3124] ss:$2 sm:$0xff]
      %s3126 = scalar_lea.vmem [#allocation2], 420
      %v3127 = vld [vmem:[%s3126] ss:$2 sm:$0xff]
      %s3128 = scalar_lea.vmem [#allocation2], 444
      %v3129 = vld [vmem:[%s3128] ss:$2 sm:$0xff]
      %s3130 = scalar_lea.vmem [#allocation2], 460
      %v3131 = vld [vmem:[%s3130] ss:$2 sm:$0xff]
      %s3132 = scalar_lea.vmem [#allocation2], 484
      %v3133 = vld [vmem:[%s3132] ss:$2 sm:$0xff]
      %s3134 = scalar_lea.vmem [#allocation2], 500
      %v3135 = vld [vmem:[%s3134] ss:$2 sm:$0xff]
      %s3136 = scalar_lea.vmem [#allocation2], 524
      %v3137 = vld [vmem:[%s3136] ss:$2 sm:$0xff]
      %s3138 = scalar_lea.vmem [#allocation2], 540
      %v3139 = vld [vmem:[%s3138] ss:$2 sm:$0xff]
      %s3140 = scalar_lea.vmem [#allocation2], 5
      %v3141 = vld [vmem:[%s3140] ss:$2 sm:$0xff]
      %s3142 = scalar_lea.vmem [#allocation2], 21
      %v3143 = vld [vmem:[%s3142] ss:$2 sm:$0xff]
      %s3144 = scalar_lea.vmem [#allocation2], 45
      %v3145 = vld [vmem:[%s3144] ss:$2 sm:$0xff]
      %s3146 = scalar_lea.vmem [#allocation2], 61
      %v3147 = vld [vmem:[%s3146] ss:$2 sm:$0xff]
      %s3148 = scalar_lea.vmem [#allocation2], 85
      %v3149 = vld [vmem:[%s3148] ss:$2 sm:$0xff]
      %s3150 = scalar_lea.vmem [#allocation2], 101
      %v3151 = vld [vmem:[%s3150] ss:$2 sm:$0xff]
      %s3152 = scalar_lea.vmem [#allocation2], 125
      %v3153 = vld [vmem:[%s3152] ss:$2 sm:$0xff]
      %s3154 = scalar_lea.vmem [#allocation2], 141
      %v3155 = vld [vmem:[%s3154] ss:$2 sm:$0xff]
      %s3156 = scalar_lea.vmem [#allocation2], 165
      %v3157 = vld [vmem:[%s3156] ss:$2 sm:$0xff]
      %s3158 = scalar_lea.vmem [#allocation2], 181
      %v3159 = vld [vmem:[%s3158] ss:$2 sm:$0xff]
      %s3160 = scalar_lea.vmem [#allocation2], 205
      %v3161 = vld [vmem:[%s3160] ss:$2 sm:$0xff]
      %s3162 = scalar_lea.vmem [#allocation2], 221
      %v3163 = vld [vmem:[%s3162] ss:$2 sm:$0xff]
      %s3164 = scalar_lea.vmem [#allocation2], 245
      %v3165 = vld [vmem:[%s3164] ss:$2 sm:$0xff]
      %s3166 = scalar_lea.vmem [#allocation2], 261
      %v3167 = vld [vmem:[%s3166] ss:$2 sm:$0xff]
      %s3168 = scalar_lea.vmem [#allocation2], 285
      %v3169 = vld [vmem:[%s3168] ss:$2 sm:$0xff]
      %s3170 = scalar_lea.vmem [#allocation2], 301
      %v3171 = vld [vmem:[%s3170] ss:$2 sm:$0xff]
      %s3172 = scalar_lea.vmem [#allocation2], 325
      %v3173 = vld [vmem:[%s3172] ss:$2 sm:$0xff]
      %s3174 = scalar_lea.vmem [#allocation2], 341
      %v3175 = vld [vmem:[%s3174] ss:$2 sm:$0xff]
      %s3176 = scalar_lea.vmem [#allocation2], 365
      %v3177 = vld [vmem:[%s3176] ss:$2 sm:$0xff]
      %s3178 = scalar_lea.vmem [#allocation2], 381
      %v3179 = vld [vmem:[%s3178] ss:$2 sm:$0xff]
      %s3180 = scalar_lea.vmem [#allocation2], 405
      %v3181 = vld [vmem:[%s3180] ss:$2 sm:$0xff]
      %s3182 = scalar_lea.vmem [#allocation2], 421
      %v3183 = vld [vmem:[%s3182] ss:$2 sm:$0xff]
      %s3184 = scalar_lea.vmem [#allocation2], 445
      %v3185 = vld [vmem:[%s3184] ss:$2 sm:$0xff]
      %s3186 = scalar_lea.vmem [#allocation2], 461
      %v3187 = vld [vmem:[%s3186] ss:$2 sm:$0xff]
      %s3188 = scalar_lea.vmem [#allocation2], 485
      %v3189 = vld [vmem:[%s3188] ss:$2 sm:$0xff]
      %s3190 = scalar_lea.vmem [#allocation2], 501
      %v3191 = vld [vmem:[%s3190] ss:$2 sm:$0xff]
      %s3192 = scalar_lea.vmem [#allocation2], 525
      %v3193 = vld [vmem:[%s3192] ss:$2 sm:$0xff]
      %s3194 = scalar_lea.vmem [#allocation2], 541
      %v3195 = vld [vmem:[%s3194] ss:$2 sm:$0xff]
      %v3196 = vmax.f32 %v3085, %v3141
      %v3197 = vmax.f32 %v3087, %v3143
      %v3198 = vmax.f32 %v3089, %v3145
      %v3199 = vmax.f32 %v3091, %v3147
      %v3200 = vmax.f32 %v3093, %v3149
      %v3201 = vmax.f32 %v3095, %v3151
      %v3202 = vmax.f32 %v3097, %v3153
      %v3203 = vmax.f32 %v3099, %v3155
      %v3204 = vmax.f32 %v3101, %v3157
      %v3205 = vmax.f32 %v3103, %v3159
      %v3206 = vmax.f32 %v3105, %v3161
      %v3207 = vmax.f32 %v3107, %v3163
      %v3208 = vmax.f32 %v3109, %v3165
      %v3209 = vmax.f32 %v3111, %v3167
      %v3210 = vmax.f32 %v3113, %v3169
      %v3211 = vmax.f32 %v3115, %v3171
      %v3212 = vmax.f32 %v3117, %v3173
      %v3213 = vmax.f32 %v3119, %v3175
      %v3214 = vmax.f32 %v3121, %v3177
      %v3215 = vmax.f32 %v3123, %v3179
      %v3216 = vmax.f32 %v3125, %v3181
      %v3217 = vmax.f32 %v3127, %v3183
      %v3218 = vmax.f32 %v3129, %v3185
      %v3219 = vmax.f32 %v3131, %v3187
      %v3220 = vmax.f32 %v3133, %v3189
      %v3221 = vmax.f32 %v3135, %v3191
      %v3222 = vmax.f32 %v3137, %v3193
      %v3223 = vmax.f32 %v3139, %v3195
      %v3224 = vpack.c.bf16 %v3197, %v3196
      %v3225 = vpack.c.bf16 %v3199, %v3198
      %v3226 = vpack.c.bf16 %v3201, %v3200
      %v3227 = vpack.c.bf16 %v3203, %v3202
      %v3228 = vpack.c.bf16 %v3205, %v3204
      %v3229 = vpack.c.bf16 %v3207, %v3206
      %v3230 = vpack.c.bf16 %v3209, %v3208
      %v3231 = vpack.c.bf16 %v3211, %v3210
      %v3232 = vpack.c.bf16 %v3213, %v3212
      %v3233 = vpack.c.bf16 %v3215, %v3214
      %v3234 = vpack.c.bf16 %v3217, %v3216
      %v3235 = vpack.c.bf16 %v3219, %v3218
      %v3236 = vpack.c.bf16 %v3221, %v3220
      %v3237 = vpack.c.bf16 %v3223, %v3222
      %v3240 = vunpack.c.l.b16 %v1295
      %v3241 = vunpack.c.l.b16 %v1296
      %v3242 = vpack.c.b16 %v3241, %v3240
      %v3245 = vsel %vm1501, %v3224, 0
      %v3248 = vsel %vm1501, %v3225, 0
      %v3251 = vsel %vm1501, %v3226, 0
      %v3254 = vsel %vm1501, %v3227, 0
      %v3257 = vsel %vm1501, %v3228, 0
      %v3260 = vsel %vm1501, %v3229, 0
      %v3263 = vsel %vm1501, %v3230, 0
      %v3266 = vsel %vm1501, %v3231, 0
      %v3269 = vsel %vm1501, %v3232, 0
      %v3272 = vsel %vm1501, %v3233, 0
      %3274 = vmatprep.subr.bf16.mxu0 0
      %3275 = vmatpush1.bf16.msra.mxu0 0
      %3276 = vmatprep.subr.bf16.mxu0 0
      %3277 = vmatpush1.bf16.msra.mxu0 0
      %3278 = vmatprep.subr.bf16.mxu0 0
      %3279 = vmatpush1.bf16.msra.mxu0 0
      %3280 = vmatprep.subr.bf16.mxu0 0
      %3281 = vmatpush1.bf16.msra.mxu0 0
      %3282 = vmatprep.subr.bf16.mxu0 0
      %3283 = vmatpush1.bf16.msra.mxu0 0
      %3284 = vmatprep.subr.bf16.mxu0 0
      %3285 = vmatpush1.bf16.msra.mxu0 0
      %3286 = vmatprep.subr.bf16.mxu0 0
      %3287 = vmatpush1.bf16.msra.mxu0 0
      %3288 = vmatprep.subr.bf16.mxu0 0
      %3289 = vmatpush1.bf16.msra.mxu0 %v3242
      %3290 = vmatprep.subr.bf16.mxu0 0
      %3291 = vmatpush2.bf16.msra.mxu0 0
      %3292 = vmatprep.subr.bf16.mxu0 0
      %3293 = vmatpush2.bf16.msra.mxu0 0
      %3294 = vmatprep.subr.bf16.mxu0 0
      %3295 = vmatpush2.bf16.msra.mxu0 0
      %3296 = vmatprep.subr.bf16.mxu0 0
      %3297 = vmatpush2.bf16.msra.mxu0 0
      %3298 = vmatprep.subr.bf16.mxu0 0
      %3299 = vmatpush2.bf16.msra.mxu0 0
      %3300 = vmatprep.subr.bf16.mxu0 0
      %3301 = vmatpush2.bf16.msra.mxu0 0
      %3302 = vmatprep.subr.bf16.mxu0 0
      %3303 = vmatpush2.bf16.msra.mxu0 0
      %3304 = vmatprep.subr.bf16.mxu0 0
      %3305 = vmatpush2.bf16.msra.mxu0 0
      %3306 = vmatprep.mubr.bf16.mxu0 0
      %3307 = vmatmul.mubr.bf16.gmra.mxu0 %v3245
      %v3308 = vpop.f32.mrf.mxu0
      %v3309 = vadd.f32 0.0, %v3308
      %v3310 = vpop.f32.mrf.mxu0
      %v3311 = vpop.f32.mrf.mxu0
      %v3312 = vadd.f32 0.0, %v3311
      %v3313 = vpop.f32.mrf.mxu0
      %3314 = vmatprep.mubr.bf16.mxu0 0
      %3315 = vmatmul.mubr.bf16.gmra.mxu0 %v3248
      %v3316 = vpop.f32.mrf.mxu0
      %v3317 = vadd.f32 0.0, %v3316
      %v3318 = vpop.f32.mrf.mxu0
      %v3319 = vpop.f32.mrf.mxu0
      %v3320 = vadd.f32 0.0, %v3319
      %v3321 = vpop.f32.mrf.mxu0
      %3322 = vmatprep.mubr.bf16.mxu0 0
      %3323 = vmatmul.mubr.bf16.gmra.mxu0 %v3251
      %v3324 = vpop.f32.mrf.mxu0
      %v3325 = vadd.f32 0.0, %v3324
      %v3326 = vpop.f32.mrf.mxu0
      %v3327 = vpop.f32.mrf.mxu0
      %v3328 = vadd.f32 0.0, %v3327
      %v3329 = vpop.f32.mrf.mxu0
      %3330 = vmatprep.mubr.bf16.mxu0 0
      %3331 = vmatmul.mubr.bf16.gmra.mxu0 %v3254
      %v3332 = vpop.f32.mrf.mxu0
      %v3333 = vadd.f32 0.0, %v3332
      %v3334 = vpop.f32.mrf.mxu0
      %v3335 = vpop.f32.mrf.mxu0
      %v3336 = vadd.f32 0.0, %v3335
      %v3337 = vpop.f32.mrf.mxu0
      %3338 = vmatprep.mubr.bf16.mxu0 0
      %3339 = vmatmul.mubr.bf16.gmra.mxu0 %v3257
      %v3340 = vpop.f32.mrf.mxu0
      %v3341 = vadd.f32 0.0, %v3340
      %v3342 = vpop.f32.mrf.mxu0
      %v3343 = vpop.f32.mrf.mxu0
      %v3344 = vadd.f32 0.0, %v3343
      %v3345 = vpop.f32.mrf.mxu0
      %3346 = vmatprep.mubr.bf16.mxu0 0
      %3347 = vmatmul.mubr.bf16.gmra.mxu0 %v3260
      %v3348 = vpop.f32.mrf.mxu0
      %v3349 = vadd.f32 0.0, %v3348
      %v3350 = vpop.f32.mrf.mxu0
      %v3351 = vpop.f32.mrf.mxu0
      %v3352 = vadd.f32 0.0, %v3351
      %v3353 = vpop.f32.mrf.mxu0
      %3354 = vmatprep.mubr.bf16.mxu0 0
      %3355 = vmatmul.mubr.bf16.gmra.mxu0 %v3263
      %v3356 = vpop.f32.mrf.mxu0
      %v3357 = vadd.f32 0.0, %v3356
      %v3358 = vpop.f32.mrf.mxu0
      %v3359 = vpop.f32.mrf.mxu0
      %v3360 = vadd.f32 0.0, %v3359
      %v3361 = vpop.f32.mrf.mxu0
      %3362 = vmatprep.mubr.bf16.mxu0 0
      %3363 = vmatmul.mubr.bf16.gmra.mxu0 %v3266
      %v3364 = vpop.f32.mrf.mxu0
      %v3365 = vadd.f32 0.0, %v3364
      %v3366 = vpop.f32.mrf.mxu0
      %v3367 = vpop.f32.mrf.mxu0
      %v3368 = vadd.f32 0.0, %v3367
      %v3369 = vpop.f32.mrf.mxu0
      %3370 = vmatprep.mubr.bf16.mxu0 0
      %3371 = vmatmul.mubr.bf16.gmra.mxu0 %v3269
      %v3372 = vpop.f32.mrf.mxu0
      %v3373 = vadd.f32 0.0, %v3372
      %v3374 = vpop.f32.mrf.mxu0
      %v3375 = vpop.f32.mrf.mxu0
      %v3376 = vadd.f32 0.0, %v3375
      %v3377 = vpop.f32.mrf.mxu0
      %3378 = vmatprep.mubr.bf16.mxu0 0
      %3379 = vmatmul.mubr.bf16.gmra.mxu0 %v3272
      %v3380 = vpop.f32.mrf.mxu0
      %v3381 = vadd.f32 0.0, %v3380
      %v3382 = vpop.f32.mrf.mxu0
      %v3383 = vpop.f32.mrf.mxu0
      %v3384 = vadd.f32 0.0, %v3383
      %v3385 = vpop.f32.mrf.mxu0
      %3386 = vdwg.mxu0
      %v3387 = vadd.f32 %v3064, %v3309
      %v3388 = vadd.f32 %v3065, %v3312
      %v3389 = vadd.f32 %v3066, %v3317
      %v3390 = vadd.f32 %v3067, %v3320
      %v3391 = vadd.f32 %v3068, %v3325
      %v3392 = vadd.f32 %v3069, %v3328
      %v3393 = vadd.f32 %v3070, %v3333
      %v3394 = vadd.f32 %v3071, %v3336
      %v3395 = vadd.f32 %v3072, %v3341
      %v3396 = vadd.f32 %v3073, %v3344
      %v3397 = vadd.f32 %v3074, %v3349
      %v3398 = vadd.f32 %v3075, %v3352
      %v3399 = vadd.f32 %v3076, %v3357
      %v3400 = vadd.f32 %v3077, %v3360
      %v3401 = vadd.f32 %v3078, %v3365
      %v3402 = vadd.f32 %v3079, %v3368
      %v3403 = vadd.f32 %v3080, %v3373
      %v3404 = vadd.f32 %v3081, %v3376
      %v3405 = vadd.f32 %v3082, %v3381
      %v3406 = vadd.f32 %v3083, %v3384
      %v3409 = vunpack.c.l.b16 %v1305
      %v3410 = vunpack.c.l.b16 %v1306
      %v3411 = vpack.c.b16 %v3410, %v3409
      %v3414 = vsel %vm1501, %v3234, 0
      %3416 = vmatprep.subr.bf16.mxu0 0
      %3417 = vmatpush1.bf16.msra.mxu0 0
      %3418 = vmatprep.subr.bf16.mxu0 0
      %3419 = vmatpush1.bf16.msra.mxu0 0
      %3420 = vmatprep.subr.bf16.mxu0 0
      %3421 = vmatpush1.bf16.msra.mxu0 0
      %3422 = vmatprep.subr.bf16.mxu0 0
      %3423 = vmatpush1.bf16.msra.mxu0 0
      %3424 = vmatprep.subr.bf16.mxu0 0
      %3425 = vmatpush1.bf16.msra.mxu0 0
      %3426 = vmatprep.subr.bf16.mxu0 0
      %3427 = vmatpush1.bf16.msra.mxu0 0
      %3428 = vmatprep.subr.bf16.mxu0 0
      %3429 = vmatpush1.bf16.msra.mxu0 0
      %3430 = vmatprep.subr.bf16.mxu0 0
      %3431 = vmatpush1.bf16.msra.mxu0 %v3411
      %3432 = vmatprep.subr.bf16.mxu0 0
      %3433 = vmatpush2.bf16.msra.mxu0 0
      %3434 = vmatprep.subr.bf16.mxu0 0
      %3435 = vmatpush2.bf16.msra.mxu0 0
      %3436 = vmatprep.subr.bf16.mxu0 0
      %3437 = vmatpush2.bf16.msra.mxu0 0
      %3438 = vmatprep.subr.bf16.mxu0 0
      %3439 = vmatpush2.bf16.msra.mxu0 0
      %3440 = vmatprep.subr.bf16.mxu0 0
      %3441 = vmatpush2.bf16.msra.mxu0 0
      %3442 = vmatprep.subr.bf16.mxu0 0
      %3443 = vmatpush2.bf16.msra.mxu0 0
      %3444 = vmatprep.subr.bf16.mxu0 0
      %3445 = vmatpush2.bf16.msra.mxu0 0
      %3446 = vmatprep.subr.bf16.mxu0 0
      %3447 = vmatpush2.bf16.msra.mxu0 0
      %3448 = vmatprep.mubr.bf16.mxu0 0
      %3449 = vmatmul.mubr.bf16.gmra.mxu0 %v3248
      %v3450 = vpop.f32.mrf.mxu0
      %v3451 = vadd.f32 0.0, %v3450
      %v3452 = vpop.f32.mrf.mxu0
      %v3453 = vpop.f32.mrf.mxu0
      %v3454 = vadd.f32 0.0, %v3453
      %v3455 = vpop.f32.mrf.mxu0
      %3456 = vmatprep.mubr.bf16.mxu0 0
      %3457 = vmatmul.mubr.bf16.gmra.mxu0 %v3251
      %v3458 = vpop.f32.mrf.mxu0
      %v3459 = vadd.f32 0.0, %v3458
      %v3460 = vpop.f32.mrf.mxu0
      %v3461 = vpop.f32.mrf.mxu0
      %v3462 = vadd.f32 0.0, %v3461
      %v3463 = vpop.f32.mrf.mxu0
      %3464 = vmatprep.mubr.bf16.mxu0 0
      %3465 = vmatmul.mubr.bf16.gmra.mxu0 %v3254
      %v3466 = vpop.f32.mrf.mxu0
      %v3467 = vadd.f32 0.0, %v3466
      %v3468 = vpop.f32.mrf.mxu0
      %v3469 = vpop.f32.mrf.mxu0
      %v3470 = vadd.f32 0.0, %v3469
      %v3471 = vpop.f32.mrf.mxu0
      %3472 = vmatprep.mubr.bf16.mxu0 0
      %3473 = vmatmul.mubr.bf16.gmra.mxu0 %v3257
      %v3474 = vpop.f32.mrf.mxu0
      %v3475 = vadd.f32 0.0, %v3474
      %v3476 = vpop.f32.mrf.mxu0
      %v3477 = vpop.f32.mrf.mxu0
      %v3478 = vadd.f32 0.0, %v3477
      %v3479 = vpop.f32.mrf.mxu0
      %3480 = vmatprep.mubr.bf16.mxu0 0
      %3481 = vmatmul.mubr.bf16.gmra.mxu0 %v3260
      %v3482 = vpop.f32.mrf.mxu0
      %v3483 = vadd.f32 0.0, %v3482
      %v3484 = vpop.f32.mrf.mxu0
      %v3485 = vpop.f32.mrf.mxu0
      %v3486 = vadd.f32 0.0, %v3485
      %v3487 = vpop.f32.mrf.mxu0
      %3488 = vmatprep.mubr.bf16.mxu0 0
      %3489 = vmatmul.mubr.bf16.gmra.mxu0 %v3263
      %v3490 = vpop.f32.mrf.mxu0
      %v3491 = vadd.f32 0.0, %v3490
      %v3492 = vpop.f32.mrf.mxu0
      %v3493 = vpop.f32.mrf.mxu0
      %v3494 = vadd.f32 0.0, %v3493
      %v3495 = vpop.f32.mrf.mxu0
      %3496 = vmatprep.mubr.bf16.mxu0 0
      %3497 = vmatmul.mubr.bf16.gmra.mxu0 %v3266
      %v3498 = vpop.f32.mrf.mxu0
      %v3499 = vadd.f32 0.0, %v3498
      %v3500 = vpop.f32.mrf.mxu0
      %v3501 = vpop.f32.mrf.mxu0
      %v3502 = vadd.f32 0.0, %v3501
      %v3503 = vpop.f32.mrf.mxu0
      %3504 = vmatprep.mubr.bf16.mxu0 0
      %3505 = vmatmul.mubr.bf16.gmra.mxu0 %v3269
      %v3506 = vpop.f32.mrf.mxu0
      %v3507 = vadd.f32 0.0, %v3506
      %v3508 = vpop.f32.mrf.mxu0
      %v3509 = vpop.f32.mrf.mxu0
      %v3510 = vadd.f32 0.0, %v3509
      %v3511 = vpop.f32.mrf.mxu0
      %3512 = vmatprep.mubr.bf16.mxu0 0
      %3513 = vmatmul.mubr.bf16.gmra.mxu0 %v3272
      %v3514 = vpop.f32.mrf.mxu0
      %v3515 = vadd.f32 0.0, %v3514
      %v3516 = vpop.f32.mrf.mxu0
      %v3517 = vpop.f32.mrf.mxu0
      %v3518 = vadd.f32 0.0, %v3517
      %v3519 = vpop.f32.mrf.mxu0
      %3520 = vmatprep.mubr.bf16.mxu0 0
      %3521 = vmatmul.mubr.bf16.gmra.mxu0 %v3414
      %v3522 = vpop.f32.mrf.mxu0
      %v3523 = vadd.f32 0.0, %v3522
      %v3524 = vpop.f32.mrf.mxu0
      %v3525 = vpop.f32.mrf.mxu0
      %v3526 = vadd.f32 0.0, %v3525
      %v3527 = vpop.f32.mrf.mxu0
      %3528 = vdwg.mxu0
      %v3529 = vadd.f32 %v3387, %v3451
      %v3530 = vadd.f32 %v3388, %v3454
      %v3531 = vadd.f32 %v3389, %v3459
      %v3532 = vadd.f32 %v3390, %v3462
      %v3533 = vadd.f32 %v3391, %v3467
      %v3534 = vadd.f32 %v3392, %v3470
      %v3535 = vadd.f32 %v3393, %v3475
      %v3536 = vadd.f32 %v3394, %v3478
      %v3537 = vadd.f32 %v3395, %v3483
      %v3538 = vadd.f32 %v3396, %v3486
      %v3539 = vadd.f32 %v3397, %v3491
      %v3540 = vadd.f32 %v3398, %v3494
      %v3541 = vadd.f32 %v3399, %v3499
      %v3542 = vadd.f32 %v3400, %v3502
      %v3543 = vadd.f32 %v3401, %v3507
      %v3544 = vadd.f32 %v3402, %v3510
      %v3545 = vadd.f32 %v3403, %v3515
      %v3546 = vadd.f32 %v3404, %v3518
      %v3547 = vadd.f32 %v3405, %v3523
      %v3548 = vadd.f32 %v3406, %v3526
      %v3551 = vunpack.c.l.b16 %v1315
      %v3552 = vunpack.c.l.b16 %v1316
      %v3553 = vpack.c.b16 %v3552, %v3551
      %v3556 = vsel %vm1501, %v3235, 0
      %3558 = vmatprep.subr.bf16.mxu0 0
      %3559 = vmatpush1.bf16.msra.mxu0 0
      %3560 = vmatprep.subr.bf16.mxu0 0
      %3561 = vmatpush1.bf16.msra.mxu0 0
      %3562 = vmatprep.subr.bf16.mxu0 0
      %3563 = vmatpush1.bf16.msra.mxu0 0
      %3564 = vmatprep.subr.bf16.mxu0 0
      %3565 = vmatpush1.bf16.msra.mxu0 0
      %3566 = vmatprep.subr.bf16.mxu0 0
      %3567 = vmatpush1.bf16.msra.mxu0 0
      %3568 = vmatprep.subr.bf16.mxu0 0
      %3569 = vmatpush1.bf16.msra.mxu0 0
      %3570 = vmatprep.subr.bf16.mxu0 0
      %3571 = vmatpush1.bf16.msra.mxu0 0
      %3572 = vmatprep.subr.bf16.mxu0 0
      %3573 = vmatpush1.bf16.msra.mxu0 %v3553
      %3574 = vmatprep.subr.bf16.mxu0 0
      %3575 = vmatpush2.bf16.msra.mxu0 0
      %3576 = vmatprep.subr.bf16.mxu0 0
      %3577 = vmatpush2.bf16.msra.mxu0 0
      %3578 = vmatprep.subr.bf16.mxu0 0
      %3579 = vmatpush2.bf16.msra.mxu0 0
      %3580 = vmatprep.subr.bf16.mxu0 0
      %3581 = vmatpush2.bf16.msra.mxu0 0
      %3582 = vmatprep.subr.bf16.mxu0 0
      %3583 = vmatpush2.bf16.msra.mxu0 0
      %3584 = vmatprep.subr.bf16.mxu0 0
      %3585 = vmatpush2.bf16.msra.mxu0 0
      %3586 = vmatprep.subr.bf16.mxu0 0
      %3587 = vmatpush2.bf16.msra.mxu0 0
      %3588 = vmatprep.subr.bf16.mxu0 0
      %3589 = vmatpush2.bf16.msra.mxu0 0
      %3590 = vmatprep.mubr.bf16.mxu0 0
      %3591 = vmatmul.mubr.bf16.gmra.mxu0 %v3251
      %v3592 = vpop.f32.mrf.mxu0
      %v3593 = vadd.f32 0.0, %v3592
      %v3594 = vpop.f32.mrf.mxu0
      %v3595 = vpop.f32.mrf.mxu0
      %v3596 = vadd.f32 0.0, %v3595
      %v3597 = vpop.f32.mrf.mxu0
      %3598 = vmatprep.mubr.bf16.mxu0 0
      %3599 = vmatmul.mubr.bf16.gmra.mxu0 %v3254
      %v3600 = vpop.f32.mrf.mxu0
      %v3601 = vadd.f32 0.0, %v3600
      %v3602 = vpop.f32.mrf.mxu0
      %v3603 = vpop.f32.mrf.mxu0
      %v3604 = vadd.f32 0.0, %v3603
      %v3605 = vpop.f32.mrf.mxu0
      %3606 = vmatprep.mubr.bf16.mxu0 0
      %3607 = vmatmul.mubr.bf16.gmra.mxu0 %v3257
      %v3608 = vpop.f32.mrf.mxu0
      %v3609 = vadd.f32 0.0, %v3608
      %v3610 = vpop.f32.mrf.mxu0
      %v3611 = vpop.f32.mrf.mxu0
      %v3612 = vadd.f32 0.0, %v3611
      %v3613 = vpop.f32.mrf.mxu0
      %3614 = vmatprep.mubr.bf16.mxu0 0
      %3615 = vmatmul.mubr.bf16.gmra.mxu0 %v3260
      %v3616 = vpop.f32.mrf.mxu0
      %v3617 = vadd.f32 0.0, %v3616
      %v3618 = vpop.f32.mrf.mxu0
      %v3619 = vpop.f32.mrf.mxu0
      %v3620 = vadd.f32 0.0, %v3619
      %v3621 = vpop.f32.mrf.mxu0
      %3622 = vmatprep.mubr.bf16.mxu0 0
      %3623 = vmatmul.mubr.bf16.gmra.mxu0 %v3263
      %v3624 = vpop.f32.mrf.mxu0
      %v3625 = vadd.f32 0.0, %v3624
      %v3626 = vpop.f32.mrf.mxu0
      %v3627 = vpop.f32.mrf.mxu0
      %v3628 = vadd.f32 0.0, %v3627
      %v3629 = vpop.f32.mrf.mxu0
      %3630 = vmatprep.mubr.bf16.mxu0 0
      %3631 = vmatmul.mubr.bf16.gmra.mxu0 %v3266
      %v3632 = vpop.f32.mrf.mxu0
      %v3633 = vadd.f32 0.0, %v3632
      %v3634 = vpop.f32.mrf.mxu0
      %v3635 = vpop.f32.mrf.mxu0
      %v3636 = vadd.f32 0.0, %v3635
      %v3637 = vpop.f32.mrf.mxu0
      %3638 = vmatprep.mubr.bf16.mxu0 0
      %3639 = vmatmul.mubr.bf16.gmra.mxu0 %v3269
      %v3640 = vpop.f32.mrf.mxu0
      %v3641 = vadd.f32 0.0, %v3640
      %v3642 = vpop.f32.mrf.mxu0
      %v3643 = vpop.f32.mrf.mxu0
      %v3644 = vadd.f32 0.0, %v3643
      %v3645 = vpop.f32.mrf.mxu0
      %3646 = vmatprep.mubr.bf16.mxu0 0
      %3647 = vmatmul.mubr.bf16.gmra.mxu0 %v3272
      %v3648 = vpop.f32.mrf.mxu0
      %v3649 = vadd.f32 0.0, %v3648
      %v3650 = vpop.f32.mrf.mxu0
      %v3651 = vpop.f32.mrf.mxu0
      %v3652 = vadd.f32 0.0, %v3651
      %v3653 = vpop.f32.mrf.mxu0
      %3654 = vmatprep.mubr.bf16.mxu0 0
      %3655 = vmatmul.mubr.bf16.gmra.mxu0 %v3414
      %v3656 = vpop.f32.mrf.mxu0
      %v3657 = vadd.f32 0.0, %v3656
      %v3658 = vpop.f32.mrf.mxu0
      %v3659 = vpop.f32.mrf.mxu0
      %v3660 = vadd.f32 0.0, %v3659
      %v3661 = vpop.f32.mrf.mxu0
      %3662 = vmatprep.mubr.bf16.mxu0 0
      %3663 = vmatmul.mubr.bf16.gmra.mxu0 %v3556
      %v3664 = vpop.f32.mrf.mxu0
      %v3665 = vadd.f32 0.0, %v3664
      %v3666 = vpop.f32.mrf.mxu0
      %v3667 = vpop.f32.mrf.mxu0
      %v3668 = vadd.f32 0.0, %v3667
      %v3669 = vpop.f32.mrf.mxu0
      %3670 = vdwg.mxu0
      %v3671 = vadd.f32 %v3529, %v3593
      %v3672 = vadd.f32 %v3530, %v3596
      %v3673 = vadd.f32 %v3531, %v3601
      %v3674 = vadd.f32 %v3532, %v3604
      %v3675 = vadd.f32 %v3533, %v3609
      %v3676 = vadd.f32 %v3534, %v3612
      %v3677 = vadd.f32 %v3535, %v3617
      %v3678 = vadd.f32 %v3536, %v3620
      %v3679 = vadd.f32 %v3537, %v3625
      %v3680 = vadd.f32 %v3538, %v3628
      %v3681 = vadd.f32 %v3539, %v3633
      %v3682 = vadd.f32 %v3540, %v3636
      %v3683 = vadd.f32 %v3541, %v3641
      %v3684 = vadd.f32 %v3542, %v3644
      %v3685 = vadd.f32 %v3543, %v3649
      %v3686 = vadd.f32 %v3544, %v3652
      %v3687 = vadd.f32 %v3545, %v3657
      %v3688 = vadd.f32 %v3546, %v3660
      %v3689 = vadd.f32 %v3547, %v3665
      %v3690 = vadd.f32 %v3548, %v3668
      %v3693 = vunpack.c.l.b16 %v1325
      %v3694 = vunpack.c.l.b16 %v1326
      %v3695 = vpack.c.b16 %v3694, %v3693
      %v3698 = vsel %vm1501, %v3236, 0
      %3700 = vmatprep.subr.bf16.mxu0 0
      %3701 = vmatpush1.bf16.msra.mxu0 0
      %3702 = vmatprep.subr.bf16.mxu0 0
      %3703 = vmatpush1.bf16.msra.mxu0 0
      %3704 = vmatprep.subr.bf16.mxu0 0
      %3705 = vmatpush1.bf16.msra.mxu0 0
      %3706 = vmatprep.subr.bf16.mxu0 0
      %3707 = vmatpush1.bf16.msra.mxu0 0
      %3708 = vmatprep.subr.bf16.mxu0 0
      %3709 = vmatpush1.bf16.msra.mxu0 0
      %3710 = vmatprep.subr.bf16.mxu0 0
      %3711 = vmatpush1.bf16.msra.mxu0 0
      %3712 = vmatprep.subr.bf16.mxu0 0
      %3713 = vmatpush1.bf16.msra.mxu0 0
      %3714 = vmatprep.subr.bf16.mxu0 0
      %3715 = vmatpush1.bf16.msra.mxu0 %v3695
      %3716 = vmatprep.subr.bf16.mxu0 0
      %3717 = vmatpush2.bf16.msra.mxu0 0
      %3718 = vmatprep.subr.bf16.mxu0 0
      %3719 = vmatpush2.bf16.msra.mxu0 0
      %3720 = vmatprep.subr.bf16.mxu0 0
      %3721 = vmatpush2.bf16.msra.mxu0 0
      %3722 = vmatprep.subr.bf16.mxu0 0
      %3723 = vmatpush2.bf16.msra.mxu0 0
      %3724 = vmatprep.subr.bf16.mxu0 0
      %3725 = vmatpush2.bf16.msra.mxu0 0
      %3726 = vmatprep.subr.bf16.mxu0 0
      %3727 = vmatpush2.bf16.msra.mxu0 0
      %3728 = vmatprep.subr.bf16.mxu0 0
      %3729 = vmatpush2.bf16.msra.mxu0 0
      %3730 = vmatprep.subr.bf16.mxu0 0
      %3731 = vmatpush2.bf16.msra.mxu0 0
      %3732 = vmatprep.mubr.bf16.mxu0 0
      %3733 = vmatmul.mubr.bf16.gmra.mxu0 %v3254
      %v3734 = vpop.f32.mrf.mxu0
      %v3735 = vadd.f32 0.0, %v3734
      %v3736 = vpop.f32.mrf.mxu0
      %v3737 = vpop.f32.mrf.mxu0
      %v3738 = vadd.f32 0.0, %v3737
      %v3739 = vpop.f32.mrf.mxu0
      %3740 = vmatprep.mubr.bf16.mxu0 0
      %3741 = vmatmul.mubr.bf16.gmra.mxu0 %v3257
      %v3742 = vpop.f32.mrf.mxu0
      %v3743 = vadd.f32 0.0, %v3742
      %v3744 = vpop.f32.mrf.mxu0
      %v3745 = vpop.f32.mrf.mxu0
      %v3746 = vadd.f32 0.0, %v3745
      %v3747 = vpop.f32.mrf.mxu0
      %3748 = vmatprep.mubr.bf16.mxu0 0
      %3749 = vmatmul.mubr.bf16.gmra.mxu0 %v3260
      %v3750 = vpop.f32.mrf.mxu0
      %v3751 = vadd.f32 0.0, %v3750
      %v3752 = vpop.f32.mrf.mxu0
      %v3753 = vpop.f32.mrf.mxu0
      %v3754 = vadd.f32 0.0, %v3753
      %v3755 = vpop.f32.mrf.mxu0
      %3756 = vmatprep.mubr.bf16.mxu0 0
      %3757 = vmatmul.mubr.bf16.gmra.mxu0 %v3263
      %v3758 = vpop.f32.mrf.mxu0
      %v3759 = vadd.f32 0.0, %v3758
      %v3760 = vpop.f32.mrf.mxu0
      %v3761 = vpop.f32.mrf.mxu0
      %v3762 = vadd.f32 0.0, %v3761
      %v3763 = vpop.f32.mrf.mxu0
      %3764 = vmatprep.mubr.bf16.mxu0 0
      %3765 = vmatmul.mubr.bf16.gmra.mxu0 %v3266
      %v3766 = vpop.f32.mrf.mxu0
      %v3767 = vadd.f32 0.0, %v3766
      %v3768 = vpop.f32.mrf.mxu0
      %v3769 = vpop.f32.mrf.mxu0
      %v3770 = vadd.f32 0.0, %v3769
      %v3771 = vpop.f32.mrf.mxu0
      %3772 = vmatprep.mubr.bf16.mxu0 0
      %3773 = vmatmul.mubr.bf16.gmra.mxu0 %v3269
      %v3774 = vpop.f32.mrf.mxu0
      %v3775 = vadd.f32 0.0, %v3774
      %v3776 = vpop.f32.mrf.mxu0
      %v3777 = vpop.f32.mrf.mxu0
      %v3778 = vadd.f32 0.0, %v3777
      %v3779 = vpop.f32.mrf.mxu0
      %3780 = vmatprep.mubr.bf16.mxu0 0
      %3781 = vmatmul.mubr.bf16.gmra.mxu0 %v3272
      %v3782 = vpop.f32.mrf.mxu0
      %v3783 = vadd.f32 0.0, %v3782
      %v3784 = vpop.f32.mrf.mxu0
      %v3785 = vpop.f32.mrf.mxu0
      %v3786 = vadd.f32 0.0, %v3785
      %v3787 = vpop.f32.mrf.mxu0
      %3788 = vmatprep.mubr.bf16.mxu0 0
      %3789 = vmatmul.mubr.bf16.gmra.mxu0 %v3414
      %v3790 = vpop.f32.mrf.mxu0
      %v3791 = vadd.f32 0.0, %v3790
      %v3792 = vpop.f32.mrf.mxu0
      %v3793 = vpop.f32.mrf.mxu0
      %v3794 = vadd.f32 0.0, %v3793
      %v3795 = vpop.f32.mrf.mxu0
      %3796 = vmatprep.mubr.bf16.mxu0 0
      %3797 = vmatmul.mubr.bf16.gmra.mxu0 %v3556
      %v3798 = vpop.f32.mrf.mxu0
      %v3799 = vadd.f32 0.0, %v3798
      %v3800 = vpop.f32.mrf.mxu0
      %v3801 = vpop.f32.mrf.mxu0
      %v3802 = vadd.f32 0.0, %v3801
      %v3803 = vpop.f32.mrf.mxu0
      %3804 = vmatprep.mubr.bf16.mxu0 0
      %3805 = vmatmul.mubr.bf16.gmra.mxu0 %v3698
      %v3806 = vpop.f32.mrf.mxu0
      %v3807 = vadd.f32 0.0, %v3806
      %v3808 = vpop.f32.mrf.mxu0
      %v3809 = vpop.f32.mrf.mxu0
      %v3810 = vadd.f32 0.0, %v3809
      %v3811 = vpop.f32.mrf.mxu0
      %3812 = vdwg.mxu0
      %v3813 = vadd.f32 %v3671, %v3735
      %v3814 = vadd.f32 %v3672, %v3738
      %v3815 = vadd.f32 %v3673, %v3743
      %v3816 = vadd.f32 %v3674, %v3746
      %v3817 = vadd.f32 %v3675, %v3751
      %v3818 = vadd.f32 %v3676, %v3754
      %v3819 = vadd.f32 %v3677, %v3759
      %v3820 = vadd.f32 %v3678, %v3762
      %v3821 = vadd.f32 %v3679, %v3767
      %v3822 = vadd.f32 %v3680, %v3770
      %v3823 = vadd.f32 %v3681, %v3775
      %v3824 = vadd.f32 %v3682, %v3778
      %v3825 = vadd.f32 %v3683, %v3783
      %v3826 = vadd.f32 %v3684, %v3786
      %v3827 = vadd.f32 %v3685, %v3791
      %v3828 = vadd.f32 %v3686, %v3794
      %v3829 = vadd.f32 %v3687, %v3799
      %v3830 = vadd.f32 %v3688, %v3802
      %v3831 = vadd.f32 %v3689, %v3807
      %v3832 = vadd.f32 %v3690, %v3810
      %v3835 = vunpack.c.l.b16 %v1335
      %v3836 = vunpack.c.l.b16 %v1336
      %v3837 = vpack.c.b16 %v3836, %v3835
      %v3840 = vsel %vm1501, %v3237, 0
      %3842 = vmatprep.subr.bf16.mxu0 0
      %3843 = vmatpush1.bf16.msra.mxu0 0
      %3844 = vmatprep.subr.bf16.mxu0 0
      %3845 = vmatpush1.bf16.msra.mxu0 0
      %3846 = vmatprep.subr.bf16.mxu0 0
      %3847 = vmatpush1.bf16.msra.mxu0 0
      %3848 = vmatprep.subr.bf16.mxu0 0
      %3849 = vmatpush1.bf16.msra.mxu0 0
      %3850 = vmatprep.subr.bf16.mxu0 0
      %3851 = vmatpush1.bf16.msra.mxu0 0
      %3852 = vmatprep.subr.bf16.mxu0 0
      %3853 = vmatpush1.bf16.msra.mxu0 0
      %3854 = vmatprep.subr.bf16.mxu0 0
      %3855 = vmatpush1.bf16.msra.mxu0 0
      %3856 = vmatprep.subr.bf16.mxu0 0
      %3857 = vmatpush1.bf16.msra.mxu0 %v3837
      %3858 = vmatprep.subr.bf16.mxu0 0
      %3859 = vmatpush2.bf16.msra.mxu0 0
      %3860 = vmatprep.subr.bf16.mxu0 0
      %3861 = vmatpush2.bf16.msra.mxu0 0
      %3862 = vmatprep.subr.bf16.mxu0 0
      %3863 = vmatpush2.bf16.msra.mxu0 0
      %3864 = vmatprep.subr.bf16.mxu0 0
      %3865 = vmatpush2.bf16.msra.mxu0 0
      %3866 = vmatprep.subr.bf16.mxu0 0
      %3867 = vmatpush2.bf16.msra.mxu0 0
      %3868 = vmatprep.subr.bf16.mxu0 0
      %3869 = vmatpush2.bf16.msra.mxu0 0
      %3870 = vmatprep.subr.bf16.mxu0 0
      %3871 = vmatpush2.bf16.msra.mxu0 0
      %3872 = vmatprep.subr.bf16.mxu0 0
      %3873 = vmatpush2.bf16.msra.mxu0 0
      %3874 = vmatprep.mubr.bf16.mxu0 0
      %3875 = vmatmul.mubr.bf16.gmra.mxu0 %v3257
      %v3876 = vpop.f32.mrf.mxu0
      %v3877 = vadd.f32 0.0, %v3876
      %v3878 = vpop.f32.mrf.mxu0
      %v3879 = vpop.f32.mrf.mxu0
      %v3880 = vadd.f32 0.0, %v3879
      %v3881 = vpop.f32.mrf.mxu0
      %3882 = vmatprep.mubr.bf16.mxu0 0
      %3883 = vmatmul.mubr.bf16.gmra.mxu0 %v3260
      %v3884 = vpop.f32.mrf.mxu0
      %v3885 = vadd.f32 0.0, %v3884
      %v3886 = vpop.f32.mrf.mxu0
      %v3887 = vpop.f32.mrf.mxu0
      %v3888 = vadd.f32 0.0, %v3887
      %v3889 = vpop.f32.mrf.mxu0
      %3890 = vmatprep.mubr.bf16.mxu0 0
      %3891 = vmatmul.mubr.bf16.gmra.mxu0 %v3263
      %v3892 = vpop.f32.mrf.mxu0
      %v3893 = vadd.f32 0.0, %v3892
      %v3894 = vpop.f32.mrf.mxu0
      %v3895 = vpop.f32.mrf.mxu0
      %v3896 = vadd.f32 0.0, %v3895
      %v3897 = vpop.f32.mrf.mxu0
      %3898 = vmatprep.mubr.bf16.mxu0 0
      %3899 = vmatmul.mubr.bf16.gmra.mxu0 %v3266
      %v3900 = vpop.f32.mrf.mxu0
      %v3901 = vadd.f32 0.0, %v3900
      %v3902 = vpop.f32.mrf.mxu0
      %v3903 = vpop.f32.mrf.mxu0
      %v3904 = vadd.f32 0.0, %v3903
      %v3905 = vpop.f32.mrf.mxu0
      %3906 = vmatprep.mubr.bf16.mxu0 0
      %3907 = vmatmul.mubr.bf16.gmra.mxu0 %v3269
      %v3908 = vpop.f32.mrf.mxu0
      %v3909 = vadd.f32 0.0, %v3908
      %v3910 = vpop.f32.mrf.mxu0
      %v3911 = vpop.f32.mrf.mxu0
      %v3912 = vadd.f32 0.0, %v3911
      %v3913 = vpop.f32.mrf.mxu0
      %3914 = vmatprep.mubr.bf16.mxu0 0
      %3915 = vmatmul.mubr.bf16.gmra.mxu0 %v3272
      %v3916 = vpop.f32.mrf.mxu0
      %v3917 = vadd.f32 0.0, %v3916
      %v3918 = vpop.f32.mrf.mxu0
      %v3919 = vpop.f32.mrf.mxu0
      %v3920 = vadd.f32 0.0, %v3919
      %v3921 = vpop.f32.mrf.mxu0
      %3922 = vmatprep.mubr.bf16.mxu0 0
      %3923 = vmatmul.mubr.bf16.gmra.mxu0 %v3414
      %v3924 = vpop.f32.mrf.mxu0
      %v3925 = vadd.f32 0.0, %v3924
      %v3926 = vpop.f32.mrf.mxu0
      %v3927 = vpop.f32.mrf.mxu0
      %v3928 = vadd.f32 0.0, %v3927
      %v3929 = vpop.f32.mrf.mxu0
      %3930 = vmatprep.mubr.bf16.mxu0 0
      %3931 = vmatmul.mubr.bf16.gmra.mxu0 %v3556
      %v3932 = vpop.f32.mrf.mxu0
      %v3933 = vadd.f32 0.0, %v3932
      %v3934 = vpop.f32.mrf.mxu0
      %v3935 = vpop.f32.mrf.mxu0
      %v3936 = vadd.f32 0.0, %v3935
      %v3937 = vpop.f32.mrf.mxu0
      %3938 = vmatprep.mubr.bf16.mxu0 0
      %3939 = vmatmul.mubr.bf16.gmra.mxu0 %v3698
      %v3940 = vpop.f32.mrf.mxu0
      %v3941 = vadd.f32 0.0, %v3940
      %v3942 = vpop.f32.mrf.mxu0
      %v3943 = vpop.f32.mrf.mxu0
      %v3944 = vadd.f32 0.0, %v3943
      %v3945 = vpop.f32.mrf.mxu0
      %3946 = vmatprep.mubr.bf16.mxu0 0
      %3947 = vmatmul.mubr.bf16.gmra.mxu0 %v3840
      %v3948 = vpop.f32.mrf.mxu0
      %v3949 = vadd.f32 0.0, %v3948
      %v3950 = vpop.f32.mrf.mxu0
      %v3951 = vpop.f32.mrf.mxu0
      %v3952 = vadd.f32 0.0, %v3951
      %v3953 = vpop.f32.mrf.mxu0
      %3954 = vdwg.mxu0
      %v3955 = vadd.f32 %v3813, %v3877
      %v3956 = vadd.f32 %v3814, %v3880
      %v3957 = vadd.f32 %v3815, %v3885
      %v3958 = vadd.f32 %v3816, %v3888
      %v3959 = vadd.f32 %v3817, %v3893
      %v3960 = vadd.f32 %v3818, %v3896
      %v3961 = vadd.f32 %v3819, %v3901
      %v3962 = vadd.f32 %v3820, %v3904
      %v3963 = vadd.f32 %v3821, %v3909
      %v3964 = vadd.f32 %v3822, %v3912
      %v3965 = vadd.f32 %v3823, %v3917
      %v3966 = vadd.f32 %v3824, %v3920
      %v3967 = vadd.f32 %v3825, %v3925
      %v3968 = vadd.f32 %v3826, %v3928
      %v3969 = vadd.f32 %v3827, %v3933
      %v3970 = vadd.f32 %v3828, %v3936
      %v3971 = vadd.f32 %v3829, %v3941
      %v3972 = vadd.f32 %v3830, %v3944
      %v3973 = vadd.f32 %v3831, %v3949
      %v3974 = vadd.f32 %v3832, %v3952
      %s3975 = scalar_lea.vmem [#allocation2], 6
      %v3976 = vld [vmem:[%s3975] ss:$2 sm:$0xff]
      %s3977 = scalar_lea.vmem [#allocation2], 22
      %v3978 = vld [vmem:[%s3977] ss:$2 sm:$0xff]
      %s3979 = scalar_lea.vmem [#allocation2], 46
      %v3980 = vld [vmem:[%s3979] ss:$2 sm:$0xff]
      %s3981 = scalar_lea.vmem [#allocation2], 62
      %v3982 = vld [vmem:[%s3981] ss:$2 sm:$0xff]
      %s3983 = scalar_lea.vmem [#allocation2], 86
      %v3984 = vld [vmem:[%s3983] ss:$2 sm:$0xff]
      %s3985 = scalar_lea.vmem [#allocation2], 102
      %v3986 = vld [vmem:[%s3985] ss:$2 sm:$0xff]
      %s3987 = scalar_lea.vmem [#allocation2], 126
      %v3988 = vld [vmem:[%s3987] ss:$2 sm:$0xff]
      %s3989 = scalar_lea.vmem [#allocation2], 142
      %v3990 = vld [vmem:[%s3989] ss:$2 sm:$0xff]
      %s3991 = scalar_lea.vmem [#allocation2], 166
      %v3992 = vld [vmem:[%s3991] ss:$2 sm:$0xff]
      %s3993 = scalar_lea.vmem [#allocation2], 182
      %v3994 = vld [vmem:[%s3993] ss:$2 sm:$0xff]
      %s3995 = scalar_lea.vmem [#allocation2], 206
      %v3996 = vld [vmem:[%s3995] ss:$2 sm:$0xff]
      %s3997 = scalar_lea.vmem [#allocation2], 222
      %v3998 = vld [vmem:[%s3997] ss:$2 sm:$0xff]
      %s3999 = scalar_lea.vmem [#allocation2], 246
      %v4000 = vld [vmem:[%s3999] ss:$2 sm:$0xff]
      %s4001 = scalar_lea.vmem [#allocation2], 262
      %v4002 = vld [vmem:[%s4001] ss:$2 sm:$0xff]
      %s4003 = scalar_lea.vmem [#allocation2], 286
      %v4004 = vld [vmem:[%s4003] ss:$2 sm:$0xff]
      %s4005 = scalar_lea.vmem [#allocation2], 302
      %v4006 = vld [vmem:[%s4005] ss:$2 sm:$0xff]
      %s4007 = scalar_lea.vmem [#allocation2], 326
      %v4008 = vld [vmem:[%s4007] ss:$2 sm:$0xff]
      %s4009 = scalar_lea.vmem [#allocation2], 342
      %v4010 = vld [vmem:[%s4009] ss:$2 sm:$0xff]
      %s4011 = scalar_lea.vmem [#allocation2], 366
      %v4012 = vld [vmem:[%s4011] ss:$2 sm:$0xff]
      %s4013 = scalar_lea.vmem [#allocation2], 382
      %v4014 = vld [vmem:[%s4013] ss:$2 sm:$0xff]
      %s4015 = scalar_lea.vmem [#allocation2], 406
      %v4016 = vld [vmem:[%s4015] ss:$2 sm:$0xff]
      %s4017 = scalar_lea.vmem [#allocation2], 422
      %v4018 = vld [vmem:[%s4017] ss:$2 sm:$0xff]
      %s4019 = scalar_lea.vmem [#allocation2], 446
      %v4020 = vld [vmem:[%s4019] ss:$2 sm:$0xff]
      %s4021 = scalar_lea.vmem [#allocation2], 462
      %v4022 = vld [vmem:[%s4021] ss:$2 sm:$0xff]
      %s4023 = scalar_lea.vmem [#allocation2], 486
      %v4024 = vld [vmem:[%s4023] ss:$2 sm:$0xff]
      %s4025 = scalar_lea.vmem [#allocation2], 502
      %v4026 = vld [vmem:[%s4025] ss:$2 sm:$0xff]
      %s4027 = scalar_lea.vmem [#allocation2], 526
      %v4028 = vld [vmem:[%s4027] ss:$2 sm:$0xff]
      %s4029 = scalar_lea.vmem [#allocation2], 542
      %v4030 = vld [vmem:[%s4029] ss:$2 sm:$0xff]
      %s4031 = scalar_lea.vmem [#allocation2], 7
      %v4032 = vld [vmem:[%s4031] ss:$2 sm:$0xff]
      %s4033 = scalar_lea.vmem [#allocation2], 23
      %v4034 = vld [vmem:[%s4033] ss:$2 sm:$0xff]
      %s4035 = scalar_lea.vmem [#allocation2], 47
      %v4036 = vld [vmem:[%s4035] ss:$2 sm:$0xff]
      %s4037 = scalar_lea.vmem [#allocation2], 63
      %v4038 = vld [vmem:[%s4037] ss:$2 sm:$0xff]
      %s4039 = scalar_lea.vmem [#allocation2], 87
      %v4040 = vld [vmem:[%s4039] ss:$2 sm:$0xff]
      %s4041 = scalar_lea.vmem [#allocation2], 103
      %v4042 = vld [vmem:[%s4041] ss:$2 sm:$0xff]
      %s4043 = scalar_lea.vmem [#allocation2], 127
      %v4044 = vld [vmem:[%s4043] ss:$2 sm:$0xff]
      %s4045 = scalar_lea.vmem [#allocation2], 143
      %v4046 = vld [vmem:[%s4045] ss:$2 sm:$0xff]
      %s4047 = scalar_lea.vmem [#allocation2], 167
      %v4048 = vld [vmem:[%s4047] ss:$2 sm:$0xff]
      %s4049 = scalar_lea.vmem [#allocation2], 183
      %v4050 = vld [vmem:[%s4049] ss:$2 sm:$0xff]
      %s4051 = scalar_lea.vmem [#allocation2], 207
      %v4052 = vld [vmem:[%s4051] ss:$2 sm:$0xff]
      %s4053 = scalar_lea.vmem [#allocation2], 223
      %v4054 = vld [vmem:[%s4053] ss:$2 sm:$0xff]
      %s4055 = scalar_lea.vmem [#allocation2], 247
      %v4056 = vld [vmem:[%s4055] ss:$2 sm:$0xff]
      %s4057 = scalar_lea.vmem [#allocation2], 263
      %v4058 = vld [vmem:[%s4057] ss:$2 sm:$0xff]
      %s4059 = scalar_lea.vmem [#allocation2], 287
      %v4060 = vld [vmem:[%s4059] ss:$2 sm:$0xff]
      %s4061 = scalar_lea.vmem [#allocation2], 303
      %v4062 = vld [vmem:[%s4061] ss:$2 sm:$0xff]
      %s4063 = scalar_lea.vmem [#allocation2], 327
      %v4064 = vld [vmem:[%s4063] ss:$2 sm:$0xff]
      %s4065 = scalar_lea.vmem [#allocation2], 343
      %v4066 = vld [vmem:[%s4065] ss:$2 sm:$0xff]
      %s4067 = scalar_lea.vmem [#allocation2], 367
      %v4068 = vld [vmem:[%s4067] ss:$2 sm:$0xff]
      %s4069 = scalar_lea.vmem [#allocation2], 383
      %v4070 = vld [vmem:[%s4069] ss:$2 sm:$0xff]
      %s4071 = scalar_lea.vmem [#allocation2], 407
      %v4072 = vld [vmem:[%s4071] ss:$2 sm:$0xff]
      %s4073 = scalar_lea.vmem [#allocation2], 423
      %v4074 = vld [vmem:[%s4073] ss:$2 sm:$0xff]
      %s4075 = scalar_lea.vmem [#allocation2], 447
      %v4076 = vld [vmem:[%s4075] ss:$2 sm:$0xff]
      %s4077 = scalar_lea.vmem [#allocation2], 463
      %v4078 = vld [vmem:[%s4077] ss:$2 sm:$0xff]
      %s4079 = scalar_lea.vmem [#allocation2], 487
      %v4080 = vld [vmem:[%s4079] ss:$2 sm:$0xff]
      %s4081 = scalar_lea.vmem [#allocation2], 503
      %v4082 = vld [vmem:[%s4081] ss:$2 sm:$0xff]
      %s4083 = scalar_lea.vmem [#allocation2], 527
      %v4084 = vld [vmem:[%s4083] ss:$2 sm:$0xff]
      %s4085 = scalar_lea.vmem [#allocation2], 543
      %v4086 = vld [vmem:[%s4085] ss:$2 sm:$0xff]
      %v4087 = vmax.f32 %v3976, %v4032
      %v4088 = vmax.f32 %v3978, %v4034
      %v4089 = vmax.f32 %v3980, %v4036
      %v4090 = vmax.f32 %v3982, %v4038
      %v4091 = vmax.f32 %v3984, %v4040
      %v4092 = vmax.f32 %v3986, %v4042
      %v4093 = vmax.f32 %v3988, %v4044
      %v4094 = vmax.f32 %v3990, %v4046
      %v4095 = vmax.f32 %v3992, %v4048
      %v4096 = vmax.f32 %v3994, %v4050
      %v4097 = vmax.f32 %v3996, %v4052
      %v4098 = vmax.f32 %v3998, %v4054
      %v4099 = vmax.f32 %v4000, %v4056
      %v4100 = vmax.f32 %v4002, %v4058
      %v4101 = vmax.f32 %v4004, %v4060
      %v4102 = vmax.f32 %v4006, %v4062
      %v4103 = vmax.f32 %v4008, %v4064
      %v4104 = vmax.f32 %v4010, %v4066
      %v4105 = vmax.f32 %v4012, %v4068
      %v4106 = vmax.f32 %v4014, %v4070
      %v4107 = vmax.f32 %v4016, %v4072
      %v4108 = vmax.f32 %v4018, %v4074
      %v4109 = vmax.f32 %v4020, %v4076
      %v4110 = vmax.f32 %v4022, %v4078
      %v4111 = vmax.f32 %v4024, %v4080
      %v4112 = vmax.f32 %v4026, %v4082
      %v4113 = vmax.f32 %v4028, %v4084
      %v4114 = vmax.f32 %v4030, %v4086
      %v4115 = vpack.c.bf16 %v4088, %v4087
      %v4116 = vpack.c.bf16 %v4090, %v4089
      %v4117 = vpack.c.bf16 %v4092, %v4091
      %v4118 = vpack.c.bf16 %v4094, %v4093
      %v4119 = vpack.c.bf16 %v4096, %v4095
      %v4120 = vpack.c.bf16 %v4098, %v4097
      %v4121 = vpack.c.bf16 %v4100, %v4099
      %v4122 = vpack.c.bf16 %v4102, %v4101
      %v4123 = vpack.c.bf16 %v4104, %v4103
      %v4124 = vpack.c.bf16 %v4106, %v4105
      %v4125 = vpack.c.bf16 %v4108, %v4107
      %v4126 = vpack.c.bf16 %v4110, %v4109
      %v4127 = vpack.c.bf16 %v4112, %v4111
      %v4128 = vpack.c.bf16 %v4114, %v4113
      %v4131 = vunpack.c.l.b16 %v1297
      %v4132 = vunpack.c.l.b16 %v1298
      %v4133 = vpack.c.b16 %v4132, %v4131
      %v4136 = vsel %vm1501, %v4115, 0
      %v4139 = vsel %vm1501, %v4116, 0
      %v4142 = vsel %vm1501, %v4117, 0
      %v4145 = vsel %vm1501, %v4118, 0
      %v4148 = vsel %vm1501, %v4119, 0
      %v4151 = vsel %vm1501, %v4120, 0
      %v4154 = vsel %vm1501, %v4121, 0
      %v4157 = vsel %vm1501, %v4122, 0
      %v4160 = vsel %vm1501, %v4123, 0
      %v4163 = vsel %vm1501, %v4124, 0
      %4165 = vmatprep.subr.bf16.mxu0 0
      %4166 = vmatpush1.bf16.msra.mxu0 0
      %4167 = vmatprep.subr.bf16.mxu0 0
      %4168 = vmatpush1.bf16.msra.mxu0 0
      %4169 = vmatprep.subr.bf16.mxu0 0
      %4170 = vmatpush1.bf16.msra.mxu0 0
      %4171 = vmatprep.subr.bf16.mxu0 0
      %4172 = vmatpush1.bf16.msra.mxu0 0
      %4173 = vmatprep.subr.bf16.mxu0 0
      %4174 = vmatpush1.bf16.msra.mxu0 0
      %4175 = vmatprep.subr.bf16.mxu0 0
      %4176 = vmatpush1.bf16.msra.mxu0 0
      %4177 = vmatprep.subr.bf16.mxu0 0
      %4178 = vmatpush1.bf16.msra.mxu0 0
      %4179 = vmatprep.subr.bf16.mxu0 0
      %4180 = vmatpush1.bf16.msra.mxu0 %v4133
      %4181 = vmatprep.subr.bf16.mxu0 0
      %4182 = vmatpush2.bf16.msra.mxu0 0
      %4183 = vmatprep.subr.bf16.mxu0 0
      %4184 = vmatpush2.bf16.msra.mxu0 0
      %4185 = vmatprep.subr.bf16.mxu0 0
      %4186 = vmatpush2.bf16.msra.mxu0 0
      %4187 = vmatprep.subr.bf16.mxu0 0
      %4188 = vmatpush2.bf16.msra.mxu0 0
      %4189 = vmatprep.subr.bf16.mxu0 0
      %4190 = vmatpush2.bf16.msra.mxu0 0
      %4191 = vmatprep.subr.bf16.mxu0 0
      %4192 = vmatpush2.bf16.msra.mxu0 0
      %4193 = vmatprep.subr.bf16.mxu0 0
      %4194 = vmatpush2.bf16.msra.mxu0 0
      %4195 = vmatprep.subr.bf16.mxu0 0
      %4196 = vmatpush2.bf16.msra.mxu0 0
      %4197 = vmatprep.mubr.bf16.mxu0 0
      %4198 = vmatmul.mubr.bf16.gmra.mxu0 %v4136
      %v4199 = vpop.f32.mrf.mxu0
      %v4200 = vadd.f32 0.0, %v4199
      %v4201 = vpop.f32.mrf.mxu0
      %v4202 = vpop.f32.mrf.mxu0
      %v4203 = vadd.f32 0.0, %v4202
      %v4204 = vpop.f32.mrf.mxu0
      %4205 = vmatprep.mubr.bf16.mxu0 0
      %4206 = vmatmul.mubr.bf16.gmra.mxu0 %v4139
      %v4207 = vpop.f32.mrf.mxu0
      %v4208 = vadd.f32 0.0, %v4207
      %v4209 = vpop.f32.mrf.mxu0
      %v4210 = vpop.f32.mrf.mxu0
      %v4211 = vadd.f32 0.0, %v4210
      %v4212 = vpop.f32.mrf.mxu0
      %4213 = vmatprep.mubr.bf16.mxu0 0
      %4214 = vmatmul.mubr.bf16.gmra.mxu0 %v4142
      %v4215 = vpop.f32.mrf.mxu0
      %v4216 = vadd.f32 0.0, %v4215
      %v4217 = vpop.f32.mrf.mxu0
      %v4218 = vpop.f32.mrf.mxu0
      %v4219 = vadd.f32 0.0, %v4218
      %v4220 = vpop.f32.mrf.mxu0
      %4221 = vmatprep.mubr.bf16.mxu0 0
      %4222 = vmatmul.mubr.bf16.gmra.mxu0 %v4145
      %v4223 = vpop.f32.mrf.mxu0
      %v4224 = vadd.f32 0.0, %v4223
      %v4225 = vpop.f32.mrf.mxu0
      %v4226 = vpop.f32.mrf.mxu0
      %v4227 = vadd.f32 0.0, %v4226
      %v4228 = vpop.f32.mrf.mxu0
      %4229 = vmatprep.mubr.bf16.mxu0 0
      %4230 = vmatmul.mubr.bf16.gmra.mxu0 %v4148
      %v4231 = vpop.f32.mrf.mxu0
      %v4232 = vadd.f32 0.0, %v4231
      %v4233 = vpop.f32.mrf.mxu0
      %v4234 = vpop.f32.mrf.mxu0
      %v4235 = vadd.f32 0.0, %v4234
      %v4236 = vpop.f32.mrf.mxu0
      %4237 = vmatprep.mubr.bf16.mxu0 0
      %4238 = vmatmul.mubr.bf16.gmra.mxu0 %v4151
      %v4239 = vpop.f32.mrf.mxu0
      %v4240 = vadd.f32 0.0, %v4239
      %v4241 = vpop.f32.mrf.mxu0
      %v4242 = vpop.f32.mrf.mxu0
      %v4243 = vadd.f32 0.0, %v4242
      %v4244 = vpop.f32.mrf.mxu0
      %4245 = vmatprep.mubr.bf16.mxu0 0
      %4246 = vmatmul.mubr.bf16.gmra.mxu0 %v4154
      %v4247 = vpop.f32.mrf.mxu0
      %v4248 = vadd.f32 0.0, %v4247
      %v4249 = vpop.f32.mrf.mxu0
      %v4250 = vpop.f32.mrf.mxu0
      %v4251 = vadd.f32 0.0, %v4250
      %v4252 = vpop.f32.mrf.mxu0
      %4253 = vmatprep.mubr.bf16.mxu0 0
      %4254 = vmatmul.mubr.bf16.gmra.mxu0 %v4157
      %v4255 = vpop.f32.mrf.mxu0
      %v4256 = vadd.f32 0.0, %v4255
      %v4257 = vpop.f32.mrf.mxu0
      %v4258 = vpop.f32.mrf.mxu0
      %v4259 = vadd.f32 0.0, %v4258
      %v4260 = vpop.f32.mrf.mxu0
      %4261 = vmatprep.mubr.bf16.mxu0 0
      %4262 = vmatmul.mubr.bf16.gmra.mxu0 %v4160
      %v4263 = vpop.f32.mrf.mxu0
      %v4264 = vadd.f32 0.0, %v4263
      %v4265 = vpop.f32.mrf.mxu0
      %v4266 = vpop.f32.mrf.mxu0
      %v4267 = vadd.f32 0.0, %v4266
      %v4268 = vpop.f32.mrf.mxu0
      %4269 = vmatprep.mubr.bf16.mxu0 0
      %4270 = vmatmul.mubr.bf16.gmra.mxu0 %v4163
      %v4271 = vpop.f32.mrf.mxu0
      %v4272 = vadd.f32 0.0, %v4271
      %v4273 = vpop.f32.mrf.mxu0
      %v4274 = vpop.f32.mrf.mxu0
      %v4275 = vadd.f32 0.0, %v4274
      %v4276 = vpop.f32.mrf.mxu0
      %4277 = vdwg.mxu0
      %v4278 = vadd.f32 %v3955, %v4200
      %v4279 = vadd.f32 %v3956, %v4203
      %v4280 = vadd.f32 %v3957, %v4208
      %v4281 = vadd.f32 %v3958, %v4211
      %v4282 = vadd.f32 %v3959, %v4216
      %v4283 = vadd.f32 %v3960, %v4219
      %v4284 = vadd.f32 %v3961, %v4224
      %v4285 = vadd.f32 %v3962, %v4227
      %v4286 = vadd.f32 %v3963, %v4232
      %v4287 = vadd.f32 %v3964, %v4235
      %v4288 = vadd.f32 %v3965, %v4240
      %v4289 = vadd.f32 %v3966, %v4243
      %v4290 = vadd.f32 %v3967, %v4248
      %v4291 = vadd.f32 %v3968, %v4251
      %v4292 = vadd.f32 %v3969, %v4256
      %v4293 = vadd.f32 %v3970, %v4259
      %v4294 = vadd.f32 %v3971, %v4264
      %v4295 = vadd.f32 %v3972, %v4267
      %v4296 = vadd.f32 %v3973, %v4272
      %v4297 = vadd.f32 %v3974, %v4275
      %v4300 = vunpack.c.l.b16 %v1307
      %v4301 = vunpack.c.l.b16 %v1308
      %v4302 = vpack.c.b16 %v4301, %v4300
      %v4305 = vsel %vm1501, %v4125, 0
      %4307 = vmatprep.subr.bf16.mxu0 0
      %4308 = vmatpush1.bf16.msra.mxu0 0
      %4309 = vmatprep.subr.bf16.mxu0 0
      %4310 = vmatpush1.bf16.msra.mxu0 0
      %4311 = vmatprep.subr.bf16.mxu0 0
      %4312 = vmatpush1.bf16.msra.mxu0 0
      %4313 = vmatprep.subr.bf16.mxu0 0
      %4314 = vmatpush1.bf16.msra.mxu0 0
      %4315 = vmatprep.subr.bf16.mxu0 0
      %4316 = vmatpush1.bf16.msra.mxu0 0
      %4317 = vmatprep.subr.bf16.mxu0 0
      %4318 = vmatpush1.bf16.msra.mxu0 0
      %4319 = vmatprep.subr.bf16.mxu0 0
      %4320 = vmatpush1.bf16.msra.mxu0 0
      %4321 = vmatprep.subr.bf16.mxu0 0
      %4322 = vmatpush1.bf16.msra.mxu0 %v4302
      %4323 = vmatprep.subr.bf16.mxu0 0
      %4324 = vmatpush2.bf16.msra.mxu0 0
      %4325 = vmatprep.subr.bf16.mxu0 0
      %4326 = vmatpush2.bf16.msra.mxu0 0
      %4327 = vmatprep.subr.bf16.mxu0 0
      %4328 = vmatpush2.bf16.msra.mxu0 0
      %4329 = vmatprep.subr.bf16.mxu0 0
      %4330 = vmatpush2.bf16.msra.mxu0 0
      %4331 = vmatprep.subr.bf16.mxu0 0
      %4332 = vmatpush2.bf16.msra.mxu0 0
      %4333 = vmatprep.subr.bf16.mxu0 0
      %4334 = vmatpush2.bf16.msra.mxu0 0
      %4335 = vmatprep.subr.bf16.mxu0 0
      %4336 = vmatpush2.bf16.msra.mxu0 0
      %4337 = vmatprep.subr.bf16.mxu0 0
      %4338 = vmatpush2.bf16.msra.mxu0 0
      %4339 = vmatprep.mubr.bf16.mxu0 0
      %4340 = vmatmul.mubr.bf16.gmra.mxu0 %v4139
      %v4341 = vpop.f32.mrf.mxu0
      %v4342 = vadd.f32 0.0, %v4341
      %v4343 = vpop.f32.mrf.mxu0
      %v4344 = vpop.f32.mrf.mxu0
      %v4345 = vadd.f32 0.0, %v4344
      %v4346 = vpop.f32.mrf.mxu0
      %4347 = vmatprep.mubr.bf16.mxu0 0
      %4348 = vmatmul.mubr.bf16.gmra.mxu0 %v4142
      %v4349 = vpop.f32.mrf.mxu0
      %v4350 = vadd.f32 0.0, %v4349
      %v4351 = vpop.f32.mrf.mxu0
      %v4352 = vpop.f32.mrf.mxu0
      %v4353 = vadd.f32 0.0, %v4352
      %v4354 = vpop.f32.mrf.mxu0
      %4355 = vmatprep.mubr.bf16.mxu0 0
      %4356 = vmatmul.mubr.bf16.gmra.mxu0 %v4145
      %v4357 = vpop.f32.mrf.mxu0
      %v4358 = vadd.f32 0.0, %v4357
      %v4359 = vpop.f32.mrf.mxu0
      %v4360 = vpop.f32.mrf.mxu0
      %v4361 = vadd.f32 0.0, %v4360
      %v4362 = vpop.f32.mrf.mxu0
      %4363 = vmatprep.mubr.bf16.mxu0 0
      %4364 = vmatmul.mubr.bf16.gmra.mxu0 %v4148
      %v4365 = vpop.f32.mrf.mxu0
      %v4366 = vadd.f32 0.0, %v4365
      %v4367 = vpop.f32.mrf.mxu0
      %v4368 = vpop.f32.mrf.mxu0
      %v4369 = vadd.f32 0.0, %v4368
      %v4370 = vpop.f32.mrf.mxu0
      %4371 = vmatprep.mubr.bf16.mxu0 0
      %4372 = vmatmul.mubr.bf16.gmra.mxu0 %v4151
      %v4373 = vpop.f32.mrf.mxu0
      %v4374 = vadd.f32 0.0, %v4373
      %v4375 = vpop.f32.mrf.mxu0
      %v4376 = vpop.f32.mrf.mxu0
      %v4377 = vadd.f32 0.0, %v4376
      %v4378 = vpop.f32.mrf.mxu0
      %4379 = vmatprep.mubr.bf16.mxu0 0
      %4380 = vmatmul.mubr.bf16.gmra.mxu0 %v4154
      %v4381 = vpop.f32.mrf.mxu0
      %v4382 = vadd.f32 0.0, %v4381
      %v4383 = vpop.f32.mrf.mxu0
      %v4384 = vpop.f32.mrf.mxu0
      %v4385 = vadd.f32 0.0, %v4384
      %v4386 = vpop.f32.mrf.mxu0
      %4387 = vmatprep.mubr.bf16.mxu0 0
      %4388 = vmatmul.mubr.bf16.gmra.mxu0 %v4157
      %v4389 = vpop.f32.mrf.mxu0
      %v4390 = vadd.f32 0.0, %v4389
      %v4391 = vpop.f32.mrf.mxu0
      %v4392 = vpop.f32.mrf.mxu0
      %v4393 = vadd.f32 0.0, %v4392
      %v4394 = vpop.f32.mrf.mxu0
      %4395 = vmatprep.mubr.bf16.mxu0 0
      %4396 = vmatmul.mubr.bf16.gmra.mxu0 %v4160
      %v4397 = vpop.f32.mrf.mxu0
      %v4398 = vadd.f32 0.0, %v4397
      %v4399 = vpop.f32.mrf.mxu0
      %v4400 = vpop.f32.mrf.mxu0
      %v4401 = vadd.f32 0.0, %v4400
      %v4402 = vpop.f32.mrf.mxu0
      %4403 = vmatprep.mubr.bf16.mxu0 0
      %4404 = vmatmul.mubr.bf16.gmra.mxu0 %v4163
      %v4405 = vpop.f32.mrf.mxu0
      %v4406 = vadd.f32 0.0, %v4405
      %v4407 = vpop.f32.mrf.mxu0
      %v4408 = vpop.f32.mrf.mxu0
      %v4409 = vadd.f32 0.0, %v4408
      %v4410 = vpop.f32.mrf.mxu0
      %4411 = vmatprep.mubr.bf16.mxu0 0
      %4412 = vmatmul.mubr.bf16.gmra.mxu0 %v4305
      %v4413 = vpop.f32.mrf.mxu0
      %v4414 = vadd.f32 0.0, %v4413
      %v4415 = vpop.f32.mrf.mxu0
      %v4416 = vpop.f32.mrf.mxu0
      %v4417 = vadd.f32 0.0, %v4416
      %v4418 = vpop.f32.mrf.mxu0
      %4419 = vdwg.mxu0
      %v4420 = vadd.f32 %v4278, %v4342
      %v4421 = vadd.f32 %v4279, %v4345
      %v4422 = vadd.f32 %v4280, %v4350
      %v4423 = vadd.f32 %v4281, %v4353
      %v4424 = vadd.f32 %v4282, %v4358
      %v4425 = vadd.f32 %v4283, %v4361
      %v4426 = vadd.f32 %v4284, %v4366
      %v4427 = vadd.f32 %v4285, %v4369
      %v4428 = vadd.f32 %v4286, %v4374
      %v4429 = vadd.f32 %v4287, %v4377
      %v4430 = vadd.f32 %v4288, %v4382
      %v4431 = vadd.f32 %v4289, %v4385
      %v4432 = vadd.f32 %v4290, %v4390
      %v4433 = vadd.f32 %v4291, %v4393
      %v4434 = vadd.f32 %v4292, %v4398
      %v4435 = vadd.f32 %v4293, %v4401
      %v4436 = vadd.f32 %v4294, %v4406
      %v4437 = vadd.f32 %v4295, %v4409
      %v4438 = vadd.f32 %v4296, %v4414
      %v4439 = vadd.f32 %v4297, %v4417
      %v4442 = vunpack.c.l.b16 %v1317
      %v4443 = vunpack.c.l.b16 %v1318
      %v4444 = vpack.c.b16 %v4443, %v4442
      %v4447 = vsel %vm1501, %v4126, 0
      %4449 = vmatprep.subr.bf16.mxu0 0
      %4450 = vmatpush1.bf16.msra.mxu0 0
      %4451 = vmatprep.subr.bf16.mxu0 0
      %4452 = vmatpush1.bf16.msra.mxu0 0
      %4453 = vmatprep.subr.bf16.mxu0 0
      %4454 = vmatpush1.bf16.msra.mxu0 0
      %4455 = vmatprep.subr.bf16.mxu0 0
      %4456 = vmatpush1.bf16.msra.mxu0 0
      %4457 = vmatprep.subr.bf16.mxu0 0
      %4458 = vmatpush1.bf16.msra.mxu0 0
      %4459 = vmatprep.subr.bf16.mxu0 0
      %4460 = vmatpush1.bf16.msra.mxu0 0
      %4461 = vmatprep.subr.bf16.mxu0 0
      %4462 = vmatpush1.bf16.msra.mxu0 0
      %4463 = vmatprep.subr.bf16.mxu0 0
      %4464 = vmatpush1.bf16.msra.mxu0 %v4444
      %4465 = vmatprep.subr.bf16.mxu0 0
      %4466 = vmatpush2.bf16.msra.mxu0 0
      %4467 = vmatprep.subr.bf16.mxu0 0
      %4468 = vmatpush2.bf16.msra.mxu0 0
      %4469 = vmatprep.subr.bf16.mxu0 0
      %4470 = vmatpush2.bf16.msra.mxu0 0
      %4471 = vmatprep.subr.bf16.mxu0 0
      %4472 = vmatpush2.bf16.msra.mxu0 0
      %4473 = vmatprep.subr.bf16.mxu0 0
      %4474 = vmatpush2.bf16.msra.mxu0 0
      %4475 = vmatprep.subr.bf16.mxu0 0
      %4476 = vmatpush2.bf16.msra.mxu0 0
      %4477 = vmatprep.subr.bf16.mxu0 0
      %4478 = vmatpush2.bf16.msra.mxu0 0
      %4479 = vmatprep.subr.bf16.mxu0 0
      %4480 = vmatpush2.bf16.msra.mxu0 0
      %4481 = vmatprep.mubr.bf16.mxu0 0
      %4482 = vmatmul.mubr.bf16.gmra.mxu0 %v4142
      %v4483 = vpop.f32.mrf.mxu0
      %v4484 = vadd.f32 0.0, %v4483
      %v4485 = vpop.f32.mrf.mxu0
      %v4486 = vpop.f32.mrf.mxu0
      %v4487 = vadd.f32 0.0, %v4486
      %v4488 = vpop.f32.mrf.mxu0
      %4489 = vmatprep.mubr.bf16.mxu0 0
      %4490 = vmatmul.mubr.bf16.gmra.mxu0 %v4145
      %v4491 = vpop.f32.mrf.mxu0
      %v4492 = vadd.f32 0.0, %v4491
      %v4493 = vpop.f32.mrf.mxu0
      %v4494 = vpop.f32.mrf.mxu0
      %v4495 = vadd.f32 0.0, %v4494
      %v4496 = vpop.f32.mrf.mxu0
      %4497 = vmatprep.mubr.bf16.mxu0 0
      %4498 = vmatmul.mubr.bf16.gmra.mxu0 %v4148
      %v4499 = vpop.f32.mrf.mxu0
      %v4500 = vadd.f32 0.0, %v4499
      %v4501 = vpop.f32.mrf.mxu0
      %v4502 = vpop.f32.mrf.mxu0
      %v4503 = vadd.f32 0.0, %v4502
      %v4504 = vpop.f32.mrf.mxu0
      %4505 = vmatprep.mubr.bf16.mxu0 0
      %4506 = vmatmul.mubr.bf16.gmra.mxu0 %v4151
      %v4507 = vpop.f32.mrf.mxu0
      %v4508 = vadd.f32 0.0, %v4507
      %v4509 = vpop.f32.mrf.mxu0
      %v4510 = vpop.f32.mrf.mxu0
      %v4511 = vadd.f32 0.0, %v4510
      %v4512 = vpop.f32.mrf.mxu0
      %4513 = vmatprep.mubr.bf16.mxu0 0
      %4514 = vmatmul.mubr.bf16.gmra.mxu0 %v4154
      %v4515 = vpop.f32.mrf.mxu0
      %v4516 = vadd.f32 0.0, %v4515
      %v4517 = vpop.f32.mrf.mxu0
      %v4518 = vpop.f32.mrf.mxu0
      %v4519 = vadd.f32 0.0, %v4518
      %v4520 = vpop.f32.mrf.mxu0
      %4521 = vmatprep.mubr.bf16.mxu0 0
      %4522 = vmatmul.mubr.bf16.gmra.mxu0 %v4157
      %v4523 = vpop.f32.mrf.mxu0
      %v4524 = vadd.f32 0.0, %v4523
      %v4525 = vpop.f32.mrf.mxu0
      %v4526 = vpop.f32.mrf.mxu0
      %v4527 = vadd.f32 0.0, %v4526
      %v4528 = vpop.f32.mrf.mxu0
      %4529 = vmatprep.mubr.bf16.mxu0 0
      %4530 = vmatmul.mubr.bf16.gmra.mxu0 %v4160
      %v4531 = vpop.f32.mrf.mxu0
      %v4532 = vadd.f32 0.0, %v4531
      %v4533 = vpop.f32.mrf.mxu0
      %v4534 = vpop.f32.mrf.mxu0
      %v4535 = vadd.f32 0.0, %v4534
      %v4536 = vpop.f32.mrf.mxu0
      %4537 = vmatprep.mubr.bf16.mxu0 0
      %4538 = vmatmul.mubr.bf16.gmra.mxu0 %v4163
      %v4539 = vpop.f32.mrf.mxu0
      %v4540 = vadd.f32 0.0, %v4539
      %v4541 = vpop.f32.mrf.mxu0
      %v4542 = vpop.f32.mrf.mxu0
      %v4543 = vadd.f32 0.0, %v4542
      %v4544 = vpop.f32.mrf.mxu0
      %4545 = vmatprep.mubr.bf16.mxu0 0
      %4546 = vmatmul.mubr.bf16.gmra.mxu0 %v4305
      %v4547 = vpop.f32.mrf.mxu0
      %v4548 = vadd.f32 0.0, %v4547
      %v4549 = vpop.f32.mrf.mxu0
      %v4550 = vpop.f32.mrf.mxu0
      %v4551 = vadd.f32 0.0, %v4550
      %v4552 = vpop.f32.mrf.mxu0
      %4553 = vmatprep.mubr.bf16.mxu0 0
      %4554 = vmatmul.mubr.bf16.gmra.mxu0 %v4447
      %v4555 = vpop.f32.mrf.mxu0
      %v4556 = vadd.f32 0.0, %v4555
      %v4557 = vpop.f32.mrf.mxu0
      %v4558 = vpop.f32.mrf.mxu0
      %v4559 = vadd.f32 0.0, %v4558
      %v4560 = vpop.f32.mrf.mxu0
      %4561 = vdwg.mxu0
      %v4562 = vadd.f32 %v4420, %v4484
      %v4563 = vadd.f32 %v4421, %v4487
      %v4564 = vadd.f32 %v4422, %v4492
      %v4565 = vadd.f32 %v4423, %v4495
      %v4566 = vadd.f32 %v4424, %v4500
      %v4567 = vadd.f32 %v4425, %v4503
      %v4568 = vadd.f32 %v4426, %v4508
      %v4569 = vadd.f32 %v4427, %v4511
      %v4570 = vadd.f32 %v4428, %v4516
      %v4571 = vadd.f32 %v4429, %v4519
      %v4572 = vadd.f32 %v4430, %v4524
      %v4573 = vadd.f32 %v4431, %v4527
      %v4574 = vadd.f32 %v4432, %v4532
      %v4575 = vadd.f32 %v4433, %v4535
      %v4576 = vadd.f32 %v4434, %v4540
      %v4577 = vadd.f32 %v4435, %v4543
      %v4578 = vadd.f32 %v4436, %v4548
      %v4579 = vadd.f32 %v4437, %v4551
      %v4580 = vadd.f32 %v4438, %v4556
      %v4581 = vadd.f32 %v4439, %v4559
      %v4584 = vunpack.c.l.b16 %v1327
      %v4585 = vunpack.c.l.b16 %v1328
      %v4586 = vpack.c.b16 %v4585, %v4584
      %v4589 = vsel %vm1501, %v4127, 0
      %4591 = vmatprep.subr.bf16.mxu0 0
      %4592 = vmatpush1.bf16.msra.mxu0 0
      %4593 = vmatprep.subr.bf16.mxu0 0
      %4594 = vmatpush1.bf16.msra.mxu0 0
      %4595 = vmatprep.subr.bf16.mxu0 0
      %4596 = vmatpush1.bf16.msra.mxu0 0
      %4597 = vmatprep.subr.bf16.mxu0 0
      %4598 = vmatpush1.bf16.msra.mxu0 0
      %4599 = vmatprep.subr.bf16.mxu0 0
      %4600 = vmatpush1.bf16.msra.mxu0 0
      %4601 = vmatprep.subr.bf16.mxu0 0
      %4602 = vmatpush1.bf16.msra.mxu0 0
      %4603 = vmatprep.subr.bf16.mxu0 0
      %4604 = vmatpush1.bf16.msra.mxu0 0
      %4605 = vmatprep.subr.bf16.mxu0 0
      %4606 = vmatpush1.bf16.msra.mxu0 %v4586
      %4607 = vmatprep.subr.bf16.mxu0 0
      %4608 = vmatpush2.bf16.msra.mxu0 0
      %4609 = vmatprep.subr.bf16.mxu0 0
      %4610 = vmatpush2.bf16.msra.mxu0 0
      %4611 = vmatprep.subr.bf16.mxu0 0
      %4612 = vmatpush2.bf16.msra.mxu0 0
      %4613 = vmatprep.subr.bf16.mxu0 0
      %4614 = vmatpush2.bf16.msra.mxu0 0
      %4615 = vmatprep.subr.bf16.mxu0 0
      %4616 = vmatpush2.bf16.msra.mxu0 0
      %4617 = vmatprep.subr.bf16.mxu0 0
      %4618 = vmatpush2.bf16.msra.mxu0 0
      %4619 = vmatprep.subr.bf16.mxu0 0
      %4620 = vmatpush2.bf16.msra.mxu0 0
      %4621 = vmatprep.subr.bf16.mxu0 0
      %4622 = vmatpush2.bf16.msra.mxu0 0
      %4623 = vmatprep.mubr.bf16.mxu0 0
      %4624 = vmatmul.mubr.bf16.gmra.mxu0 %v4145
      %v4625 = vpop.f32.mrf.mxu0
      %v4626 = vadd.f32 0.0, %v4625
      %v4627 = vpop.f32.mrf.mxu0
      %v4628 = vpop.f32.mrf.mxu0
      %v4629 = vadd.f32 0.0, %v4628
      %v4630 = vpop.f32.mrf.mxu0
      %4631 = vmatprep.mubr.bf16.mxu0 0
      %4632 = vmatmul.mubr.bf16.gmra.mxu0 %v4148
      %v4633 = vpop.f32.mrf.mxu0
      %v4634 = vadd.f32 0.0, %v4633
      %v4635 = vpop.f32.mrf.mxu0
      %v4636 = vpop.f32.mrf.mxu0
      %v4637 = vadd.f32 0.0, %v4636
      %v4638 = vpop.f32.mrf.mxu0
      %4639 = vmatprep.mubr.bf16.mxu0 0
      %4640 = vmatmul.mubr.bf16.gmra.mxu0 %v4151
      %v4641 = vpop.f32.mrf.mxu0
      %v4642 = vadd.f32 0.0, %v4641
      %v4643 = vpop.f32.mrf.mxu0
      %v4644 = vpop.f32.mrf.mxu0
      %v4645 = vadd.f32 0.0, %v4644
      %v4646 = vpop.f32.mrf.mxu0
      %4647 = vmatprep.mubr.bf16.mxu0 0
      %4648 = vmatmul.mubr.bf16.gmra.mxu0 %v4154
      %v4649 = vpop.f32.mrf.mxu0
      %v4650 = vadd.f32 0.0, %v4649
      %v4651 = vpop.f32.mrf.mxu0
      %v4652 = vpop.f32.mrf.mxu0
      %v4653 = vadd.f32 0.0, %v4652
      %v4654 = vpop.f32.mrf.mxu0
      %4655 = vmatprep.mubr.bf16.mxu0 0
      %4656 = vmatmul.mubr.bf16.gmra.mxu0 %v4157
      %v4657 = vpop.f32.mrf.mxu0
      %v4658 = vadd.f32 0.0, %v4657
      %v4659 = vpop.f32.mrf.mxu0
      %v4660 = vpop.f32.mrf.mxu0
      %v4661 = vadd.f32 0.0, %v4660
      %v4662 = vpop.f32.mrf.mxu0
      %4663 = vmatprep.mubr.bf16.mxu0 0
      %4664 = vmatmul.mubr.bf16.gmra.mxu0 %v4160
      %v4665 = vpop.f32.mrf.mxu0
      %v4666 = vadd.f32 0.0, %v4665
      %v4667 = vpop.f32.mrf.mxu0
      %v4668 = vpop.f32.mrf.mxu0
      %v4669 = vadd.f32 0.0, %v4668
      %v4670 = vpop.f32.mrf.mxu0
      %4671 = vmatprep.mubr.bf16.mxu0 0
      %4672 = vmatmul.mubr.bf16.gmra.mxu0 %v4163
      %v4673 = vpop.f32.mrf.mxu0
      %v4674 = vadd.f32 0.0, %v4673
      %v4675 = vpop.f32.mrf.mxu0
      %v4676 = vpop.f32.mrf.mxu0
      %v4677 = vadd.f32 0.0, %v4676
      %v4678 = vpop.f32.mrf.mxu0
      %4679 = vmatprep.mubr.bf16.mxu0 0
      %4680 = vmatmul.mubr.bf16.gmra.mxu0 %v4305
      %v4681 = vpop.f32.mrf.mxu0
      %v4682 = vadd.f32 0.0, %v4681
      %v4683 = vpop.f32.mrf.mxu0
      %v4684 = vpop.f32.mrf.mxu0
      %v4685 = vadd.f32 0.0, %v4684
      %v4686 = vpop.f32.mrf.mxu0
      %4687 = vmatprep.mubr.bf16.mxu0 0
      %4688 = vmatmul.mubr.bf16.gmra.mxu0 %v4447
      %v4689 = vpop.f32.mrf.mxu0
      %v4690 = vadd.f32 0.0, %v4689
      %v4691 = vpop.f32.mrf.mxu0
      %v4692 = vpop.f32.mrf.mxu0
      %v4693 = vadd.f32 0.0, %v4692
      %v4694 = vpop.f32.mrf.mxu0
      %4695 = vmatprep.mubr.bf16.mxu0 0
      %4696 = vmatmul.mubr.bf16.gmra.mxu0 %v4589
      %v4697 = vpop.f32.mrf.mxu0
      %v4698 = vadd.f32 0.0, %v4697
      %v4699 = vpop.f32.mrf.mxu0
      %v4700 = vpop.f32.mrf.mxu0
      %v4701 = vadd.f32 0.0, %v4700
      %v4702 = vpop.f32.mrf.mxu0
      %4703 = vdwg.mxu0
      %v4704 = vadd.f32 %v4562, %v4626
      %v4705 = vadd.f32 %v4563, %v4629
      %v4706 = vadd.f32 %v4564, %v4634
      %v4707 = vadd.f32 %v4565, %v4637
      %v4708 = vadd.f32 %v4566, %v4642
      %v4709 = vadd.f32 %v4567, %v4645
      %v4710 = vadd.f32 %v4568, %v4650
      %v4711 = vadd.f32 %v4569, %v4653
      %v4712 = vadd.f32 %v4570, %v4658
      %v4713 = vadd.f32 %v4571, %v4661
      %v4714 = vadd.f32 %v4572, %v4666
      %v4715 = vadd.f32 %v4573, %v4669
      %v4716 = vadd.f32 %v4574, %v4674
      %v4717 = vadd.f32 %v4575, %v4677
      %v4718 = vadd.f32 %v4576, %v4682
      %v4719 = vadd.f32 %v4577, %v4685
      %v4720 = vadd.f32 %v4578, %v4690
      %v4721 = vadd.f32 %v4579, %v4693
      %v4722 = vadd.f32 %v4580, %v4698
      %v4723 = vadd.f32 %v4581, %v4701
      %v4726 = vunpack.c.l.b16 %v1337
      %v4727 = vunpack.c.l.b16 %v1338
      %v4728 = vpack.c.b16 %v4727, %v4726
      %v4731 = vsel %vm1501, %v4128, 0
      %4733 = vmatprep.subr.bf16.mxu0 0
      %4734 = vmatpush1.bf16.msra.mxu0 0
      %4735 = vmatprep.subr.bf16.mxu0 0
      %4736 = vmatpush1.bf16.msra.mxu0 0
      %4737 = vmatprep.subr.bf16.mxu0 0
      %4738 = vmatpush1.bf16.msra.mxu0 0
      %4739 = vmatprep.subr.bf16.mxu0 0
      %4740 = vmatpush1.bf16.msra.mxu0 0
      %4741 = vmatprep.subr.bf16.mxu0 0
      %4742 = vmatpush1.bf16.msra.mxu0 0
      %4743 = vmatprep.subr.bf16.mxu0 0
      %4744 = vmatpush1.bf16.msra.mxu0 0
      %4745 = vmatprep.subr.bf16.mxu0 0
      %4746 = vmatpush1.bf16.msra.mxu0 0
      %4747 = vmatprep.subr.bf16.mxu0 0
      %4748 = vmatpush1.bf16.msra.mxu0 %v4728
      %4749 = vmatprep.subr.bf16.mxu0 0
      %4750 = vmatpush2.bf16.msra.mxu0 0
      %4751 = vmatprep.subr.bf16.mxu0 0
      %4752 = vmatpush2.bf16.msra.mxu0 0
      %4753 = vmatprep.subr.bf16.mxu0 0
      %4754 = vmatpush2.bf16.msra.mxu0 0
      %4755 = vmatprep.subr.bf16.mxu0 0
      %4756 = vmatpush2.bf16.msra.mxu0 0
      %4757 = vmatprep.subr.bf16.mxu0 0
      %4758 = vmatpush2.bf16.msra.mxu0 0
      %4759 = vmatprep.subr.bf16.mxu0 0
      %4760 = vmatpush2.bf16.msra.mxu0 0
      %4761 = vmatprep.subr.bf16.mxu0 0
      %4762 = vmatpush2.bf16.msra.mxu0 0
      %4763 = vmatprep.subr.bf16.mxu0 0
      %4764 = vmatpush2.bf16.msra.mxu0 0
      %4765 = vmatprep.mubr.bf16.mxu0 0
      %4766 = vmatmul.mubr.bf16.gmra.mxu0 %v4148
      %v4767 = vpop.f32.mrf.mxu0
      %v4768 = vadd.f32 0.0, %v4767
      %v4769 = vpop.f32.mrf.mxu0
      %v4770 = vpop.f32.mrf.mxu0
      %v4771 = vadd.f32 0.0, %v4770
      %v4772 = vpop.f32.mrf.mxu0
      %4773 = vmatprep.mubr.bf16.mxu0 0
      %4774 = vmatmul.mubr.bf16.gmra.mxu0 %v4151
      %v4775 = vpop.f32.mrf.mxu0
      %v4776 = vadd.f32 0.0, %v4775
      %v4777 = vpop.f32.mrf.mxu0
      %v4778 = vpop.f32.mrf.mxu0
      %v4779 = vadd.f32 0.0, %v4778
      %v4780 = vpop.f32.mrf.mxu0
      %4781 = vmatprep.mubr.bf16.mxu0 0
      %4782 = vmatmul.mubr.bf16.gmra.mxu0 %v4154
      %v4783 = vpop.f32.mrf.mxu0
      %v4784 = vadd.f32 0.0, %v4783
      %v4785 = vpop.f32.mrf.mxu0
      %v4786 = vpop.f32.mrf.mxu0
      %v4787 = vadd.f32 0.0, %v4786
      %v4788 = vpop.f32.mrf.mxu0
      %4789 = vmatprep.mubr.bf16.mxu0 0
      %4790 = vmatmul.mubr.bf16.gmra.mxu0 %v4157
      %v4791 = vpop.f32.mrf.mxu0
      %v4792 = vadd.f32 0.0, %v4791
      %v4793 = vpop.f32.mrf.mxu0
      %v4794 = vpop.f32.mrf.mxu0
      %v4795 = vadd.f32 0.0, %v4794
      %v4796 = vpop.f32.mrf.mxu0
      %4797 = vmatprep.mubr.bf16.mxu0 0
      %4798 = vmatmul.mubr.bf16.gmra.mxu0 %v4160
      %v4799 = vpop.f32.mrf.mxu0
      %v4800 = vadd.f32 0.0, %v4799
      %v4801 = vpop.f32.mrf.mxu0
      %v4802 = vpop.f32.mrf.mxu0
      %v4803 = vadd.f32 0.0, %v4802
      %v4804 = vpop.f32.mrf.mxu0
      %4805 = vmatprep.mubr.bf16.mxu0 0
      %4806 = vmatmul.mubr.bf16.gmra.mxu0 %v4163
      %v4807 = vpop.f32.mrf.mxu0
      %v4808 = vadd.f32 0.0, %v4807
      %v4809 = vpop.f32.mrf.mxu0
      %v4810 = vpop.f32.mrf.mxu0
      %v4811 = vadd.f32 0.0, %v4810
      %v4812 = vpop.f32.mrf.mxu0
      %4813 = vmatprep.mubr.bf16.mxu0 0
      %4814 = vmatmul.mubr.bf16.gmra.mxu0 %v4305
      %v4815 = vpop.f32.mrf.mxu0
      %v4816 = vadd.f32 0.0, %v4815
      %v4817 = vpop.f32.mrf.mxu0
      %v4818 = vpop.f32.mrf.mxu0
      %v4819 = vadd.f32 0.0, %v4818
      %v4820 = vpop.f32.mrf.mxu0
      %4821 = vmatprep.mubr.bf16.mxu0 0
      %4822 = vmatmul.mubr.bf16.gmra.mxu0 %v4447
      %v4823 = vpop.f32.mrf.mxu0
      %v4824 = vadd.f32 0.0, %v4823
      %v4825 = vpop.f32.mrf.mxu0
      %v4826 = vpop.f32.mrf.mxu0
      %v4827 = vadd.f32 0.0, %v4826
      %v4828 = vpop.f32.mrf.mxu0
      %4829 = vmatprep.mubr.bf16.mxu0 0
      %4830 = vmatmul.mubr.bf16.gmra.mxu0 %v4589
      %v4831 = vpop.f32.mrf.mxu0
      %v4832 = vadd.f32 0.0, %v4831
      %v4833 = vpop.f32.mrf.mxu0
      %v4834 = vpop.f32.mrf.mxu0
      %v4835 = vadd.f32 0.0, %v4834
      %v4836 = vpop.f32.mrf.mxu0
      %4837 = vmatprep.mubr.bf16.mxu0 0
      %4838 = vmatmul.mubr.bf16.gmra.mxu0 %v4731
      %v4839 = vpop.f32.mrf.mxu0
      %v4840 = vadd.f32 0.0, %v4839
      %v4841 = vpop.f32.mrf.mxu0
      %v4842 = vpop.f32.mrf.mxu0
      %v4843 = vadd.f32 0.0, %v4842
      %v4844 = vpop.f32.mrf.mxu0
      %4845 = vdwg.mxu0
      %v4846 = vadd.f32 %v4704, %v4768
      %v4847 = vadd.f32 %v4705, %v4771
      %v4848 = vadd.f32 %v4706, %v4776
      %v4849 = vadd.f32 %v4707, %v4779
      %v4850 = vadd.f32 %v4708, %v4784
      %v4851 = vadd.f32 %v4709, %v4787
      %v4852 = vadd.f32 %v4710, %v4792
      %v4853 = vadd.f32 %v4711, %v4795
      %v4854 = vadd.f32 %v4712, %v4800
      %v4855 = vadd.f32 %v4713, %v4803
      %v4856 = vadd.f32 %v4714, %v4808
      %v4857 = vadd.f32 %v4715, %v4811
      %v4858 = vadd.f32 %v4716, %v4816
      %v4859 = vadd.f32 %v4717, %v4819
      %v4860 = vadd.f32 %v4718, %v4824
      %v4861 = vadd.f32 %v4719, %v4827
      %v4862 = vadd.f32 %v4720, %v4832
      %v4863 = vadd.f32 %v4721, %v4835
      %v4864 = vadd.f32 %v4722, %v4840
      %v4865 = vadd.f32 %v4723, %v4843
      %s4866 = scalar_lea.vmem [#allocation2], 8
      %v4867 = vld [vmem:[%s4866] ss:$2 sm:$0xff]
      %s4868 = scalar_lea.vmem [#allocation2], 24
      %v4869 = vld [vmem:[%s4868] ss:$2 sm:$0xff]
      %s4870 = scalar_lea.vmem [#allocation2], 48
      %v4871 = vld [vmem:[%s4870] ss:$2 sm:$0xff]
      %s4872 = scalar_lea.vmem [#allocation2], 64
      %v4873 = vld [vmem:[%s4872] ss:$2 sm:$0xff]
      %s4874 = scalar_lea.vmem [#allocation2], 88
      %v4875 = vld [vmem:[%s4874] ss:$2 sm:$0xff]
      %s4876 = scalar_lea.vmem [#allocation2], 104
      %v4877 = vld [vmem:[%s4876] ss:$2 sm:$0xff]
      %s4878 = scalar_lea.vmem [#allocation2], 128
      %v4879 = vld [vmem:[%s4878] ss:$2 sm:$0xff]
      %s4880 = scalar_lea.vmem [#allocation2], 144
      %v4881 = vld [vmem:[%s4880] ss:$2 sm:$0xff]
      %s4882 = scalar_lea.vmem [#allocation2], 168
      %v4883 = vld [vmem:[%s4882] ss:$2 sm:$0xff]
      %s4884 = scalar_lea.vmem [#allocation2], 184
      %v4885 = vld [vmem:[%s4884] ss:$2 sm:$0xff]
      %s4886 = scalar_lea.vmem [#allocation2], 208
      %v4887 = vld [vmem:[%s4886] ss:$2 sm:$0xff]
      %s4888 = scalar_lea.vmem [#allocation2], 224
      %v4889 = vld [vmem:[%s4888] ss:$2 sm:$0xff]
      %s4890 = scalar_lea.vmem [#allocation2], 248
      %v4891 = vld [vmem:[%s4890] ss:$2 sm:$0xff]
      %s4892 = scalar_lea.vmem [#allocation2], 264
      %v4893 = vld [vmem:[%s4892] ss:$2 sm:$0xff]
      %s4894 = scalar_lea.vmem [#allocation2], 288
      %v4895 = vld [vmem:[%s4894] ss:$2 sm:$0xff]
      %s4896 = scalar_lea.vmem [#allocation2], 304
      %v4897 = vld [vmem:[%s4896] ss:$2 sm:$0xff]
      %s4898 = scalar_lea.vmem [#allocation2], 328
      %v4899 = vld [vmem:[%s4898] ss:$2 sm:$0xff]
      %s4900 = scalar_lea.vmem [#allocation2], 344
      %v4901 = vld [vmem:[%s4900] ss:$2 sm:$0xff]
      %s4902 = scalar_lea.vmem [#allocation2], 368
      %v4903 = vld [vmem:[%s4902] ss:$2 sm:$0xff]
      %s4904 = scalar_lea.vmem [#allocation2], 384
      %v4905 = vld [vmem:[%s4904] ss:$2 sm:$0xff]
      %s4906 = scalar_lea.vmem [#allocation2], 408
      %v4907 = vld [vmem:[%s4906] ss:$2 sm:$0xff]
      %s4908 = scalar_lea.vmem [#allocation2], 424
      %v4909 = vld [vmem:[%s4908] ss:$2 sm:$0xff]
      %s4910 = scalar_lea.vmem [#allocation2], 448
      %v4911 = vld [vmem:[%s4910] ss:$2 sm:$0xff]
      %s4912 = scalar_lea.vmem [#allocation2], 464
      %v4913 = vld [vmem:[%s4912] ss:$2 sm:$0xff]
      %s4914 = scalar_lea.vmem [#allocation2], 488
      %v4915 = vld [vmem:[%s4914] ss:$2 sm:$0xff]
      %s4916 = scalar_lea.vmem [#allocation2], 504
      %v4917 = vld [vmem:[%s4916] ss:$2 sm:$0xff]
      %s4918 = scalar_lea.vmem [#allocation2], 528
      %v4919 = vld [vmem:[%s4918] ss:$2 sm:$0xff]
      %s4920 = scalar_lea.vmem [#allocation2], 544
      %v4921 = vld [vmem:[%s4920] ss:$2 sm:$0xff]
      %s4922 = scalar_lea.vmem [#allocation2], 9
      %v4923 = vld [vmem:[%s4922] ss:$2 sm:$0xff]
      %s4924 = scalar_lea.vmem [#allocation2], 25
      %v4925 = vld [vmem:[%s4924] ss:$2 sm:$0xff]
      %s4926 = scalar_lea.vmem [#allocation2], 49
      %v4927 = vld [vmem:[%s4926] ss:$2 sm:$0xff]
      %s4928 = scalar_lea.vmem [#allocation2], 65
      %v4929 = vld [vmem:[%s4928] ss:$2 sm:$0xff]
      %s4930 = scalar_lea.vmem [#allocation2], 89
      %v4931 = vld [vmem:[%s4930] ss:$2 sm:$0xff]
      %s4932 = scalar_lea.vmem [#allocation2], 105
      %v4933 = vld [vmem:[%s4932] ss:$2 sm:$0xff]
      %s4934 = scalar_lea.vmem [#allocation2], 129
      %v4935 = vld [vmem:[%s4934] ss:$2 sm:$0xff]
      %s4936 = scalar_lea.vmem [#allocation2], 145
      %v4937 = vld [vmem:[%s4936] ss:$2 sm:$0xff]
      %s4938 = scalar_lea.vmem [#allocation2], 169
      %v4939 = vld [vmem:[%s4938] ss:$2 sm:$0xff]
      %s4940 = scalar_lea.vmem [#allocation2], 185
      %v4941 = vld [vmem:[%s4940] ss:$2 sm:$0xff]
      %s4942 = scalar_lea.vmem [#allocation2], 209
      %v4943 = vld [vmem:[%s4942] ss:$2 sm:$0xff]
      %s4944 = scalar_lea.vmem [#allocation2], 225
      %v4945 = vld [vmem:[%s4944] ss:$2 sm:$0xff]
      %s4946 = scalar_lea.vmem [#allocation2], 249
      %v4947 = vld [vmem:[%s4946] ss:$2 sm:$0xff]
      %s4948 = scalar_lea.vmem [#allocation2], 265
      %v4949 = vld [vmem:[%s4948] ss:$2 sm:$0xff]
      %s4950 = scalar_lea.vmem [#allocation2], 289
      %v4951 = vld [vmem:[%s4950] ss:$2 sm:$0xff]
      %s4952 = scalar_lea.vmem [#allocation2], 305
      %v4953 = vld [vmem:[%s4952] ss:$2 sm:$0xff]
      %s4954 = scalar_lea.vmem [#allocation2], 329
      %v4955 = vld [vmem:[%s4954] ss:$2 sm:$0xff]
      %s4956 = scalar_lea.vmem [#allocation2], 345
      %v4957 = vld [vmem:[%s4956] ss:$2 sm:$0xff]
      %s4958 = scalar_lea.vmem [#allocation2], 369
      %v4959 = vld [vmem:[%s4958] ss:$2 sm:$0xff]
      %s4960 = scalar_lea.vmem [#allocation2], 385
      %v4961 = vld [vmem:[%s4960] ss:$2 sm:$0xff]
      %s4962 = scalar_lea.vmem [#allocation2], 409
      %v4963 = vld [vmem:[%s4962] ss:$2 sm:$0xff]
      %s4964 = scalar_lea.vmem [#allocation2], 425
      %v4965 = vld [vmem:[%s4964] ss:$2 sm:$0xff]
      %s4966 = scalar_lea.vmem [#allocation2], 449
      %v4967 = vld [vmem:[%s4966] ss:$2 sm:$0xff]
      %s4968 = scalar_lea.vmem [#allocation2], 465
      %v4969 = vld [vmem:[%s4968] ss:$2 sm:$0xff]
      %s4970 = scalar_lea.vmem [#allocation2], 489
      %v4971 = vld [vmem:[%s4970] ss:$2 sm:$0xff]
      %s4972 = scalar_lea.vmem [#allocation2], 505
      %v4973 = vld [vmem:[%s4972] ss:$2 sm:$0xff]
      %s4974 = scalar_lea.vmem [#allocation2], 529
      %v4975 = vld [vmem:[%s4974] ss:$2 sm:$0xff]
      %s4976 = scalar_lea.vmem [#allocation2], 545
      %v4977 = vld [vmem:[%s4976] ss:$2 sm:$0xff]
      %v4978 = vmax.f32 %v4867, %v4923
      %v4979 = vmax.f32 %v4869, %v4925
      %v4980 = vmax.f32 %v4871, %v4927
      %v4981 = vmax.f32 %v4873, %v4929
      %v4982 = vmax.f32 %v4875, %v4931
      %v4983 = vmax.f32 %v4877, %v4933
      %v4984 = vmax.f32 %v4879, %v4935
      %v4985 = vmax.f32 %v4881, %v4937
      %v4986 = vmax.f32 %v4883, %v4939
      %v4987 = vmax.f32 %v4885, %v4941
      %v4988 = vmax.f32 %v4887, %v4943
      %v4989 = vmax.f32 %v4889, %v4945
      %v4990 = vmax.f32 %v4891, %v4947
      %v4991 = vmax.f32 %v4893, %v4949
      %v4992 = vmax.f32 %v4895, %v4951
      %v4993 = vmax.f32 %v4897, %v4953
      %v4994 = vmax.f32 %v4899, %v4955
      %v4995 = vmax.f32 %v4901, %v4957
      %v4996 = vmax.f32 %v4903, %v4959
      %v4997 = vmax.f32 %v4905, %v4961
      %v4998 = vmax.f32 %v4907, %v4963
      %v4999 = vmax.f32 %v4909, %v4965
      %v5000 = vmax.f32 %v4911, %v4967
      %v5001 = vmax.f32 %v4913, %v4969
      %v5002 = vmax.f32 %v4915, %v4971
      %v5003 = vmax.f32 %v4917, %v4973
      %v5004 = vmax.f32 %v4919, %v4975
      %v5005 = vmax.f32 %v4921, %v4977
      %v5006 = vpack.c.bf16 %v4979, %v4978
      %v5007 = vpack.c.bf16 %v4981, %v4980
      %v5008 = vpack.c.bf16 %v4983, %v4982
      %v5009 = vpack.c.bf16 %v4985, %v4984
      %v5010 = vpack.c.bf16 %v4987, %v4986
      %v5011 = vpack.c.bf16 %v4989, %v4988
      %v5012 = vpack.c.bf16 %v4991, %v4990
      %v5013 = vpack.c.bf16 %v4993, %v4992
      %v5014 = vpack.c.bf16 %v4995, %v4994
      %v5015 = vpack.c.bf16 %v4997, %v4996
      %v5016 = vpack.c.bf16 %v4999, %v4998
      %v5017 = vpack.c.bf16 %v5001, %v5000
      %v5018 = vpack.c.bf16 %v5003, %v5002
      %v5019 = vpack.c.bf16 %v5005, %v5004
      %v5022 = vunpack.c.l.b16 %v1299
      %v5023 = vunpack.c.l.b16 %v1300
      %v5024 = vpack.c.b16 %v5023, %v5022
      %v5027 = vsel %vm1501, %v5006, 0
      %v5030 = vsel %vm1501, %v5007, 0
      %v5033 = vsel %vm1501, %v5008, 0
      %v5036 = vsel %vm1501, %v5009, 0
      %v5039 = vsel %vm1501, %v5010, 0
      %v5042 = vsel %vm1501, %v5011, 0
      %v5045 = vsel %vm1501, %v5012, 0
      %v5048 = vsel %vm1501, %v5013, 0
      %v5051 = vsel %vm1501, %v5014, 0
      %v5054 = vsel %vm1501, %v5015, 0
      %5056 = vmatprep.subr.bf16.mxu0 0
      %5057 = vmatpush1.bf16.msra.mxu0 0
      %5058 = vmatprep.subr.bf16.mxu0 0
      %5059 = vmatpush1.bf16.msra.mxu0 0
      %5060 = vmatprep.subr.bf16.mxu0 0
      %5061 = vmatpush1.bf16.msra.mxu0 0
      %5062 = vmatprep.subr.bf16.mxu0 0
      %5063 = vmatpush1.bf16.msra.mxu0 0
      %5064 = vmatprep.subr.bf16.mxu0 0
      %5065 = vmatpush1.bf16.msra.mxu0 0
      %5066 = vmatprep.subr.bf16.mxu0 0
      %5067 = vmatpush1.bf16.msra.mxu0 0
      %5068 = vmatprep.subr.bf16.mxu0 0
      %5069 = vmatpush1.bf16.msra.mxu0 0
      %5070 = vmatprep.subr.bf16.mxu0 0
      %5071 = vmatpush1.bf16.msra.mxu0 %v5024
      %5072 = vmatprep.subr.bf16.mxu0 0
      %5073 = vmatpush2.bf16.msra.mxu0 0
      %5074 = vmatprep.subr.bf16.mxu0 0
      %5075 = vmatpush2.bf16.msra.mxu0 0
      %5076 = vmatprep.subr.bf16.mxu0 0
      %5077 = vmatpush2.bf16.msra.mxu0 0
      %5078 = vmatprep.subr.bf16.mxu0 0
      %5079 = vmatpush2.bf16.msra.mxu0 0
      %5080 = vmatprep.subr.bf16.mxu0 0
      %5081 = vmatpush2.bf16.msra.mxu0 0
      %5082 = vmatprep.subr.bf16.mxu0 0
      %5083 = vmatpush2.bf16.msra.mxu0 0
      %5084 = vmatprep.subr.bf16.mxu0 0
      %5085 = vmatpush2.bf16.msra.mxu0 0
      %5086 = vmatprep.subr.bf16.mxu0 0
      %5087 = vmatpush2.bf16.msra.mxu0 0
      %5088 = vmatprep.mubr.bf16.mxu0 0
      %5089 = vmatmul.mubr.bf16.gmra.mxu0 %v5027
      %v5090 = vpop.f32.mrf.mxu0
      %v5091 = vadd.f32 0.0, %v5090
      %v5092 = vpop.f32.mrf.mxu0
      %v5093 = vpop.f32.mrf.mxu0
      %v5094 = vadd.f32 0.0, %v5093
      %v5095 = vpop.f32.mrf.mxu0
      %5096 = vmatprep.mubr.bf16.mxu0 0
      %5097 = vmatmul.mubr.bf16.gmra.mxu0 %v5030
      %v5098 = vpop.f32.mrf.mxu0
      %v5099 = vadd.f32 0.0, %v5098
      %v5100 = vpop.f32.mrf.mxu0
      %v5101 = vpop.f32.mrf.mxu0
      %v5102 = vadd.f32 0.0, %v5101
      %v5103 = vpop.f32.mrf.mxu0
      %5104 = vmatprep.mubr.bf16.mxu0 0
      %5105 = vmatmul.mubr.bf16.gmra.mxu0 %v5033
      %v5106 = vpop.f32.mrf.mxu0
      %v5107 = vadd.f32 0.0, %v5106
      %v5108 = vpop.f32.mrf.mxu0
      %v5109 = vpop.f32.mrf.mxu0
      %v5110 = vadd.f32 0.0, %v5109
      %v5111 = vpop.f32.mrf.mxu0
      %5112 = vmatprep.mubr.bf16.mxu0 0
      %5113 = vmatmul.mubr.bf16.gmra.mxu0 %v5036
      %v5114 = vpop.f32.mrf.mxu0
      %v5115 = vadd.f32 0.0, %v5114
      %v5116 = vpop.f32.mrf.mxu0
      %v5117 = vpop.f32.mrf.mxu0
      %v5118 = vadd.f32 0.0, %v5117
      %v5119 = vpop.f32.mrf.mxu0
      %5120 = vmatprep.mubr.bf16.mxu0 0
      %5121 = vmatmul.mubr.bf16.gmra.mxu0 %v5039
      %v5122 = vpop.f32.mrf.mxu0
      %v5123 = vadd.f32 0.0, %v5122
      %v5124 = vpop.f32.mrf.mxu0
      %v5125 = vpop.f32.mrf.mxu0
      %v5126 = vadd.f32 0.0, %v5125
      %v5127 = vpop.f32.mrf.mxu0
      %5128 = vmatprep.mubr.bf16.mxu0 0
      %5129 = vmatmul.mubr.bf16.gmra.mxu0 %v5042
      %v5130 = vpop.f32.mrf.mxu0
      %v5131 = vadd.f32 0.0, %v5130
      %v5132 = vpop.f32.mrf.mxu0
      %v5133 = vpop.f32.mrf.mxu0
      %v5134 = vadd.f32 0.0, %v5133
      %v5135 = vpop.f32.mrf.mxu0
      %5136 = vmatprep.mubr.bf16.mxu0 0
      %5137 = vmatmul.mubr.bf16.gmra.mxu0 %v5045
      %v5138 = vpop.f32.mrf.mxu0
      %v5139 = vadd.f32 0.0, %v5138
      %v5140 = vpop.f32.mrf.mxu0
      %v5141 = vpop.f32.mrf.mxu0
      %v5142 = vadd.f32 0.0, %v5141
      %v5143 = vpop.f32.mrf.mxu0
      %5144 = vmatprep.mubr.bf16.mxu0 0
      %5145 = vmatmul.mubr.bf16.gmra.mxu0 %v5048
      %v5146 = vpop.f32.mrf.mxu0
      %v5147 = vadd.f32 0.0, %v5146
      %v5148 = vpop.f32.mrf.mxu0
      %v5149 = vpop.f32.mrf.mxu0
      %v5150 = vadd.f32 0.0, %v5149
      %v5151 = vpop.f32.mrf.mxu0
      %5152 = vmatprep.mubr.bf16.mxu0 0
      %5153 = vmatmul.mubr.bf16.gmra.mxu0 %v5051
      %v5154 = vpop.f32.mrf.mxu0
      %v5155 = vadd.f32 0.0, %v5154
      %v5156 = vpop.f32.mrf.mxu0
      %v5157 = vpop.f32.mrf.mxu0
      %v5158 = vadd.f32 0.0, %v5157
      %v5159 = vpop.f32.mrf.mxu0
      %5160 = vmatprep.mubr.bf16.mxu0 0
      %5161 = vmatmul.mubr.bf16.gmra.mxu0 %v5054
      %v5162 = vpop.f32.mrf.mxu0
      %v5163 = vadd.f32 0.0, %v5162
      %v5164 = vpop.f32.mrf.mxu0
      %v5165 = vpop.f32.mrf.mxu0
      %v5166 = vadd.f32 0.0, %v5165
      %v5167 = vpop.f32.mrf.mxu0
      %5168 = vdwg.mxu0
      %v5169 = vadd.f32 %v4846, %v5091
      %v5170 = vadd.f32 %v4847, %v5094
      %v5171 = vadd.f32 %v4848, %v5099
      %v5172 = vadd.f32 %v4849, %v5102
      %v5173 = vadd.f32 %v4850, %v5107
      %v5174 = vadd.f32 %v4851, %v5110
      %v5175 = vadd.f32 %v4852, %v5115
      %v5176 = vadd.f32 %v4853, %v5118
      %v5177 = vadd.f32 %v4854, %v5123
      %v5178 = vadd.f32 %v4855, %v5126
      %v5179 = vadd.f32 %v4856, %v5131
      %v5180 = vadd.f32 %v4857, %v5134
      %v5181 = vadd.f32 %v4858, %v5139
      %v5182 = vadd.f32 %v4859, %v5142
      %v5183 = vadd.f32 %v4860, %v5147
      %v5184 = vadd.f32 %v4861, %v5150
      %v5185 = vadd.f32 %v4862, %v5155
      %v5186 = vadd.f32 %v4863, %v5158
      %v5187 = vadd.f32 %v4864, %v5163
      %v5188 = vadd.f32 %v4865, %v5166
      %v5191 = vunpack.c.l.b16 %v1309
      %v5192 = vunpack.c.l.b16 %v1310
      %v5193 = vpack.c.b16 %v5192, %v5191
      %v5196 = vsel %vm1501, %v5016, 0
      %5198 = vmatprep.subr.bf16.mxu0 0
      %5199 = vmatpush1.bf16.msra.mxu0 0
      %5200 = vmatprep.subr.bf16.mxu0 0
      %5201 = vmatpush1.bf16.msra.mxu0 0
      %5202 = vmatprep.subr.bf16.mxu0 0
      %5203 = vmatpush1.bf16.msra.mxu0 0
      %5204 = vmatprep.subr.bf16.mxu0 0
      %5205 = vmatpush1.bf16.msra.mxu0 0
      %5206 = vmatprep.subr.bf16.mxu0 0
      %5207 = vmatpush1.bf16.msra.mxu0 0
      %5208 = vmatprep.subr.bf16.mxu0 0
      %5209 = vmatpush1.bf16.msra.mxu0 0
      %5210 = vmatprep.subr.bf16.mxu0 0
      %5211 = vmatpush1.bf16.msra.mxu0 0
      %5212 = vmatprep.subr.bf16.mxu0 0
      %5213 = vmatpush1.bf16.msra.mxu0 %v5193
      %5214 = vmatprep.subr.bf16.mxu0 0
      %5215 = vmatpush2.bf16.msra.mxu0 0
      %5216 = vmatprep.subr.bf16.mxu0 0
      %5217 = vmatpush2.bf16.msra.mxu0 0
      %5218 = vmatprep.subr.bf16.mxu0 0
      %5219 = vmatpush2.bf16.msra.mxu0 0
      %5220 = vmatprep.subr.bf16.mxu0 0
      %5221 = vmatpush2.bf16.msra.mxu0 0
      %5222 = vmatprep.subr.bf16.mxu0 0
      %5223 = vmatpush2.bf16.msra.mxu0 0
      %5224 = vmatprep.subr.bf16.mxu0 0
      %5225 = vmatpush2.bf16.msra.mxu0 0
      %5226 = vmatprep.subr.bf16.mxu0 0
      %5227 = vmatpush2.bf16.msra.mxu0 0
      %5228 = vmatprep.subr.bf16.mxu0 0
      %5229 = vmatpush2.bf16.msra.mxu0 0
      %5230 = vmatprep.mubr.bf16.mxu0 0
      %5231 = vmatmul.mubr.bf16.gmra.mxu0 %v5030
      %v5232 = vpop.f32.mrf.mxu0
      %v5233 = vadd.f32 0.0, %v5232
      %v5234 = vpop.f32.mrf.mxu0
      %v5235 = vpop.f32.mrf.mxu0
      %v5236 = vadd.f32 0.0, %v5235
      %v5237 = vpop.f32.mrf.mxu0
      %5238 = vmatprep.mubr.bf16.mxu0 0
      %5239 = vmatmul.mubr.bf16.gmra.mxu0 %v5033
      %v5240 = vpop.f32.mrf.mxu0
      %v5241 = vadd.f32 0.0, %v5240
      %v5242 = vpop.f32.mrf.mxu0
      %v5243 = vpop.f32.mrf.mxu0
      %v5244 = vadd.f32 0.0, %v5243
      %v5245 = vpop.f32.mrf.mxu0
      %5246 = vmatprep.mubr.bf16.mxu0 0
      %5247 = vmatmul.mubr.bf16.gmra.mxu0 %v5036
      %v5248 = vpop.f32.mrf.mxu0
      %v5249 = vadd.f32 0.0, %v5248
      %v5250 = vpop.f32.mrf.mxu0
      %v5251 = vpop.f32.mrf.mxu0
      %v5252 = vadd.f32 0.0, %v5251
      %v5253 = vpop.f32.mrf.mxu0
      %5254 = vmatprep.mubr.bf16.mxu0 0
      %5255 = vmatmul.mubr.bf16.gmra.mxu0 %v5039
      %v5256 = vpop.f32.mrf.mxu0
      %v5257 = vadd.f32 0.0, %v5256
      %v5258 = vpop.f32.mrf.mxu0
      %v5259 = vpop.f32.mrf.mxu0
      %v5260 = vadd.f32 0.0, %v5259
      %v5261 = vpop.f32.mrf.mxu0
      %5262 = vmatprep.mubr.bf16.mxu0 0
      %5263 = vmatmul.mubr.bf16.gmra.mxu0 %v5042
      %v5264 = vpop.f32.mrf.mxu0
      %v5265 = vadd.f32 0.0, %v5264
      %v5266 = vpop.f32.mrf.mxu0
      %v5267 = vpop.f32.mrf.mxu0
      %v5268 = vadd.f32 0.0, %v5267
      %v5269 = vpop.f32.mrf.mxu0
      %5270 = vmatprep.mubr.bf16.mxu0 0
      %5271 = vmatmul.mubr.bf16.gmra.mxu0 %v5045
      %v5272 = vpop.f32.mrf.mxu0
      %v5273 = vadd.f32 0.0, %v5272
      %v5274 = vpop.f32.mrf.mxu0
      %v5275 = vpop.f32.mrf.mxu0
      %v5276 = vadd.f32 0.0, %v5275
      %v5277 = vpop.f32.mrf.mxu0
      %5278 = vmatprep.mubr.bf16.mxu0 0
      %5279 = vmatmul.mubr.bf16.gmra.mxu0 %v5048
      %v5280 = vpop.f32.mrf.mxu0
      %v5281 = vadd.f32 0.0, %v5280
      %v5282 = vpop.f32.mrf.mxu0
      %v5283 = vpop.f32.mrf.mxu0
      %v5284 = vadd.f32 0.0, %v5283
      %v5285 = vpop.f32.mrf.mxu0
      %5286 = vmatprep.mubr.bf16.mxu0 0
      %5287 = vmatmul.mubr.bf16.gmra.mxu0 %v5051
      %v5288 = vpop.f32.mrf.mxu0
      %v5289 = vadd.f32 0.0, %v5288
      %v5290 = vpop.f32.mrf.mxu0
      %v5291 = vpop.f32.mrf.mxu0
      %v5292 = vadd.f32 0.0, %v5291
      %v5293 = vpop.f32.mrf.mxu0
      %5294 = vmatprep.mubr.bf16.mxu0 0
      %5295 = vmatmul.mubr.bf16.gmra.mxu0 %v5054
      %v5296 = vpop.f32.mrf.mxu0
      %v5297 = vadd.f32 0.0, %v5296
      %v5298 = vpop.f32.mrf.mxu0
      %v5299 = vpop.f32.mrf.mxu0
      %v5300 = vadd.f32 0.0, %v5299
      %v5301 = vpop.f32.mrf.mxu0
      %5302 = vmatprep.mubr.bf16.mxu0 0
      %5303 = vmatmul.mubr.bf16.gmra.mxu0 %v5196
      %v5304 = vpop.f32.mrf.mxu0
      %v5305 = vadd.f32 0.0, %v5304
      %v5306 = vpop.f32.mrf.mxu0
      %v5307 = vpop.f32.mrf.mxu0
      %v5308 = vadd.f32 0.0, %v5307
      %v5309 = vpop.f32.mrf.mxu0
      %5310 = vdwg.mxu0
      %v5311 = vadd.f32 %v5169, %v5233
      %v5312 = vadd.f32 %v5170, %v5236
      %v5313 = vadd.f32 %v5171, %v5241
      %v5314 = vadd.f32 %v5172, %v5244
      %v5315 = vadd.f32 %v5173, %v5249
      %v5316 = vadd.f32 %v5174, %v5252
      %v5317 = vadd.f32 %v5175, %v5257
      %v5318 = vadd.f32 %v5176, %v5260
      %v5319 = vadd.f32 %v5177, %v5265
      %v5320 = vadd.f32 %v5178, %v5268
      %v5321 = vadd.f32 %v5179, %v5273
      %v5322 = vadd.f32 %v5180, %v5276
      %v5323 = vadd.f32 %v5181, %v5281
      %v5324 = vadd.f32 %v5182, %v5284
      %v5325 = vadd.f32 %v5183, %v5289
      %v5326 = vadd.f32 %v5184, %v5292
      %v5327 = vadd.f32 %v5185, %v5297
      %v5328 = vadd.f32 %v5186, %v5300
      %v5329 = vadd.f32 %v5187, %v5305
      %v5330 = vadd.f32 %v5188, %v5308
      %v5333 = vunpack.c.l.b16 %v1319
      %v5334 = vunpack.c.l.b16 %v1320
      %v5335 = vpack.c.b16 %v5334, %v5333
      %v5338 = vsel %vm1501, %v5017, 0
      %5340 = vmatprep.subr.bf16.mxu0 0
      %5341 = vmatpush1.bf16.msra.mxu0 0
      %5342 = vmatprep.subr.bf16.mxu0 0
      %5343 = vmatpush1.bf16.msra.mxu0 0
      %5344 = vmatprep.subr.bf16.mxu0 0
      %5345 = vmatpush1.bf16.msra.mxu0 0
      %5346 = vmatprep.subr.bf16.mxu0 0
      %5347 = vmatpush1.bf16.msra.mxu0 0
      %5348 = vmatprep.subr.bf16.mxu0 0
      %5349 = vmatpush1.bf16.msra.mxu0 0
      %5350 = vmatprep.subr.bf16.mxu0 0
      %5351 = vmatpush1.bf16.msra.mxu0 0
      %5352 = vmatprep.subr.bf16.mxu0 0
      %5353 = vmatpush1.bf16.msra.mxu0 0
      %5354 = vmatprep.subr.bf16.mxu0 0
      %5355 = vmatpush1.bf16.msra.mxu0 %v5335
      %5356 = vmatprep.subr.bf16.mxu0 0
      %5357 = vmatpush2.bf16.msra.mxu0 0
      %5358 = vmatprep.subr.bf16.mxu0 0
      %5359 = vmatpush2.bf16.msra.mxu0 0
      %5360 = vmatprep.subr.bf16.mxu0 0
      %5361 = vmatpush2.bf16.msra.mxu0 0
      %5362 = vmatprep.subr.bf16.mxu0 0
      %5363 = vmatpush2.bf16.msra.mxu0 0
      %5364 = vmatprep.subr.bf16.mxu0 0
      %5365 = vmatpush2.bf16.msra.mxu0 0
      %5366 = vmatprep.subr.bf16.mxu0 0
      %5367 = vmatpush2.bf16.msra.mxu0 0
      %5368 = vmatprep.subr.bf16.mxu0 0
      %5369 = vmatpush2.bf16.msra.mxu0 0
      %5370 = vmatprep.subr.bf16.mxu0 0
      %5371 = vmatpush2.bf16.msra.mxu0 0
      %5372 = vmatprep.mubr.bf16.mxu0 0
      %5373 = vmatmul.mubr.bf16.gmra.mxu0 %v5033
      %v5374 = vpop.f32.mrf.mxu0
      %v5375 = vadd.f32 0.0, %v5374
      %v5376 = vpop.f32.mrf.mxu0
      %v5377 = vpop.f32.mrf.mxu0
      %v5378 = vadd.f32 0.0, %v5377
      %v5379 = vpop.f32.mrf.mxu0
      %5380 = vmatprep.mubr.bf16.mxu0 0
      %5381 = vmatmul.mubr.bf16.gmra.mxu0 %v5036
      %v5382 = vpop.f32.mrf.mxu0
      %v5383 = vadd.f32 0.0, %v5382
      %v5384 = vpop.f32.mrf.mxu0
      %v5385 = vpop.f32.mrf.mxu0
      %v5386 = vadd.f32 0.0, %v5385
      %v5387 = vpop.f32.mrf.mxu0
      %5388 = vmatprep.mubr.bf16.mxu0 0
      %5389 = vmatmul.mubr.bf16.gmra.mxu0 %v5039
      %v5390 = vpop.f32.mrf.mxu0
      %v5391 = vadd.f32 0.0, %v5390
      %v5392 = vpop.f32.mrf.mxu0
      %v5393 = vpop.f32.mrf.mxu0
      %v5394 = vadd.f32 0.0, %v5393
      %v5395 = vpop.f32.mrf.mxu0
      %5396 = vmatprep.mubr.bf16.mxu0 0
      %5397 = vmatmul.mubr.bf16.gmra.mxu0 %v5042
      %v5398 = vpop.f32.mrf.mxu0
      %v5399 = vadd.f32 0.0, %v5398
      %v5400 = vpop.f32.mrf.mxu0
      %v5401 = vpop.f32.mrf.mxu0
      %v5402 = vadd.f32 0.0, %v5401
      %v5403 = vpop.f32.mrf.mxu0
      %5404 = vmatprep.mubr.bf16.mxu0 0
      %5405 = vmatmul.mubr.bf16.gmra.mxu0 %v5045
      %v5406 = vpop.f32.mrf.mxu0
      %v5407 = vadd.f32 0.0, %v5406
      %v5408 = vpop.f32.mrf.mxu0
      %v5409 = vpop.f32.mrf.mxu0
      %v5410 = vadd.f32 0.0, %v5409
      %v5411 = vpop.f32.mrf.mxu0
      %5412 = vmatprep.mubr.bf16.mxu0 0
      %5413 = vmatmul.mubr.bf16.gmra.mxu0 %v5048
      %v5414 = vpop.f32.mrf.mxu0
      %v5415 = vadd.f32 0.0, %v5414
      %v5416 = vpop.f32.mrf.mxu0
      %v5417 = vpop.f32.mrf.mxu0
      %v5418 = vadd.f32 0.0, %v5417
      %v5419 = vpop.f32.mrf.mxu0
      %5420 = vmatprep.mubr.bf16.mxu0 0
      %5421 = vmatmul.mubr.bf16.gmra.mxu0 %v5051
      %v5422 = vpop.f32.mrf.mxu0
      %v5423 = vadd.f32 0.0, %v5422
      %v5424 = vpop.f32.mrf.mxu0
      %v5425 = vpop.f32.mrf.mxu0
      %v5426 = vadd.f32 0.0, %v5425
      %v5427 = vpop.f32.mrf.mxu0
      %5428 = vmatprep.mubr.bf16.mxu0 0
      %5429 = vmatmul.mubr.bf16.gmra.mxu0 %v5054
      %v5430 = vpop.f32.mrf.mxu0
      %v5431 = vadd.f32 0.0, %v5430
      %v5432 = vpop.f32.mrf.mxu0
      %v5433 = vpop.f32.mrf.mxu0
      %v5434 = vadd.f32 0.0, %v5433
      %v5435 = vpop.f32.mrf.mxu0
      %5436 = vmatprep.mubr.bf16.mxu0 0
      %5437 = vmatmul.mubr.bf16.gmra.mxu0 %v5196
      %v5438 = vpop.f32.mrf.mxu0
      %v5439 = vadd.f32 0.0, %v5438
      %v5440 = vpop.f32.mrf.mxu0
      %v5441 = vpop.f32.mrf.mxu0
      %v5442 = vadd.f32 0.0, %v5441
      %v5443 = vpop.f32.mrf.mxu0
      %5444 = vmatprep.mubr.bf16.mxu0 0
      %5445 = vmatmul.mubr.bf16.gmra.mxu0 %v5338
      %v5446 = vpop.f32.mrf.mxu0
      %v5447 = vadd.f32 0.0, %v5446
      %v5448 = vpop.f32.mrf.mxu0
      %v5449 = vpop.f32.mrf.mxu0
      %v5450 = vadd.f32 0.0, %v5449
      %v5451 = vpop.f32.mrf.mxu0
      %5452 = vdwg.mxu0
      %v5453 = vadd.f32 %v5311, %v5375
      %v5454 = vadd.f32 %v5312, %v5378
      %v5455 = vadd.f32 %v5313, %v5383
      %v5456 = vadd.f32 %v5314, %v5386
      %v5457 = vadd.f32 %v5315, %v5391
      %v5458 = vadd.f32 %v5316, %v5394
      %v5459 = vadd.f32 %v5317, %v5399
      %v5460 = vadd.f32 %v5318, %v5402
      %v5461 = vadd.f32 %v5319, %v5407
      %v5462 = vadd.f32 %v5320, %v5410
      %v5463 = vadd.f32 %v5321, %v5415
      %v5464 = vadd.f32 %v5322, %v5418
      %v5465 = vadd.f32 %v5323, %v5423
      %v5466 = vadd.f32 %v5324, %v5426
      %v5467 = vadd.f32 %v5325, %v5431
      %v5468 = vadd.f32 %v5326, %v5434
      %v5469 = vadd.f32 %v5327, %v5439
      %v5470 = vadd.f32 %v5328, %v5442
      %v5471 = vadd.f32 %v5329, %v5447
      %v5472 = vadd.f32 %v5330, %v5450
      %v5475 = vunpack.c.l.b16 %v1329
      %v5476 = vunpack.c.l.b16 %v1330
      %v5477 = vpack.c.b16 %v5476, %v5475
      %v5480 = vsel %vm1501, %v5018, 0
      %5482 = vmatprep.subr.bf16.mxu0 0
      %5483 = vmatpush1.bf16.msra.mxu0 0
      %5484 = vmatprep.subr.bf16.mxu0 0
      %5485 = vmatpush1.bf16.msra.mxu0 0
      %5486 = vmatprep.subr.bf16.mxu0 0
      %5487 = vmatpush1.bf16.msra.mxu0 0
      %5488 = vmatprep.subr.bf16.mxu0 0
      %5489 = vmatpush1.bf16.msra.mxu0 0
      %5490 = vmatprep.subr.bf16.mxu0 0
      %5491 = vmatpush1.bf16.msra.mxu0 0
      %5492 = vmatprep.subr.bf16.mxu0 0
      %5493 = vmatpush1.bf16.msra.mxu0 0
      %5494 = vmatprep.subr.bf16.mxu0 0
      %5495 = vmatpush1.bf16.msra.mxu0 0
      %5496 = vmatprep.subr.bf16.mxu0 0
      %5497 = vmatpush1.bf16.msra.mxu0 %v5477
      %5498 = vmatprep.subr.bf16.mxu0 0
      %5499 = vmatpush2.bf16.msra.mxu0 0
      %5500 = vmatprep.subr.bf16.mxu0 0
      %5501 = vmatpush2.bf16.msra.mxu0 0
      %5502 = vmatprep.subr.bf16.mxu0 0
      %5503 = vmatpush2.bf16.msra.mxu0 0
      %5504 = vmatprep.subr.bf16.mxu0 0
      %5505 = vmatpush2.bf16.msra.mxu0 0
      %5506 = vmatprep.subr.bf16.mxu0 0
      %5507 = vmatpush2.bf16.msra.mxu0 0
      %5508 = vmatprep.subr.bf16.mxu0 0
      %5509 = vmatpush2.bf16.msra.mxu0 0
      %5510 = vmatprep.subr.bf16.mxu0 0
      %5511 = vmatpush2.bf16.msra.mxu0 0
      %5512 = vmatprep.subr.bf16.mxu0 0
      %5513 = vmatpush2.bf16.msra.mxu0 0
      %5514 = vmatprep.mubr.bf16.mxu0 0
      %5515 = vmatmul.mubr.bf16.gmra.mxu0 %v5036
      %v5516 = vpop.f32.mrf.mxu0
      %v5517 = vadd.f32 0.0, %v5516
      %v5518 = vpop.f32.mrf.mxu0
      %v5519 = vpop.f32.mrf.mxu0
      %v5520 = vadd.f32 0.0, %v5519
      %v5521 = vpop.f32.mrf.mxu0
      %5522 = vmatprep.mubr.bf16.mxu0 0
      %5523 = vmatmul.mubr.bf16.gmra.mxu0 %v5039
      %v5524 = vpop.f32.mrf.mxu0
      %v5525 = vadd.f32 0.0, %v5524
      %v5526 = vpop.f32.mrf.mxu0
      %v5527 = vpop.f32.mrf.mxu0
      %v5528 = vadd.f32 0.0, %v5527
      %v5529 = vpop.f32.mrf.mxu0
      %5530 = vmatprep.mubr.bf16.mxu0 0
      %5531 = vmatmul.mubr.bf16.gmra.mxu0 %v5042
      %v5532 = vpop.f32.mrf.mxu0
      %v5533 = vadd.f32 0.0, %v5532
      %v5534 = vpop.f32.mrf.mxu0
      %v5535 = vpop.f32.mrf.mxu0
      %v5536 = vadd.f32 0.0, %v5535
      %v5537 = vpop.f32.mrf.mxu0
      %5538 = vmatprep.mubr.bf16.mxu0 0
      %5539 = vmatmul.mubr.bf16.gmra.mxu0 %v5045
      %v5540 = vpop.f32.mrf.mxu0
      %v5541 = vadd.f32 0.0, %v5540
      %v5542 = vpop.f32.mrf.mxu0
      %v5543 = vpop.f32.mrf.mxu0
      %v5544 = vadd.f32 0.0, %v5543
      %v5545 = vpop.f32.mrf.mxu0
      %5546 = vmatprep.mubr.bf16.mxu0 0
      %5547 = vmatmul.mubr.bf16.gmra.mxu0 %v5048
      %v5548 = vpop.f32.mrf.mxu0
      %v5549 = vadd.f32 0.0, %v5548
      %v5550 = vpop.f32.mrf.mxu0
      %v5551 = vpop.f32.mrf.mxu0
      %v5552 = vadd.f32 0.0, %v5551
      %v5553 = vpop.f32.mrf.mxu0
      %5554 = vmatprep.mubr.bf16.mxu0 0
      %5555 = vmatmul.mubr.bf16.gmra.mxu0 %v5051
      %v5556 = vpop.f32.mrf.mxu0
      %v5557 = vadd.f32 0.0, %v5556
      %v5558 = vpop.f32.mrf.mxu0
      %v5559 = vpop.f32.mrf.mxu0
      %v5560 = vadd.f32 0.0, %v5559
      %v5561 = vpop.f32.mrf.mxu0
      %5562 = vmatprep.mubr.bf16.mxu0 0
      %5563 = vmatmul.mubr.bf16.gmra.mxu0 %v5054
      %v5564 = vpop.f32.mrf.mxu0
      %v5565 = vadd.f32 0.0, %v5564
      %v5566 = vpop.f32.mrf.mxu0
      %v5567 = vpop.f32.mrf.mxu0
      %v5568 = vadd.f32 0.0, %v5567
      %v5569 = vpop.f32.mrf.mxu0
      %5570 = vmatprep.mubr.bf16.mxu0 0
      %5571 = vmatmul.mubr.bf16.gmra.mxu0 %v5196
      %v5572 = vpop.f32.mrf.mxu0
      %v5573 = vadd.f32 0.0, %v5572
      %v5574 = vpop.f32.mrf.mxu0
      %v5575 = vpop.f32.mrf.mxu0
      %v5576 = vadd.f32 0.0, %v5575
      %v5577 = vpop.f32.mrf.mxu0
      %5578 = vmatprep.mubr.bf16.mxu0 0
      %5579 = vmatmul.mubr.bf16.gmra.mxu0 %v5338
      %v5580 = vpop.f32.mrf.mxu0
      %v5581 = vadd.f32 0.0, %v5580
      %v5582 = vpop.f32.mrf.mxu0
      %v5583 = vpop.f32.mrf.mxu0
      %v5584 = vadd.f32 0.0, %v5583
      %v5585 = vpop.f32.mrf.mxu0
      %5586 = vmatprep.mubr.bf16.mxu0 0
      %5587 = vmatmul.mubr.bf16.gmra.mxu0 %v5480
      %v5588 = vpop.f32.mrf.mxu0
      %v5589 = vadd.f32 0.0, %v5588
      %v5590 = vpop.f32.mrf.mxu0
      %v5591 = vpop.f32.mrf.mxu0
      %v5592 = vadd.f32 0.0, %v5591
      %v5593 = vpop.f32.mrf.mxu0
      %5594 = vdwg.mxu0
      %v5595 = vadd.f32 %v5453, %v5517
      %v5596 = vadd.f32 %v5454, %v5520
      %v5597 = vadd.f32 %v5455, %v5525
      %v5598 = vadd.f32 %v5456, %v5528
      %v5599 = vadd.f32 %v5457, %v5533
      %v5600 = vadd.f32 %v5458, %v5536
      %v5601 = vadd.f32 %v5459, %v5541
      %v5602 = vadd.f32 %v5460, %v5544
      %v5603 = vadd.f32 %v5461, %v5549
      %v5604 = vadd.f32 %v5462, %v5552
      %v5605 = vadd.f32 %v5463, %v5557
      %v5606 = vadd.f32 %v5464, %v5560
      %v5607 = vadd.f32 %v5465, %v5565
      %v5608 = vadd.f32 %v5466, %v5568
      %v5609 = vadd.f32 %v5467, %v5573
      %v5610 = vadd.f32 %v5468, %v5576
      %v5611 = vadd.f32 %v5469, %v5581
      %v5612 = vadd.f32 %v5470, %v5584
      %v5613 = vadd.f32 %v5471, %v5589
      %v5614 = vadd.f32 %v5472, %v5592
      %v5617 = vunpack.c.l.b16 %v1339
      %v5618 = vunpack.c.l.b16 %v1340
      %v5619 = vpack.c.b16 %v5618, %v5617
      %v5622 = vsel %vm1501, %v5019, 0
      %5624 = vmatprep.subr.bf16.mxu0 0
      %5625 = vmatpush1.bf16.msra.mxu0 0
      %5626 = vmatprep.subr.bf16.mxu0 0
      %5627 = vmatpush1.bf16.msra.mxu0 0
      %5628 = vmatprep.subr.bf16.mxu0 0
      %5629 = vmatpush1.bf16.msra.mxu0 0
      %5630 = vmatprep.subr.bf16.mxu0 0
      %5631 = vmatpush1.bf16.msra.mxu0 0
      %5632 = vmatprep.subr.bf16.mxu0 0
      %5633 = vmatpush1.bf16.msra.mxu0 0
      %5634 = vmatprep.subr.bf16.mxu0 0
      %5635 = vmatpush1.bf16.msra.mxu0 0
      %5636 = vmatprep.subr.bf16.mxu0 0
      %5637 = vmatpush1.bf16.msra.mxu0 0
      %5638 = vmatprep.subr.bf16.mxu0 0
      %5639 = vmatpush1.bf16.msra.mxu0 %v5619
      %5640 = vmatprep.subr.bf16.mxu0 0
      %5641 = vmatpush2.bf16.msra.mxu0 0
      %5642 = vmatprep.subr.bf16.mxu0 0
      %5643 = vmatpush2.bf16.msra.mxu0 0
      %5644 = vmatprep.subr.bf16.mxu0 0
      %5645 = vmatpush2.bf16.msra.mxu0 0
      %5646 = vmatprep.subr.bf16.mxu0 0
      %5647 = vmatpush2.bf16.msra.mxu0 0
      %5648 = vmatprep.subr.bf16.mxu0 0
      %5649 = vmatpush2.bf16.msra.mxu0 0
      %5650 = vmatprep.subr.bf16.mxu0 0
      %5651 = vmatpush2.bf16.msra.mxu0 0
      %5652 = vmatprep.subr.bf16.mxu0 0
      %5653 = vmatpush2.bf16.msra.mxu0 0
      %5654 = vmatprep.subr.bf16.mxu0 0
      %5655 = vmatpush2.bf16.msra.mxu0 0
      %5656 = vmatprep.mubr.bf16.mxu0 0
      %5657 = vmatmul.mubr.bf16.gmra.mxu0 %v5039
      %v5658 = vpop.f32.mrf.mxu0
      %v5659 = vadd.f32 0.0, %v5658
      %v5660 = vpop.f32.mrf.mxu0
      %v5661 = vpop.f32.mrf.mxu0
      %v5662 = vadd.f32 0.0, %v5661
      %v5663 = vpop.f32.mrf.mxu0
      %5664 = vmatprep.mubr.bf16.mxu0 0
      %5665 = vmatmul.mubr.bf16.gmra.mxu0 %v5042
      %v5666 = vpop.f32.mrf.mxu0
      %v5667 = vadd.f32 0.0, %v5666
      %v5668 = vpop.f32.mrf.mxu0
      %v5669 = vpop.f32.mrf.mxu0
      %v5670 = vadd.f32 0.0, %v5669
      %v5671 = vpop.f32.mrf.mxu0
      %5672 = vmatprep.mubr.bf16.mxu0 0
      %5673 = vmatmul.mubr.bf16.gmra.mxu0 %v5045
      %v5674 = vpop.f32.mrf.mxu0
      %v5675 = vadd.f32 0.0, %v5674
      %v5676 = vpop.f32.mrf.mxu0
      %v5677 = vpop.f32.mrf.mxu0
      %v5678 = vadd.f32 0.0, %v5677
      %v5679 = vpop.f32.mrf.mxu0
      %5680 = vmatprep.mubr.bf16.mxu0 0
      %5681 = vmatmul.mubr.bf16.gmra.mxu0 %v5048
      %v5682 = vpop.f32.mrf.mxu0
      %v5683 = vadd.f32 0.0, %v5682
      %v5684 = vpop.f32.mrf.mxu0
      %v5685 = vpop.f32.mrf.mxu0
      %v5686 = vadd.f32 0.0, %v5685
      %v5687 = vpop.f32.mrf.mxu0
      %5688 = vmatprep.mubr.bf16.mxu0 0
      %5689 = vmatmul.mubr.bf16.gmra.mxu0 %v5051
      %v5690 = vpop.f32.mrf.mxu0
      %v5691 = vadd.f32 0.0, %v5690
      %v5692 = vpop.f32.mrf.mxu0
      %v5693 = vpop.f32.mrf.mxu0
      %v5694 = vadd.f32 0.0, %v5693
      %v5695 = vpop.f32.mrf.mxu0
      %5696 = vmatprep.mubr.bf16.mxu0 0
      %5697 = vmatmul.mubr.bf16.gmra.mxu0 %v5054
      %v5698 = vpop.f32.mrf.mxu0
      %v5699 = vadd.f32 0.0, %v5698
      %v5700 = vpop.f32.mrf.mxu0
      %v5701 = vpop.f32.mrf.mxu0
      %v5702 = vadd.f32 0.0, %v5701
      %v5703 = vpop.f32.mrf.mxu0
      %5704 = vmatprep.mubr.bf16.mxu0 0
      %5705 = vmatmul.mubr.bf16.gmra.mxu0 %v5196
      %v5706 = vpop.f32.mrf.mxu0
      %v5707 = vadd.f32 0.0, %v5706
      %v5708 = vpop.f32.mrf.mxu0
      %v5709 = vpop.f32.mrf.mxu0
      %v5710 = vadd.f32 0.0, %v5709
      %v5711 = vpop.f32.mrf.mxu0
      %5712 = vmatprep.mubr.bf16.mxu0 0
      %5713 = vmatmul.mubr.bf16.gmra.mxu0 %v5338
      %v5714 = vpop.f32.mrf.mxu0
      %v5715 = vadd.f32 0.0, %v5714
      %v5716 = vpop.f32.mrf.mxu0
      %v5717 = vpop.f32.mrf.mxu0
      %v5718 = vadd.f32 0.0, %v5717
      %v5719 = vpop.f32.mrf.mxu0
      %5720 = vmatprep.mubr.bf16.mxu0 0
      %5721 = vmatmul.mubr.bf16.gmra.mxu0 %v5480
      %v5722 = vpop.f32.mrf.mxu0
      %v5723 = vadd.f32 0.0, %v5722
      %v5724 = vpop.f32.mrf.mxu0
      %v5725 = vpop.f32.mrf.mxu0
      %v5726 = vadd.f32 0.0, %v5725
      %v5727 = vpop.f32.mrf.mxu0
      %5728 = vmatprep.mubr.bf16.mxu0 0
      %5729 = vmatmul.mubr.bf16.gmra.mxu0 %v5622
      %v5730 = vpop.f32.mrf.mxu0
      %v5731 = vadd.f32 0.0, %v5730
      %v5732 = vpop.f32.mrf.mxu0
      %v5733 = vpop.f32.mrf.mxu0
      %v5734 = vadd.f32 0.0, %v5733
      %v5735 = vpop.f32.mrf.mxu0
      %5736 = vdwg.mxu0
      %v5737 = vadd.f32 %v5595, %v5659
      %v5738 = vadd.f32 %v5596, %v5662
      %v5739 = vadd.f32 %v5597, %v5667
      %v5740 = vadd.f32 %v5598, %v5670
      %v5741 = vadd.f32 %v5599, %v5675
      %v5742 = vadd.f32 %v5600, %v5678
      %v5743 = vadd.f32 %v5601, %v5683
      %v5744 = vadd.f32 %v5602, %v5686
      %v5745 = vadd.f32 %v5603, %v5691
      %v5746 = vadd.f32 %v5604, %v5694
      %v5747 = vadd.f32 %v5605, %v5699
      %v5748 = vadd.f32 %v5606, %v5702
      %v5749 = vadd.f32 %v5607, %v5707
      %v5750 = vadd.f32 %v5608, %v5710
      %v5751 = vadd.f32 %v5609, %v5715
      %v5752 = vadd.f32 %v5610, %v5718
      %v5753 = vadd.f32 %v5611, %v5723
      %v5754 = vadd.f32 %v5612, %v5726
      %v5755 = vadd.f32 %v5613, %v5731
      %v5756 = vadd.f32 %v5614, %v5734
      %v5758 = vlaneseq
      %v5759 = vshrl.u32 %v5758, 7
      %v5760 = vsub.s32 0, %v5759
      %v5761 = vrot.slane %v1341, %v5760
      %v5763 = vadd.f32 %v5737, %v5761
      %v5764 = vadd.f32 %v5738, %v5761
      %v5765 = vadd.f32 %v5739, %v5761
      %v5766 = vadd.f32 %v5740, %v5761
      %v5767 = vadd.f32 %v5741, %v5761
      %v5768 = vadd.f32 %v5742, %v5761
      %v5769 = vadd.f32 %v5743, %v5761
      %v5770 = vadd.f32 %v5744, %v5761
      %v5771 = vadd.f32 %v5745, %v5761
      %v5772 = vadd.f32 %v5746, %v5761
      %v5773 = vadd.f32 %v5747, %v5761
      %v5774 = vadd.f32 %v5748, %v5761
      %v5775 = vadd.f32 %v5749, %v5761
      %v5776 = vadd.f32 %v5750, %v5761
      %v5777 = vadd.f32 %v5751, %v5761
      %v5778 = vadd.f32 %v5752, %v5761
      %v5779 = vadd.f32 %v5753, %v5761
      %v5780 = vadd.f32 %v5754, %v5761
      %v5781 = vadd.f32 %v5755, %v5761
      %v5782 = vadd.f32 %v5756, %v5761
      %v5783 = vmax.f32 %v5763, 0.0
      %v5784 = vmax.f32 %v5764, 0.0
      %v5785 = vmax.f32 %v5765, 0.0
      %v5786 = vmax.f32 %v5766, 0.0
      %v5787 = vmax.f32 %v5767, 0.0
      %v5788 = vmax.f32 %v5768, 0.0
      %v5789 = vmax.f32 %v5769, 0.0
      %v5790 = vmax.f32 %v5770, 0.0
      %v5791 = vmax.f32 %v5771, 0.0
      %v5792 = vmax.f32 %v5772, 0.0
      %v5793 = vmax.f32 %v5773, 0.0
      %v5794 = vmax.f32 %v5774, 0.0
      %v5795 = vmax.f32 %v5775, 0.0
      %v5796 = vmax.f32 %v5776, 0.0
      %v5797 = vmax.f32 %v5777, 0.0
      %v5798 = vmax.f32 %v5778, 0.0
      %v5799 = vmax.f32 %v5779, 0.0
      %v5800 = vmax.f32 %v5780, 0.0
      %v5801 = vmax.f32 %v5781, 0.0
      %v5802 = vmax.f32 %v5782, 0.0
      %v5803 = vmax.f32 %v5783, %v5785
      %v5804 = vmax.f32 %v5784, %v5786
      %v5805 = vmax.f32 %v5787, %v5789
      %v5806 = vmax.f32 %v5788, %v5790
      %v5807 = vmax.f32 %v5791, %v5793
      %v5808 = vmax.f32 %v5792, %v5794
      %v5809 = vmax.f32 %v5795, %v5797
      %v5810 = vmax.f32 %v5796, %v5798
      %v5811 = vmax.f32 %v5799, %v5801
      %v5812 = vmax.f32 %v5800, %v5802
      %5813 = vst.msk [vmem:[#allocation3] sm:$0xff] %vm1501, %v5803
      %5814 = vst.msk [vmem:[#allocation3 + $0x8] sm:$0xff] %vm1501, %v5804
      %5815 = vst.msk [vmem:[#allocation3 + $0x10] sm:$0xff] %vm1501, %v5805
      %5816 = vst.msk [vmem:[#allocation3 + $0x18] sm:$0xff] %vm1501, %v5806
      %5817 = vst.msk [vmem:[#allocation3 + $0x20] sm:$0xff] %vm1501, %v5807
      %5818 = vst.msk [vmem:[#allocation3 + $0x28] sm:$0xff] %vm1501, %v5808
      %5819 = vst.msk [vmem:[#allocation3 + $0x30] sm:$0xff] %vm1501, %v5809
      %5820 = vst.msk [vmem:[#allocation3 + $0x38] sm:$0xff] %vm1501, %v5810
      %5821 = vst.msk [vmem:[#allocation3 + $0x40] sm:$0xff] %vm1501, %v5811
      %5822 = vst.msk [vmem:[#allocation3 + $0x48] sm:$0xff] %vm1501, %v5812
      %v5823 = vld [vmem:[#allocation3] ss:$2 sm:$0x1f]
      %s5824 = scalar_lea.vmem [#allocation3], 16
      %v5825 = vld [vmem:[%s5824] ss:$2 sm:$0x1f]
      %s5826 = scalar_lea.vmem [#allocation3], 32
      %v5827 = vld [vmem:[%s5826] ss:$2 sm:$0x1f]
      %s5828 = scalar_lea.vmem [#allocation3], 48
      %v5829 = vld [vmem:[%s5828] ss:$2 sm:$0x1f]
      %s5830 = scalar_lea.vmem [#allocation3], 64
      %v5831 = vld [vmem:[%s5830] ss:$2 sm:$0x1f]
      %s5832 = scalar_lea.vmem [#allocation3], 1
      %v5833 = vld [vmem:[%s5832] ss:$2 sm:$0x1f]
      %s5834 = scalar_lea.vmem [#allocation3], 17
      %v5835 = vld [vmem:[%s5834] ss:$2 sm:$0x1f]
      %s5836 = scalar_lea.vmem [#allocation3], 33
      %v5837 = vld [vmem:[%s5836] ss:$2 sm:$0x1f]
      %s5838 = scalar_lea.vmem [#allocation3], 49
      %v5839 = vld [vmem:[%s5838] ss:$2 sm:$0x1f]
      %s5840 = scalar_lea.vmem [#allocation3], 65
      %v5841 = vld [vmem:[%s5840] ss:$2 sm:$0x1f]
      %v5842 = vmax.f32 %v5823, %v5833
      %v5843 = vmax.f32 %v5825, %v5835
      %v5844 = vmax.f32 %v5827, %v5837
      %v5845 = vmax.f32 %v5829, %v5839
      %v5846 = vmax.f32 %v5831, %v5841
      %vm5847 = vcmask 1044480
      %v5848 = vsel %vm5847, %v5842, 0.0
      %v5849 = vsel %vm5847, %v5843, 0.0
      %v5850 = vsel %vm5847, %v5844, 0.0
      %v5851 = vsel %vm5847, %v5845, 0.0
      %v5852 = vsel %vm5847, %v5846, 0.0
      %v5853 = vpack.c.bf16 %v5849, %v5848
      %v5854 = vpack.c.bf16 %v5851, %v5850
      %v5855 = vpack.c.bf16 %v5852, %v5852
      %v5859 = vunpack.c.l.b16 %v5853
      %v5860 = vunpack.c.h.b16 %v5853
      %v5861 = vunpack.c.l.b16 %v5854
      %v5862 = vunpack.c.h.b16 %v5854
      %v5863 = vunpack.c.l.b16 %v5855
      %v5864 = vpack.c.b16 %v5859, %v5859
      %v5865 = vpack.c.b16 %v5860, %v5860
      %v5866 = vpack.c.b16 %v5861, %v5861
      %v5867 = vpack.c.b16 %v5862, %v5862
      %v5868 = vpack.c.b16 %v5863, %v5863
      %vm5874 = vcmask 125952
      %5875 = vst.msk [vmem:[%s224] sm:$0xf] %vm5874, %v5864
      %5876 = vst.msk [vmem:[%s224 + $0x4] sm:$0xf] %vm5874, %v5865
      %5877 = vst.msk [vmem:[%s224 + $0x8] sm:$0xf] %vm5874, %v5866
      %5878 = vst.msk [vmem:[%s224 + $0xc] sm:$0xf] %vm5874, %v5867
      %5879 = vst.msk [vmem:[%s224 + $0x10] sm:$0xf] %vm5874, %v5868
      %p5880 = scmp.lt.s32.totalorder %s16, 1
      %s5881 = scalar_select %p5880, %s16, 1
      %s5882 = smul.addr %s5881, 5
      %s5883 = smul.addr %s5882, 4
      %s5884 = scalar_lea.vmem %s5, %s5883
      // Predicated region
      $region48: #{convnet_forward.2} parent=39 // pred_check
        %p5885 = pneg %p144
      $region49: #{convnet_forward.2} parent=39 // pred_check_branch
        %5887 = sbr.rel (%p5885) target = $region51
      $region50: #{convnet_forward.2} parent=39 // pred_region
        _
      $region51: #{convnet_forward.2} parent=39 // pred_fallthru
        _
    $region40: #{convnet_forward.2} parent=5 // pred_fallthru
      _
    %p5888 = scmp.le.s32.totalorder 2, %s11
    // Predicated region
    $region52: #{convnet_forward.2} parent=5 // pred_check
      %p5889 = pneg %p5888
    $region53: #{convnet_forward.2} parent=5 // pred_check_branch
      %5891 = sbr.rel (%p5889) target = $region55
    $region54: #{convnet_forward.2} parent=5 // pred_region
      %s5892 = ssub.s32 %s11, 2
      // Predicated region
      $region56: #{convnet_forward.2} parent=54 // pred_check
        %p5893 = pneg %p150
      $region57: #{convnet_forward.2} parent=54 // pred_check_branch
        %5895 = sbr.rel (%p5893) target = $region59
      $region58: #{convnet_forward.2} parent=54 // pred_region
        %p5896 = scmp.lt.s32.totalorder %s17, 1
        %s5897 = scalar_select %p5896, %s17, 1
        %s5898 = smul.addr %s5897, 5
        %s5899 = smul.addr %s5898, 4
        %s5900 = scalar_lea.vmem %s5, %s5899
      $region59: #{convnet_forward.2} parent=54 // pred_fallthru
        _
    $region55: #{convnet_forward.2} parent=5 // pred_fallthru
      _
  $region6: #{convnet_forward.2} parent=0 // loop_footer
    %s15 = sadd.s32 1, %s11
  $region7: #{convnet_forward.2} parent=0 // loop_footer_branch
    %10 = sbr.rel target = $region3
  $region8: #{convnet_forward.2} parent=0 // loop_exit
    _

</llo_original>
